<compile_context>
chip_gen: v6e
topology: v6e:2x2x1
jax: 0.10.0
libtpu: 0.0.40
codegen_flags: <defaults>
</compile_context>

<pallas_src>
import functools
import math

import jax
import jax.numpy as jnp
from jax.experimental import pallas as pl
from jax.experimental.pallas import tpu as pltpu

PAD_INDEX = 0
BERT_HIDDEN_SIZE = 768      # fixed by the module
FFN_DIM = 512               # TODO(synk): bert-base-uncased uses 3072
VOCAB = 64
LN_EPS = 1e-12
NEG_INF = -1e9
TARGET_ROWS = 512           # rows (TB*S) per grid step; 256 already suffices on v5e


def _gelu(x):
    # TODO(synk): HF BERT default is exact erf GELU; tanh approximation used here.
    return 0.5 * x * (1.0 + jnp.tanh(0.7978845608028654 * (x + 0.044715 * x * x * x)))


def _layer_norm(x, g, b):
    mu = jnp.mean(x, axis=-1, keepdims=True)
    xc = x - mu
    var = jnp.mean(xc * xc, axis=-1, keepdims=True)
    return xc * jax.lax.rsqrt(var + LN_EPS) * g + b


def _summarizer_kernel(seq_len, bias_ref, x_ref,
                       wqkv_ref, wo_ref, w1_ref, w2_ref,
                       ln1_g_ref, ln1_b_ref, ln2_g_ref, ln2_b_ref,
                       head_w_ref, head_b_ref, out_ref):
    _, R, H = x_ref.shape                          # R = TB * seq_len (flattened rows)

    x_bf = x_ref[0]                                # (R, H) bf16 token embeddings
    x32 = x_bf.astype(jnp.float32)                 # residual / LayerNorm path stays f32

    # --- fused QKV projection: one (R, H) x (H, 3H) bf16 matmul, f32 acc ---
    qkv = jnp.dot(x_bf, wqkv_ref[...], preferred_element_type=jnp.float32)
    q = qkv[:, 0 * H:1 * H].astype(jnp.bfloat16)   # 1/sqrt(H) pre-folded into wqkv
    k = qkv[:, 1 * H:2 * H].astype(jnp.bfloat16)
    v = qkv[:, 2 * H:3 * H].astype(jnp.bfloat16)

    # --- self attention over the flattened block as ONE (R, R) matmul ---
    # TODO(synk): for seq_len >= 128 a per-batch einsum path avoids the O(TB^2)
    # score waste; the flattened form is the right choice for small S.
    scores = jax.lax.dot_general(q, k, (((1,), (1,)), ((), ())),
                                 preferred_element_type=jnp.float32)   # (R, R)
    scores = scores + bias_ref[0]                  # (1, R) key-side -1e9 pad bias
    if R != seq_len:                               # TB > 1: block-diagonal mask so
        row_b = jax.lax.broadcasted_iota(jnp.int32, (R, R), 0) // seq_len
        col_b = jax.lax.broadcasted_iota(jnp.int32, (R, R), 1) // seq_len
        scores = jnp.where(row_b == col_b, scores, NEG_INF)  # queries stay in-batch

    m = jnp.max(scores, axis=-1, keepdims=True)
    e = jnp.exp(scores - m)
    l = jnp.sum(e, axis=-1, keepdims=True)
    p = (e * pl.reciprocal(l, approx=True)).astype(jnp.bfloat16)   # softmax; EUP divide

    ctx = jnp.dot(p, v, preferred_element_type=jnp.float32)        # (R, H) f32
    attn = jnp.dot(ctx.astype(jnp.bfloat16), wo_ref[...],
                   preferred_element_type=jnp.float32)

    h1 = _layer_norm(x32 + attn, ln1_g_ref[...], ln1_b_ref[...])   # f32 (R, H)

    # --- feed forward ---
    ff = jnp.dot(h1.astype(jnp.bfloat16), w1_ref[...],
                 preferred_element_type=jnp.float32)                # (R, F)
    ff = _gelu(ff)
    ff = jnp.dot(ff.astype(jnp.bfloat16), w2_ref[...],
                 preferred_element_type=jnp.float32)                # (R, H)

    h2 = _layer_norm(h1 + ff, ln2_g_ref[...], ln2_b_ref[...])       # == encoded_layers

    # --- linear head nn.Linear(768, 1): LANE-DENSE (1, R) row ---
    enc = jax.lax.dot_general(head_w_ref[...],                      # (1, H) bf16
                              h2.astype(jnp.bfloat16),              # (R, H)
                              (((1,), (1,)), ((), ())),
                              preferred_element_type=jnp.float32)   # (1, R)
    out_ref[0] = enc + head_b_ref[0, 0]


def _pick_tb(B, S):
    tb = max(1, TARGET_ROWS // max(S, 1))
    tb = min(tb, B)
    # keep at least 2 grid blocks when possible so both v7x TensorCores get work
    if B > 1 and -(-B // tb) < 2:
        tb = -(-B // 2)
    return tb


def _vmem_limit_bytes(R, H, F):
    """Right-size the VMEM request for this generation instead of a flat 48 MiB."""
    bf16, f32 = 2, 4
    weights = (H * 3 * H + H * H + 2 * H * F + H) * bf16 + 4 * H * f32   # single-buffered
    streams = 2 * (R * H * bf16 + 2 * R * f32)                           # x / bias / out, 2-deep
    interm = (R * 3 * H + 5 * R * H + R * F + 3 * R * R) * f32 + 4 * R * H * bf16
    need = weights + streams + interm + (8 << 20)                        # Mosaic headroom
    try:
        cap = pltpu.get_tpu_info().vmem_capacity_bytes                   # 64 MiB on v7x
    except Exception:
        cap = 64 << 20
    return int(min(max(need, 24 << 20), int(cap * 0.85)))


def summarizer_forward(X, params):
    """X: int32 [B, S] token ids. Returns f32 [B, S]."""
    B, S = X.shape
    H, F = BERT_HIDDEN_SIZE, FFN_DIM

    TB = _pick_tb(B, S)
    n_blocks = -(-B // TB)
    B_pad = n_blocks * TB
    if B_pad != B:
        X = jnp.concatenate(
            [X, jnp.full((B_pad - B, S), PAD_INDEX, dtype=X.dtype)], axis=0)
    R = TB * S

    # glue outside the kernel: embedding gather (stand-in for BERT embeddings), bf16 stream
    x_emb = jnp.take(params["emb"], X, axis=0)                # (B_pad, S, H) bf16
    x_flat = x_emb.reshape(n_blocks, R, H)                    # contiguous reshape (free)

    # mask = (X != PAD_INDEX).float() -> additive key-side bias, flattened per block
    bias = jnp.where(X == PAD_INDEX, NEG_INF, 0.0).astype(jnp.float32)   # (B_pad, S)
    bias = bias.reshape(n_blocks, 1, R)

    wmap = lambda b: (0, 0)
    single = dict(pipeline_mode=pl.Buffered(1))   # grid-invariant weights: no double buffer

    grid_spec = pltpu.PrefetchScalarGridSpec(
        num_scalar_prefetch=0,
        grid=(n_blocks,),
        in_specs=[
            pl.BlockSpec((1, 1, R), lambda b: (b, 0, 0)),               # pad-mask bias
            pl.BlockSpec((1, R, H), lambda b: (b, 0, 0)),               # bf16 embeddings
            pl.BlockSpec((H, 3 * H), wmap, **single),                   # wqkv (fused, scaled)
            pl.BlockSpec((H, H), wmap, **single),                       # wo
            pl.BlockSpec((H, F), wmap, **single),                       # w1
            pl.BlockSpec((F, H), wmap, **single),                       # w2
            pl.BlockSpec((1, H), wmap, **single),                       # ln1_g
            pl.BlockSpec((1, H), wmap, **single),                       # ln1_b
            pl.BlockSpec((1, H), wmap, **single),                       # ln2_g
            pl.BlockSpec((1, H), wmap, **single),                       # ln2_b
            pl.BlockSpec((1, H), wmap, **single),                       # head_w (1, 768)
            pl.BlockSpec(memory_space=pltpu.MemorySpace.SMEM),          # head_b scalar
        ],
        out_specs=pl.BlockSpec((1, 1, R), lambda b: (b, 0, 0)),
    )

    out = pl.pallas_call(
        functools.partial(_summarizer_kernel, S),
        out_shape=jax.ShapeDtypeStruct((n_blocks, 1, R), jnp.float32),
        grid_spec=grid_spec,
        compiler_params=pltpu.CompilerParams(
            dimension_semantics=("parallel",),
            vmem_limit_bytes=_vmem_limit_bytes(R, H, F),
        ),
    )(bias, x_flat,
      params["wqkv"], params["wo"], params["w1"], params["w2"],
      params["ln1_g"], params["ln1_b"], params["ln2_g"], params["ln2_b"],
      params["head_w"], params["head_b"])

    return out.reshape(B_pad, S)[:B]                 # squeeze(-1) -> (B, S)


def init_params(key):
    H, F = BERT_HIDDEN_SIZE, FFN_DIM
    ks = jax.random.split(key, 8)
    scaled = lambda k, shape: 0.02 * jax.random.normal(k, shape, dtype=jnp.float32)

    wqkv = scaled(ks[1], (H, 3 * H))
    # perf: fold the attention 1/sqrt(H) scale into the q-slice of wqkv so the
    # kernel never runs a VPU multiply over the (R, R) f32 scores tensor.
    wqkv = wqkv.at[:, :H].multiply(1.0 / math.sqrt(H))

    # xavier_uniform_ for the Linear(768, 1) weight, as in the module __init__
    bound = math.sqrt(6.0 / (H + 1))
    head_w = jax.random.uniform(ks[5], (1, H), jnp.float32, -bound, bound)
    hb_bound = 1.0 / math.sqrt(H)                    # torch nn.Linear default bias init
    head_b = jax.random.uniform(ks[6], (1, 1), jnp.float32, -hb_bound, hb_bound)

    return {
        "emb": scaled(ks[0], (VOCAB, H)).astype(jnp.bfloat16),
        "wqkv": wqkv.astype(jnp.bfloat16),
        "wo": scaled(ks[2], (H, H)).astype(jnp.bfloat16),
        "w1": scaled(ks[3], (H, F)).astype(jnp.bfloat16),
        "w2": scaled(ks[4], (F, H)).astype(jnp.bfloat16),
        "ln1_g": jnp.ones((1, H), jnp.float32),
        "ln1_b": jnp.zeros((1, H), jnp.float32),
        "ln2_g": jnp.ones((1, H), jnp.float32),
        "ln2_b": jnp.zeros((1, H), jnp.float32),
        "head_w": head_w.astype(jnp.bfloat16),
        "head_b": head_b,
    }


if __name__ == "__main__":
    B, S = 2, 8
    key = jax.random.PRNGKey(0)
    k_param, k_ids = jax.random.split(key)

    params = init_params(k_param)
    X = jax.random.randint(k_ids, (B, S), 1, VOCAB, dtype=jnp.int32)
    X = X.at[:, -2:].set(PAD_INDEX)     # trailing PAD tokens to exercise the mask

    enc = jax.block_until_ready(summarizer_forward(X, params))
    assert enc.shape == (B, S) and enc.dtype == jnp.float32
    assert bool(jnp.all(jnp.isfinite(enc)))
    print("KERNEL_OK")
</pallas_src>

<mosaic_0001>
module attributes {stable_mosaic.version = 11 : i64} {
  func.func @_summarizer_kernel(%arg0: i32, %arg1: memref<1x1x8xf32, #tpu.memory_space<vmem>>, %arg2: memref<1x8x768xbf16, #tpu.memory_space<vmem>>, %arg3: memref<768x2304xbf16, #tpu.memory_space<vmem>>, %arg4: memref<768x768xbf16, #tpu.memory_space<vmem>>, %arg5: memref<768x512xbf16, #tpu.memory_space<vmem>>, %arg6: memref<512x768xbf16, #tpu.memory_space<vmem>>, %arg7: memref<1x768xf32, #tpu.memory_space<vmem>>, %arg8: memref<1x768xf32, #tpu.memory_space<vmem>>, %arg9: memref<1x768xf32, #tpu.memory_space<vmem>>, %arg10: memref<1x768xf32, #tpu.memory_space<vmem>>, %arg11: memref<1x768xbf16, #tpu.memory_space<vmem>>, %arg12: memref<1x1xf32, #tpu.memory_space<smem>>, %arg13: memref<1x1x8xf32, #tpu.memory_space<vmem>>) attributes {dimension_semantics = [#tpu.dimension_semantics<parallel>], iteration_bounds = array<i64: 2>, scalar_prefetch = 0 : i64, scratch_operands = 0 : i64, tpu.core_type = #tpu.core_type<tc>, window_params = [{transform_indices = @transform_0, window_bounds = array<i64: 1, 1, 8>}, {transform_indices = @transform_1, window_bounds = array<i64: 1, 8, 768>}, {pipeline_mode = #tpu.pipeline_mode<synchronous>, transform_indices = @transform_2, window_bounds = array<i64: 768, 2304>}, {pipeline_mode = #tpu.pipeline_mode<synchronous>, transform_indices = @transform_3, window_bounds = array<i64: 768, 768>}, {pipeline_mode = #tpu.pipeline_mode<synchronous>, transform_indices = @transform_4, window_bounds = array<i64: 768, 512>}, {pipeline_mode = #tpu.pipeline_mode<synchronous>, transform_indices = @transform_5, window_bounds = array<i64: 512, 768>}, {pipeline_mode = #tpu.pipeline_mode<synchronous>, transform_indices = @transform_6, window_bounds = array<i64: 1, 768>}, {pipeline_mode = #tpu.pipeline_mode<synchronous>, transform_indices = @transform_7, window_bounds = array<i64: 1, 768>}, {pipeline_mode = #tpu.pipeline_mode<synchronous>, transform_indices = @transform_8, window_bounds = array<i64: 1, 768>}, {pipeline_mode = #tpu.pipeline_mode<synchronous>, transform_indices = @transform_9, window_bounds = array<i64: 1, 768>}, {pipeline_mode = #tpu.pipeline_mode<synchronous>, transform_indices = @transform_10, window_bounds = array<i64: 1, 768>}, {transform_indices = @transform_11, window_bounds = array<i64: 1, 1>}, {transform_indices = @transform_12, window_bounds = array<i64: 1, 1, 8>}]} {
    %c0 = arith.constant 0 : index
    %c0_0 = arith.constant 0 : index
    %c0_1 = arith.constant 0 : index
    %0 = vector.load %arg2[%c0, %c0_0, %c0_1] : memref<1x8x768xbf16, #tpu.memory_space<vmem>>, vector<1x8x768xbf16>
    %1 = vector.shape_cast %0 : vector<1x8x768xbf16> to vector<8x768xbf16>
    %2 = arith.extf %1 : vector<8x768xbf16> to vector<8x768xf32>
    %c0_2 = arith.constant 0 : index
    %c0_3 = arith.constant 0 : index
    %3 = vector.load %arg3[%c0_2, %c0_3] : memref<768x2304xbf16, #tpu.memory_space<vmem>>, vector<768x2304xbf16>
    %cst = arith.constant dense<0.000000e+00> : vector<8x2304xf32>
    %4 = tpu.matmul %1, %3, %cst {dimension_numbers = #tpu.dot_dimension_numbers<[1], [0], [0], [1], [0, 0, 1, 1], [], []>} : vector<8x768xbf16>, vector<768x2304xbf16>, vector<8x2304xf32> -> vector<8x2304xf32>
    %5 = vector.extract_strided_slice %4 {offsets = [0, 0], sizes = [8, 768], strides = [1, 1]} : vector<8x2304xf32> to vector<8x768xf32>
    %6 = arith.truncf %5 : vector<8x768xf32> to vector<8x768xbf16>
    %7 = vector.extract_strided_slice %4 {offsets = [0, 768], sizes = [8, 768], strides = [1, 1]} : vector<8x2304xf32> to vector<8x768xf32>
    %8 = arith.truncf %7 : vector<8x768xf32> to vector<8x768xbf16>
    %9 = vector.extract_strided_slice %4 {offsets = [0, 1536], sizes = [8, 768], strides = [1, 1]} : vector<8x2304xf32> to vector<8x768xf32>
    %10 = arith.truncf %9 : vector<8x768xf32> to vector<8x768xbf16>
    %cst_4 = arith.constant dense<0.000000e+00> : vector<8x8xf32>
    %11 = tpu.matmul %6, %8, %cst_4 {dimension_numbers = #tpu.dot_dimension_numbers<[1], [1], [0], [0], [0, 0, 1, 0], [], []>} : vector<8x768xbf16>, vector<8x768xbf16>, vector<8x8xf32> -> vector<8x8xf32>
    %c0_5 = arith.constant 0 : index
    %c0_6 = arith.constant 0 : index
    %c0_7 = arith.constant 0 : index
    %12 = vector.load %arg1[%c0_5, %c0_6, %c0_7] : memref<1x1x8xf32, #tpu.memory_space<vmem>>, vector<1x1x8xf32>
    %13 = vector.shape_cast %12 : vector<1x1x8xf32> to vector<1x8xf32>
    %14 = vector.broadcast %13 : vector<1x8xf32> to vector<8x8xf32>
    %15 = arith.addf %11, %14 : vector<8x8xf32>
    %cst_8 = arith.constant dense<0xFF800000> : vector<8xf32>
    %16 = vector.multi_reduction <maximumf>, %15, %cst_8 [1] : vector<8x8xf32> to vector<8xf32>
    %17 = vector.shape_cast %16 : vector<8xf32> to vector<8x1xf32>
    %18 = vector.broadcast %17 : vector<8x1xf32> to vector<8x8xf32>
    %19 = arith.subf %15, %18 : vector<8x8xf32>
    %20 = math.exp %19 : vector<8x8xf32>
    %cst_9 = arith.constant dense<0.000000e+00> : vector<8xf32>
    %21 = vector.multi_reduction <add>, %20, %cst_9 [1] : vector<8x8xf32> to vector<8xf32>
    %22 = vector.shape_cast %21 : vector<8xf32> to vector<8x1xf32>
    %23 = tpu.reciprocal %22 {approx = true} : vector<8x1xf32> -> vector<8x1xf32>
    %24 = vector.broadcast %23 : vector<8x1xf32> to vector<8x8xf32>
    %25 = arith.mulf %20, %24 : vector<8x8xf32>
    %26 = arith.truncf %25 : vector<8x8xf32> to vector<8x8xbf16>
    %cst_10 = arith.constant dense<0.000000e+00> : vector<8x768xf32>
    %27 = tpu.matmul %26, %10, %cst_10 {dimension_numbers = #tpu.dot_dimension_numbers<[1], [0], [0], [1], [0, 0, 1, 1], [], []>} : vector<8x8xbf16>, vector<8x768xbf16>, vector<8x768xf32> -> vector<8x768xf32>
    %28 = arith.truncf %27 : vector<8x768xf32> to vector<8x768xbf16>
    %c0_11 = arith.constant 0 : index
    %c0_12 = arith.constant 0 : index
    %29 = vector.load %arg4[%c0_11, %c0_12] : memref<768x768xbf16, #tpu.memory_space<vmem>>, vector<768x768xbf16>
    %cst_13 = arith.constant dense<0.000000e+00> : vector<8x768xf32>
    %30 = tpu.matmul %28, %29, %cst_13 {dimension_numbers = #tpu.dot_dimension_numbers<[1], [0], [0], [1], [0, 0, 1, 1], [], []>} : vector<8x768xbf16>, vector<768x768xbf16>, vector<8x768xf32> -> vector<8x768xf32>
    %31 = arith.addf %2, %30 : vector<8x768xf32>
    %c0_14 = arith.constant 0 : index
    %c0_15 = arith.constant 0 : index
    %32 = vector.load %arg7[%c0_14, %c0_15] : memref<1x768xf32, #tpu.memory_space<vmem>>, vector<1x768xf32>
    %c0_16 = arith.constant 0 : index
    %c0_17 = arith.constant 0 : index
    %33 = vector.load %arg8[%c0_16, %c0_17] : memref<1x768xf32, #tpu.memory_space<vmem>>, vector<1x768xf32>
    %cst_18 = arith.constant dense<0.000000e+00> : vector<8xf32>
    %34 = vector.multi_reduction <add>, %31, %cst_18 [1] : vector<8x768xf32> to vector<8xf32>
    %35 = vector.shape_cast %34 : vector<8xf32> to vector<8x1xf32>
    %cst_19 = arith.constant 7.680000e+02 : f32
    %36 = vector.broadcast %cst_19 : f32 to vector<8x1xf32>
    %37 = arith.divf %35, %36 : vector<8x1xf32>
    %38 = vector.broadcast %37 : vector<8x1xf32> to vector<8x768xf32>
    %39 = arith.subf %31, %38 : vector<8x768xf32>
    %40 = arith.mulf %39, %39 : vector<8x768xf32>
    %cst_20 = arith.constant dense<0.000000e+00> : vector<8xf32>
    %41 = vector.multi_reduction <add>, %40, %cst_20 [1] : vector<8x768xf32> to vector<8xf32>
    %42 = vector.shape_cast %41 : vector<8xf32> to vector<8x1xf32>
    %cst_21 = arith.constant 7.680000e+02 : f32
    %43 = vector.broadcast %cst_21 : f32 to vector<8x1xf32>
    %44 = arith.divf %42, %43 : vector<8x1xf32>
    %cst_22 = arith.constant 9.99999996E-13 : f32
    %45 = vector.broadcast %cst_22 : f32 to vector<8x1xf32>
    %46 = arith.addf %44, %45 : vector<8x1xf32>
    %47 = math.rsqrt %46 : vector<8x1xf32>
    %48 = vector.broadcast %47 : vector<8x1xf32> to vector<8x768xf32>
    %49 = arith.mulf %39, %48 : vector<8x768xf32>
    %50 = vector.broadcast %32 : vector<1x768xf32> to vector<8x768xf32>
    %51 = arith.mulf %49, %50 : vector<8x768xf32>
    %52 = vector.broadcast %33 : vector<1x768xf32> to vector<8x768xf32>
    %53 = arith.addf %51, %52 : vector<8x768xf32>
    %54 = arith.truncf %53 : vector<8x768xf32> to vector<8x768xbf16>
    %c0_23 = arith.constant 0 : index
    %c0_24 = arith.constant 0 : index
    %55 = vector.load %arg5[%c0_23, %c0_24] : memref<768x512xbf16, #tpu.memory_space<vmem>>, vector<768x512xbf16>
    %cst_25 = arith.constant dense<0.000000e+00> : vector<8x512xf32>
    %56 = tpu.matmul %54, %55, %cst_25 {dimension_numbers = #tpu.dot_dimension_numbers<[1], [0], [0], [1], [0, 0, 1, 1], [], []>} : vector<8x768xbf16>, vector<768x512xbf16>, vector<8x512xf32> -> vector<8x512xf32>
    %cst_26 = arith.constant 5.000000e-01 : f32
    %57 = vector.broadcast %cst_26 : f32 to vector<8x512xf32>
    %58 = arith.mulf %57, %56 : vector<8x512xf32>
    %cst_27 = arith.constant 4.471500e-02 : f32
    %59 = vector.broadcast %cst_27 : f32 to vector<8x512xf32>
    %60 = arith.mulf %59, %56 : vector<8x512xf32>
    %61 = arith.mulf %60, %56 : vector<8x512xf32>
    %62 = arith.mulf %61, %56 : vector<8x512xf32>
    %63 = arith.addf %56, %62 : vector<8x512xf32>
    %cst_28 = arith.constant 0.797884583 : f32
    %64 = vector.broadcast %cst_28 : f32 to vector<8x512xf32>
    %65 = arith.mulf %64, %63 : vector<8x512xf32>
    %66 = math.tanh %65 : vector<8x512xf32>
    %cst_29 = arith.constant 1.000000e+00 : f32
    %67 = vector.broadcast %cst_29 : f32 to vector<8x512xf32>
    %68 = arith.addf %67, %66 : vector<8x512xf32>
    %69 = arith.mulf %58, %68 : vector<8x512xf32>
    %70 = arith.truncf %69 : vector<8x512xf32> to vector<8x512xbf16>
    %c0_30 = arith.constant 0 : index
    %c0_31 = arith.constant 0 : index
    %71 = vector.load %arg6[%c0_30, %c0_31] : memref<512x768xbf16, #tpu.memory_space<vmem>>, vector<512x768xbf16>
    %cst_32 = arith.constant dense<0.000000e+00> : vector<8x768xf32>
    %72 = tpu.matmul %70, %71, %cst_32 {dimension_numbers = #tpu.dot_dimension_numbers<[1], [0], [0], [1], [0, 0, 1, 1], [], []>} : vector<8x512xbf16>, vector<512x768xbf16>, vector<8x768xf32> -> vector<8x768xf32>
    %73 = arith.addf %53, %72 : vector<8x768xf32>
    %c0_33 = arith.constant 0 : index
    %c0_34 = arith.constant 0 : index
    %74 = vector.load %arg9[%c0_33, %c0_34] : memref<1x768xf32, #tpu.memory_space<vmem>>, vector<1x768xf32>
    %c0_35 = arith.constant 0 : index
    %c0_36 = arith.constant 0 : index
    %75 = vector.load %arg10[%c0_35, %c0_36] : memref<1x768xf32, #tpu.memory_space<vmem>>, vector<1x768xf32>
    %cst_37 = arith.constant dense<0.000000e+00> : vector<8xf32>
    %76 = vector.multi_reduction <add>, %73, %cst_37 [1] : vector<8x768xf32> to vector<8xf32>
    %77 = vector.shape_cast %76 : vector<8xf32> to vector<8x1xf32>
    %cst_38 = arith.constant 7.680000e+02 : f32
    %78 = vector.broadcast %cst_38 : f32 to vector<8x1xf32>
    %79 = arith.divf %77, %78 : vector<8x1xf32>
    %80 = vector.broadcast %79 : vector<8x1xf32> to vector<8x768xf32>
    %81 = arith.subf %73, %80 : vector<8x768xf32>
    %82 = arith.mulf %81, %81 : vector<8x768xf32>
    %cst_39 = arith.constant dense<0.000000e+00> : vector<8xf32>
    %83 = vector.multi_reduction <add>, %82, %cst_39 [1] : vector<8x768xf32> to vector<8xf32>
    %84 = vector.shape_cast %83 : vector<8xf32> to vector<8x1xf32>
    %cst_40 = arith.constant 7.680000e+02 : f32
    %85 = vector.broadcast %cst_40 : f32 to vector<8x1xf32>
    %86 = arith.divf %84, %85 : vector<8x1xf32>
    %cst_41 = arith.constant 9.99999996E-13 : f32
    %87 = vector.broadcast %cst_41 : f32 to vector<8x1xf32>
    %88 = arith.addf %86, %87 : vector<8x1xf32>
    %89 = math.rsqrt %88 : vector<8x1xf32>
    %90 = vector.broadcast %89 : vector<8x1xf32> to vector<8x768xf32>
    %91 = arith.mulf %81, %90 : vector<8x768xf32>
    %92 = vector.broadcast %74 : vector<1x768xf32> to vector<8x768xf32>
    %93 = arith.mulf %91, %92 : vector<8x768xf32>
    %94 = vector.broadcast %75 : vector<1x768xf32> to vector<8x768xf32>
    %95 = arith.addf %93, %94 : vector<8x768xf32>
    %c0_42 = arith.constant 0 : index
    %c0_43 = arith.constant 0 : index
    %96 = vector.load %arg11[%c0_42, %c0_43] : memref<1x768xbf16, #tpu.memory_space<vmem>>, vector<1x768xbf16>
    %97 = arith.truncf %95 : vector<8x768xf32> to vector<8x768xbf16>
    %cst_44 = arith.constant dense<0.000000e+00> : vector<1x8xf32>
    %98 = tpu.matmul %96, %97, %cst_44 {dimension_numbers = #tpu.dot_dimension_numbers<[1], [1], [0], [0], [0, 0, 1, 0], [], []>} : vector<1x768xbf16>, vector<8x768xbf16>, vector<1x8xf32> -> vector<1x8xf32>
    %c0_45 = arith.constant 0 : index
    %c0_46 = arith.constant 0 : index
    %99 = memref.load %arg12[%c0_45, %c0_46] : memref<1x1xf32, #tpu.memory_space<smem>>
    %100 = vector.broadcast %99 : f32 to vector<1x8xf32>
    %101 = arith.addf %98, %100 : vector<1x8xf32>
    %c0_47 = arith.constant 0 : index
    %c0_48 = arith.constant 0 : index
    %c0_49 = arith.constant 0 : index
    %102 = vector.load %arg13[%c0_47, %c0_48, %c0_49] : memref<1x1x8xf32, #tpu.memory_space<vmem>>, vector<1x1x8xf32>
    %103 = vector.shape_cast %102 : vector<1x1x8xf32> to vector<1x8xf32>
    %104 = vector.shape_cast %101 : vector<1x8xf32> to vector<1x1x8xf32>
    tpu.vector_store %arg13[%c0_47, %c0_48, %c0_49], %104 {strides = array<i32>} : memref<1x1x8xf32, #tpu.memory_space<vmem>>, vector<1x1x8xf32>,
    return
  }
  func.func @transform_0(%arg0: i32) -> (i32, i32, i32) {
    %c0_i32 = arith.constant 0 : i32
    %c0_i32_0 = arith.constant 0 : i32
    %c0_i32_1 = arith.constant 0 : i32
    return %arg0, %c0_i32, %c0_i32_0 : i32, i32, i32
  }
  func.func @transform_1(%arg0: i32) -> (i32, i32, i32) {
    %c0_i32 = arith.constant 0 : i32
    %c0_i32_0 = arith.constant 0 : i32
    %c0_i32_1 = arith.constant 0 : i32
    return %arg0, %c0_i32, %c0_i32_0 : i32, i32, i32
  }
  func.func @transform_2(%arg0: i32) -> (i32, i32) {
    %c0_i32 = arith.constant 0 : i32
    %c0_i32_0 = arith.constant 0 : i32
    %c0_i32_1 = arith.constant 0 : i32
    return %c0_i32, %c0_i32_0 : i32, i32
  }
  func.func @transform_3(%arg0: i32) -> (i32, i32) {
    %c0_i32 = arith.constant 0 : i32
    %c0_i32_0 = arith.constant 0 : i32
    %c0_i32_1 = arith.constant 0 : i32
    return %c0_i32, %c0_i32_0 : i32, i32
  }
  func.func @transform_4(%arg0: i32) -> (i32, i32) {
    %c0_i32 = arith.constant 0 : i32
    %c0_i32_0 = arith.constant 0 : i32
    %c0_i32_1 = arith.constant 0 : i32
    return %c0_i32, %c0_i32_0 : i32, i32
  }
  func.func @transform_5(%arg0: i32) -> (i32, i32) {
    %c0_i32 = arith.constant 0 : i32
    %c0_i32_0 = arith.constant 0 : i32
    %c0_i32_1 = arith.constant 0 : i32
    return %c0_i32, %c0_i32_0 : i32, i32
  }
  func.func @transform_6(%arg0: i32) -> (i32, i32) {
    %c0_i32 = arith.constant 0 : i32
    %c0_i32_0 = arith.constant 0 : i32
    %c0_i32_1 = arith.constant 0 : i32
    return %c0_i32, %c0_i32_0 : i32, i32
  }
  func.func @transform_7(%arg0: i32) -> (i32, i32) {
    %c0_i32 = arith.constant 0 : i32
    %c0_i32_0 = arith.constant 0 : i32
    %c0_i32_1 = arith.constant 0 : i32
    return %c0_i32, %c0_i32_0 : i32, i32
  }
  func.func @transform_8(%arg0: i32) -> (i32, i32) {
    %c0_i32 = arith.constant 0 : i32
    %c0_i32_0 = arith.constant 0 : i32
    %c0_i32_1 = arith.constant 0 : i32
    return %c0_i32, %c0_i32_0 : i32, i32
  }
  func.func @transform_9(%arg0: i32) -> (i32, i32) {
    %c0_i32 = arith.constant 0 : i32
    %c0_i32_0 = arith.constant 0 : i32
    %c0_i32_1 = arith.constant 0 : i32
    return %c0_i32, %c0_i32_0 : i32, i32
  }
  func.func @transform_10(%arg0: i32) -> (i32, i32) {
    %c0_i32 = arith.constant 0 : i32
    %c0_i32_0 = arith.constant 0 : i32
    %c0_i32_1 = arith.constant 0 : i32
    return %c0_i32, %c0_i32_0 : i32, i32
  }
  func.func @transform_11(%arg0: i32) -> (i32, i32) {
    %c0_i32 = arith.constant 0 : i32
    %c0_i32_0 = arith.constant 0 : i32
    %c0_i32_1 = arith.constant 0 : i32
    return %c0_i32, %c0_i32_0 : i32, i32
  }
  func.func @transform_12(%arg0: i32) -> (i32, i32, i32) {
    %c0_i32 = arith.constant 0 : i32
    %c0_i32_0 = arith.constant 0 : i32
    %c0_i32_1 = arith.constant 0 : i32
    return %arg0, %c0_i32, %c0_i32_0 : i32, i32, i32
  }
}

</mosaic_0001>

<llo_original>
// kernel: tpu_custom_call.1
$region0: #{tpu_custom_call.1}
  #allocation0 [shape = 'u32[]', space=smem, size = 0x4, offset = 0x4, fixed_abs, tag = 'smem constant byte address 0x4 - core index']
  #allocation1 [shape = 'u32[144,128]{1,0:T(1,128)}', space=vmem, size = 0x12000, scoped, tag = 'internal scratch']
  #allocation2 [shape = 'f32[1,1]{1,0:T(1,128)S(6)}', space=smem, size = 0x200, scoped, tag = 'scoped memory for tpu_custom_call.1']
  %s0 = inlined_call_operand.hbm [shape: f32[2,1,8], index: 0, kind: input, shape index: {}]
  %s1 = inlined_call_operand.hbm [shape: bf16[2,8,768], index: 1, kind: input, shape index: {}]
  %s2 = inlined_call_operand.hbm [shape: bf16[768,2304], index: 2, kind: input, shape index: {}]
  %s3 = inlined_call_operand.hbm [shape: bf16[768,768], index: 3, kind: input, shape index: {}]
  %s4 = inlined_call_operand.hbm [shape: bf16[768,512], index: 4, kind: input, shape index: {}]
  %s5 = inlined_call_operand.hbm [shape: bf16[512,768], index: 5, kind: input, shape index: {}]
  %s6 = inlined_call_operand.hbm [shape: f32[1,768], index: 6, kind: input, shape index: {}]
  %s7 = inlined_call_operand.hbm [shape: f32[1,768], index: 7, kind: input, shape index: {}]
  %s8 = inlined_call_operand.hbm [shape: f32[1,768], index: 8, kind: input, shape index: {}]
  %s9 = inlined_call_operand.hbm [shape: f32[1,768], index: 9, kind: input, shape index: {}]
  %s10 = inlined_call_operand.hbm [shape: bf16[1,768], index: 10, kind: input, shape index: {}]
  %s11 = inlined_call_operand.<no memory space> [shape: f32[1,1], index: 11, kind: input, shape index: {}]
  %s12 = inlined_call_operand.hbm [shape: f32[2,1,8], index: 12, kind: output, shape index: {}]
  %s13 = sld [smem:[#allocation0]]
  $region125: #{tpu_custom_call.1} parent=0
    _
  %s15 = ssub.s32 1, %s13
  %s16 = scalar_select 0, %s15, %s13
  %17 = sst [smem:[#allocation2]] %s11
  $region1: #{tpu_custom_call.1} parent=0
    #allocation3 [shape = 'u8[1024]{0}', space=vmem, size = 0x400, scoped, tag = 'input window, operand 0']
    #allocation4 [shape = 's32[2]{0}', space=sflag, size = 0x8, scoped, tag = 'scoped memory for tpu_custom_call.1']
    #allocation5 [shape = 's32[2]{0}', space=sflag, size = 0x8, scoped, tag = 'scoped memory for tpu_custom_call.1']
    #allocation6 [shape = 'u8[24576]{0}', space=vmem, size = 0x6000, scoped, tag = 'input window, operand 1']
    #allocation7 [shape = 's32[2]{0}', space=sflag, size = 0x8, scoped, tag = 'scoped memory for tpu_custom_call.1']
    #allocation8 [shape = 'u8[3538944]{0}', space=vmem, size = 0x360000, scoped, tag = 'input window, operand 2, single buffered']
    #allocation9 [shape = 'u8[1179648]{0}', space=vmem, size = 0x120000, scoped, tag = 'input window, operand 3, single buffered']
    #allocation10 [shape = 's32[1]{0}', space=sflag, size = 0x4, scoped, tag = 'scoped memory for tpu_custom_call.1']
    #allocation11 [shape = 'u8[786432]{0}', space=vmem, size = 0xc0000, scoped, tag = 'input window, operand 4, single buffered']
    #allocation12 [shape = 'u8[786432]{0}', space=vmem, size = 0xc0000, scoped, tag = 'input window, operand 5, single buffered']
    #allocation13 [shape = 's32[1]{0}', space=sflag, size = 0x4, scoped, tag = 'scoped memory for tpu_custom_call.1']
    #allocation14 [shape = 'u8[3072]{0}', space=vmem, size = 0xc00, scoped, tag = 'input window, operand 6, single buffered']
    #allocation15 [shape = 'u8[3072]{0}', space=vmem, size = 0xc00, scoped, tag = 'input window, operand 7, single buffered']
    #allocation16 [shape = 's32[1]{0}', space=sflag, size = 0x4, scoped, tag = 'scoped memory for tpu_custom_call.1']
    #allocation17 [shape = 'u8[3072]{0}', space=vmem, size = 0xc00, scoped, tag = 'input window, operand 8, single buffered']
    #allocation18 [shape = 'u8[3072]{0}', space=vmem, size = 0xc00, scoped, tag = 'input window, operand 9, single buffered']
    #allocation19 [shape = 's32[1]{0}', space=sflag, size = 0x4, scoped, tag = 'scoped memory for tpu_custom_call.1']
    #allocation20 [shape = 'u8[3072]{0}', space=vmem, size = 0xc00, scoped, tag = 'input window, operand 10, single buffered']
    #allocation21 [shape = 'u8[1024]{0}', space=vmem, size = 0x400, scoped, tag = 'output window, operand 0']
    %18 = vsyncpa [#allocation4], 0
    %s19 = scalar_lea.sflag [#allocation4], 1
    %20 = vsyncpa %s19, 0
    %21 = vsyncpa [#allocation7], 0
    %s22 = scalar_lea.sflag [#allocation7], 1
    %23 = vsyncpa %s22, 0
    %24 = vsyncpa [#allocation10], 0
    %25 = vsyncpa [#allocation13], 0
    %26 = vsyncpa [#allocation16], 0
    %27 = vsyncpa [#allocation19], 0
    %28 = vsyncpa [#allocation5], 0
    %s29 = scalar_lea.sflag [#allocation5], 1
    %30 = vsyncpa %s29, 0
    loop: start=0, step=1, limit=4
    $region2: #{tpu_custom_call.1} parent=1 // loop_pre_header
      _
    $region3: #{tpu_custom_call.1} parent=1 // loop_header
      %s32 = sphi 0, %s36
      %p33 = scmp.ge.s32.totalorder %s32, 4
      %s42 = sphi 0, %s44
      %s45 = sphi 0, %s42
      %s46 = sphi 0, %s45
      %s62 = sphi 0, %s46
      %s68 = sphi 0, %s70
      %s71 = sphi 0, %s68
      %s72 = sphi 0, %s71
      %s88 = sphi 0, %s72
      %s92 = sphi 0, %s92
      %s94 = sphi 0, %s92
      %s95 = sphi 0, %s94
      %s109 = sphi 0, %s95
      %s113 = sphi 0, %s113
      %s115 = sphi 0, %s113
      %s116 = sphi 0, %s115
      %s130 = sphi 0, %s116
      %s134 = sphi 0, %s134
      %s136 = sphi 0, %s134
      %s137 = sphi 0, %s136
      %s151 = sphi 0, %s137
      %s155 = sphi 0, %s155
      %s157 = sphi 0, %s155
      %s158 = sphi 0, %s157
      %s172 = sphi 0, %s158
      %s176 = sphi 0, %s176
      %s178 = sphi 0, %s176
      %s179 = sphi 0, %s178
      %s193 = sphi 0, %s179
      %s197 = sphi 0, %s197
      %s199 = sphi 0, %s197
      %s200 = sphi 0, %s199
      %s214 = sphi 0, %s200
      %s218 = sphi 0, %s218
      %s220 = sphi 0, %s218
      %s221 = sphi 0, %s220
      %s235 = sphi 0, %s221
      %s239 = sphi 0, %s239
      %s241 = sphi 0, %s239
      %s242 = sphi 0, %s241
      %s256 = sphi 0, %s242
      %s260 = sphi 0, %s260
      %s262 = sphi 0, %s260
      %s263 = sphi 0, %s262
      %s277 = sphi 0, %s263
      %s281 = sphi 0, %s281
      %s283 = sphi 0, %s281
      %s284 = sphi 0, %s283
      %s298 = sphi 0, %s284
      %s304 = sphi 0, %s306
      %s307 = sphi 0, %s304
      %s308 = sphi 0, %s307
      %s324 = sphi 0, %s308
    $region4: #{tpu_custom_call.1} parent=1 // loop_header_branch
      %35 = sbr.rel (%p33) target = $region8
    $region5: #{tpu_custom_call.1} parent=1 // loop_body
      %s37 = ssub.s32 %s32, 1
      %s38 = ssub.s32 %s32, 2
      %s39 = sadd.s32 %s32, 1
      %s40 = ssub.s32 %s32, %s39
      %p41 = scmp.eq.s32.totalorder %s40, 0
      %s43 = sadd.s32 %s42, 1
      %s44 = scalar_select %p41, %s42, %s43
      %p47 = pneg %p41
      %p48 = scmp.eq.s32.totalorder %s32, 1
      %p49 = por %p47, %p48
      %p50 = scmp.ne.s32.totalorder %s42, %s45
      %p51 = scmp.eq.s32.totalorder %s32, 0
      %p52 = por %p50, %p51
      %p53 = scmp.ne.s32.totalorder %s42, %s45
      %p54 = scmp.eq.s32.totalorder %s37, 1
      %p55 = por %p53, %p54
      %p56 = scmp.ne.s32.totalorder %s45, %s46
      %p57 = scmp.eq.s32.totalorder %s37, 0
      %p58 = por %p56, %p57
      %p59 = scmp.ne.s32.totalorder %s45, %s46
      %p60 = scmp.eq.s32.totalorder %s38, 1
      %p61 = por %p59, %p60
      %p63 = scmp.ne.s32.totalorder %s46, %s62
      %p64 = scmp.eq.s32.totalorder %s38, 0
      %p65 = por %p63, %p64
      %s66 = ssub.s32 %s32, %s39
      %p67 = scmp.eq.s32.totalorder %s66, 0
      %s69 = sadd.s32 %s68, 1
      %s70 = scalar_select %p67, %s68, %s69
      %p73 = pneg %p67
      %p74 = scmp.eq.s32.totalorder %s32, 1
      %p75 = por %p73, %p74
      %p76 = scmp.ne.s32.totalorder %s68, %s71
      %p77 = scmp.eq.s32.totalorder %s32, 0
      %p78 = por %p76, %p77
      %p79 = scmp.ne.s32.totalorder %s68, %s71
      %p80 = scmp.eq.s32.totalorder %s37, 1
      %p81 = por %p79, %p80
      %p82 = scmp.ne.s32.totalorder %s71, %s72
      %p83 = scmp.eq.s32.totalorder %s37, 0
      %p84 = por %p82, %p83
      %p85 = scmp.ne.s32.totalorder %s71, %s72
      %p86 = scmp.eq.s32.totalorder %s38, 1
      %p87 = por %p85, %p86
      %p89 = scmp.ne.s32.totalorder %s72, %s88
      %p90 = scmp.eq.s32.totalorder %s38, 0
      %p91 = por %p89, %p90
      %s93 = sadd.s32 %s92, 1
      %p96 = scmp.eq.s32.totalorder %s32, 1
      %p97 = scmp.ne.s32.totalorder %s92, %s94
      %p98 = scmp.eq.s32.totalorder %s32, 0
      %p99 = por %p97, %p98
      %p100 = scmp.ne.s32.totalorder %s92, %s94
      %p101 = scmp.eq.s32.totalorder %s37, 1
      %p102 = por %p100, %p101
      %p103 = scmp.ne.s32.totalorder %s94, %s95
      %p104 = scmp.eq.s32.totalorder %s37, 0
      %p105 = por %p103, %p104
      %p106 = scmp.ne.s32.totalorder %s94, %s95
      %p107 = scmp.eq.s32.totalorder %s38, 1
      %p108 = por %p106, %p107
      %p110 = scmp.ne.s32.totalorder %s95, %s109
      %p111 = scmp.eq.s32.totalorder %s38, 0
      %p112 = por %p110, %p111
      %s114 = sadd.s32 %s113, 1
      %p117 = scmp.eq.s32.totalorder %s32, 1
      %p118 = scmp.ne.s32.totalorder %s113, %s115
      %p119 = scmp.eq.s32.totalorder %s32, 0
      %p120 = por %p118, %p119
      %p121 = scmp.ne.s32.totalorder %s113, %s115
      %p122 = scmp.eq.s32.totalorder %s37, 1
      %p123 = por %p121, %p122
      %p124 = scmp.ne.s32.totalorder %s115, %s116
      %p125 = scmp.eq.s32.totalorder %s37, 0
      %p126 = por %p124, %p125
      %p127 = scmp.ne.s32.totalorder %s115, %s116
      %p128 = scmp.eq.s32.totalorder %s38, 1
      %p129 = por %p127, %p128
      %p131 = scmp.ne.s32.totalorder %s116, %s130
      %p132 = scmp.eq.s32.totalorder %s38, 0
      %p133 = por %p131, %p132
      %s135 = sadd.s32 %s134, 1
      %p138 = scmp.eq.s32.totalorder %s32, 1
      %p139 = scmp.ne.s32.totalorder %s134, %s136
      %p140 = scmp.eq.s32.totalorder %s32, 0
      %p141 = por %p139, %p140
      %p142 = scmp.ne.s32.totalorder %s134, %s136
      %p143 = scmp.eq.s32.totalorder %s37, 1
      %p144 = por %p142, %p143
      %p145 = scmp.ne.s32.totalorder %s136, %s137
      %p146 = scmp.eq.s32.totalorder %s37, 0
      %p147 = por %p145, %p146
      %p148 = scmp.ne.s32.totalorder %s136, %s137
      %p149 = scmp.eq.s32.totalorder %s38, 1
      %p150 = por %p148, %p149
      %p152 = scmp.ne.s32.totalorder %s137, %s151
      %p153 = scmp.eq.s32.totalorder %s38, 0
      %p154 = por %p152, %p153
      %s156 = sadd.s32 %s155, 1
      %p159 = scmp.eq.s32.totalorder %s32, 1
      %p160 = scmp.ne.s32.totalorder %s155, %s157
      %p161 = scmp.eq.s32.totalorder %s32, 0
      %p162 = por %p160, %p161
      %p163 = scmp.ne.s32.totalorder %s155, %s157
      %p164 = scmp.eq.s32.totalorder %s37, 1
      %p165 = por %p163, %p164
      %p166 = scmp.ne.s32.totalorder %s157, %s158
      %p167 = scmp.eq.s32.totalorder %s37, 0
      %p168 = por %p166, %p167
      %p169 = scmp.ne.s32.totalorder %s157, %s158
      %p170 = scmp.eq.s32.totalorder %s38, 1
      %p171 = por %p169, %p170
      %p173 = scmp.ne.s32.totalorder %s158, %s172
      %p174 = scmp.eq.s32.totalorder %s38, 0
      %p175 = por %p173, %p174
      %s177 = sadd.s32 %s176, 1
      %p180 = scmp.eq.s32.totalorder %s32, 1
      %p181 = scmp.ne.s32.totalorder %s176, %s178
      %p182 = scmp.eq.s32.totalorder %s32, 0
      %p183 = por %p181, %p182
      %p184 = scmp.ne.s32.totalorder %s176, %s178
      %p185 = scmp.eq.s32.totalorder %s37, 1
      %p186 = por %p184, %p185
      %p187 = scmp.ne.s32.totalorder %s178, %s179
      %p188 = scmp.eq.s32.totalorder %s37, 0
      %p189 = por %p187, %p188
      %p190 = scmp.ne.s32.totalorder %s178, %s179
      %p191 = scmp.eq.s32.totalorder %s38, 1
      %p192 = por %p190, %p191
      %p194 = scmp.ne.s32.totalorder %s179, %s193
      %p195 = scmp.eq.s32.totalorder %s38, 0
      %p196 = por %p194, %p195
      %s198 = sadd.s32 %s197, 1
      %p201 = scmp.eq.s32.totalorder %s32, 1
      %p202 = scmp.ne.s32.totalorder %s197, %s199
      %p203 = scmp.eq.s32.totalorder %s32, 0
      %p204 = por %p202, %p203
      %p205 = scmp.ne.s32.totalorder %s197, %s199
      %p206 = scmp.eq.s32.totalorder %s37, 1
      %p207 = por %p205, %p206
      %p208 = scmp.ne.s32.totalorder %s199, %s200
      %p209 = scmp.eq.s32.totalorder %s37, 0
      %p210 = por %p208, %p209
      %p211 = scmp.ne.s32.totalorder %s199, %s200
      %p212 = scmp.eq.s32.totalorder %s38, 1
      %p213 = por %p211, %p212
      %p215 = scmp.ne.s32.totalorder %s200, %s214
      %p216 = scmp.eq.s32.totalorder %s38, 0
      %p217 = por %p215, %p216
      %s219 = sadd.s32 %s218, 1
      %p222 = scmp.eq.s32.totalorder %s32, 1
      %p223 = scmp.ne.s32.totalorder %s218, %s220
      %p224 = scmp.eq.s32.totalorder %s32, 0
      %p225 = por %p223, %p224
      %p226 = scmp.ne.s32.totalorder %s218, %s220
      %p227 = scmp.eq.s32.totalorder %s37, 1
      %p228 = por %p226, %p227
      %p229 = scmp.ne.s32.totalorder %s220, %s221
      %p230 = scmp.eq.s32.totalorder %s37, 0
      %p231 = por %p229, %p230
      %p232 = scmp.ne.s32.totalorder %s220, %s221
      %p233 = scmp.eq.s32.totalorder %s38, 1
      %p234 = por %p232, %p233
      %p236 = scmp.ne.s32.totalorder %s221, %s235
      %p237 = scmp.eq.s32.totalorder %s38, 0
      %p238 = por %p236, %p237
      %s240 = sadd.s32 %s239, 1
      %p243 = scmp.eq.s32.totalorder %s32, 1
      %p244 = scmp.ne.s32.totalorder %s239, %s241
      %p245 = scmp.eq.s32.totalorder %s32, 0
      %p246 = por %p244, %p245
      %p247 = scmp.ne.s32.totalorder %s239, %s241
      %p248 = scmp.eq.s32.totalorder %s37, 1
      %p249 = por %p247, %p248
      %p250 = scmp.ne.s32.totalorder %s241, %s242
      %p251 = scmp.eq.s32.totalorder %s37, 0
      %p252 = por %p250, %p251
      %p253 = scmp.ne.s32.totalorder %s241, %s242
      %p254 = scmp.eq.s32.totalorder %s38, 1
      %p255 = por %p253, %p254
      %p257 = scmp.ne.s32.totalorder %s242, %s256
      %p258 = scmp.eq.s32.totalorder %s38, 0
      %p259 = por %p257, %p258
      %s261 = sadd.s32 %s260, 1
      %p264 = scmp.eq.s32.totalorder %s32, 1
      %p265 = scmp.ne.s32.totalorder %s260, %s262
      %p266 = scmp.eq.s32.totalorder %s32, 0
      %p267 = por %p265, %p266
      %p268 = scmp.ne.s32.totalorder %s260, %s262
      %p269 = scmp.eq.s32.totalorder %s37, 1
      %p270 = por %p268, %p269
      %p271 = scmp.ne.s32.totalorder %s262, %s263
      %p272 = scmp.eq.s32.totalorder %s37, 0
      %p273 = por %p271, %p272
      %p274 = scmp.ne.s32.totalorder %s262, %s263
      %p275 = scmp.eq.s32.totalorder %s38, 1
      %p276 = por %p274, %p275
      %p278 = scmp.ne.s32.totalorder %s263, %s277
      %p279 = scmp.eq.s32.totalorder %s38, 0
      %p280 = por %p278, %p279
      %s282 = sadd.s32 %s281, 1
      %p285 = scmp.eq.s32.totalorder %s32, 1
      %p286 = scmp.ne.s32.totalorder %s281, %s283
      %p287 = scmp.eq.s32.totalorder %s32, 0
      %p288 = por %p286, %p287
      %p289 = scmp.ne.s32.totalorder %s281, %s283
      %p290 = scmp.eq.s32.totalorder %s37, 1
      %p291 = por %p289, %p290
      %p292 = scmp.ne.s32.totalorder %s283, %s284
      %p293 = scmp.eq.s32.totalorder %s37, 0
      %p294 = por %p292, %p293
      %p295 = scmp.ne.s32.totalorder %s283, %s284
      %p296 = scmp.eq.s32.totalorder %s38, 1
      %p297 = por %p295, %p296
      %p299 = scmp.ne.s32.totalorder %s284, %s298
      %p300 = scmp.eq.s32.totalorder %s38, 0
      %p301 = por %p299, %p300
      %s302 = ssub.s32 %s32, %s39
      %p303 = scmp.eq.s32.totalorder %s302, 0
      %s305 = sadd.s32 %s304, 1
      %s306 = scalar_select %p303, %s304, %s305
      %p309 = pneg %p303
      %p310 = scmp.eq.s32.totalorder %s32, 1
      %p311 = por %p309, %p310
      %p312 = scmp.ne.s32.totalorder %s304, %s307
      %p313 = scmp.eq.s32.totalorder %s32, 0
      %p314 = por %p312, %p313
      %p315 = scmp.ne.s32.totalorder %s304, %s307
      %p316 = scmp.eq.s32.totalorder %s37, 1
      %p317 = por %p315, %p316
      %p318 = scmp.ne.s32.totalorder %s307, %s308
      %p319 = scmp.eq.s32.totalorder %s37, 0
      %p320 = por %p318, %p319
      %p321 = scmp.ne.s32.totalorder %s307, %s308
      %p322 = scmp.eq.s32.totalorder %s38, 1
      %p323 = por %p321, %p322
      %p325 = scmp.ne.s32.totalorder %s308, %s324
      %p326 = scmp.eq.s32.totalorder %s38, 0
      %p327 = por %p325, %p326
      %p328 = scmp.le.s32.totalorder 1, %s32
      %p329 = scmp.lt.s32.totalorder %s32, 3
      %p330 = pnand %p328, %p329
      %p331 = pneg %p330
      // Predicated region
      $region9: #{tpu_custom_call.1} parent=5 // pred_check
        _
      $region10: #{tpu_custom_call.1} parent=5 // pred_check_branch
        %333 = sbr.rel (%p330) target = $region12
      $region11: #{tpu_custom_call.1} parent=5 // pred_region
        %s334 = ssub.s32 %s32, 1
        // Predicated region
        $region13: #{tpu_custom_call.1} parent=11 // pred_check
          %p335 = pneg %p105
        $region14: #{tpu_custom_call.1} parent=11 // pred_check_branch
          %337 = sbr.rel (%p335) target = $region16
        $region15: #{tpu_custom_call.1} parent=11 // pred_region
          %s339 = ssub.s32 110592, 110592
          %340 = vsyncadd [#allocation7], %s339
          %s341 = sshll.u32 [#allocation8], 4
          %s342 = int_to_ptr.vmem [resolvable:$true] %s341
          %347 = dma.hbm_to_vmem [thread:$0]  %s2, 110592, %s342, [#allocation7], 1152, 1152, 72
        $region16: #{tpu_custom_call.1} parent=11 // pred_fallthru
          _
        // Predicated region
        $region17: #{tpu_custom_call.1} parent=11 // pred_check
          %p348 = pneg %p126
        $region18: #{tpu_custom_call.1} parent=11 // pred_check_branch
          %350 = sbr.rel (%p348) target = $region20
        $region19: #{tpu_custom_call.1} parent=11 // pred_region
          %s352 = ssub.s32 36864, 36864
          %353 = vsyncadd [#allocation10], %s352
          %s354 = sshll.u32 [#allocation9], 4
          %s355 = int_to_ptr.vmem [resolvable:$true] %s354
          %360 = dma.hbm_to_vmem [thread:$0]  %s3, 36864, %s355, [#allocation10], 384, 384, 24
        $region20: #{tpu_custom_call.1} parent=11 // pred_fallthru
          _
        // Predicated region
        $region21: #{tpu_custom_call.1} parent=11 // pred_check
          %p361 = pneg %p147
        $region22: #{tpu_custom_call.1} parent=11 // pred_check_branch
          %363 = sbr.rel (%p361) target = $region24
        $region23: #{tpu_custom_call.1} parent=11 // pred_region
          %s365 = ssub.s32 24576, 24576
          %366 = vsyncadd [#allocation10], %s365
          %s367 = sshll.u32 [#allocation11], 4
          %s368 = int_to_ptr.vmem [resolvable:$true] %s367
          %373 = dma.hbm_to_vmem [thread:$0]  %s4, 24576, %s368, [#allocation10], 256, 256, 16
        $region24: #{tpu_custom_call.1} parent=11 // pred_fallthru
          _
        // Predicated region
        $region25: #{tpu_custom_call.1} parent=11 // pred_check
          %p374 = pneg %p168
        $region26: #{tpu_custom_call.1} parent=11 // pred_check_branch
          %376 = sbr.rel (%p374) target = $region28
        $region27: #{tpu_custom_call.1} parent=11 // pred_region
          %s378 = ssub.s32 24576, 24576
          %379 = vsyncadd [#allocation13], %s378
          %s380 = sshll.u32 [#allocation12], 4
          %s381 = int_to_ptr.vmem [resolvable:$true] %s380
          %386 = dma.hbm_to_vmem [thread:$0]  %s5, 24576, %s381, [#allocation13], 384, 384, 24
        $region28: #{tpu_custom_call.1} parent=11 // pred_fallthru
          _
        // Predicated region
        $region29: #{tpu_custom_call.1} parent=11 // pred_check
          %p387 = pneg %p189
        $region30: #{tpu_custom_call.1} parent=11 // pred_check_branch
          %389 = sbr.rel (%p387) target = $region32
        $region31: #{tpu_custom_call.1} parent=11 // pred_region
          %s391 = ssub.s32 96, 96
          %392 = vsyncadd [#allocation13], %s391
          %s394 = sshll.u32 [#allocation14], 4
          %s395 = int_to_ptr.vmem [resolvable:$true] %s394
          %397 = dma.hbm_to_vmem [thread:$0]  %s6, 96, %s395, [#allocation13]
        $region32: #{tpu_custom_call.1} parent=11 // pred_fallthru
          _
        // Predicated region
        $region33: #{tpu_custom_call.1} parent=11 // pred_check
          %p398 = pneg %p210
        $region34: #{tpu_custom_call.1} parent=11 // pred_check_branch
          %400 = sbr.rel (%p398) target = $region36
        $region35: #{tpu_custom_call.1} parent=11 // pred_region
          %s402 = ssub.s32 96, 96
          %403 = vsyncadd [#allocation16], %s402
          %s405 = sshll.u32 [#allocation15], 4
          %s406 = int_to_ptr.vmem [resolvable:$true] %s405
          %408 = dma.hbm_to_vmem [thread:$0]  %s7, 96, %s406, [#allocation16]
        $region36: #{tpu_custom_call.1} parent=11 // pred_fallthru
          _
        // Predicated region
        $region37: #{tpu_custom_call.1} parent=11 // pred_check
          %p409 = pneg %p231
        $region38: #{tpu_custom_call.1} parent=11 // pred_check_branch
          %411 = sbr.rel (%p409) target = $region40
        $region39: #{tpu_custom_call.1} parent=11 // pred_region
          %s413 = ssub.s32 96, 96
          %414 = vsyncadd [#allocation16], %s413
          %s416 = sshll.u32 [#allocation17], 4
          %s417 = int_to_ptr.vmem [resolvable:$true] %s416
          %419 = dma.hbm_to_vmem [thread:$0]  %s8, 96, %s417, [#allocation16]
        $region40: #{tpu_custom_call.1} parent=11 // pred_fallthru
          _
        // Predicated region
        $region41: #{tpu_custom_call.1} parent=11 // pred_check
          %p420 = pneg %p252
        $region42: #{tpu_custom_call.1} parent=11 // pred_check_branch
          %422 = sbr.rel (%p420) target = $region44
        $region43: #{tpu_custom_call.1} parent=11 // pred_region
          %s424 = ssub.s32 96, 96
          %425 = vsyncadd [#allocation19], %s424
          %s427 = sshll.u32 [#allocation18], 4
          %s428 = int_to_ptr.vmem [resolvable:$true] %s427
          %430 = dma.hbm_to_vmem [thread:$0]  %s9, 96, %s428, [#allocation19]
        $region44: #{tpu_custom_call.1} parent=11 // pred_fallthru
          _
        // Predicated region
        $region45: #{tpu_custom_call.1} parent=11 // pred_check
          %p431 = pneg %p273
        $region46: #{tpu_custom_call.1} parent=11 // pred_check_branch
          %433 = sbr.rel (%p431) target = $region48
        $region47: #{tpu_custom_call.1} parent=11 // pred_region
          %s435 = ssub.s32 96, 96
          %436 = vsyncadd [#allocation19], %s435
          %s438 = sshll.u32 [#allocation20], 4
          %s439 = int_to_ptr.vmem [resolvable:$true] %s438
          %441 = dma.hbm_to_vmem [thread:$0]  %s10, 96, %s439, [#allocation19]
        $region48: #{tpu_custom_call.1} parent=11 // pred_fallthru
          _
        // Predicated region
        $region49: #{tpu_custom_call.1} parent=11 // pred_check
          %p442 = pneg %p294
        $region50: #{tpu_custom_call.1} parent=11 // pred_check_branch
          %444 = sbr.rel (%p442) target = $region52
        $region51: #{tpu_custom_call.1} parent=11 // pred_region
          _
        $region52: #{tpu_custom_call.1} parent=11 // pred_fallthru
          _
      $region12: #{tpu_custom_call.1} parent=5 // pred_fallthru
        _
      %p445 = scmp.lt.s32.totalorder %s32, 2
      // Predicated region
      $region53: #{tpu_custom_call.1} parent=5 // pred_check
        %p446 = pneg %p445
      $region54: #{tpu_custom_call.1} parent=5 // pred_check_branch
        %448 = sbr.rel (%p446) target = $region56
      $region55: #{tpu_custom_call.1} parent=5 // pred_region
        // Predicated region
        $region57: #{tpu_custom_call.1} parent=55 // pred_check
          %p449 = pneg %p52
        $region58: #{tpu_custom_call.1} parent=55 // pred_check_branch
          %451 = sbr.rel (%p449) target = $region60
        $region59: #{tpu_custom_call.1} parent=55 // pred_region
          %s452 = sand.u32 %s42, 1
          %s453 = scalar_lea.sflag [#allocation4], %s452
          %s454 = sand.u32 %s42, 1
          %s455 = scalar_lea.vmem [#allocation3], %s454
          %s457 = ssub.s32 16, 16
          %458 = vsyncadd %s453, %s457
          %s459 = smul.addr %s32, 16
          %s460 = scalar_lea.hbm %s0, %s459
          %s462 = sshll.u32 %s455, 4
          %s463 = int_to_ptr.vmem [resolvable:$true] %s462
          %465 = dma.hbm_to_vmem [thread:$0]  %s460, 16, %s463, %s453
        $region60: #{tpu_custom_call.1} parent=55 // pred_fallthru
          _
        // Predicated region
        $region61: #{tpu_custom_call.1} parent=55 // pred_check
          %p466 = pneg %p78
        $region62: #{tpu_custom_call.1} parent=55 // pred_check_branch
          %468 = sbr.rel (%p466) target = $region64
        $region63: #{tpu_custom_call.1} parent=55 // pred_region
          %s469 = sand.u32 %s32, 1
          %s470 = scalar_lea.sflag [#allocation7], %s469
          %s471 = sand.u32 %s68, 1
          %s472 = smul.addr %s471, 24
          %s473 = scalar_lea.vmem [#allocation6], %s472
          %s475 = ssub.s32 384, 384
          %476 = vsyncadd %s470, %s475
          %s477 = smul.addr %s32, 6
          %s478 = smul.addr %s477, 64
          %s479 = scalar_lea.hbm %s1, %s478
          %s481 = sshll.u32 %s473, 4
          %s482 = int_to_ptr.vmem [resolvable:$true] %s481
          %484 = dma.hbm_to_vmem [thread:$0]  %s479, 384, %s482, %s470
        $region64: #{tpu_custom_call.1} parent=55 // pred_fallthru
          _
      $region56: #{tpu_custom_call.1} parent=5 // pred_fallthru
        _
      %p485 = scmp.le.s32.totalorder 1, %s32
      %p486 = scmp.lt.s32.totalorder %s32, 3
      %p487 = pnand %p485, %p486
      %p488 = pneg %p487
      // Predicated region
      $region65: #{tpu_custom_call.1} parent=5 // pred_check
        _
      $region66: #{tpu_custom_call.1} parent=5 // pred_check_branch
        %490 = sbr.rel (%p487) target = $region68
      $region67: #{tpu_custom_call.1} parent=5 // pred_region
        %s491 = ssub.s32 %s32, 1
        %s492 = sand.u32 %s45, 1
        %s493 = scalar_lea.sflag [#allocation4], %s492
        %s494 = sand.u32 %s45, 1
        %s495 = scalar_lea.vmem [#allocation3], %s494
        // Predicated region
        $region69: #{tpu_custom_call.1} parent=67 // pred_check
          %p496 = pneg %p58
        $region70: #{tpu_custom_call.1} parent=67 // pred_check_branch
          %498 = sbr.rel (%p496) target = $region72
        $region71: #{tpu_custom_call.1} parent=67 // pred_region
          %499 = dma.done %s493, 16
        $region72: #{tpu_custom_call.1} parent=67 // pred_fallthru
          _
        %s500 = sand.u32 %s37, 1
        %s501 = scalar_lea.sflag [#allocation7], %s500
        %s502 = sand.u32 %s71, 1
        %s503 = smul.addr %s502, 24
        %s504 = scalar_lea.vmem [#allocation6], %s503
        // Predicated region
        $region73: #{tpu_custom_call.1} parent=67 // pred_check
          %p505 = pneg %p84
        $region74: #{tpu_custom_call.1} parent=67 // pred_check_branch
          %507 = sbr.rel (%p505) target = $region76
        $region75: #{tpu_custom_call.1} parent=67 // pred_region
          %508 = dma.done %s501, 384
        $region76: #{tpu_custom_call.1} parent=67 // pred_fallthru
          _
        // Predicated region
        $region77: #{tpu_custom_call.1} parent=67 // pred_check
          %p509 = pneg %p105
        $region78: #{tpu_custom_call.1} parent=67 // pred_check_branch
          %511 = sbr.rel (%p509) target = $region80
        $region79: #{tpu_custom_call.1} parent=67 // pred_region
          %512 = dma.done [#allocation7], 110592
        $region80: #{tpu_custom_call.1} parent=67 // pred_fallthru
          _
        // Predicated region
        $region81: #{tpu_custom_call.1} parent=67 // pred_check
          %p513 = pneg %p126
        $region82: #{tpu_custom_call.1} parent=67 // pred_check_branch
          %515 = sbr.rel (%p513) target = $region84
        $region83: #{tpu_custom_call.1} parent=67 // pred_region
          %516 = dma.done [#allocation10], 36864
        $region84: #{tpu_custom_call.1} parent=67 // pred_fallthru
          _
        // Predicated region
        $region85: #{tpu_custom_call.1} parent=67 // pred_check
          %p517 = pneg %p147
        $region86: #{tpu_custom_call.1} parent=67 // pred_check_branch
          %519 = sbr.rel (%p517) target = $region88
        $region87: #{tpu_custom_call.1} parent=67 // pred_region
          %520 = dma.done [#allocation10], 24576
        $region88: #{tpu_custom_call.1} parent=67 // pred_fallthru
          _
        // Predicated region
        $region89: #{tpu_custom_call.1} parent=67 // pred_check
          %p521 = pneg %p168
        $region90: #{tpu_custom_call.1} parent=67 // pred_check_branch
          %523 = sbr.rel (%p521) target = $region92
        $region91: #{tpu_custom_call.1} parent=67 // pred_region
          %524 = dma.done [#allocation13], 24576
        $region92: #{tpu_custom_call.1} parent=67 // pred_fallthru
          _
        // Predicated region
        $region93: #{tpu_custom_call.1} parent=67 // pred_check
          %p525 = pneg %p189
        $region94: #{tpu_custom_call.1} parent=67 // pred_check_branch
          %527 = sbr.rel (%p525) target = $region96
        $region95: #{tpu_custom_call.1} parent=67 // pred_region
          %528 = dma.done [#allocation13], 96
        $region96: #{tpu_custom_call.1} parent=67 // pred_fallthru
          _
        // Predicated region
        $region97: #{tpu_custom_call.1} parent=67 // pred_check
          %p529 = pneg %p210
        $region98: #{tpu_custom_call.1} parent=67 // pred_check_branch
          %531 = sbr.rel (%p529) target = $region100
        $region99: #{tpu_custom_call.1} parent=67 // pred_region
          %532 = dma.done [#allocation16], 96
        $region100: #{tpu_custom_call.1} parent=67 // pred_fallthru
          _
        // Predicated region
        $region101: #{tpu_custom_call.1} parent=67 // pred_check
          %p533 = pneg %p231
        $region102: #{tpu_custom_call.1} parent=67 // pred_check_branch
          %535 = sbr.rel (%p533) target = $region104
        $region103: #{tpu_custom_call.1} parent=67 // pred_region
          %536 = dma.done [#allocation16], 96
        $region104: #{tpu_custom_call.1} parent=67 // pred_fallthru
          _
        // Predicated region
        $region105: #{tpu_custom_call.1} parent=67 // pred_check
          %p537 = pneg %p252
        $region106: #{tpu_custom_call.1} parent=67 // pred_check_branch
          %539 = sbr.rel (%p537) target = $region108
        $region107: #{tpu_custom_call.1} parent=67 // pred_region
          %540 = dma.done [#allocation19], 96
        $region108: #{tpu_custom_call.1} parent=67 // pred_fallthru
          _
        // Predicated region
        $region109: #{tpu_custom_call.1} parent=67 // pred_check
          %p541 = pneg %p273
        $region110: #{tpu_custom_call.1} parent=67 // pred_check_branch
          %543 = sbr.rel (%p541) target = $region112
        $region111: #{tpu_custom_call.1} parent=67 // pred_region
          %544 = dma.done [#allocation19], 96
        $region112: #{tpu_custom_call.1} parent=67 // pred_fallthru
          _
        %s545 = sand.u32 %s45, 1
        %s546 = scalar_lea.sflag [#allocation4], %s545
        %s547 = sand.u32 %s45, 1
        %s548 = scalar_lea.vmem [#allocation3], %s547
        %p549 = pneg %p58
        %p550 = pneg %p55
        %s551 = sand.u32 %s37, 1
        %s552 = scalar_lea.sflag [#allocation7], %s551
        %s553 = sand.u32 %s71, 1
        %s554 = smul.addr %s553, 24
        %s555 = scalar_lea.vmem [#allocation6], %s554
        %p556 = pneg %p84
        %p557 = pneg %p81
        %p558 = pneg %p105
        %p559 = pneg %p102
        %p560 = pneg %p126
        %p561 = pneg %p123
        %p562 = pneg %p147
        %p563 = pneg %p144
        %p564 = pneg %p168
        %p565 = pneg %p165
        %p566 = pneg %p189
        %p567 = pneg %p186
        %p568 = pneg %p210
        %p569 = pneg %p207
        %p570 = pneg %p231
        %p571 = pneg %p228
        %p572 = pneg %p252
        %p573 = pneg %p249
        %p574 = pneg %p273
        %p575 = pneg %p270
        %p576 = pneg %p294
        %p577 = pneg %p291
        %p578 = pneg %p320
        %p579 = pneg %p317
        %s580 = sand.u32 %s307, 1
        %s581 = scalar_lea.sflag [#allocation5], %s580
        %s582 = sand.u32 %s307, 1
        %s583 = scalar_lea.vmem [#allocation21], %s582
        %v585 = vld [vmem:[%s504] sm:$0xff]
        %v586 = vld [vmem:[%s504 + $0x8] sm:$0xff]
        %v587 = vld [vmem:[%s504 + $0x10] sm:$0xff]
        %v588 = vunpack.c.l.bf16 %v585
        %v589 = vunpack.c.h.bf16 %v585
        %v590 = vunpack.c.l.bf16 %v586
        %v591 = vunpack.c.h.bf16 %v586
        %v592 = vunpack.c.l.bf16 %v587
        %v593 = vunpack.c.h.bf16 %v587
        %v594 = vld [vmem:[#allocation8] sm:$0xff]
        %v595 = vld [vmem:[#allocation8 + $0x8] sm:$0xff]
        %v596 = vld [vmem:[#allocation8 + $0x10] sm:$0xff]
        %v597 = vld [vmem:[#allocation8 + $0x18] sm:$0xff]
        %v598 = vld [vmem:[#allocation8 + $0x20] sm:$0xff]
        %v599 = vld [vmem:[#allocation8 + $0x28] sm:$0xff]
        %v600 = vld [vmem:[#allocation8 + $0x30] sm:$0xff]
        %v601 = vld [vmem:[#allocation8 + $0x38] sm:$0xff]
        %v602 = vld [vmem:[#allocation8 + $0x40] sm:$0xff]
        %v603 = vld [vmem:[#allocation8 + $0x48] sm:$0xff]
        %v604 = vld [vmem:[#allocation8 + $0x50] sm:$0xff]
        %v605 = vld [vmem:[#allocation8 + $0x58] sm:$0xff]
        %v606 = vld [vmem:[#allocation8 + $0x60] sm:$0xff]
        %v607 = vld [vmem:[#allocation8 + $0x68] sm:$0xff]
        %v608 = vld [vmem:[#allocation8 + $0x70] sm:$0xff]
        %v609 = vld [vmem:[#allocation8 + $0x78] sm:$0xff]
        %v610 = vld [vmem:[#allocation8 + $0x80] sm:$0xff]
        %v611 = vld [vmem:[#allocation8 + $0x88] sm:$0xff]
        %v612 = vld [vmem:[#allocation8 + $0x90] sm:$0xff]
        %v613 = vld [vmem:[#allocation8 + $0x98] sm:$0xff]
        %v614 = vld [vmem:[#allocation8 + $0xa0] sm:$0xff]
        %v615 = vld [vmem:[#allocation8 + $0xa8] sm:$0xff]
        %v616 = vld [vmem:[#allocation8 + $0xb0] sm:$0xff]
        %v617 = vld [vmem:[#allocation8 + $0xb8] sm:$0xff]
        %v618 = vld [vmem:[#allocation8 + $0xc0] sm:$0xff]
        %v619 = vld [vmem:[#allocation8 + $0xc8] sm:$0xff]
        %v620 = vld [vmem:[#allocation8 + $0xd0] sm:$0xff]
        %v621 = vld [vmem:[#allocation8 + $0xd8] sm:$0xff]
        %v622 = vld [vmem:[#allocation8 + $0xe0] sm:$0xff]
        %v623 = vld [vmem:[#allocation8 + $0xe8] sm:$0xff]
        %v624 = vld [vmem:[#allocation8 + $0xf0] sm:$0xff]
        %v625 = vld [vmem:[#allocation8 + $0xf8] sm:$0xff]
        %v626 = vld [vmem:[#allocation8 + $0x100] sm:$0xff]
        %v627 = vld [vmem:[#allocation8 + $0x108] sm:$0xff]
        %v628 = vld [vmem:[#allocation8 + $0x110] sm:$0xff]
        %v629 = vld [vmem:[#allocation8 + $0x118] sm:$0xff]
        %v630 = vld [vmem:[#allocation8 + $0x120] sm:$0xff]
        %v631 = vld [vmem:[#allocation8 + $0x128] sm:$0xff]
        %v632 = vld [vmem:[#allocation8 + $0x130] sm:$0xff]
        %v633 = vld [vmem:[#allocation8 + $0x138] sm:$0xff]
        %v634 = vld [vmem:[#allocation8 + $0x140] sm:$0xff]
        %v635 = vld [vmem:[#allocation8 + $0x148] sm:$0xff]
        %v636 = vld [vmem:[#allocation8 + $0x150] sm:$0xff]
        %v637 = vld [vmem:[#allocation8 + $0x158] sm:$0xff]
        %v638 = vld [vmem:[#allocation8 + $0x160] sm:$0xff]
        %v639 = vld [vmem:[#allocation8 + $0x168] sm:$0xff]
        %v640 = vld [vmem:[#allocation8 + $0x170] sm:$0xff]
        %v641 = vld [vmem:[#allocation8 + $0x178] sm:$0xff]
        %v642 = vld [vmem:[#allocation8 + $0x180] sm:$0xff]
        %v643 = vld [vmem:[#allocation8 + $0x188] sm:$0xff]
        %v644 = vld [vmem:[#allocation8 + $0x190] sm:$0xff]
        %v645 = vld [vmem:[#allocation8 + $0x198] sm:$0xff]
        %v646 = vld [vmem:[#allocation8 + $0x1a0] sm:$0xff]
        %v647 = vld [vmem:[#allocation8 + $0x1a8] sm:$0xff]
        %v648 = vld [vmem:[#allocation8 + $0x1b0] sm:$0xff]
        %v649 = vld [vmem:[#allocation8 + $0x1b8] sm:$0xff]
        %v650 = vld [vmem:[#allocation8 + $0x1c0] sm:$0xff]
        %v651 = vld [vmem:[#allocation8 + $0x1c8] sm:$0xff]
        %v652 = vld [vmem:[#allocation8 + $0x1d0] sm:$0xff]
        %v653 = vld [vmem:[#allocation8 + $0x1d8] sm:$0xff]
        %v654 = vld [vmem:[#allocation8 + $0x1e0] sm:$0xff]
        %v655 = vld [vmem:[#allocation8 + $0x1e8] sm:$0xff]
        %v656 = vld [vmem:[#allocation8 + $0x1f0] sm:$0xff]
        %v657 = vld [vmem:[#allocation8 + $0x1f8] sm:$0xff]
        %v658 = vld [vmem:[#allocation8 + $0x200] sm:$0xff]
        %v659 = vld [vmem:[#allocation8 + $0x208] sm:$0xff]
        %v660 = vld [vmem:[#allocation8 + $0x210] sm:$0xff]
        %v661 = vld [vmem:[#allocation8 + $0x218] sm:$0xff]
        %v662 = vld [vmem:[#allocation8 + $0x220] sm:$0xff]
        %v663 = vld [vmem:[#allocation8 + $0x228] sm:$0xff]
        %v664 = vld [vmem:[#allocation8 + $0x230] sm:$0xff]
        %v665 = vld [vmem:[#allocation8 + $0x238] sm:$0xff]
        %v666 = vld [vmem:[#allocation8 + $0x240] sm:$0xff]
        %v667 = vld [vmem:[#allocation8 + $0x248] sm:$0xff]
        %v668 = vld [vmem:[#allocation8 + $0x250] sm:$0xff]
        %v669 = vld [vmem:[#allocation8 + $0x258] sm:$0xff]
        %v670 = vld [vmem:[#allocation8 + $0x260] sm:$0xff]
        %v671 = vld [vmem:[#allocation8 + $0x268] sm:$0xff]
        %v672 = vld [vmem:[#allocation8 + $0x270] sm:$0xff]
        %v673 = vld [vmem:[#allocation8 + $0x278] sm:$0xff]
        %v674 = vld [vmem:[#allocation8 + $0x280] sm:$0xff]
        %v675 = vld [vmem:[#allocation8 + $0x288] sm:$0xff]
        %v676 = vld [vmem:[#allocation8 + $0x290] sm:$0xff]
        %v677 = vld [vmem:[#allocation8 + $0x298] sm:$0xff]
        %v678 = vld [vmem:[#allocation8 + $0x2a0] sm:$0xff]
        %v679 = vld [vmem:[#allocation8 + $0x2a8] sm:$0xff]
        %v680 = vld [vmem:[#allocation8 + $0x2b0] sm:$0xff]
        %v681 = vld [vmem:[#allocation8 + $0x2b8] sm:$0xff]
        %v682 = vld [vmem:[#allocation8 + $0x2c0] sm:$0xff]
        %v683 = vld [vmem:[#allocation8 + $0x2c8] sm:$0xff]
        %v684 = vld [vmem:[#allocation8 + $0x2d0] sm:$0xff]
        %v685 = vld [vmem:[#allocation8 + $0x2d8] sm:$0xff]
        %v686 = vld [vmem:[#allocation8 + $0x2e0] sm:$0xff]
        %v687 = vld [vmem:[#allocation8 + $0x2e8] sm:$0xff]
        %v688 = vld [vmem:[#allocation8 + $0x2f0] sm:$0xff]
        %v689 = vld [vmem:[#allocation8 + $0x2f8] sm:$0xff]
        %v690 = vld [vmem:[#allocation8 + $0x300] sm:$0xff]
        %v691 = vld [vmem:[#allocation8 + $0x308] sm:$0xff]
        %v692 = vld [vmem:[#allocation8 + $0x310] sm:$0xff]
        %v693 = vld [vmem:[#allocation8 + $0x318] sm:$0xff]
        %v694 = vld [vmem:[#allocation8 + $0x320] sm:$0xff]
        %v695 = vld [vmem:[#allocation8 + $0x328] sm:$0xff]
        %v696 = vld [vmem:[#allocation8 + $0x330] sm:$0xff]
        %v697 = vld [vmem:[#allocation8 + $0x338] sm:$0xff]
        %v698 = vld [vmem:[#allocation8 + $0x340] sm:$0xff]
        %v699 = vld [vmem:[#allocation8 + $0x348] sm:$0xff]
        %v700 = vld [vmem:[#allocation8 + $0x350] sm:$0xff]
        %v701 = vld [vmem:[#allocation8 + $0x358] sm:$0xff]
        %v702 = vld [vmem:[#allocation8 + $0x360] sm:$0xff]
        %v703 = vld [vmem:[#allocation8 + $0x368] sm:$0xff]
        %v704 = vld [vmem:[#allocation8 + $0x370] sm:$0xff]
        %v705 = vld [vmem:[#allocation8 + $0x378] sm:$0xff]
        %v706 = vld [vmem:[#allocation8 + $0x380] sm:$0xff]
        %v707 = vld [vmem:[#allocation8 + $0x388] sm:$0xff]
        %v708 = vld [vmem:[#allocation8 + $0x390] sm:$0xff]
        %v709 = vld [vmem:[#allocation8 + $0x398] sm:$0xff]
        %v710 = vld [vmem:[#allocation8 + $0x3a0] sm:$0xff]
        %v711 = vld [vmem:[#allocation8 + $0x3a8] sm:$0xff]
        %v712 = vld [vmem:[#allocation8 + $0x3b0] sm:$0xff]
        %v713 = vld [vmem:[#allocation8 + $0x3b8] sm:$0xff]
        %v714 = vld [vmem:[#allocation8 + $0x3c0] sm:$0xff]
        %v715 = vld [vmem:[#allocation8 + $0x3c8] sm:$0xff]
        %v716 = vld [vmem:[#allocation8 + $0x3d0] sm:$0xff]
        %v717 = vld [vmem:[#allocation8 + $0x3d8] sm:$0xff]
        %v718 = vld [vmem:[#allocation8 + $0x3e0] sm:$0xff]
        %v719 = vld [vmem:[#allocation8 + $0x3e8] sm:$0xff]
        %v720 = vld [vmem:[#allocation8 + $0x3f0] sm:$0xff]
        %v721 = vld [vmem:[#allocation8 + $0x3f8] sm:$0xff]
        %v722 = vld [vmem:[#allocation8 + $0x400] sm:$0xff]
        %v723 = vld [vmem:[#allocation8 + $0x408] sm:$0xff]
        %v724 = vld [vmem:[#allocation8 + $0x410] sm:$0xff]
        %v725 = vld [vmem:[#allocation8 + $0x418] sm:$0xff]
        %v726 = vld [vmem:[#allocation8 + $0x420] sm:$0xff]
        %v727 = vld [vmem:[#allocation8 + $0x428] sm:$0xff]
        %v728 = vld [vmem:[#allocation8 + $0x430] sm:$0xff]
        %v729 = vld [vmem:[#allocation8 + $0x438] sm:$0xff]
        %v730 = vld [vmem:[#allocation8 + $0x440] sm:$0xff]
        %v731 = vld [vmem:[#allocation8 + $0x448] sm:$0xff]
        %v732 = vld [vmem:[#allocation8 + $0x450] sm:$0xff]
        %v733 = vld [vmem:[#allocation8 + $0x458] sm:$0xff]
        %v734 = vld [vmem:[#allocation8 + $0x460] sm:$0xff]
        %v735 = vld [vmem:[#allocation8 + $0x468] sm:$0xff]
        %v736 = vld [vmem:[#allocation8 + $0x470] sm:$0xff]
        %v737 = vld [vmem:[#allocation8 + $0x478] sm:$0xff]
        %v738 = vld [vmem:[#allocation8 + $0x480] sm:$0xff]
        %v739 = vld [vmem:[#allocation8 + $0x488] sm:$0xff]
        %v740 = vld [vmem:[#allocation8 + $0x490] sm:$0xff]
        %v741 = vld [vmem:[#allocation8 + $0x498] sm:$0xff]
        %v742 = vld [vmem:[#allocation8 + $0x4a0] sm:$0xff]
        %v743 = vld [vmem:[#allocation8 + $0x4a8] sm:$0xff]
        %v744 = vld [vmem:[#allocation8 + $0x4b0] sm:$0xff]
        %v745 = vld [vmem:[#allocation8 + $0x4b8] sm:$0xff]
        %v746 = vld [vmem:[#allocation8 + $0x4c0] sm:$0xff]
        %v747 = vld [vmem:[#allocation8 + $0x4c8] sm:$0xff]
        %v748 = vld [vmem:[#allocation8 + $0x4d0] sm:$0xff]
        %v749 = vld [vmem:[#allocation8 + $0x4d8] sm:$0xff]
        %v750 = vld [vmem:[#allocation8 + $0x4e0] sm:$0xff]
        %v751 = vld [vmem:[#allocation8 + $0x4e8] sm:$0xff]
        %v752 = vld [vmem:[#allocation8 + $0x4f0] sm:$0xff]
        %v753 = vld [vmem:[#allocation8 + $0x4f8] sm:$0xff]
        %v754 = vld [vmem:[#allocation8 + $0x500] sm:$0xff]
        %v755 = vld [vmem:[#allocation8 + $0x508] sm:$0xff]
        %v756 = vld [vmem:[#allocation8 + $0x510] sm:$0xff]
        %v757 = vld [vmem:[#allocation8 + $0x518] sm:$0xff]
        %v758 = vld [vmem:[#allocation8 + $0x520] sm:$0xff]
        %v759 = vld [vmem:[#allocation8 + $0x528] sm:$0xff]
        %v760 = vld [vmem:[#allocation8 + $0x530] sm:$0xff]
        %v761 = vld [vmem:[#allocation8 + $0x538] sm:$0xff]
        %v762 = vld [vmem:[#allocation8 + $0x540] sm:$0xff]
        %v763 = vld [vmem:[#allocation8 + $0x548] sm:$0xff]
        %v764 = vld [vmem:[#allocation8 + $0x550] sm:$0xff]
        %v765 = vld [vmem:[#allocation8 + $0x558] sm:$0xff]
        %v766 = vld [vmem:[#allocation8 + $0x560] sm:$0xff]
        %v767 = vld [vmem:[#allocation8 + $0x568] sm:$0xff]
        %v768 = vld [vmem:[#allocation8 + $0x570] sm:$0xff]
        %v769 = vld [vmem:[#allocation8 + $0x578] sm:$0xff]
        %v770 = vld [vmem:[#allocation8 + $0x580] sm:$0xff]
        %v771 = vld [vmem:[#allocation8 + $0x588] sm:$0xff]
        %v772 = vld [vmem:[#allocation8 + $0x590] sm:$0xff]
        %v773 = vld [vmem:[#allocation8 + $0x598] sm:$0xff]
        %v774 = vld [vmem:[#allocation8 + $0x5a0] sm:$0xff]
        %v775 = vld [vmem:[#allocation8 + $0x5a8] sm:$0xff]
        %v776 = vld [vmem:[#allocation8 + $0x5b0] sm:$0xff]
        %v777 = vld [vmem:[#allocation8 + $0x5b8] sm:$0xff]
        %v778 = vld [vmem:[#allocation8 + $0x5c0] sm:$0xff]
        %v779 = vld [vmem:[#allocation8 + $0x5c8] sm:$0xff]
        %v780 = vld [vmem:[#allocation8 + $0x5d0] sm:$0xff]
        %v781 = vld [vmem:[#allocation8 + $0x5d8] sm:$0xff]
        %v782 = vld [vmem:[#allocation8 + $0x5e0] sm:$0xff]
        %v783 = vld [vmem:[#allocation8 + $0x5e8] sm:$0xff]
        %v784 = vld [vmem:[#allocation8 + $0x5f0] sm:$0xff]
        %v785 = vld [vmem:[#allocation8 + $0x5f8] sm:$0xff]
        %v786 = vld [vmem:[#allocation8 + $0x600] sm:$0xff]
        %v787 = vld [vmem:[#allocation8 + $0x608] sm:$0xff]
        %v788 = vld [vmem:[#allocation8 + $0x610] sm:$0xff]
        %v789 = vld [vmem:[#allocation8 + $0x618] sm:$0xff]
        %v790 = vld [vmem:[#allocation8 + $0x620] sm:$0xff]
        %v791 = vld [vmem:[#allocation8 + $0x628] sm:$0xff]
        %v792 = vld [vmem:[#allocation8 + $0x630] sm:$0xff]
        %v793 = vld [vmem:[#allocation8 + $0x638] sm:$0xff]
        %v794 = vld [vmem:[#allocation8 + $0x640] sm:$0xff]
        %v795 = vld [vmem:[#allocation8 + $0x648] sm:$0xff]
        %v796 = vld [vmem:[#allocation8 + $0x650] sm:$0xff]
        %v797 = vld [vmem:[#allocation8 + $0x658] sm:$0xff]
        %v798 = vld [vmem:[#allocation8 + $0x660] sm:$0xff]
        %v799 = vld [vmem:[#allocation8 + $0x668] sm:$0xff]
        %v800 = vld [vmem:[#allocation8 + $0x670] sm:$0xff]
        %v801 = vld [vmem:[#allocation8 + $0x678] sm:$0xff]
        %v802 = vld [vmem:[#allocation8 + $0x680] sm:$0xff]
        %v803 = vld [vmem:[#allocation8 + $0x688] sm:$0xff]
        %v804 = vld [vmem:[#allocation8 + $0x690] sm:$0xff]
        %v805 = vld [vmem:[#allocation8 + $0x698] sm:$0xff]
        %v806 = vld [vmem:[#allocation8 + $0x6a0] sm:$0xff]
        %v807 = vld [vmem:[#allocation8 + $0x6a8] sm:$0xff]
        %v808 = vld [vmem:[#allocation8 + $0x6b0] sm:$0xff]
        %v809 = vld [vmem:[#allocation8 + $0x6b8] sm:$0xff]
        %v810 = vld [vmem:[#allocation8 + $0x6c0] sm:$0xff]
        %v811 = vld [vmem:[#allocation8 + $0x6c8] sm:$0xff]
        %v812 = vld [vmem:[#allocation8 + $0x6d0] sm:$0xff]
        %v813 = vld [vmem:[#allocation8 + $0x6d8] sm:$0xff]
        %v814 = vld [vmem:[#allocation8 + $0x6e0] sm:$0xff]
        %v815 = vld [vmem:[#allocation8 + $0x6e8] sm:$0xff]
        %v816 = vld [vmem:[#allocation8 + $0x6f0] sm:$0xff]
        %v817 = vld [vmem:[#allocation8 + $0x6f8] sm:$0xff]
        %v818 = vld [vmem:[#allocation8 + $0x700] sm:$0xff]
        %v819 = vld [vmem:[#allocation8 + $0x708] sm:$0xff]
        %v820 = vld [vmem:[#allocation8 + $0x710] sm:$0xff]
        %v821 = vld [vmem:[#allocation8 + $0x718] sm:$0xff]
        %v822 = vld [vmem:[#allocation8 + $0x720] sm:$0xff]
        %v823 = vld [vmem:[#allocation8 + $0x728] sm:$0xff]
        %v824 = vld [vmem:[#allocation8 + $0x730] sm:$0xff]
        %v825 = vld [vmem:[#allocation8 + $0x738] sm:$0xff]
        %v826 = vld [vmem:[#allocation8 + $0x740] sm:$0xff]
        %v827 = vld [vmem:[#allocation8 + $0x748] sm:$0xff]
        %v828 = vld [vmem:[#allocation8 + $0x750] sm:$0xff]
        %v829 = vld [vmem:[#allocation8 + $0x758] sm:$0xff]
        %v830 = vld [vmem:[#allocation8 + $0x760] sm:$0xff]
        %v831 = vld [vmem:[#allocation8 + $0x768] sm:$0xff]
        %v832 = vld [vmem:[#allocation8 + $0x770] sm:$0xff]
        %v833 = vld [vmem:[#allocation8 + $0x778] sm:$0xff]
        %v834 = vld [vmem:[#allocation8 + $0x780] sm:$0xff]
        %v835 = vld [vmem:[#allocation8 + $0x788] sm:$0xff]
        %v836 = vld [vmem:[#allocation8 + $0x790] sm:$0xff]
        %v837 = vld [vmem:[#allocation8 + $0x798] sm:$0xff]
        %v838 = vld [vmem:[#allocation8 + $0x7a0] sm:$0xff]
        %v839 = vld [vmem:[#allocation8 + $0x7a8] sm:$0xff]
        %v840 = vld [vmem:[#allocation8 + $0x7b0] sm:$0xff]
        %v841 = vld [vmem:[#allocation8 + $0x7b8] sm:$0xff]
        %v842 = vld [vmem:[#allocation8 + $0x7c0] sm:$0xff]
        %v843 = vld [vmem:[#allocation8 + $0x7c8] sm:$0xff]
        %v844 = vld [vmem:[#allocation8 + $0x7d0] sm:$0xff]
        %v845 = vld [vmem:[#allocation8 + $0x7d8] sm:$0xff]
        %v846 = vld [vmem:[#allocation8 + $0x7e0] sm:$0xff]
        %v847 = vld [vmem:[#allocation8 + $0x7e8] sm:$0xff]
        %v848 = vld [vmem:[#allocation8 + $0x7f0] sm:$0xff]
        %v849 = vld [vmem:[#allocation8 + $0x7f8] sm:$0xff]
        %v850 = vld [vmem:[#allocation8 + $0x800] sm:$0xff]
        %v851 = vld [vmem:[#allocation8 + $0x808] sm:$0xff]
        %v852 = vld [vmem:[#allocation8 + $0x810] sm:$0xff]
        %v853 = vld [vmem:[#allocation8 + $0x818] sm:$0xff]
        %v854 = vld [vmem:[#allocation8 + $0x820] sm:$0xff]
        %v855 = vld [vmem:[#allocation8 + $0x828] sm:$0xff]
        %v856 = vld [vmem:[#allocation8 + $0x830] sm:$0xff]
        %v857 = vld [vmem:[#allocation8 + $0x838] sm:$0xff]
        %v858 = vld [vmem:[#allocation8 + $0x840] sm:$0xff]
        %v859 = vld [vmem:[#allocation8 + $0x848] sm:$0xff]
        %v860 = vld [vmem:[#allocation8 + $0x850] sm:$0xff]
        %v861 = vld [vmem:[#allocation8 + $0x858] sm:$0xff]
        %v862 = vld [vmem:[#allocation8 + $0x860] sm:$0xff]
        %v863 = vld [vmem:[#allocation8 + $0x868] sm:$0xff]
        %v864 = vld [vmem:[#allocation8 + $0x870] sm:$0xff]
        %v865 = vld [vmem:[#allocation8 + $0x878] sm:$0xff]
        %v866 = vld [vmem:[#allocation8 + $0x880] sm:$0xff]
        %v867 = vld [vmem:[#allocation8 + $0x888] sm:$0xff]
        %v868 = vld [vmem:[#allocation8 + $0x890] sm:$0xff]
        %v869 = vld [vmem:[#allocation8 + $0x898] sm:$0xff]
        %v870 = vld [vmem:[#allocation8 + $0x8a0] sm:$0xff]
        %v871 = vld [vmem:[#allocation8 + $0x8a8] sm:$0xff]
        %v872 = vld [vmem:[#allocation8 + $0x8b0] sm:$0xff]
        %v873 = vld [vmem:[#allocation8 + $0x8b8] sm:$0xff]
        %v874 = vld [vmem:[#allocation8 + $0x8c0] sm:$0xff]
        %v875 = vld [vmem:[#allocation8 + $0x8c8] sm:$0xff]
        %v876 = vld [vmem:[#allocation8 + $0x8d0] sm:$0xff]
        %v877 = vld [vmem:[#allocation8 + $0x8d8] sm:$0xff]
        %v878 = vld [vmem:[#allocation8 + $0x8e0] sm:$0xff]
        %v879 = vld [vmem:[#allocation8 + $0x8e8] sm:$0xff]
        %v880 = vld [vmem:[#allocation8 + $0x8f0] sm:$0xff]
        %v881 = vld [vmem:[#allocation8 + $0x8f8] sm:$0xff]
        %v882 = vld [vmem:[#allocation8 + $0x900] sm:$0xff]
        %v883 = vld [vmem:[#allocation8 + $0x908] sm:$0xff]
        %v884 = vld [vmem:[#allocation8 + $0x910] sm:$0xff]
        %v885 = vld [vmem:[#allocation8 + $0x918] sm:$0xff]
        %v886 = vld [vmem:[#allocation8 + $0x920] sm:$0xff]
        %v887 = vld [vmem:[#allocation8 + $0x928] sm:$0xff]
        %v888 = vld [vmem:[#allocation8 + $0x930] sm:$0xff]
        %v889 = vld [vmem:[#allocation8 + $0x938] sm:$0xff]
        %v890 = vld [vmem:[#allocation8 + $0x940] sm:$0xff]
        %v891 = vld [vmem:[#allocation8 + $0x948] sm:$0xff]
        %v892 = vld [vmem:[#allocation8 + $0x950] sm:$0xff]
        %v893 = vld [vmem:[#allocation8 + $0x958] sm:$0xff]
        %v894 = vld [vmem:[#allocation8 + $0x960] sm:$0xff]
        %v895 = vld [vmem:[#allocation8 + $0x968] sm:$0xff]
        %v896 = vld [vmem:[#allocation8 + $0x970] sm:$0xff]
        %v897 = vld [vmem:[#allocation8 + $0x978] sm:$0xff]
        %v898 = vld [vmem:[#allocation8 + $0x980] sm:$0xff]
        %v899 = vld [vmem:[#allocation8 + $0x988] sm:$0xff]
        %v900 = vld [vmem:[#allocation8 + $0x990] sm:$0xff]
        %v901 = vld [vmem:[#allocation8 + $0x998] sm:$0xff]
        %v902 = vld [vmem:[#allocation8 + $0x9a0] sm:$0xff]
        %v903 = vld [vmem:[#allocation8 + $0x9a8] sm:$0xff]
        %v904 = vld [vmem:[#allocation8 + $0x9b0] sm:$0xff]
        %v905 = vld [vmem:[#allocation8 + $0x9b8] sm:$0xff]
        %v906 = vld [vmem:[#allocation8 + $0x9c0] sm:$0xff]
        %v907 = vld [vmem:[#allocation8 + $0x9c8] sm:$0xff]
        %v908 = vld [vmem:[#allocation8 + $0x9d0] sm:$0xff]
        %v909 = vld [vmem:[#allocation8 + $0x9d8] sm:$0xff]
        %v910 = vld [vmem:[#allocation8 + $0x9e0] sm:$0xff]
        %v911 = vld [vmem:[#allocation8 + $0x9e8] sm:$0xff]
        %v912 = vld [vmem:[#allocation8 + $0x9f0] sm:$0xff]
        %v913 = vld [vmem:[#allocation8 + $0x9f8] sm:$0xff]
        %v914 = vld [vmem:[#allocation8 + $0xa00] sm:$0xff]
        %v915 = vld [vmem:[#allocation8 + $0xa08] sm:$0xff]
        %v916 = vld [vmem:[#allocation8 + $0xa10] sm:$0xff]
        %v917 = vld [vmem:[#allocation8 + $0xa18] sm:$0xff]
        %v918 = vld [vmem:[#allocation8 + $0xa20] sm:$0xff]
        %v919 = vld [vmem:[#allocation8 + $0xa28] sm:$0xff]
        %v920 = vld [vmem:[#allocation8 + $0xa30] sm:$0xff]
        %v921 = vld [vmem:[#allocation8 + $0xa38] sm:$0xff]
        %v922 = vld [vmem:[#allocation8 + $0xa40] sm:$0xff]
        %v923 = vld [vmem:[#allocation8 + $0xa48] sm:$0xff]
        %v924 = vld [vmem:[#allocation8 + $0xa50] sm:$0xff]
        %v925 = vld [vmem:[#allocation8 + $0xa58] sm:$0xff]
        %v926 = vld [vmem:[#allocation8 + $0xa60] sm:$0xff]
        %v927 = vld [vmem:[#allocation8 + $0xa68] sm:$0xff]
        %v928 = vld [vmem:[#allocation8 + $0xa70] sm:$0xff]
        %v929 = vld [vmem:[#allocation8 + $0xa78] sm:$0xff]
        %v930 = vld [vmem:[#allocation8 + $0xa80] sm:$0xff]
        %v931 = vld [vmem:[#allocation8 + $0xa88] sm:$0xff]
        %v932 = vld [vmem:[#allocation8 + $0xa90] sm:$0xff]
        %v933 = vld [vmem:[#allocation8 + $0xa98] sm:$0xff]
        %v934 = vld [vmem:[#allocation8 + $0xaa0] sm:$0xff]
        %v935 = vld [vmem:[#allocation8 + $0xaa8] sm:$0xff]
        %v936 = vld [vmem:[#allocation8 + $0xab0] sm:$0xff]
        %v937 = vld [vmem:[#allocation8 + $0xab8] sm:$0xff]
        %v938 = vld [vmem:[#allocation8 + $0xac0] sm:$0xff]
        %v939 = vld [vmem:[#allocation8 + $0xac8] sm:$0xff]
        %v940 = vld [vmem:[#allocation8 + $0xad0] sm:$0xff]
        %v941 = vld [vmem:[#allocation8 + $0xad8] sm:$0xff]
        %v942 = vld [vmem:[#allocation8 + $0xae0] sm:$0xff]
        %v943 = vld [vmem:[#allocation8 + $0xae8] sm:$0xff]
        %v944 = vld [vmem:[#allocation8 + $0xaf0] sm:$0xff]
        %v945 = vld [vmem:[#allocation8 + $0xaf8] sm:$0xff]
        %v946 = vld [vmem:[#allocation8 + $0xb00] sm:$0xff]
        %v947 = vld [vmem:[#allocation8 + $0xb08] sm:$0xff]
        %v948 = vld [vmem:[#allocation8 + $0xb10] sm:$0xff]
        %v949 = vld [vmem:[#allocation8 + $0xb18] sm:$0xff]
        %v950 = vld [vmem:[#allocation8 + $0xb20] sm:$0xff]
        %v951 = vld [vmem:[#allocation8 + $0xb28] sm:$0xff]
        %v952 = vld [vmem:[#allocation8 + $0xb30] sm:$0xff]
        %v953 = vld [vmem:[#allocation8 + $0xb38] sm:$0xff]
        %v954 = vld [vmem:[#allocation8 + $0xb40] sm:$0xff]
        %v955 = vld [vmem:[#allocation8 + $0xb48] sm:$0xff]
        %v956 = vld [vmem:[#allocation8 + $0xb50] sm:$0xff]
        %v957 = vld [vmem:[#allocation8 + $0xb58] sm:$0xff]
        %v958 = vld [vmem:[#allocation8 + $0xb60] sm:$0xff]
        %v959 = vld [vmem:[#allocation8 + $0xb68] sm:$0xff]
        %v960 = vld [vmem:[#allocation8 + $0xb70] sm:$0xff]
        %v961 = vld [vmem:[#allocation8 + $0xb78] sm:$0xff]
        %v962 = vld [vmem:[#allocation8 + $0xb80] sm:$0xff]
        %v963 = vld [vmem:[#allocation8 + $0xb88] sm:$0xff]
        %v964 = vld [vmem:[#allocation8 + $0xb90] sm:$0xff]
        %v965 = vld [vmem:[#allocation8 + $0xb98] sm:$0xff]
        %v966 = vld [vmem:[#allocation8 + $0xba0] sm:$0xff]
        %v967 = vld [vmem:[#allocation8 + $0xba8] sm:$0xff]
        %v968 = vld [vmem:[#allocation8 + $0xbb0] sm:$0xff]
        %v969 = vld [vmem:[#allocation8 + $0xbb8] sm:$0xff]
        %v970 = vld [vmem:[#allocation8 + $0xbc0] sm:$0xff]
        %v971 = vld [vmem:[#allocation8 + $0xbc8] sm:$0xff]
        %v972 = vld [vmem:[#allocation8 + $0xbd0] sm:$0xff]
        %v973 = vld [vmem:[#allocation8 + $0xbd8] sm:$0xff]
        %v974 = vld [vmem:[#allocation8 + $0xbe0] sm:$0xff]
        %v975 = vld [vmem:[#allocation8 + $0xbe8] sm:$0xff]
        %v976 = vld [vmem:[#allocation8 + $0xbf0] sm:$0xff]
        %v977 = vld [vmem:[#allocation8 + $0xbf8] sm:$0xff]
        %v978 = vld [vmem:[#allocation8 + $0xc00] sm:$0xff]
        %v979 = vld [vmem:[#allocation8 + $0xc08] sm:$0xff]
        %v980 = vld [vmem:[#allocation8 + $0xc10] sm:$0xff]
        %v981 = vld [vmem:[#allocation8 + $0xc18] sm:$0xff]
        %v982 = vld [vmem:[#allocation8 + $0xc20] sm:$0xff]
        %v983 = vld [vmem:[#allocation8 + $0xc28] sm:$0xff]
        %v984 = vld [vmem:[#allocation8 + $0xc30] sm:$0xff]
        %v985 = vld [vmem:[#allocation8 + $0xc38] sm:$0xff]
        %v986 = vld [vmem:[#allocation8 + $0xc40] sm:$0xff]
        %v987 = vld [vmem:[#allocation8 + $0xc48] sm:$0xff]
        %v988 = vld [vmem:[#allocation8 + $0xc50] sm:$0xff]
        %v989 = vld [vmem:[#allocation8 + $0xc58] sm:$0xff]
        %v990 = vld [vmem:[#allocation8 + $0xc60] sm:$0xff]
        %v991 = vld [vmem:[#allocation8 + $0xc68] sm:$0xff]
        %v992 = vld [vmem:[#allocation8 + $0xc70] sm:$0xff]
        %v993 = vld [vmem:[#allocation8 + $0xc78] sm:$0xff]
        %v994 = vld [vmem:[#allocation8 + $0xc80] sm:$0xff]
        %v995 = vld [vmem:[#allocation8 + $0xc88] sm:$0xff]
        %v996 = vld [vmem:[#allocation8 + $0xc90] sm:$0xff]
        %v997 = vld [vmem:[#allocation8 + $0xc98] sm:$0xff]
        %v998 = vld [vmem:[#allocation8 + $0xca0] sm:$0xff]
        %v999 = vld [vmem:[#allocation8 + $0xca8] sm:$0xff]
        %v1000 = vld [vmem:[#allocation8 + $0xcb0] sm:$0xff]
        %v1001 = vld [vmem:[#allocation8 + $0xcb8] sm:$0xff]
        %v1002 = vld [vmem:[#allocation8 + $0xcc0] sm:$0xff]
        %v1003 = vld [vmem:[#allocation8 + $0xcc8] sm:$0xff]
        %v1004 = vld [vmem:[#allocation8 + $0xcd0] sm:$0xff]
        %v1005 = vld [vmem:[#allocation8 + $0xcd8] sm:$0xff]
        %v1006 = vld [vmem:[#allocation8 + $0xce0] sm:$0xff]
        %v1007 = vld [vmem:[#allocation8 + $0xce8] sm:$0xff]
        %v1008 = vld [vmem:[#allocation8 + $0xcf0] sm:$0xff]
        %v1009 = vld [vmem:[#allocation8 + $0xcf8] sm:$0xff]
        %v1010 = vld [vmem:[#allocation8 + $0xd00] sm:$0xff]
        %v1011 = vld [vmem:[#allocation8 + $0xd08] sm:$0xff]
        %v1012 = vld [vmem:[#allocation8 + $0xd10] sm:$0xff]
        %v1013 = vld [vmem:[#allocation8 + $0xd18] sm:$0xff]
        %v1014 = vld [vmem:[#allocation8 + $0xd20] sm:$0xff]
        %v1015 = vld [vmem:[#allocation8 + $0xd28] sm:$0xff]
        %v1016 = vld [vmem:[#allocation8 + $0xd30] sm:$0xff]
        %v1017 = vld [vmem:[#allocation8 + $0xd38] sm:$0xff]
        %v1018 = vld [vmem:[#allocation8 + $0xd40] sm:$0xff]
        %v1019 = vld [vmem:[#allocation8 + $0xd48] sm:$0xff]
        %v1020 = vld [vmem:[#allocation8 + $0xd50] sm:$0xff]
        %v1021 = vld [vmem:[#allocation8 + $0xd58] sm:$0xff]
        %v1022 = vld [vmem:[#allocation8 + $0xd60] sm:$0xff]
        %v1023 = vld [vmem:[#allocation8 + $0xd68] sm:$0xff]
        %v1024 = vld [vmem:[#allocation8 + $0xd70] sm:$0xff]
        %v1025 = vld [vmem:[#allocation8 + $0xd78] sm:$0xff]
        %v1026 = vld [vmem:[#allocation8 + $0xd80] sm:$0xff]
        %v1027 = vld [vmem:[#allocation8 + $0xd88] sm:$0xff]
        %v1028 = vld [vmem:[#allocation8 + $0xd90] sm:$0xff]
        %v1029 = vld [vmem:[#allocation8 + $0xd98] sm:$0xff]
        %v1030 = vld [vmem:[#allocation8 + $0xda0] sm:$0xff]
        %v1031 = vld [vmem:[#allocation8 + $0xda8] sm:$0xff]
        %v1032 = vld [vmem:[#allocation8 + $0xdb0] sm:$0xff]
        %v1033 = vld [vmem:[#allocation8 + $0xdb8] sm:$0xff]
        %v1034 = vld [vmem:[#allocation8 + $0xdc0] sm:$0xff]
        %v1035 = vld [vmem:[#allocation8 + $0xdc8] sm:$0xff]
        %v1036 = vld [vmem:[#allocation8 + $0xdd0] sm:$0xff]
        %v1037 = vld [vmem:[#allocation8 + $0xdd8] sm:$0xff]
        %v1038 = vld [vmem:[#allocation8 + $0xde0] sm:$0xff]
        %v1039 = vld [vmem:[#allocation8 + $0xde8] sm:$0xff]
        %v1040 = vld [vmem:[#allocation8 + $0xdf0] sm:$0xff]
        %v1041 = vld [vmem:[#allocation8 + $0xdf8] sm:$0xff]
        %v1042 = vld [vmem:[#allocation8 + $0xe00] sm:$0xff]
        %v1043 = vld [vmem:[#allocation8 + $0xe08] sm:$0xff]
        %v1044 = vld [vmem:[#allocation8 + $0xe10] sm:$0xff]
        %v1045 = vld [vmem:[#allocation8 + $0xe18] sm:$0xff]
        %v1046 = vld [vmem:[#allocation8 + $0xe20] sm:$0xff]
        %v1047 = vld [vmem:[#allocation8 + $0xe28] sm:$0xff]
        %v1048 = vld [vmem:[#allocation8 + $0xe30] sm:$0xff]
        %v1049 = vld [vmem:[#allocation8 + $0xe38] sm:$0xff]
        %v1050 = vld [vmem:[#allocation8 + $0xe40] sm:$0xff]
        %v1051 = vld [vmem:[#allocation8 + $0xe48] sm:$0xff]
        %v1052 = vld [vmem:[#allocation8 + $0xe50] sm:$0xff]
        %v1053 = vld [vmem:[#allocation8 + $0xe58] sm:$0xff]
        %v1054 = vld [vmem:[#allocation8 + $0xe60] sm:$0xff]
        %v1055 = vld [vmem:[#allocation8 + $0xe68] sm:$0xff]
        %v1056 = vld [vmem:[#allocation8 + $0xe70] sm:$0xff]
        %v1057 = vld [vmem:[#allocation8 + $0xe78] sm:$0xff]
        %v1058 = vld [vmem:[#allocation8 + $0xe80] sm:$0xff]
        %v1059 = vld [vmem:[#allocation8 + $0xe88] sm:$0xff]
        %v1060 = vld [vmem:[#allocation8 + $0xe90] sm:$0xff]
        %v1061 = vld [vmem:[#allocation8 + $0xe98] sm:$0xff]
        %v1062 = vld [vmem:[#allocation8 + $0xea0] sm:$0xff]
        %v1063 = vld [vmem:[#allocation8 + $0xea8] sm:$0xff]
        %v1064 = vld [vmem:[#allocation8 + $0xeb0] sm:$0xff]
        %v1065 = vld [vmem:[#allocation8 + $0xeb8] sm:$0xff]
        %v1066 = vld [vmem:[#allocation8 + $0xec0] sm:$0xff]
        %v1067 = vld [vmem:[#allocation8 + $0xec8] sm:$0xff]
        %v1068 = vld [vmem:[#allocation8 + $0xed0] sm:$0xff]
        %v1069 = vld [vmem:[#allocation8 + $0xed8] sm:$0xff]
        %v1070 = vld [vmem:[#allocation8 + $0xee0] sm:$0xff]
        %v1071 = vld [vmem:[#allocation8 + $0xee8] sm:$0xff]
        %v1072 = vld [vmem:[#allocation8 + $0xef0] sm:$0xff]
        %v1073 = vld [vmem:[#allocation8 + $0xef8] sm:$0xff]
        %v1074 = vld [vmem:[#allocation8 + $0xf00] sm:$0xff]
        %v1075 = vld [vmem:[#allocation8 + $0xf08] sm:$0xff]
        %v1076 = vld [vmem:[#allocation8 + $0xf10] sm:$0xff]
        %v1077 = vld [vmem:[#allocation8 + $0xf18] sm:$0xff]
        %v1078 = vld [vmem:[#allocation8 + $0xf20] sm:$0xff]
        %v1079 = vld [vmem:[#allocation8 + $0xf28] sm:$0xff]
        %v1080 = vld [vmem:[#allocation8 + $0xf30] sm:$0xff]
        %v1081 = vld [vmem:[#allocation8 + $0xf38] sm:$0xff]
        %v1082 = vld [vmem:[#allocation8 + $0xf40] sm:$0xff]
        %v1083 = vld [vmem:[#allocation8 + $0xf48] sm:$0xff]
        %v1084 = vld [vmem:[#allocation8 + $0xf50] sm:$0xff]
        %v1085 = vld [vmem:[#allocation8 + $0xf58] sm:$0xff]
        %v1086 = vld [vmem:[#allocation8 + $0xf60] sm:$0xff]
        %v1087 = vld [vmem:[#allocation8 + $0xf68] sm:$0xff]
        %v1088 = vld [vmem:[#allocation8 + $0xf70] sm:$0xff]
        %v1089 = vld [vmem:[#allocation8 + $0xf78] sm:$0xff]
        %v1090 = vld [vmem:[#allocation8 + $0xf80] sm:$0xff]
        %v1091 = vld [vmem:[#allocation8 + $0xf88] sm:$0xff]
        %v1092 = vld [vmem:[#allocation8 + $0xf90] sm:$0xff]
        %v1093 = vld [vmem:[#allocation8 + $0xf98] sm:$0xff]
        %v1094 = vld [vmem:[#allocation8 + $0xfa0] sm:$0xff]
        %v1095 = vld [vmem:[#allocation8 + $0xfa8] sm:$0xff]
        %v1096 = vld [vmem:[#allocation8 + $0xfb0] sm:$0xff]
        %v1097 = vld [vmem:[#allocation8 + $0xfb8] sm:$0xff]
        %v1098 = vld [vmem:[#allocation8 + $0xfc0] sm:$0xff]
        %v1099 = vld [vmem:[#allocation8 + $0xfc8] sm:$0xff]
        %v1100 = vld [vmem:[#allocation8 + $0xfd0] sm:$0xff]
        %v1101 = vld [vmem:[#allocation8 + $0xfd8] sm:$0xff]
        %v1102 = vld [vmem:[#allocation8 + $0xfe0] sm:$0xff]
        %v1103 = vld [vmem:[#allocation8 + $0xfe8] sm:$0xff]
        %v1104 = vld [vmem:[#allocation8 + $0xff0] sm:$0xff]
        %v1105 = vld [vmem:[#allocation8 + $0xff8] sm:$0xff]
        %v1106 = vld [vmem:[#allocation8 + $0x1000] sm:$0xff]
        %v1107 = vld [vmem:[#allocation8 + $0x1008] sm:$0xff]
        %v1108 = vld [vmem:[#allocation8 + $0x1010] sm:$0xff]
        %v1109 = vld [vmem:[#allocation8 + $0x1018] sm:$0xff]
        %v1110 = vld [vmem:[#allocation8 + $0x1020] sm:$0xff]
        %v1111 = vld [vmem:[#allocation8 + $0x1028] sm:$0xff]
        %v1112 = vld [vmem:[#allocation8 + $0x1030] sm:$0xff]
        %v1113 = vld [vmem:[#allocation8 + $0x1038] sm:$0xff]
        %v1114 = vld [vmem:[#allocation8 + $0x1040] sm:$0xff]
        %v1115 = vld [vmem:[#allocation8 + $0x1048] sm:$0xff]
        %v1116 = vld [vmem:[#allocation8 + $0x1050] sm:$0xff]
        %v1117 = vld [vmem:[#allocation8 + $0x1058] sm:$0xff]
        %v1118 = vld [vmem:[#allocation8 + $0x1060] sm:$0xff]
        %v1119 = vld [vmem:[#allocation8 + $0x1068] sm:$0xff]
        %v1120 = vld [vmem:[#allocation8 + $0x1070] sm:$0xff]
        %v1121 = vld [vmem:[#allocation8 + $0x1078] sm:$0xff]
        %v1122 = vld [vmem:[#allocation8 + $0x1080] sm:$0xff]
        %v1123 = vld [vmem:[#allocation8 + $0x1088] sm:$0xff]
        %v1124 = vld [vmem:[#allocation8 + $0x1090] sm:$0xff]
        %v1125 = vld [vmem:[#allocation8 + $0x1098] sm:$0xff]
        %v1126 = vld [vmem:[#allocation8 + $0x10a0] sm:$0xff]
        %v1127 = vld [vmem:[#allocation8 + $0x10a8] sm:$0xff]
        %v1128 = vld [vmem:[#allocation8 + $0x10b0] sm:$0xff]
        %v1129 = vld [vmem:[#allocation8 + $0x10b8] sm:$0xff]
        %v1130 = vld [vmem:[#allocation8 + $0x10c0] sm:$0xff]
        %v1131 = vld [vmem:[#allocation8 + $0x10c8] sm:$0xff]
        %v1132 = vld [vmem:[#allocation8 + $0x10d0] sm:$0xff]
        %v1133 = vld [vmem:[#allocation8 + $0x10d8] sm:$0xff]
        %v1134 = vld [vmem:[#allocation8 + $0x10e0] sm:$0xff]
        %v1135 = vld [vmem:[#allocation8 + $0x10e8] sm:$0xff]
        %v1136 = vld [vmem:[#allocation8 + $0x10f0] sm:$0xff]
        %v1137 = vld [vmem:[#allocation8 + $0x10f8] sm:$0xff]
        %v1138 = vld [vmem:[#allocation8 + $0x1100] sm:$0xff]
        %v1139 = vld [vmem:[#allocation8 + $0x1108] sm:$0xff]
        %v1140 = vld [vmem:[#allocation8 + $0x1110] sm:$0xff]
        %v1141 = vld [vmem:[#allocation8 + $0x1118] sm:$0xff]
        %v1142 = vld [vmem:[#allocation8 + $0x1120] sm:$0xff]
        %v1143 = vld [vmem:[#allocation8 + $0x1128] sm:$0xff]
        %v1144 = vld [vmem:[#allocation8 + $0x1130] sm:$0xff]
        %v1145 = vld [vmem:[#allocation8 + $0x1138] sm:$0xff]
        %v1146 = vld [vmem:[#allocation8 + $0x1140] sm:$0xff]
        %v1147 = vld [vmem:[#allocation8 + $0x1148] sm:$0xff]
        %v1148 = vld [vmem:[#allocation8 + $0x1150] sm:$0xff]
        %v1149 = vld [vmem:[#allocation8 + $0x1158] sm:$0xff]
        %v1150 = vld [vmem:[#allocation8 + $0x1160] sm:$0xff]
        %v1151 = vld [vmem:[#allocation8 + $0x1168] sm:$0xff]
        %v1152 = vld [vmem:[#allocation8 + $0x1170] sm:$0xff]
        %v1153 = vld [vmem:[#allocation8 + $0x1178] sm:$0xff]
        %v1154 = vld [vmem:[#allocation8 + $0x1180] sm:$0xff]
        %v1155 = vld [vmem:[#allocation8 + $0x1188] sm:$0xff]
        %v1156 = vld [vmem:[#allocation8 + $0x1190] sm:$0xff]
        %v1157 = vld [vmem:[#allocation8 + $0x1198] sm:$0xff]
        %v1158 = vld [vmem:[#allocation8 + $0x11a0] sm:$0xff]
        %v1159 = vld [vmem:[#allocation8 + $0x11a8] sm:$0xff]
        %v1160 = vld [vmem:[#allocation8 + $0x11b0] sm:$0xff]
        %v1161 = vld [vmem:[#allocation8 + $0x11b8] sm:$0xff]
        %v1162 = vld [vmem:[#allocation8 + $0x11c0] sm:$0xff]
        %v1163 = vld [vmem:[#allocation8 + $0x11c8] sm:$0xff]
        %v1164 = vld [vmem:[#allocation8 + $0x11d0] sm:$0xff]
        %v1165 = vld [vmem:[#allocation8 + $0x11d8] sm:$0xff]
        %v1166 = vld [vmem:[#allocation8 + $0x11e0] sm:$0xff]
        %v1167 = vld [vmem:[#allocation8 + $0x11e8] sm:$0xff]
        %v1168 = vld [vmem:[#allocation8 + $0x11f0] sm:$0xff]
        %v1169 = vld [vmem:[#allocation8 + $0x11f8] sm:$0xff]
        %v1170 = vld [vmem:[#allocation8 + $0x1200] sm:$0xff]
        %v1171 = vld [vmem:[#allocation8 + $0x1208] sm:$0xff]
        %v1172 = vld [vmem:[#allocation8 + $0x1210] sm:$0xff]
        %v1173 = vld [vmem:[#allocation8 + $0x1218] sm:$0xff]
        %v1174 = vld [vmem:[#allocation8 + $0x1220] sm:$0xff]
        %v1175 = vld [vmem:[#allocation8 + $0x1228] sm:$0xff]
        %v1176 = vld [vmem:[#allocation8 + $0x1230] sm:$0xff]
        %v1177 = vld [vmem:[#allocation8 + $0x1238] sm:$0xff]
        %v1178 = vld [vmem:[#allocation8 + $0x1240] sm:$0xff]
        %v1179 = vld [vmem:[#allocation8 + $0x1248] sm:$0xff]
        %v1180 = vld [vmem:[#allocation8 + $0x1250] sm:$0xff]
        %v1181 = vld [vmem:[#allocation8 + $0x1258] sm:$0xff]
        %v1182 = vld [vmem:[#allocation8 + $0x1260] sm:$0xff]
        %v1183 = vld [vmem:[#allocation8 + $0x1268] sm:$0xff]
        %v1184 = vld [vmem:[#allocation8 + $0x1270] sm:$0xff]
        %v1185 = vld [vmem:[#allocation8 + $0x1278] sm:$0xff]
        %v1186 = vld [vmem:[#allocation8 + $0x1280] sm:$0xff]
        %v1187 = vld [vmem:[#allocation8 + $0x1288] sm:$0xff]
        %v1188 = vld [vmem:[#allocation8 + $0x1290] sm:$0xff]
        %v1189 = vld [vmem:[#allocation8 + $0x1298] sm:$0xff]
        %v1190 = vld [vmem:[#allocation8 + $0x12a0] sm:$0xff]
        %v1191 = vld [vmem:[#allocation8 + $0x12a8] sm:$0xff]
        %v1192 = vld [vmem:[#allocation8 + $0x12b0] sm:$0xff]
        %v1193 = vld [vmem:[#allocation8 + $0x12b8] sm:$0xff]
        %v1194 = vld [vmem:[#allocation8 + $0x12c0] sm:$0xff]
        %v1195 = vld [vmem:[#allocation8 + $0x12c8] sm:$0xff]
        %v1196 = vld [vmem:[#allocation8 + $0x12d0] sm:$0xff]
        %v1197 = vld [vmem:[#allocation8 + $0x12d8] sm:$0xff]
        %v1198 = vld [vmem:[#allocation8 + $0x12e0] sm:$0xff]
        %v1199 = vld [vmem:[#allocation8 + $0x12e8] sm:$0xff]
        %v1200 = vld [vmem:[#allocation8 + $0x12f0] sm:$0xff]
        %v1201 = vld [vmem:[#allocation8 + $0x12f8] sm:$0xff]
        %v1202 = vld [vmem:[#allocation8 + $0x1300] sm:$0xff]
        %v1203 = vld [vmem:[#allocation8 + $0x1308] sm:$0xff]
        %v1204 = vld [vmem:[#allocation8 + $0x1310] sm:$0xff]
        %v1205 = vld [vmem:[#allocation8 + $0x1318] sm:$0xff]
        %v1206 = vld [vmem:[#allocation8 + $0x1320] sm:$0xff]
        %v1207 = vld [vmem:[#allocation8 + $0x1328] sm:$0xff]
        %v1208 = vld [vmem:[#allocation8 + $0x1330] sm:$0xff]
        %v1209 = vld [vmem:[#allocation8 + $0x1338] sm:$0xff]
        %v1210 = vld [vmem:[#allocation8 + $0x1340] sm:$0xff]
        %v1211 = vld [vmem:[#allocation8 + $0x1348] sm:$0xff]
        %v1212 = vld [vmem:[#allocation8 + $0x1350] sm:$0xff]
        %v1213 = vld [vmem:[#allocation8 + $0x1358] sm:$0xff]
        %v1214 = vld [vmem:[#allocation8 + $0x1360] sm:$0xff]
        %v1215 = vld [vmem:[#allocation8 + $0x1368] sm:$0xff]
        %v1216 = vld [vmem:[#allocation8 + $0x1370] sm:$0xff]
        %v1217 = vld [vmem:[#allocation8 + $0x1378] sm:$0xff]
        %v1218 = vld [vmem:[#allocation8 + $0x1380] sm:$0xff]
        %v1219 = vld [vmem:[#allocation8 + $0x1388] sm:$0xff]
        %v1220 = vld [vmem:[#allocation8 + $0x1390] sm:$0xff]
        %v1221 = vld [vmem:[#allocation8 + $0x1398] sm:$0xff]
        %v1222 = vld [vmem:[#allocation8 + $0x13a0] sm:$0xff]
        %v1223 = vld [vmem:[#allocation8 + $0x13a8] sm:$0xff]
        %v1224 = vld [vmem:[#allocation8 + $0x13b0] sm:$0xff]
        %v1225 = vld [vmem:[#allocation8 + $0x13b8] sm:$0xff]
        %v1226 = vld [vmem:[#allocation8 + $0x13c0] sm:$0xff]
        %v1227 = vld [vmem:[#allocation8 + $0x13c8] sm:$0xff]
        %v1228 = vld [vmem:[#allocation8 + $0x13d0] sm:$0xff]
        %v1229 = vld [vmem:[#allocation8 + $0x13d8] sm:$0xff]
        %v1230 = vld [vmem:[#allocation8 + $0x13e0] sm:$0xff]
        %v1231 = vld [vmem:[#allocation8 + $0x13e8] sm:$0xff]
        %v1232 = vld [vmem:[#allocation8 + $0x13f0] sm:$0xff]
        %v1233 = vld [vmem:[#allocation8 + $0x13f8] sm:$0xff]
        %v1234 = vld [vmem:[#allocation8 + $0x1400] sm:$0xff]
        %v1235 = vld [vmem:[#allocation8 + $0x1408] sm:$0xff]
        %v1236 = vld [vmem:[#allocation8 + $0x1410] sm:$0xff]
        %v1237 = vld [vmem:[#allocation8 + $0x1418] sm:$0xff]
        %v1238 = vld [vmem:[#allocation8 + $0x1420] sm:$0xff]
        %v1239 = vld [vmem:[#allocation8 + $0x1428] sm:$0xff]
        %v1240 = vld [vmem:[#allocation8 + $0x1430] sm:$0xff]
        %v1241 = vld [vmem:[#allocation8 + $0x1438] sm:$0xff]
        %v1242 = vld [vmem:[#allocation8 + $0x1440] sm:$0xff]
        %v1243 = vld [vmem:[#allocation8 + $0x1448] sm:$0xff]
        %v1244 = vld [vmem:[#allocation8 + $0x1450] sm:$0xff]
        %v1245 = vld [vmem:[#allocation8 + $0x1458] sm:$0xff]
        %v1246 = vld [vmem:[#allocation8 + $0x1460] sm:$0xff]
        %v1247 = vld [vmem:[#allocation8 + $0x1468] sm:$0xff]
        %v1248 = vld [vmem:[#allocation8 + $0x1470] sm:$0xff]
        %v1249 = vld [vmem:[#allocation8 + $0x1478] sm:$0xff]
        %v1250 = vld [vmem:[#allocation8 + $0x1480] sm:$0xff]
        %v1251 = vld [vmem:[#allocation8 + $0x1488] sm:$0xff]
        %v1252 = vld [vmem:[#allocation8 + $0x1490] sm:$0xff]
        %v1253 = vld [vmem:[#allocation8 + $0x1498] sm:$0xff]
        %v1254 = vld [vmem:[#allocation8 + $0x14a0] sm:$0xff]
        %v1255 = vld [vmem:[#allocation8 + $0x14a8] sm:$0xff]
        %v1256 = vld [vmem:[#allocation8 + $0x14b0] sm:$0xff]
        %v1257 = vld [vmem:[#allocation8 + $0x14b8] sm:$0xff]
        %v1258 = vld [vmem:[#allocation8 + $0x14c0] sm:$0xff]
        %v1259 = vld [vmem:[#allocation8 + $0x14c8] sm:$0xff]
        %v1260 = vld [vmem:[#allocation8 + $0x14d0] sm:$0xff]
        %v1261 = vld [vmem:[#allocation8 + $0x14d8] sm:$0xff]
        %v1262 = vld [vmem:[#allocation8 + $0x14e0] sm:$0xff]
        %v1263 = vld [vmem:[#allocation8 + $0x14e8] sm:$0xff]
        %v1264 = vld [vmem:[#allocation8 + $0x14f0] sm:$0xff]
        %v1265 = vld [vmem:[#allocation8 + $0x14f8] sm:$0xff]
        %v1266 = vld [vmem:[#allocation8 + $0x1500] sm:$0xff]
        %v1267 = vld [vmem:[#allocation8 + $0x1508] sm:$0xff]
        %v1268 = vld [vmem:[#allocation8 + $0x1510] sm:$0xff]
        %v1269 = vld [vmem:[#allocation8 + $0x1518] sm:$0xff]
        %v1270 = vld [vmem:[#allocation8 + $0x1520] sm:$0xff]
        %v1271 = vld [vmem:[#allocation8 + $0x1528] sm:$0xff]
        %v1272 = vld [vmem:[#allocation8 + $0x1530] sm:$0xff]
        %v1273 = vld [vmem:[#allocation8 + $0x1538] sm:$0xff]
        %v1274 = vld [vmem:[#allocation8 + $0x1540] sm:$0xff]
        %v1275 = vld [vmem:[#allocation8 + $0x1548] sm:$0xff]
        %v1276 = vld [vmem:[#allocation8 + $0x1550] sm:$0xff]
        %v1277 = vld [vmem:[#allocation8 + $0x1558] sm:$0xff]
        %v1278 = vld [vmem:[#allocation8 + $0x1560] sm:$0xff]
        %v1279 = vld [vmem:[#allocation8 + $0x1568] sm:$0xff]
        %v1280 = vld [vmem:[#allocation8 + $0x1570] sm:$0xff]
        %v1281 = vld [vmem:[#allocation8 + $0x1578] sm:$0xff]
        %v1282 = vld [vmem:[#allocation8 + $0x1580] sm:$0xff]
        %v1283 = vld [vmem:[#allocation8 + $0x1588] sm:$0xff]
        %v1284 = vld [vmem:[#allocation8 + $0x1590] sm:$0xff]
        %v1285 = vld [vmem:[#allocation8 + $0x1598] sm:$0xff]
        %v1286 = vld [vmem:[#allocation8 + $0x15a0] sm:$0xff]
        %v1287 = vld [vmem:[#allocation8 + $0x15a8] sm:$0xff]
        %v1288 = vld [vmem:[#allocation8 + $0x15b0] sm:$0xff]
        %v1289 = vld [vmem:[#allocation8 + $0x15b8] sm:$0xff]
        %v1290 = vld [vmem:[#allocation8 + $0x15c0] sm:$0xff]
        %v1291 = vld [vmem:[#allocation8 + $0x15c8] sm:$0xff]
        %v1292 = vld [vmem:[#allocation8 + $0x15d0] sm:$0xff]
        %v1293 = vld [vmem:[#allocation8 + $0x15d8] sm:$0xff]
        %v1294 = vld [vmem:[#allocation8 + $0x15e0] sm:$0xff]
        %v1295 = vld [vmem:[#allocation8 + $0x15e8] sm:$0xff]
        %v1296 = vld [vmem:[#allocation8 + $0x15f0] sm:$0xff]
        %v1297 = vld [vmem:[#allocation8 + $0x15f8] sm:$0xff]
        %v1298 = vld [vmem:[#allocation8 + $0x1600] sm:$0xff]
        %v1299 = vld [vmem:[#allocation8 + $0x1608] sm:$0xff]
        %v1300 = vld [vmem:[#allocation8 + $0x1610] sm:$0xff]
        %v1301 = vld [vmem:[#allocation8 + $0x1618] sm:$0xff]
        %v1302 = vld [vmem:[#allocation8 + $0x1620] sm:$0xff]
        %v1303 = vld [vmem:[#allocation8 + $0x1628] sm:$0xff]
        %v1304 = vld [vmem:[#allocation8 + $0x1630] sm:$0xff]
        %v1305 = vld [vmem:[#allocation8 + $0x1638] sm:$0xff]
        %v1306 = vld [vmem:[#allocation8 + $0x1640] sm:$0xff]
        %v1307 = vld [vmem:[#allocation8 + $0x1648] sm:$0xff]
        %v1308 = vld [vmem:[#allocation8 + $0x1650] sm:$0xff]
        %v1309 = vld [vmem:[#allocation8 + $0x1658] sm:$0xff]
        %v1310 = vld [vmem:[#allocation8 + $0x1660] sm:$0xff]
        %v1311 = vld [vmem:[#allocation8 + $0x1668] sm:$0xff]
        %v1312 = vld [vmem:[#allocation8 + $0x1670] sm:$0xff]
        %v1313 = vld [vmem:[#allocation8 + $0x1678] sm:$0xff]
        %v1314 = vld [vmem:[#allocation8 + $0x1680] sm:$0xff]
        %v1315 = vld [vmem:[#allocation8 + $0x1688] sm:$0xff]
        %v1316 = vld [vmem:[#allocation8 + $0x1690] sm:$0xff]
        %v1317 = vld [vmem:[#allocation8 + $0x1698] sm:$0xff]
        %v1318 = vld [vmem:[#allocation8 + $0x16a0] sm:$0xff]
        %v1319 = vld [vmem:[#allocation8 + $0x16a8] sm:$0xff]
        %v1320 = vld [vmem:[#allocation8 + $0x16b0] sm:$0xff]
        %v1321 = vld [vmem:[#allocation8 + $0x16b8] sm:$0xff]
        %v1322 = vld [vmem:[#allocation8 + $0x16c0] sm:$0xff]
        %v1323 = vld [vmem:[#allocation8 + $0x16c8] sm:$0xff]
        %v1324 = vld [vmem:[#allocation8 + $0x16d0] sm:$0xff]
        %v1325 = vld [vmem:[#allocation8 + $0x16d8] sm:$0xff]
        %v1326 = vld [vmem:[#allocation8 + $0x16e0] sm:$0xff]
        %v1327 = vld [vmem:[#allocation8 + $0x16e8] sm:$0xff]
        %v1328 = vld [vmem:[#allocation8 + $0x16f0] sm:$0xff]
        %v1329 = vld [vmem:[#allocation8 + $0x16f8] sm:$0xff]
        %v1330 = vld [vmem:[#allocation8 + $0x1700] sm:$0xff]
        %v1331 = vld [vmem:[#allocation8 + $0x1708] sm:$0xff]
        %v1332 = vld [vmem:[#allocation8 + $0x1710] sm:$0xff]
        %v1333 = vld [vmem:[#allocation8 + $0x1718] sm:$0xff]
        %v1334 = vld [vmem:[#allocation8 + $0x1720] sm:$0xff]
        %v1335 = vld [vmem:[#allocation8 + $0x1728] sm:$0xff]
        %v1336 = vld [vmem:[#allocation8 + $0x1730] sm:$0xff]
        %v1337 = vld [vmem:[#allocation8 + $0x1738] sm:$0xff]
        %v1338 = vld [vmem:[#allocation8 + $0x1740] sm:$0xff]
        %v1339 = vld [vmem:[#allocation8 + $0x1748] sm:$0xff]
        %v1340 = vld [vmem:[#allocation8 + $0x1750] sm:$0xff]
        %v1341 = vld [vmem:[#allocation8 + $0x1758] sm:$0xff]
        %v1342 = vld [vmem:[#allocation8 + $0x1760] sm:$0xff]
        %v1343 = vld [vmem:[#allocation8 + $0x1768] sm:$0xff]
        %v1344 = vld [vmem:[#allocation8 + $0x1770] sm:$0xff]
        %v1345 = vld [vmem:[#allocation8 + $0x1778] sm:$0xff]
        %v1346 = vld [vmem:[#allocation8 + $0x1780] sm:$0xff]
        %v1347 = vld [vmem:[#allocation8 + $0x1788] sm:$0xff]
        %v1348 = vld [vmem:[#allocation8 + $0x1790] sm:$0xff]
        %v1349 = vld [vmem:[#allocation8 + $0x1798] sm:$0xff]
        %v1350 = vld [vmem:[#allocation8 + $0x17a0] sm:$0xff]
        %v1351 = vld [vmem:[#allocation8 + $0x17a8] sm:$0xff]
        %v1352 = vld [vmem:[#allocation8 + $0x17b0] sm:$0xff]
        %v1353 = vld [vmem:[#allocation8 + $0x17b8] sm:$0xff]
        %v1354 = vld [vmem:[#allocation8 + $0x17c0] sm:$0xff]
        %v1355 = vld [vmem:[#allocation8 + $0x17c8] sm:$0xff]
        %v1356 = vld [vmem:[#allocation8 + $0x17d0] sm:$0xff]
        %v1357 = vld [vmem:[#allocation8 + $0x17d8] sm:$0xff]
        %v1358 = vld [vmem:[#allocation8 + $0x17e0] sm:$0xff]
        %v1359 = vld [vmem:[#allocation8 + $0x17e8] sm:$0xff]
        %v1360 = vld [vmem:[#allocation8 + $0x17f0] sm:$0xff]
        %v1361 = vld [vmem:[#allocation8 + $0x17f8] sm:$0xff]
        %v1362 = vld [vmem:[#allocation8 + $0x1800] sm:$0xff]
        %v1363 = vld [vmem:[#allocation8 + $0x1808] sm:$0xff]
        %v1364 = vld [vmem:[#allocation8 + $0x1810] sm:$0xff]
        %v1365 = vld [vmem:[#allocation8 + $0x1818] sm:$0xff]
        %v1366 = vld [vmem:[#allocation8 + $0x1820] sm:$0xff]
        %v1367 = vld [vmem:[#allocation8 + $0x1828] sm:$0xff]
        %v1368 = vld [vmem:[#allocation8 + $0x1830] sm:$0xff]
        %v1369 = vld [vmem:[#allocation8 + $0x1838] sm:$0xff]
        %v1370 = vld [vmem:[#allocation8 + $0x1840] sm:$0xff]
        %v1371 = vld [vmem:[#allocation8 + $0x1848] sm:$0xff]
        %v1372 = vld [vmem:[#allocation8 + $0x1850] sm:$0xff]
        %v1373 = vld [vmem:[#allocation8 + $0x1858] sm:$0xff]
        %v1374 = vld [vmem:[#allocation8 + $0x1860] sm:$0xff]
        %v1375 = vld [vmem:[#allocation8 + $0x1868] sm:$0xff]
        %v1376 = vld [vmem:[#allocation8 + $0x1870] sm:$0xff]
        %v1377 = vld [vmem:[#allocation8 + $0x1878] sm:$0xff]
        %v1378 = vld [vmem:[#allocation8 + $0x1880] sm:$0xff]
        %v1379 = vld [vmem:[#allocation8 + $0x1888] sm:$0xff]
        %v1380 = vld [vmem:[#allocation8 + $0x1890] sm:$0xff]
        %v1381 = vld [vmem:[#allocation8 + $0x1898] sm:$0xff]
        %v1382 = vld [vmem:[#allocation8 + $0x18a0] sm:$0xff]
        %v1383 = vld [vmem:[#allocation8 + $0x18a8] sm:$0xff]
        %v1384 = vld [vmem:[#allocation8 + $0x18b0] sm:$0xff]
        %v1385 = vld [vmem:[#allocation8 + $0x18b8] sm:$0xff]
        %v1386 = vld [vmem:[#allocation8 + $0x18c0] sm:$0xff]
        %v1387 = vld [vmem:[#allocation8 + $0x18c8] sm:$0xff]
        %v1388 = vld [vmem:[#allocation8 + $0x18d0] sm:$0xff]
        %v1389 = vld [vmem:[#allocation8 + $0x18d8] sm:$0xff]
        %v1390 = vld [vmem:[#allocation8 + $0x18e0] sm:$0xff]
        %v1391 = vld [vmem:[#allocation8 + $0x18e8] sm:$0xff]
        %v1392 = vld [vmem:[#allocation8 + $0x18f0] sm:$0xff]
        %v1393 = vld [vmem:[#allocation8 + $0x18f8] sm:$0xff]
        %v1394 = vld [vmem:[#allocation8 + $0x1900] sm:$0xff]
        %v1395 = vld [vmem:[#allocation8 + $0x1908] sm:$0xff]
        %v1396 = vld [vmem:[#allocation8 + $0x1910] sm:$0xff]
        %v1397 = vld [vmem:[#allocation8 + $0x1918] sm:$0xff]
        %v1398 = vld [vmem:[#allocation8 + $0x1920] sm:$0xff]
        %v1399 = vld [vmem:[#allocation8 + $0x1928] sm:$0xff]
        %v1400 = vld [vmem:[#allocation8 + $0x1930] sm:$0xff]
        %v1401 = vld [vmem:[#allocation8 + $0x1938] sm:$0xff]
        %v1402 = vld [vmem:[#allocation8 + $0x1940] sm:$0xff]
        %v1403 = vld [vmem:[#allocation8 + $0x1948] sm:$0xff]
        %v1404 = vld [vmem:[#allocation8 + $0x1950] sm:$0xff]
        %v1405 = vld [vmem:[#allocation8 + $0x1958] sm:$0xff]
        %v1406 = vld [vmem:[#allocation8 + $0x1960] sm:$0xff]
        %v1407 = vld [vmem:[#allocation8 + $0x1968] sm:$0xff]
        %v1408 = vld [vmem:[#allocation8 + $0x1970] sm:$0xff]
        %v1409 = vld [vmem:[#allocation8 + $0x1978] sm:$0xff]
        %v1410 = vld [vmem:[#allocation8 + $0x1980] sm:$0xff]
        %v1411 = vld [vmem:[#allocation8 + $0x1988] sm:$0xff]
        %v1412 = vld [vmem:[#allocation8 + $0x1990] sm:$0xff]
        %v1413 = vld [vmem:[#allocation8 + $0x1998] sm:$0xff]
        %v1414 = vld [vmem:[#allocation8 + $0x19a0] sm:$0xff]
        %v1415 = vld [vmem:[#allocation8 + $0x19a8] sm:$0xff]
        %v1416 = vld [vmem:[#allocation8 + $0x19b0] sm:$0xff]
        %v1417 = vld [vmem:[#allocation8 + $0x19b8] sm:$0xff]
        %v1418 = vld [vmem:[#allocation8 + $0x19c0] sm:$0xff]
        %v1419 = vld [vmem:[#allocation8 + $0x19c8] sm:$0xff]
        %v1420 = vld [vmem:[#allocation8 + $0x19d0] sm:$0xff]
        %v1421 = vld [vmem:[#allocation8 + $0x19d8] sm:$0xff]
        %v1422 = vld [vmem:[#allocation8 + $0x19e0] sm:$0xff]
        %v1423 = vld [vmem:[#allocation8 + $0x19e8] sm:$0xff]
        %v1424 = vld [vmem:[#allocation8 + $0x19f0] sm:$0xff]
        %v1425 = vld [vmem:[#allocation8 + $0x19f8] sm:$0xff]
        %v1426 = vld [vmem:[#allocation8 + $0x1a00] sm:$0xff]
        %v1427 = vld [vmem:[#allocation8 + $0x1a08] sm:$0xff]
        %v1428 = vld [vmem:[#allocation8 + $0x1a10] sm:$0xff]
        %v1429 = vld [vmem:[#allocation8 + $0x1a18] sm:$0xff]
        %v1430 = vld [vmem:[#allocation8 + $0x1a20] sm:$0xff]
        %v1431 = vld [vmem:[#allocation8 + $0x1a28] sm:$0xff]
        %v1432 = vld [vmem:[#allocation8 + $0x1a30] sm:$0xff]
        %v1433 = vld [vmem:[#allocation8 + $0x1a38] sm:$0xff]
        %v1434 = vld [vmem:[#allocation8 + $0x1a40] sm:$0xff]
        %v1435 = vld [vmem:[#allocation8 + $0x1a48] sm:$0xff]
        %v1436 = vld [vmem:[#allocation8 + $0x1a50] sm:$0xff]
        %v1437 = vld [vmem:[#allocation8 + $0x1a58] sm:$0xff]
        %v1438 = vld [vmem:[#allocation8 + $0x1a60] sm:$0xff]
        %v1439 = vld [vmem:[#allocation8 + $0x1a68] sm:$0xff]
        %v1440 = vld [vmem:[#allocation8 + $0x1a70] sm:$0xff]
        %v1441 = vld [vmem:[#allocation8 + $0x1a78] sm:$0xff]
        %v1442 = vld [vmem:[#allocation8 + $0x1a80] sm:$0xff]
        %v1443 = vld [vmem:[#allocation8 + $0x1a88] sm:$0xff]
        %v1444 = vld [vmem:[#allocation8 + $0x1a90] sm:$0xff]
        %v1445 = vld [vmem:[#allocation8 + $0x1a98] sm:$0xff]
        %v1446 = vld [vmem:[#allocation8 + $0x1aa0] sm:$0xff]
        %v1447 = vld [vmem:[#allocation8 + $0x1aa8] sm:$0xff]
        %v1448 = vld [vmem:[#allocation8 + $0x1ab0] sm:$0xff]
        %v1449 = vld [vmem:[#allocation8 + $0x1ab8] sm:$0xff]
        %v1450 = vld [vmem:[#allocation8 + $0x1ac0] sm:$0xff]
        %v1451 = vld [vmem:[#allocation8 + $0x1ac8] sm:$0xff]
        %v1452 = vld [vmem:[#allocation8 + $0x1ad0] sm:$0xff]
        %v1453 = vld [vmem:[#allocation8 + $0x1ad8] sm:$0xff]
        %v1454 = vld [vmem:[#allocation8 + $0x1ae0] sm:$0xff]
        %v1455 = vld [vmem:[#allocation8 + $0x1ae8] sm:$0xff]
        %v1456 = vld [vmem:[#allocation8 + $0x1af0] sm:$0xff]
        %v1457 = vld [vmem:[#allocation8 + $0x1af8] sm:$0xff]
        %v1461 = vunpack.c.l.b16 %v585
        %v1462 = vunpack.c.h.b16 %v585
        %v1463 = vunpack.c.l.b16 %v586
        %v1464 = vunpack.c.h.b16 %v586
        %v1465 = vunpack.c.l.b16 %v587
        %v1466 = vunpack.c.h.b16 %v587
        %v1467 = vpack.c.b16 %v1461, %v1461
        %v1468 = vpack.c.b16 %v1462, %v1462
        %v1469 = vpack.c.b16 %v1463, %v1463
        %v1470 = vpack.c.b16 %v1464, %v1464
        %v1471 = vpack.c.b16 %v1465, %v1465
        %v1472 = vpack.c.b16 %v1466, %v1466
        %v2343 = vunpack.c.l.b16 %v594
        %v2344 = vunpack.c.h.b16 %v594
        %v2345 = vunpack.c.l.b16 %v595
        %v2346 = vunpack.c.h.b16 %v595
        %v2347 = vunpack.c.l.b16 %v596
        %v2348 = vunpack.c.h.b16 %v596
        %v2349 = vunpack.c.l.b16 %v597
        %v2350 = vunpack.c.h.b16 %v597
        %v2351 = vunpack.c.l.b16 %v598
        %v2352 = vunpack.c.h.b16 %v598
        %v2353 = vunpack.c.l.b16 %v599
        %v2354 = vunpack.c.h.b16 %v599
        %v2355 = vunpack.c.l.b16 %v600
        %v2356 = vunpack.c.h.b16 %v600
        %v2357 = vunpack.c.l.b16 %v601
        %v2358 = vunpack.c.h.b16 %v601
        %v2359 = vunpack.c.l.b16 %v602
        %v2360 = vunpack.c.h.b16 %v602
        %v2361 = vunpack.c.l.b16 %v603
        %v2362 = vunpack.c.h.b16 %v603
        %v2363 = vunpack.c.l.b16 %v604
        %v2364 = vunpack.c.h.b16 %v604
        %v2365 = vunpack.c.l.b16 %v605
        %v2366 = vunpack.c.h.b16 %v605
        %v2367 = vunpack.c.l.b16 %v606
        %v2368 = vunpack.c.h.b16 %v606
        %v2369 = vunpack.c.l.b16 %v607
        %v2370 = vunpack.c.h.b16 %v607
        %v2371 = vunpack.c.l.b16 %v608
        %v2372 = vunpack.c.h.b16 %v608
        %v2373 = vunpack.c.l.b16 %v609
        %v2374 = vunpack.c.h.b16 %v609
        %v2375 = vunpack.c.l.b16 %v610
        %v2376 = vunpack.c.h.b16 %v610
        %v2377 = vunpack.c.l.b16 %v611
        %v2378 = vunpack.c.h.b16 %v611
        %v2379 = vunpack.c.l.b16 %v612
        %v2380 = vunpack.c.h.b16 %v612
        %v2381 = vunpack.c.l.b16 %v613
        %v2382 = vunpack.c.h.b16 %v613
        %v2383 = vunpack.c.l.b16 %v614
        %v2384 = vunpack.c.h.b16 %v614
        %v2385 = vunpack.c.l.b16 %v615
        %v2386 = vunpack.c.h.b16 %v615
        %v2387 = vunpack.c.l.b16 %v616
        %v2388 = vunpack.c.h.b16 %v616
        %v2389 = vunpack.c.l.b16 %v617
        %v2390 = vunpack.c.h.b16 %v617
        %v2391 = vunpack.c.l.b16 %v618
        %v2392 = vunpack.c.h.b16 %v618
        %v2393 = vunpack.c.l.b16 %v619
        %v2394 = vunpack.c.h.b16 %v619
        %v2395 = vunpack.c.l.b16 %v620
        %v2396 = vunpack.c.h.b16 %v620
        %v2397 = vunpack.c.l.b16 %v621
        %v2398 = vunpack.c.h.b16 %v621
        %v2399 = vunpack.c.l.b16 %v622
        %v2400 = vunpack.c.h.b16 %v622
        %v2401 = vunpack.c.l.b16 %v623
        %v2402 = vunpack.c.h.b16 %v623
        %v2403 = vunpack.c.l.b16 %v624
        %v2404 = vunpack.c.h.b16 %v624
        %v2405 = vunpack.c.l.b16 %v625
        %v2406 = vunpack.c.h.b16 %v625
        %v2407 = vunpack.c.l.b16 %v626
        %v2408 = vunpack.c.h.b16 %v626
        %v2409 = vunpack.c.l.b16 %v627
        %v2410 = vunpack.c.h.b16 %v627
        %v2411 = vunpack.c.l.b16 %v628
        %v2412 = vunpack.c.h.b16 %v628
        %v2413 = vunpack.c.l.b16 %v629
        %v2414 = vunpack.c.h.b16 %v629
        %v2415 = vunpack.c.l.b16 %v630
        %v2416 = vunpack.c.h.b16 %v630
        %v2417 = vunpack.c.l.b16 %v631
        %v2418 = vunpack.c.h.b16 %v631
        %v2419 = vunpack.c.l.b16 %v632
        %v2420 = vunpack.c.h.b16 %v632
        %v2421 = vunpack.c.l.b16 %v633
        %v2422 = vunpack.c.h.b16 %v633
        %v2423 = vunpack.c.l.b16 %v634
        %v2424 = vunpack.c.h.b16 %v634
        %v2425 = vunpack.c.l.b16 %v635
        %v2426 = vunpack.c.h.b16 %v635
        %v2427 = vunpack.c.l.b16 %v636
        %v2428 = vunpack.c.h.b16 %v636
        %v2429 = vunpack.c.l.b16 %v637
        %v2430 = vunpack.c.h.b16 %v637
        %v2431 = vunpack.c.l.b16 %v638
        %v2432 = vunpack.c.h.b16 %v638
        %v2433 = vunpack.c.l.b16 %v639
        %v2434 = vunpack.c.h.b16 %v639
        %v2435 = vunpack.c.l.b16 %v640
        %v2436 = vunpack.c.h.b16 %v640
        %v2437 = vunpack.c.l.b16 %v641
        %v2438 = vunpack.c.h.b16 %v641
        %v2439 = vunpack.c.l.b16 %v642
        %v2440 = vunpack.c.h.b16 %v642
        %v2441 = vunpack.c.l.b16 %v643
        %v2442 = vunpack.c.h.b16 %v643
        %v2443 = vunpack.c.l.b16 %v644
        %v2444 = vunpack.c.h.b16 %v644
        %v2445 = vunpack.c.l.b16 %v645
        %v2446 = vunpack.c.h.b16 %v645
        %v2447 = vunpack.c.l.b16 %v646
        %v2448 = vunpack.c.h.b16 %v646
        %v2449 = vunpack.c.l.b16 %v647
        %v2450 = vunpack.c.h.b16 %v647
        %v2451 = vunpack.c.l.b16 %v648
        %v2452 = vunpack.c.h.b16 %v648
        %v2453 = vunpack.c.l.b16 %v649
        %v2454 = vunpack.c.h.b16 %v649
        %v2455 = vunpack.c.l.b16 %v650
        %v2456 = vunpack.c.h.b16 %v650
        %v2457 = vunpack.c.l.b16 %v651
        %v2458 = vunpack.c.h.b16 %v651
        %v2459 = vunpack.c.l.b16 %v652
        %v2460 = vunpack.c.h.b16 %v652
        %v2461 = vunpack.c.l.b16 %v653
        %v2462 = vunpack.c.h.b16 %v653
        %v2463 = vunpack.c.l.b16 %v654
        %v2464 = vunpack.c.h.b16 %v654
        %v2465 = vunpack.c.l.b16 %v655
        %v2466 = vunpack.c.h.b16 %v655
        %v2467 = vunpack.c.l.b16 %v656
        %v2468 = vunpack.c.h.b16 %v656
        %v2469 = vunpack.c.l.b16 %v657
        %v2470 = vunpack.c.h.b16 %v657
        %v2471 = vunpack.c.l.b16 %v658
        %v2472 = vunpack.c.h.b16 %v658
        %v2473 = vunpack.c.l.b16 %v659
        %v2474 = vunpack.c.h.b16 %v659
        %v2475 = vunpack.c.l.b16 %v660
        %v2476 = vunpack.c.h.b16 %v660
        %v2477 = vunpack.c.l.b16 %v661
        %v2478 = vunpack.c.h.b16 %v661
        %v2479 = vunpack.c.l.b16 %v662
        %v2480 = vunpack.c.h.b16 %v662
        %v2481 = vunpack.c.l.b16 %v663
        %v2482 = vunpack.c.h.b16 %v663
        %v2483 = vunpack.c.l.b16 %v664
        %v2484 = vunpack.c.h.b16 %v664
        %v2485 = vunpack.c.l.b16 %v665
        %v2486 = vunpack.c.h.b16 %v665
        %v2487 = vunpack.c.l.b16 %v666
        %v2488 = vunpack.c.h.b16 %v666
        %v2489 = vunpack.c.l.b16 %v667
        %v2490 = vunpack.c.h.b16 %v667
        %v2491 = vunpack.c.l.b16 %v668
        %v2492 = vunpack.c.h.b16 %v668
        %v2493 = vunpack.c.l.b16 %v669
        %v2494 = vunpack.c.h.b16 %v669
        %v2495 = vunpack.c.l.b16 %v670
        %v2496 = vunpack.c.h.b16 %v670
        %v2497 = vunpack.c.l.b16 %v671
        %v2498 = vunpack.c.h.b16 %v671
        %v2499 = vunpack.c.l.b16 %v672
        %v2500 = vunpack.c.h.b16 %v672
        %v2501 = vunpack.c.l.b16 %v673
        %v2502 = vunpack.c.h.b16 %v673
        %v2503 = vunpack.c.l.b16 %v674
        %v2504 = vunpack.c.h.b16 %v674
        %v2505 = vunpack.c.l.b16 %v675
        %v2506 = vunpack.c.h.b16 %v675
        %v2507 = vunpack.c.l.b16 %v676
        %v2508 = vunpack.c.h.b16 %v676
        %v2509 = vunpack.c.l.b16 %v677
        %v2510 = vunpack.c.h.b16 %v677
        %v2511 = vunpack.c.l.b16 %v678
        %v2512 = vunpack.c.h.b16 %v678
        %v2513 = vunpack.c.l.b16 %v679
        %v2514 = vunpack.c.h.b16 %v679
        %v2515 = vunpack.c.l.b16 %v680
        %v2516 = vunpack.c.h.b16 %v680
        %v2517 = vunpack.c.l.b16 %v681
        %v2518 = vunpack.c.h.b16 %v681
        %v2519 = vunpack.c.l.b16 %v682
        %v2520 = vunpack.c.h.b16 %v682
        %v2521 = vunpack.c.l.b16 %v683
        %v2522 = vunpack.c.h.b16 %v683
        %v2523 = vunpack.c.l.b16 %v684
        %v2524 = vunpack.c.h.b16 %v684
        %v2525 = vunpack.c.l.b16 %v685
        %v2526 = vunpack.c.h.b16 %v685
        %v2527 = vunpack.c.l.b16 %v686
        %v2528 = vunpack.c.h.b16 %v686
        %v2529 = vunpack.c.l.b16 %v687
        %v2530 = vunpack.c.h.b16 %v687
        %v2531 = vunpack.c.l.b16 %v688
        %v2532 = vunpack.c.h.b16 %v688
        %v2533 = vunpack.c.l.b16 %v689
        %v2534 = vunpack.c.h.b16 %v689
        %v2535 = vunpack.c.l.b16 %v690
        %v2536 = vunpack.c.h.b16 %v690
        %v2537 = vunpack.c.l.b16 %v691
        %v2538 = vunpack.c.h.b16 %v691
        %v2539 = vunpack.c.l.b16 %v692
        %v2540 = vunpack.c.h.b16 %v692
        %v2541 = vunpack.c.l.b16 %v693
        %v2542 = vunpack.c.h.b16 %v693
        %v2543 = vunpack.c.l.b16 %v694
        %v2544 = vunpack.c.h.b16 %v694
        %v2545 = vunpack.c.l.b16 %v695
        %v2546 = vunpack.c.h.b16 %v695
        %v2547 = vunpack.c.l.b16 %v696
        %v2548 = vunpack.c.h.b16 %v696
        %v2549 = vunpack.c.l.b16 %v697
        %v2550 = vunpack.c.h.b16 %v697
        %v2551 = vunpack.c.l.b16 %v698
        %v2552 = vunpack.c.h.b16 %v698
        %v2553 = vunpack.c.l.b16 %v699
        %v2554 = vunpack.c.h.b16 %v699
        %v2555 = vunpack.c.l.b16 %v700
        %v2556 = vunpack.c.h.b16 %v700
        %v2557 = vunpack.c.l.b16 %v701
        %v2558 = vunpack.c.h.b16 %v701
        %v2559 = vunpack.c.l.b16 %v702
        %v2560 = vunpack.c.h.b16 %v702
        %v2561 = vunpack.c.l.b16 %v703
        %v2562 = vunpack.c.h.b16 %v703
        %v2563 = vunpack.c.l.b16 %v704
        %v2564 = vunpack.c.h.b16 %v704
        %v2565 = vunpack.c.l.b16 %v705
        %v2566 = vunpack.c.h.b16 %v705
        %v2567 = vunpack.c.l.b16 %v706
        %v2568 = vunpack.c.h.b16 %v706
        %v2569 = vunpack.c.l.b16 %v707
        %v2570 = vunpack.c.h.b16 %v707
        %v2571 = vunpack.c.l.b16 %v708
        %v2572 = vunpack.c.h.b16 %v708
        %v2573 = vunpack.c.l.b16 %v709
        %v2574 = vunpack.c.h.b16 %v709
        %v2575 = vunpack.c.l.b16 %v710
        %v2576 = vunpack.c.h.b16 %v710
        %v2577 = vunpack.c.l.b16 %v711
        %v2578 = vunpack.c.h.b16 %v711
        %v2579 = vunpack.c.l.b16 %v712
        %v2580 = vunpack.c.h.b16 %v712
        %v2581 = vunpack.c.l.b16 %v713
        %v2582 = vunpack.c.h.b16 %v713
        %v2583 = vunpack.c.l.b16 %v714
        %v2584 = vunpack.c.h.b16 %v714
        %v2585 = vunpack.c.l.b16 %v715
        %v2586 = vunpack.c.h.b16 %v715
        %v2587 = vunpack.c.l.b16 %v716
        %v2588 = vunpack.c.h.b16 %v716
        %v2589 = vunpack.c.l.b16 %v717
        %v2590 = vunpack.c.h.b16 %v717
        %v2591 = vunpack.c.l.b16 %v718
        %v2592 = vunpack.c.h.b16 %v718
        %v2593 = vunpack.c.l.b16 %v719
        %v2594 = vunpack.c.h.b16 %v719
        %v2595 = vunpack.c.l.b16 %v720
        %v2596 = vunpack.c.h.b16 %v720
        %v2597 = vunpack.c.l.b16 %v721
        %v2598 = vunpack.c.h.b16 %v721
        %v2599 = vunpack.c.l.b16 %v722
        %v2600 = vunpack.c.h.b16 %v722
        %v2601 = vunpack.c.l.b16 %v723
        %v2602 = vunpack.c.h.b16 %v723
        %v2603 = vunpack.c.l.b16 %v724
        %v2604 = vunpack.c.h.b16 %v724
        %v2605 = vunpack.c.l.b16 %v725
        %v2606 = vunpack.c.h.b16 %v725
        %v2607 = vunpack.c.l.b16 %v726
        %v2608 = vunpack.c.h.b16 %v726
        %v2609 = vunpack.c.l.b16 %v727
        %v2610 = vunpack.c.h.b16 %v727
        %v2611 = vunpack.c.l.b16 %v728
        %v2612 = vunpack.c.h.b16 %v728
        %v2613 = vunpack.c.l.b16 %v729
        %v2614 = vunpack.c.h.b16 %v729
        %v2615 = vunpack.c.l.b16 %v730
        %v2616 = vunpack.c.h.b16 %v730
        %v2617 = vunpack.c.l.b16 %v731
        %v2618 = vunpack.c.h.b16 %v731
        %v2619 = vunpack.c.l.b16 %v732
        %v2620 = vunpack.c.h.b16 %v732
        %v2621 = vunpack.c.l.b16 %v733
        %v2622 = vunpack.c.h.b16 %v733
        %v2623 = vunpack.c.l.b16 %v734
        %v2624 = vunpack.c.h.b16 %v734
        %v2625 = vunpack.c.l.b16 %v735
        %v2626 = vunpack.c.h.b16 %v735
        %v2627 = vunpack.c.l.b16 %v736
        %v2628 = vunpack.c.h.b16 %v736
        %v2629 = vunpack.c.l.b16 %v737
        %v2630 = vunpack.c.h.b16 %v737
        %v2631 = vunpack.c.l.b16 %v738
        %v2632 = vunpack.c.h.b16 %v738
        %v2633 = vunpack.c.l.b16 %v739
        %v2634 = vunpack.c.h.b16 %v739
        %v2635 = vunpack.c.l.b16 %v740
        %v2636 = vunpack.c.h.b16 %v740
        %v2637 = vunpack.c.l.b16 %v741
        %v2638 = vunpack.c.h.b16 %v741
        %v2639 = vunpack.c.l.b16 %v742
        %v2640 = vunpack.c.h.b16 %v742
        %v2641 = vunpack.c.l.b16 %v743
        %v2642 = vunpack.c.h.b16 %v743
        %v2643 = vunpack.c.l.b16 %v744
        %v2644 = vunpack.c.h.b16 %v744
        %v2645 = vunpack.c.l.b16 %v745
        %v2646 = vunpack.c.h.b16 %v745
        %v2647 = vunpack.c.l.b16 %v746
        %v2648 = vunpack.c.h.b16 %v746
        %v2649 = vunpack.c.l.b16 %v747
        %v2650 = vunpack.c.h.b16 %v747
        %v2651 = vunpack.c.l.b16 %v748
        %v2652 = vunpack.c.h.b16 %v748
        %v2653 = vunpack.c.l.b16 %v749
        %v2654 = vunpack.c.h.b16 %v749
        %v2655 = vunpack.c.l.b16 %v750
        %v2656 = vunpack.c.h.b16 %v750
        %v2657 = vunpack.c.l.b16 %v751
        %v2658 = vunpack.c.h.b16 %v751
        %v2659 = vunpack.c.l.b16 %v752
        %v2660 = vunpack.c.h.b16 %v752
        %v2661 = vunpack.c.l.b16 %v753
        %v2662 = vunpack.c.h.b16 %v753
        %v2663 = vunpack.c.l.b16 %v754
        %v2664 = vunpack.c.h.b16 %v754
        %v2665 = vunpack.c.l.b16 %v755
        %v2666 = vunpack.c.h.b16 %v755
        %v2667 = vunpack.c.l.b16 %v756
        %v2668 = vunpack.c.h.b16 %v756
        %v2669 = vunpack.c.l.b16 %v757
        %v2670 = vunpack.c.h.b16 %v757
        %v2671 = vunpack.c.l.b16 %v758
        %v2672 = vunpack.c.h.b16 %v758
        %v2673 = vunpack.c.l.b16 %v759
        %v2674 = vunpack.c.h.b16 %v759
        %v2675 = vunpack.c.l.b16 %v760
        %v2676 = vunpack.c.h.b16 %v760
        %v2677 = vunpack.c.l.b16 %v761
        %v2678 = vunpack.c.h.b16 %v761
        %v2679 = vunpack.c.l.b16 %v762
        %v2680 = vunpack.c.h.b16 %v762
        %v2681 = vunpack.c.l.b16 %v763
        %v2682 = vunpack.c.h.b16 %v763
        %v2683 = vunpack.c.l.b16 %v764
        %v2684 = vunpack.c.h.b16 %v764
        %v2685 = vunpack.c.l.b16 %v765
        %v2686 = vunpack.c.h.b16 %v765
        %v2687 = vunpack.c.l.b16 %v766
        %v2688 = vunpack.c.h.b16 %v766
        %v2689 = vunpack.c.l.b16 %v767
        %v2690 = vunpack.c.h.b16 %v767
        %v2691 = vunpack.c.l.b16 %v768
        %v2692 = vunpack.c.h.b16 %v768
        %v2693 = vunpack.c.l.b16 %v769
        %v2694 = vunpack.c.h.b16 %v769
        %v2695 = vunpack.c.l.b16 %v770
        %v2696 = vunpack.c.h.b16 %v770
        %v2697 = vunpack.c.l.b16 %v771
        %v2698 = vunpack.c.h.b16 %v771
        %v2699 = vunpack.c.l.b16 %v772
        %v2700 = vunpack.c.h.b16 %v772
        %v2701 = vunpack.c.l.b16 %v773
        %v2702 = vunpack.c.h.b16 %v773
        %v2703 = vunpack.c.l.b16 %v774
        %v2704 = vunpack.c.h.b16 %v774
        %v2705 = vunpack.c.l.b16 %v775
        %v2706 = vunpack.c.h.b16 %v775
        %v2707 = vunpack.c.l.b16 %v776
        %v2708 = vunpack.c.h.b16 %v776
        %v2709 = vunpack.c.l.b16 %v777
        %v2710 = vunpack.c.h.b16 %v777
        %v2711 = vunpack.c.l.b16 %v778
        %v2712 = vunpack.c.h.b16 %v778
        %v2713 = vunpack.c.l.b16 %v779
        %v2714 = vunpack.c.h.b16 %v779
        %v2715 = vunpack.c.l.b16 %v780
        %v2716 = vunpack.c.h.b16 %v780
        %v2717 = vunpack.c.l.b16 %v781
        %v2718 = vunpack.c.h.b16 %v781
        %v2719 = vunpack.c.l.b16 %v782
        %v2720 = vunpack.c.h.b16 %v782
        %v2721 = vunpack.c.l.b16 %v783
        %v2722 = vunpack.c.h.b16 %v783
        %v2723 = vunpack.c.l.b16 %v784
        %v2724 = vunpack.c.h.b16 %v784
        %v2725 = vunpack.c.l.b16 %v785
        %v2726 = vunpack.c.h.b16 %v785
        %v2727 = vunpack.c.l.b16 %v786
        %v2728 = vunpack.c.h.b16 %v786
        %v2729 = vunpack.c.l.b16 %v787
        %v2730 = vunpack.c.h.b16 %v787
        %v2731 = vunpack.c.l.b16 %v788
        %v2732 = vunpack.c.h.b16 %v788
        %v2733 = vunpack.c.l.b16 %v789
        %v2734 = vunpack.c.h.b16 %v789
        %v2735 = vunpack.c.l.b16 %v790
        %v2736 = vunpack.c.h.b16 %v790
        %v2737 = vunpack.c.l.b16 %v791
        %v2738 = vunpack.c.h.b16 %v791
        %v2739 = vunpack.c.l.b16 %v792
        %v2740 = vunpack.c.h.b16 %v792
        %v2741 = vunpack.c.l.b16 %v793
        %v2742 = vunpack.c.h.b16 %v793
        %v2743 = vunpack.c.l.b16 %v794
        %v2744 = vunpack.c.h.b16 %v794
        %v2745 = vunpack.c.l.b16 %v795
        %v2746 = vunpack.c.h.b16 %v795
        %v2747 = vunpack.c.l.b16 %v796
        %v2748 = vunpack.c.h.b16 %v796
        %v2749 = vunpack.c.l.b16 %v797
        %v2750 = vunpack.c.h.b16 %v797
        %v2751 = vunpack.c.l.b16 %v798
        %v2752 = vunpack.c.h.b16 %v798
        %v2753 = vunpack.c.l.b16 %v799
        %v2754 = vunpack.c.h.b16 %v799
        %v2755 = vunpack.c.l.b16 %v800
        %v2756 = vunpack.c.h.b16 %v800
        %v2757 = vunpack.c.l.b16 %v801
        %v2758 = vunpack.c.h.b16 %v801
        %v2759 = vunpack.c.l.b16 %v802
        %v2760 = vunpack.c.h.b16 %v802
        %v2761 = vunpack.c.l.b16 %v803
        %v2762 = vunpack.c.h.b16 %v803
        %v2763 = vunpack.c.l.b16 %v804
        %v2764 = vunpack.c.h.b16 %v804
        %v2765 = vunpack.c.l.b16 %v805
        %v2766 = vunpack.c.h.b16 %v805
        %v2767 = vunpack.c.l.b16 %v806
        %v2768 = vunpack.c.h.b16 %v806
        %v2769 = vunpack.c.l.b16 %v807
        %v2770 = vunpack.c.h.b16 %v807
        %v2771 = vunpack.c.l.b16 %v808
        %v2772 = vunpack.c.h.b16 %v808
        %v2773 = vunpack.c.l.b16 %v809
        %v2774 = vunpack.c.h.b16 %v809
        %v2775 = vunpack.c.l.b16 %v810
        %v2776 = vunpack.c.h.b16 %v810
        %v2777 = vunpack.c.l.b16 %v811
        %v2778 = vunpack.c.h.b16 %v811
        %v2779 = vunpack.c.l.b16 %v812
        %v2780 = vunpack.c.h.b16 %v812
        %v2781 = vunpack.c.l.b16 %v813
        %v2782 = vunpack.c.h.b16 %v813
        %v2783 = vunpack.c.l.b16 %v814
        %v2784 = vunpack.c.h.b16 %v814
        %v2785 = vunpack.c.l.b16 %v815
        %v2786 = vunpack.c.h.b16 %v815
        %v2787 = vunpack.c.l.b16 %v816
        %v2788 = vunpack.c.h.b16 %v816
        %v2789 = vunpack.c.l.b16 %v817
        %v2790 = vunpack.c.h.b16 %v817
        %v2791 = vunpack.c.l.b16 %v818
        %v2792 = vunpack.c.h.b16 %v818
        %v2793 = vunpack.c.l.b16 %v819
        %v2794 = vunpack.c.h.b16 %v819
        %v2795 = vunpack.c.l.b16 %v820
        %v2796 = vunpack.c.h.b16 %v820
        %v2797 = vunpack.c.l.b16 %v821
        %v2798 = vunpack.c.h.b16 %v821
        %v2799 = vunpack.c.l.b16 %v822
        %v2800 = vunpack.c.h.b16 %v822
        %v2801 = vunpack.c.l.b16 %v823
        %v2802 = vunpack.c.h.b16 %v823
        %v2803 = vunpack.c.l.b16 %v824
        %v2804 = vunpack.c.h.b16 %v824
        %v2805 = vunpack.c.l.b16 %v825
        %v2806 = vunpack.c.h.b16 %v825
        %v2807 = vunpack.c.l.b16 %v826
        %v2808 = vunpack.c.h.b16 %v826
        %v2809 = vunpack.c.l.b16 %v827
        %v2810 = vunpack.c.h.b16 %v827
        %v2811 = vunpack.c.l.b16 %v828
        %v2812 = vunpack.c.h.b16 %v828
        %v2813 = vunpack.c.l.b16 %v829
        %v2814 = vunpack.c.h.b16 %v829
        %v2815 = vunpack.c.l.b16 %v830
        %v2816 = vunpack.c.h.b16 %v830
        %v2817 = vunpack.c.l.b16 %v831
        %v2818 = vunpack.c.h.b16 %v831
        %v2819 = vunpack.c.l.b16 %v832
        %v2820 = vunpack.c.h.b16 %v832
        %v2821 = vunpack.c.l.b16 %v833
        %v2822 = vunpack.c.h.b16 %v833
        %v2823 = vunpack.c.l.b16 %v834
        %v2824 = vunpack.c.h.b16 %v834
        %v2825 = vunpack.c.l.b16 %v835
        %v2826 = vunpack.c.h.b16 %v835
        %v2827 = vunpack.c.l.b16 %v836
        %v2828 = vunpack.c.h.b16 %v836
        %v2829 = vunpack.c.l.b16 %v837
        %v2830 = vunpack.c.h.b16 %v837
        %v2831 = vunpack.c.l.b16 %v838
        %v2832 = vunpack.c.h.b16 %v838
        %v2833 = vunpack.c.l.b16 %v839
        %v2834 = vunpack.c.h.b16 %v839
        %v2835 = vunpack.c.l.b16 %v840
        %v2836 = vunpack.c.h.b16 %v840
        %v2837 = vunpack.c.l.b16 %v841
        %v2838 = vunpack.c.h.b16 %v841
        %v2839 = vunpack.c.l.b16 %v842
        %v2840 = vunpack.c.h.b16 %v842
        %v2841 = vunpack.c.l.b16 %v843
        %v2842 = vunpack.c.h.b16 %v843
        %v2843 = vunpack.c.l.b16 %v844
        %v2844 = vunpack.c.h.b16 %v844
        %v2845 = vunpack.c.l.b16 %v845
        %v2846 = vunpack.c.h.b16 %v845
        %v2847 = vunpack.c.l.b16 %v846
        %v2848 = vunpack.c.h.b16 %v846
        %v2849 = vunpack.c.l.b16 %v847
        %v2850 = vunpack.c.h.b16 %v847
        %v2851 = vunpack.c.l.b16 %v848
        %v2852 = vunpack.c.h.b16 %v848
        %v2853 = vunpack.c.l.b16 %v849
        %v2854 = vunpack.c.h.b16 %v849
        %v2855 = vunpack.c.l.b16 %v850
        %v2856 = vunpack.c.h.b16 %v850
        %v2857 = vunpack.c.l.b16 %v851
        %v2858 = vunpack.c.h.b16 %v851
        %v2859 = vunpack.c.l.b16 %v852
        %v2860 = vunpack.c.h.b16 %v852
        %v2861 = vunpack.c.l.b16 %v853
        %v2862 = vunpack.c.h.b16 %v853
        %v2863 = vunpack.c.l.b16 %v854
        %v2864 = vunpack.c.h.b16 %v854
        %v2865 = vunpack.c.l.b16 %v855
        %v2866 = vunpack.c.h.b16 %v855
        %v2867 = vunpack.c.l.b16 %v856
        %v2868 = vunpack.c.h.b16 %v856
        %v2869 = vunpack.c.l.b16 %v857
        %v2870 = vunpack.c.h.b16 %v857
        %v2871 = vunpack.c.l.b16 %v858
        %v2872 = vunpack.c.h.b16 %v858
        %v2873 = vunpack.c.l.b16 %v859
        %v2874 = vunpack.c.h.b16 %v859
        %v2875 = vunpack.c.l.b16 %v860
        %v2876 = vunpack.c.h.b16 %v860
        %v2877 = vunpack.c.l.b16 %v861
        %v2878 = vunpack.c.h.b16 %v861
        %v2879 = vunpack.c.l.b16 %v862
        %v2880 = vunpack.c.h.b16 %v862
        %v2881 = vunpack.c.l.b16 %v863
        %v2882 = vunpack.c.h.b16 %v863
        %v2883 = vunpack.c.l.b16 %v864
        %v2884 = vunpack.c.h.b16 %v864
        %v2885 = vunpack.c.l.b16 %v865
        %v2886 = vunpack.c.h.b16 %v865
        %v2887 = vunpack.c.l.b16 %v866
        %v2888 = vunpack.c.h.b16 %v866
        %v2889 = vunpack.c.l.b16 %v867
        %v2890 = vunpack.c.h.b16 %v867
        %v2891 = vunpack.c.l.b16 %v868
        %v2892 = vunpack.c.h.b16 %v868
        %v2893 = vunpack.c.l.b16 %v869
        %v2894 = vunpack.c.h.b16 %v869
        %v2895 = vunpack.c.l.b16 %v870
        %v2896 = vunpack.c.h.b16 %v870
        %v2897 = vunpack.c.l.b16 %v871
        %v2898 = vunpack.c.h.b16 %v871
        %v2899 = vunpack.c.l.b16 %v872
        %v2900 = vunpack.c.h.b16 %v872
        %v2901 = vunpack.c.l.b16 %v873
        %v2902 = vunpack.c.h.b16 %v873
        %v2903 = vunpack.c.l.b16 %v874
        %v2904 = vunpack.c.h.b16 %v874
        %v2905 = vunpack.c.l.b16 %v875
        %v2906 = vunpack.c.h.b16 %v875
        %v2907 = vunpack.c.l.b16 %v876
        %v2908 = vunpack.c.h.b16 %v876
        %v2909 = vunpack.c.l.b16 %v877
        %v2910 = vunpack.c.h.b16 %v877
        %v2911 = vunpack.c.l.b16 %v878
        %v2912 = vunpack.c.h.b16 %v878
        %v2913 = vunpack.c.l.b16 %v879
        %v2914 = vunpack.c.h.b16 %v879
        %v2915 = vunpack.c.l.b16 %v880
        %v2916 = vunpack.c.h.b16 %v880
        %v2917 = vunpack.c.l.b16 %v881
        %v2918 = vunpack.c.h.b16 %v881
        %v2919 = vunpack.c.l.b16 %v882
        %v2920 = vunpack.c.h.b16 %v882
        %v2921 = vunpack.c.l.b16 %v883
        %v2922 = vunpack.c.h.b16 %v883
        %v2923 = vunpack.c.l.b16 %v884
        %v2924 = vunpack.c.h.b16 %v884
        %v2925 = vunpack.c.l.b16 %v885
        %v2926 = vunpack.c.h.b16 %v885
        %v2927 = vunpack.c.l.b16 %v886
        %v2928 = vunpack.c.h.b16 %v886
        %v2929 = vunpack.c.l.b16 %v887
        %v2930 = vunpack.c.h.b16 %v887
        %v2931 = vunpack.c.l.b16 %v888
        %v2932 = vunpack.c.h.b16 %v888
        %v2933 = vunpack.c.l.b16 %v889
        %v2934 = vunpack.c.h.b16 %v889
        %v2935 = vunpack.c.l.b16 %v890
        %v2936 = vunpack.c.h.b16 %v890
        %v2937 = vunpack.c.l.b16 %v891
        %v2938 = vunpack.c.h.b16 %v891
        %v2939 = vunpack.c.l.b16 %v892
        %v2940 = vunpack.c.h.b16 %v892
        %v2941 = vunpack.c.l.b16 %v893
        %v2942 = vunpack.c.h.b16 %v893
        %v2943 = vunpack.c.l.b16 %v894
        %v2944 = vunpack.c.h.b16 %v894
        %v2945 = vunpack.c.l.b16 %v895
        %v2946 = vunpack.c.h.b16 %v895
        %v2947 = vunpack.c.l.b16 %v896
        %v2948 = vunpack.c.h.b16 %v896
        %v2949 = vunpack.c.l.b16 %v897
        %v2950 = vunpack.c.h.b16 %v897
        %v2951 = vunpack.c.l.b16 %v898
        %v2952 = vunpack.c.h.b16 %v898
        %v2953 = vunpack.c.l.b16 %v899
        %v2954 = vunpack.c.h.b16 %v899
        %v2955 = vunpack.c.l.b16 %v900
        %v2956 = vunpack.c.h.b16 %v900
        %v2957 = vunpack.c.l.b16 %v901
        %v2958 = vunpack.c.h.b16 %v901
        %v2959 = vunpack.c.l.b16 %v902
        %v2960 = vunpack.c.h.b16 %v902
        %v2961 = vunpack.c.l.b16 %v903
        %v2962 = vunpack.c.h.b16 %v903
        %v2963 = vunpack.c.l.b16 %v904
        %v2964 = vunpack.c.h.b16 %v904
        %v2965 = vunpack.c.l.b16 %v905
        %v2966 = vunpack.c.h.b16 %v905
        %v2967 = vunpack.c.l.b16 %v906
        %v2968 = vunpack.c.h.b16 %v906
        %v2969 = vunpack.c.l.b16 %v907
        %v2970 = vunpack.c.h.b16 %v907
        %v2971 = vunpack.c.l.b16 %v908
        %v2972 = vunpack.c.h.b16 %v908
        %v2973 = vunpack.c.l.b16 %v909
        %v2974 = vunpack.c.h.b16 %v909
        %v2975 = vunpack.c.l.b16 %v910
        %v2976 = vunpack.c.h.b16 %v910
        %v2977 = vunpack.c.l.b16 %v911
        %v2978 = vunpack.c.h.b16 %v911
        %v2979 = vunpack.c.l.b16 %v912
        %v2980 = vunpack.c.h.b16 %v912
        %v2981 = vunpack.c.l.b16 %v913
        %v2982 = vunpack.c.h.b16 %v913
        %v2983 = vunpack.c.l.b16 %v914
        %v2984 = vunpack.c.h.b16 %v914
        %v2985 = vunpack.c.l.b16 %v915
        %v2986 = vunpack.c.h.b16 %v915
        %v2987 = vunpack.c.l.b16 %v916
        %v2988 = vunpack.c.h.b16 %v916
        %v2989 = vunpack.c.l.b16 %v917
        %v2990 = vunpack.c.h.b16 %v917
        %v2991 = vunpack.c.l.b16 %v918
        %v2992 = vunpack.c.h.b16 %v918
        %v2993 = vunpack.c.l.b16 %v919
        %v2994 = vunpack.c.h.b16 %v919
        %v2995 = vunpack.c.l.b16 %v920
        %v2996 = vunpack.c.h.b16 %v920
        %v2997 = vunpack.c.l.b16 %v921
        %v2998 = vunpack.c.h.b16 %v921
        %v2999 = vunpack.c.l.b16 %v922
        %v3000 = vunpack.c.h.b16 %v922
        %v3001 = vunpack.c.l.b16 %v923
        %v3002 = vunpack.c.h.b16 %v923
        %v3003 = vunpack.c.l.b16 %v924
        %v3004 = vunpack.c.h.b16 %v924
        %v3005 = vunpack.c.l.b16 %v925
        %v3006 = vunpack.c.h.b16 %v925
        %v3007 = vunpack.c.l.b16 %v926
        %v3008 = vunpack.c.h.b16 %v926
        %v3009 = vunpack.c.l.b16 %v927
        %v3010 = vunpack.c.h.b16 %v927
        %v3011 = vunpack.c.l.b16 %v928
        %v3012 = vunpack.c.h.b16 %v928
        %v3013 = vunpack.c.l.b16 %v929
        %v3014 = vunpack.c.h.b16 %v929
        %v3015 = vunpack.c.l.b16 %v930
        %v3016 = vunpack.c.h.b16 %v930
        %v3017 = vunpack.c.l.b16 %v931
        %v3018 = vunpack.c.h.b16 %v931
        %v3019 = vunpack.c.l.b16 %v932
        %v3020 = vunpack.c.h.b16 %v932
        %v3021 = vunpack.c.l.b16 %v933
        %v3022 = vunpack.c.h.b16 %v933
        %v3023 = vunpack.c.l.b16 %v934
        %v3024 = vunpack.c.h.b16 %v934
        %v3025 = vunpack.c.l.b16 %v935
        %v3026 = vunpack.c.h.b16 %v935
        %v3027 = vunpack.c.l.b16 %v936
        %v3028 = vunpack.c.h.b16 %v936
        %v3029 = vunpack.c.l.b16 %v937
        %v3030 = vunpack.c.h.b16 %v937
        %v3031 = vunpack.c.l.b16 %v938
        %v3032 = vunpack.c.h.b16 %v938
        %v3033 = vunpack.c.l.b16 %v939
        %v3034 = vunpack.c.h.b16 %v939
        %v3035 = vunpack.c.l.b16 %v940
        %v3036 = vunpack.c.h.b16 %v940
        %v3037 = vunpack.c.l.b16 %v941
        %v3038 = vunpack.c.h.b16 %v941
        %v3039 = vunpack.c.l.b16 %v942
        %v3040 = vunpack.c.h.b16 %v942
        %v3041 = vunpack.c.l.b16 %v943
        %v3042 = vunpack.c.h.b16 %v943
        %v3043 = vunpack.c.l.b16 %v944
        %v3044 = vunpack.c.h.b16 %v944
        %v3045 = vunpack.c.l.b16 %v945
        %v3046 = vunpack.c.h.b16 %v945
        %v3047 = vunpack.c.l.b16 %v946
        %v3048 = vunpack.c.h.b16 %v946
        %v3049 = vunpack.c.l.b16 %v947
        %v3050 = vunpack.c.h.b16 %v947
        %v3051 = vunpack.c.l.b16 %v948
        %v3052 = vunpack.c.h.b16 %v948
        %v3053 = vunpack.c.l.b16 %v949
        %v3054 = vunpack.c.h.b16 %v949
        %v3055 = vunpack.c.l.b16 %v950
        %v3056 = vunpack.c.h.b16 %v950
        %v3057 = vunpack.c.l.b16 %v951
        %v3058 = vunpack.c.h.b16 %v951
        %v3059 = vunpack.c.l.b16 %v952
        %v3060 = vunpack.c.h.b16 %v952
        %v3061 = vunpack.c.l.b16 %v953
        %v3062 = vunpack.c.h.b16 %v953
        %v3063 = vunpack.c.l.b16 %v954
        %v3064 = vunpack.c.h.b16 %v954
        %v3065 = vunpack.c.l.b16 %v955
        %v3066 = vunpack.c.h.b16 %v955
        %v3067 = vunpack.c.l.b16 %v956
        %v3068 = vunpack.c.h.b16 %v956
        %v3069 = vunpack.c.l.b16 %v957
        %v3070 = vunpack.c.h.b16 %v957
        %v3071 = vunpack.c.l.b16 %v958
        %v3072 = vunpack.c.h.b16 %v958
        %v3073 = vunpack.c.l.b16 %v959
        %v3074 = vunpack.c.h.b16 %v959
        %v3075 = vunpack.c.l.b16 %v960
        %v3076 = vunpack.c.h.b16 %v960
        %v3077 = vunpack.c.l.b16 %v961
        %v3078 = vunpack.c.h.b16 %v961
        %v3079 = vunpack.c.l.b16 %v962
        %v3080 = vunpack.c.h.b16 %v962
        %v3081 = vunpack.c.l.b16 %v963
        %v3082 = vunpack.c.h.b16 %v963
        %v3083 = vunpack.c.l.b16 %v964
        %v3084 = vunpack.c.h.b16 %v964
        %v3085 = vunpack.c.l.b16 %v965
        %v3086 = vunpack.c.h.b16 %v965
        %v3087 = vunpack.c.l.b16 %v966
        %v3088 = vunpack.c.h.b16 %v966
        %v3089 = vunpack.c.l.b16 %v967
        %v3090 = vunpack.c.h.b16 %v967
        %v3091 = vunpack.c.l.b16 %v968
        %v3092 = vunpack.c.h.b16 %v968
        %v3093 = vunpack.c.l.b16 %v969
        %v3094 = vunpack.c.h.b16 %v969
        %v3095 = vunpack.c.l.b16 %v970
        %v3096 = vunpack.c.h.b16 %v970
        %v3097 = vunpack.c.l.b16 %v971
        %v3098 = vunpack.c.h.b16 %v971
        %v3099 = vunpack.c.l.b16 %v972
        %v3100 = vunpack.c.h.b16 %v972
        %v3101 = vunpack.c.l.b16 %v973
        %v3102 = vunpack.c.h.b16 %v973
        %v3103 = vunpack.c.l.b16 %v974
        %v3104 = vunpack.c.h.b16 %v974
        %v3105 = vunpack.c.l.b16 %v975
        %v3106 = vunpack.c.h.b16 %v975
        %v3107 = vunpack.c.l.b16 %v976
        %v3108 = vunpack.c.h.b16 %v976
        %v3109 = vunpack.c.l.b16 %v977
        %v3110 = vunpack.c.h.b16 %v977
        %v3111 = vunpack.c.l.b16 %v978
        %v3112 = vunpack.c.h.b16 %v978
        %v3113 = vunpack.c.l.b16 %v979
        %v3114 = vunpack.c.h.b16 %v979
        %v3115 = vunpack.c.l.b16 %v980
        %v3116 = vunpack.c.h.b16 %v980
        %v3117 = vunpack.c.l.b16 %v981
        %v3118 = vunpack.c.h.b16 %v981
        %v3119 = vunpack.c.l.b16 %v982
        %v3120 = vunpack.c.h.b16 %v982
        %v3121 = vunpack.c.l.b16 %v983
        %v3122 = vunpack.c.h.b16 %v983
        %v3123 = vunpack.c.l.b16 %v984
        %v3124 = vunpack.c.h.b16 %v984
        %v3125 = vunpack.c.l.b16 %v985
        %v3126 = vunpack.c.h.b16 %v985
        %v3127 = vunpack.c.l.b16 %v986
        %v3128 = vunpack.c.h.b16 %v986
        %v3129 = vunpack.c.l.b16 %v987
        %v3130 = vunpack.c.h.b16 %v987
        %v3131 = vunpack.c.l.b16 %v988
        %v3132 = vunpack.c.h.b16 %v988
        %v3133 = vunpack.c.l.b16 %v989
        %v3134 = vunpack.c.h.b16 %v989
        %v3135 = vunpack.c.l.b16 %v990
        %v3136 = vunpack.c.h.b16 %v990
        %v3137 = vunpack.c.l.b16 %v991
        %v3138 = vunpack.c.h.b16 %v991
        %v3139 = vunpack.c.l.b16 %v992
        %v3140 = vunpack.c.h.b16 %v992
        %v3141 = vunpack.c.l.b16 %v993
        %v3142 = vunpack.c.h.b16 %v993
        %v3143 = vunpack.c.l.b16 %v994
        %v3144 = vunpack.c.h.b16 %v994
        %v3145 = vunpack.c.l.b16 %v995
        %v3146 = vunpack.c.h.b16 %v995
        %v3147 = vunpack.c.l.b16 %v996
        %v3148 = vunpack.c.h.b16 %v996
        %v3149 = vunpack.c.l.b16 %v997
        %v3150 = vunpack.c.h.b16 %v997
        %v3151 = vunpack.c.l.b16 %v998
        %v3152 = vunpack.c.h.b16 %v998
        %v3153 = vunpack.c.l.b16 %v999
        %v3154 = vunpack.c.h.b16 %v999
        %v3155 = vunpack.c.l.b16 %v1000
        %v3156 = vunpack.c.h.b16 %v1000
        %v3157 = vunpack.c.l.b16 %v1001
        %v3158 = vunpack.c.h.b16 %v1001
        %v3159 = vunpack.c.l.b16 %v1002
        %v3160 = vunpack.c.h.b16 %v1002
        %v3161 = vunpack.c.l.b16 %v1003
        %v3162 = vunpack.c.h.b16 %v1003
        %v3163 = vunpack.c.l.b16 %v1004
        %v3164 = vunpack.c.h.b16 %v1004
        %v3165 = vunpack.c.l.b16 %v1005
        %v3166 = vunpack.c.h.b16 %v1005
        %v3167 = vunpack.c.l.b16 %v1006
        %v3168 = vunpack.c.h.b16 %v1006
        %v3169 = vunpack.c.l.b16 %v1007
        %v3170 = vunpack.c.h.b16 %v1007
        %v3171 = vunpack.c.l.b16 %v1008
        %v3172 = vunpack.c.h.b16 %v1008
        %v3173 = vunpack.c.l.b16 %v1009
        %v3174 = vunpack.c.h.b16 %v1009
        %v3175 = vunpack.c.l.b16 %v1010
        %v3176 = vunpack.c.h.b16 %v1010
        %v3177 = vunpack.c.l.b16 %v1011
        %v3178 = vunpack.c.h.b16 %v1011
        %v3179 = vunpack.c.l.b16 %v1012
        %v3180 = vunpack.c.h.b16 %v1012
        %v3181 = vunpack.c.l.b16 %v1013
        %v3182 = vunpack.c.h.b16 %v1013
        %v3183 = vunpack.c.l.b16 %v1014
        %v3184 = vunpack.c.h.b16 %v1014
        %v3185 = vunpack.c.l.b16 %v1015
        %v3186 = vunpack.c.h.b16 %v1015
        %v3187 = vunpack.c.l.b16 %v1016
        %v3188 = vunpack.c.h.b16 %v1016
        %v3189 = vunpack.c.l.b16 %v1017
        %v3190 = vunpack.c.h.b16 %v1017
        %v3191 = vunpack.c.l.b16 %v1018
        %v3192 = vunpack.c.h.b16 %v1018
        %v3193 = vunpack.c.l.b16 %v1019
        %v3194 = vunpack.c.h.b16 %v1019
        %v3195 = vunpack.c.l.b16 %v1020
        %v3196 = vunpack.c.h.b16 %v1020
        %v3197 = vunpack.c.l.b16 %v1021
        %v3198 = vunpack.c.h.b16 %v1021
        %v3199 = vunpack.c.l.b16 %v1022
        %v3200 = vunpack.c.h.b16 %v1022
        %v3201 = vunpack.c.l.b16 %v1023
        %v3202 = vunpack.c.h.b16 %v1023
        %v3203 = vunpack.c.l.b16 %v1024
        %v3204 = vunpack.c.h.b16 %v1024
        %v3205 = vunpack.c.l.b16 %v1025
        %v3206 = vunpack.c.h.b16 %v1025
        %v3207 = vunpack.c.l.b16 %v1026
        %v3208 = vunpack.c.h.b16 %v1026
        %v3209 = vunpack.c.l.b16 %v1027
        %v3210 = vunpack.c.h.b16 %v1027
        %v3211 = vunpack.c.l.b16 %v1028
        %v3212 = vunpack.c.h.b16 %v1028
        %v3213 = vunpack.c.l.b16 %v1029
        %v3214 = vunpack.c.h.b16 %v1029
        %v3215 = vunpack.c.l.b16 %v1030
        %v3216 = vunpack.c.h.b16 %v1030
        %v3217 = vunpack.c.l.b16 %v1031
        %v3218 = vunpack.c.h.b16 %v1031
        %v3219 = vunpack.c.l.b16 %v1032
        %v3220 = vunpack.c.h.b16 %v1032
        %v3221 = vunpack.c.l.b16 %v1033
        %v3222 = vunpack.c.h.b16 %v1033
        %v3223 = vunpack.c.l.b16 %v1034
        %v3224 = vunpack.c.h.b16 %v1034
        %v3225 = vunpack.c.l.b16 %v1035
        %v3226 = vunpack.c.h.b16 %v1035
        %v3227 = vunpack.c.l.b16 %v1036
        %v3228 = vunpack.c.h.b16 %v1036
        %v3229 = vunpack.c.l.b16 %v1037
        %v3230 = vunpack.c.h.b16 %v1037
        %v3231 = vunpack.c.l.b16 %v1038
        %v3232 = vunpack.c.h.b16 %v1038
        %v3233 = vunpack.c.l.b16 %v1039
        %v3234 = vunpack.c.h.b16 %v1039
        %v3235 = vunpack.c.l.b16 %v1040
        %v3236 = vunpack.c.h.b16 %v1040
        %v3237 = vunpack.c.l.b16 %v1041
        %v3238 = vunpack.c.h.b16 %v1041
        %v3239 = vunpack.c.l.b16 %v1042
        %v3240 = vunpack.c.h.b16 %v1042
        %v3241 = vunpack.c.l.b16 %v1043
        %v3242 = vunpack.c.h.b16 %v1043
        %v3243 = vunpack.c.l.b16 %v1044
        %v3244 = vunpack.c.h.b16 %v1044
        %v3245 = vunpack.c.l.b16 %v1045
        %v3246 = vunpack.c.h.b16 %v1045
        %v3247 = vunpack.c.l.b16 %v1046
        %v3248 = vunpack.c.h.b16 %v1046
        %v3249 = vunpack.c.l.b16 %v1047
        %v3250 = vunpack.c.h.b16 %v1047
        %v3251 = vunpack.c.l.b16 %v1048
        %v3252 = vunpack.c.h.b16 %v1048
        %v3253 = vunpack.c.l.b16 %v1049
        %v3254 = vunpack.c.h.b16 %v1049
        %v3255 = vunpack.c.l.b16 %v1050
        %v3256 = vunpack.c.h.b16 %v1050
        %v3257 = vunpack.c.l.b16 %v1051
        %v3258 = vunpack.c.h.b16 %v1051
        %v3259 = vunpack.c.l.b16 %v1052
        %v3260 = vunpack.c.h.b16 %v1052
        %v3261 = vunpack.c.l.b16 %v1053
        %v3262 = vunpack.c.h.b16 %v1053
        %v3263 = vunpack.c.l.b16 %v1054
        %v3264 = vunpack.c.h.b16 %v1054
        %v3265 = vunpack.c.l.b16 %v1055
        %v3266 = vunpack.c.h.b16 %v1055
        %v3267 = vunpack.c.l.b16 %v1056
        %v3268 = vunpack.c.h.b16 %v1056
        %v3269 = vunpack.c.l.b16 %v1057
        %v3270 = vunpack.c.h.b16 %v1057
        %v3271 = vunpack.c.l.b16 %v1058
        %v3272 = vunpack.c.h.b16 %v1058
        %v3273 = vunpack.c.l.b16 %v1059
        %v3274 = vunpack.c.h.b16 %v1059
        %v3275 = vunpack.c.l.b16 %v1060
        %v3276 = vunpack.c.h.b16 %v1060
        %v3277 = vunpack.c.l.b16 %v1061
        %v3278 = vunpack.c.h.b16 %v1061
        %v3279 = vunpack.c.l.b16 %v1062
        %v3280 = vunpack.c.h.b16 %v1062
        %v3281 = vunpack.c.l.b16 %v1063
        %v3282 = vunpack.c.h.b16 %v1063
        %v3283 = vunpack.c.l.b16 %v1064
        %v3284 = vunpack.c.h.b16 %v1064
        %v3285 = vunpack.c.l.b16 %v1065
        %v3286 = vunpack.c.h.b16 %v1065
        %v3287 = vunpack.c.l.b16 %v1066
        %v3288 = vunpack.c.h.b16 %v1066
        %v3289 = vunpack.c.l.b16 %v1067
        %v3290 = vunpack.c.h.b16 %v1067
        %v3291 = vunpack.c.l.b16 %v1068
        %v3292 = vunpack.c.h.b16 %v1068
        %v3293 = vunpack.c.l.b16 %v1069
        %v3294 = vunpack.c.h.b16 %v1069
        %v3295 = vunpack.c.l.b16 %v1070
        %v3296 = vunpack.c.h.b16 %v1070
        %v3297 = vunpack.c.l.b16 %v1071
        %v3298 = vunpack.c.h.b16 %v1071
        %v3299 = vunpack.c.l.b16 %v1072
        %v3300 = vunpack.c.h.b16 %v1072
        %v3301 = vunpack.c.l.b16 %v1073
        %v3302 = vunpack.c.h.b16 %v1073
        %v3303 = vunpack.c.l.b16 %v1074
        %v3304 = vunpack.c.h.b16 %v1074
        %v3305 = vunpack.c.l.b16 %v1075
        %v3306 = vunpack.c.h.b16 %v1075
        %v3307 = vunpack.c.l.b16 %v1076
        %v3308 = vunpack.c.h.b16 %v1076
        %v3309 = vunpack.c.l.b16 %v1077
        %v3310 = vunpack.c.h.b16 %v1077
        %v3311 = vunpack.c.l.b16 %v1078
        %v3312 = vunpack.c.h.b16 %v1078
        %v3313 = vunpack.c.l.b16 %v1079
        %v3314 = vunpack.c.h.b16 %v1079
        %v3315 = vunpack.c.l.b16 %v1080
        %v3316 = vunpack.c.h.b16 %v1080
        %v3317 = vunpack.c.l.b16 %v1081
        %v3318 = vunpack.c.h.b16 %v1081
        %v3319 = vunpack.c.l.b16 %v1082
        %v3320 = vunpack.c.h.b16 %v1082
        %v3321 = vunpack.c.l.b16 %v1083
        %v3322 = vunpack.c.h.b16 %v1083
        %v3323 = vunpack.c.l.b16 %v1084
        %v3324 = vunpack.c.h.b16 %v1084
        %v3325 = vunpack.c.l.b16 %v1085
        %v3326 = vunpack.c.h.b16 %v1085
        %v3327 = vunpack.c.l.b16 %v1086
        %v3328 = vunpack.c.h.b16 %v1086
        %v3329 = vunpack.c.l.b16 %v1087
        %v3330 = vunpack.c.h.b16 %v1087
        %v3331 = vunpack.c.l.b16 %v1088
        %v3332 = vunpack.c.h.b16 %v1088
        %v3333 = vunpack.c.l.b16 %v1089
        %v3334 = vunpack.c.h.b16 %v1089
        %v3335 = vunpack.c.l.b16 %v1090
        %v3336 = vunpack.c.h.b16 %v1090
        %v3337 = vunpack.c.l.b16 %v1091
        %v3338 = vunpack.c.h.b16 %v1091
        %v3339 = vunpack.c.l.b16 %v1092
        %v3340 = vunpack.c.h.b16 %v1092
        %v3341 = vunpack.c.l.b16 %v1093
        %v3342 = vunpack.c.h.b16 %v1093
        %v3343 = vunpack.c.l.b16 %v1094
        %v3344 = vunpack.c.h.b16 %v1094
        %v3345 = vunpack.c.l.b16 %v1095
        %v3346 = vunpack.c.h.b16 %v1095
        %v3347 = vunpack.c.l.b16 %v1096
        %v3348 = vunpack.c.h.b16 %v1096
        %v3349 = vunpack.c.l.b16 %v1097
        %v3350 = vunpack.c.h.b16 %v1097
        %v3351 = vunpack.c.l.b16 %v1098
        %v3352 = vunpack.c.h.b16 %v1098
        %v3353 = vunpack.c.l.b16 %v1099
        %v3354 = vunpack.c.h.b16 %v1099
        %v3355 = vunpack.c.l.b16 %v1100
        %v3356 = vunpack.c.h.b16 %v1100
        %v3357 = vunpack.c.l.b16 %v1101
        %v3358 = vunpack.c.h.b16 %v1101
        %v3359 = vunpack.c.l.b16 %v1102
        %v3360 = vunpack.c.h.b16 %v1102
        %v3361 = vunpack.c.l.b16 %v1103
        %v3362 = vunpack.c.h.b16 %v1103
        %v3363 = vunpack.c.l.b16 %v1104
        %v3364 = vunpack.c.h.b16 %v1104
        %v3365 = vunpack.c.l.b16 %v1105
        %v3366 = vunpack.c.h.b16 %v1105
        %v3367 = vunpack.c.l.b16 %v1106
        %v3368 = vunpack.c.h.b16 %v1106
        %v3369 = vunpack.c.l.b16 %v1107
        %v3370 = vunpack.c.h.b16 %v1107
        %v3371 = vunpack.c.l.b16 %v1108
        %v3372 = vunpack.c.h.b16 %v1108
        %v3373 = vunpack.c.l.b16 %v1109
        %v3374 = vunpack.c.h.b16 %v1109
        %v3375 = vunpack.c.l.b16 %v1110
        %v3376 = vunpack.c.h.b16 %v1110
        %v3377 = vunpack.c.l.b16 %v1111
        %v3378 = vunpack.c.h.b16 %v1111
        %v3379 = vunpack.c.l.b16 %v1112
        %v3380 = vunpack.c.h.b16 %v1112
        %v3381 = vunpack.c.l.b16 %v1113
        %v3382 = vunpack.c.h.b16 %v1113
        %v3383 = vunpack.c.l.b16 %v1114
        %v3384 = vunpack.c.h.b16 %v1114
        %v3385 = vunpack.c.l.b16 %v1115
        %v3386 = vunpack.c.h.b16 %v1115
        %v3387 = vunpack.c.l.b16 %v1116
        %v3388 = vunpack.c.h.b16 %v1116
        %v3389 = vunpack.c.l.b16 %v1117
        %v3390 = vunpack.c.h.b16 %v1117
        %v3391 = vunpack.c.l.b16 %v1118
        %v3392 = vunpack.c.h.b16 %v1118
        %v3393 = vunpack.c.l.b16 %v1119
        %v3394 = vunpack.c.h.b16 %v1119
        %v3395 = vunpack.c.l.b16 %v1120
        %v3396 = vunpack.c.h.b16 %v1120
        %v3397 = vunpack.c.l.b16 %v1121
        %v3398 = vunpack.c.h.b16 %v1121
        %v3399 = vunpack.c.l.b16 %v1122
        %v3400 = vunpack.c.h.b16 %v1122
        %v3401 = vunpack.c.l.b16 %v1123
        %v3402 = vunpack.c.h.b16 %v1123
        %v3403 = vunpack.c.l.b16 %v1124
        %v3404 = vunpack.c.h.b16 %v1124
        %v3405 = vunpack.c.l.b16 %v1125
        %v3406 = vunpack.c.h.b16 %v1125
        %v3407 = vunpack.c.l.b16 %v1126
        %v3408 = vunpack.c.h.b16 %v1126
        %v3409 = vunpack.c.l.b16 %v1127
        %v3410 = vunpack.c.h.b16 %v1127
        %v3411 = vunpack.c.l.b16 %v1128
        %v3412 = vunpack.c.h.b16 %v1128
        %v3413 = vunpack.c.l.b16 %v1129
        %v3414 = vunpack.c.h.b16 %v1129
        %v3415 = vunpack.c.l.b16 %v1130
        %v3416 = vunpack.c.h.b16 %v1130
        %v3417 = vunpack.c.l.b16 %v1131
        %v3418 = vunpack.c.h.b16 %v1131
        %v3419 = vunpack.c.l.b16 %v1132
        %v3420 = vunpack.c.h.b16 %v1132
        %v3421 = vunpack.c.l.b16 %v1133
        %v3422 = vunpack.c.h.b16 %v1133
        %v3423 = vunpack.c.l.b16 %v1134
        %v3424 = vunpack.c.h.b16 %v1134
        %v3425 = vunpack.c.l.b16 %v1135
        %v3426 = vunpack.c.h.b16 %v1135
        %v3427 = vunpack.c.l.b16 %v1136
        %v3428 = vunpack.c.h.b16 %v1136
        %v3429 = vunpack.c.l.b16 %v1137
        %v3430 = vunpack.c.h.b16 %v1137
        %v3431 = vunpack.c.l.b16 %v1138
        %v3432 = vunpack.c.h.b16 %v1138
        %v3433 = vunpack.c.l.b16 %v1139
        %v3434 = vunpack.c.h.b16 %v1139
        %v3435 = vunpack.c.l.b16 %v1140
        %v3436 = vunpack.c.h.b16 %v1140
        %v3437 = vunpack.c.l.b16 %v1141
        %v3438 = vunpack.c.h.b16 %v1141
        %v3439 = vunpack.c.l.b16 %v1142
        %v3440 = vunpack.c.h.b16 %v1142
        %v3441 = vunpack.c.l.b16 %v1143
        %v3442 = vunpack.c.h.b16 %v1143
        %v3443 = vunpack.c.l.b16 %v1144
        %v3444 = vunpack.c.h.b16 %v1144
        %v3445 = vunpack.c.l.b16 %v1145
        %v3446 = vunpack.c.h.b16 %v1145
        %v3447 = vunpack.c.l.b16 %v1146
        %v3448 = vunpack.c.h.b16 %v1146
        %v3449 = vunpack.c.l.b16 %v1147
        %v3450 = vunpack.c.h.b16 %v1147
        %v3451 = vunpack.c.l.b16 %v1148
        %v3452 = vunpack.c.h.b16 %v1148
        %v3453 = vunpack.c.l.b16 %v1149
        %v3454 = vunpack.c.h.b16 %v1149
        %v3455 = vunpack.c.l.b16 %v1150
        %v3456 = vunpack.c.h.b16 %v1150
        %v3457 = vunpack.c.l.b16 %v1151
        %v3458 = vunpack.c.h.b16 %v1151
        %v3459 = vunpack.c.l.b16 %v1152
        %v3460 = vunpack.c.h.b16 %v1152
        %v3461 = vunpack.c.l.b16 %v1153
        %v3462 = vunpack.c.h.b16 %v1153
        %v3463 = vunpack.c.l.b16 %v1154
        %v3464 = vunpack.c.h.b16 %v1154
        %v3465 = vunpack.c.l.b16 %v1155
        %v3466 = vunpack.c.h.b16 %v1155
        %v3467 = vunpack.c.l.b16 %v1156
        %v3468 = vunpack.c.h.b16 %v1156
        %v3469 = vunpack.c.l.b16 %v1157
        %v3470 = vunpack.c.h.b16 %v1157
        %v3471 = vunpack.c.l.b16 %v1158
        %v3472 = vunpack.c.h.b16 %v1158
        %v3473 = vunpack.c.l.b16 %v1159
        %v3474 = vunpack.c.h.b16 %v1159
        %v3475 = vunpack.c.l.b16 %v1160
        %v3476 = vunpack.c.h.b16 %v1160
        %v3477 = vunpack.c.l.b16 %v1161
        %v3478 = vunpack.c.h.b16 %v1161
        %v3479 = vunpack.c.l.b16 %v1162
        %v3480 = vunpack.c.h.b16 %v1162
        %v3481 = vunpack.c.l.b16 %v1163
        %v3482 = vunpack.c.h.b16 %v1163
        %v3483 = vunpack.c.l.b16 %v1164
        %v3484 = vunpack.c.h.b16 %v1164
        %v3485 = vunpack.c.l.b16 %v1165
        %v3486 = vunpack.c.h.b16 %v1165
        %v3487 = vunpack.c.l.b16 %v1166
        %v3488 = vunpack.c.h.b16 %v1166
        %v3489 = vunpack.c.l.b16 %v1167
        %v3490 = vunpack.c.h.b16 %v1167
        %v3491 = vunpack.c.l.b16 %v1168
        %v3492 = vunpack.c.h.b16 %v1168
        %v3493 = vunpack.c.l.b16 %v1169
        %v3494 = vunpack.c.h.b16 %v1169
        %v3495 = vunpack.c.l.b16 %v1170
        %v3496 = vunpack.c.h.b16 %v1170
        %v3497 = vunpack.c.l.b16 %v1171
        %v3498 = vunpack.c.h.b16 %v1171
        %v3499 = vunpack.c.l.b16 %v1172
        %v3500 = vunpack.c.h.b16 %v1172
        %v3501 = vunpack.c.l.b16 %v1173
        %v3502 = vunpack.c.h.b16 %v1173
        %v3503 = vunpack.c.l.b16 %v1174
        %v3504 = vunpack.c.h.b16 %v1174
        %v3505 = vunpack.c.l.b16 %v1175
        %v3506 = vunpack.c.h.b16 %v1175
        %v3507 = vunpack.c.l.b16 %v1176
        %v3508 = vunpack.c.h.b16 %v1176
        %v3509 = vunpack.c.l.b16 %v1177
        %v3510 = vunpack.c.h.b16 %v1177
        %v3511 = vunpack.c.l.b16 %v1178
        %v3512 = vunpack.c.h.b16 %v1178
        %v3513 = vunpack.c.l.b16 %v1179
        %v3514 = vunpack.c.h.b16 %v1179
        %v3515 = vunpack.c.l.b16 %v1180
        %v3516 = vunpack.c.h.b16 %v1180
        %v3517 = vunpack.c.l.b16 %v1181
        %v3518 = vunpack.c.h.b16 %v1181
        %v3519 = vunpack.c.l.b16 %v1182
        %v3520 = vunpack.c.h.b16 %v1182
        %v3521 = vunpack.c.l.b16 %v1183
        %v3522 = vunpack.c.h.b16 %v1183
        %v3523 = vunpack.c.l.b16 %v1184
        %v3524 = vunpack.c.h.b16 %v1184
        %v3525 = vunpack.c.l.b16 %v1185
        %v3526 = vunpack.c.h.b16 %v1185
        %v3527 = vunpack.c.l.b16 %v1186
        %v3528 = vunpack.c.h.b16 %v1186
        %v3529 = vunpack.c.l.b16 %v1187
        %v3530 = vunpack.c.h.b16 %v1187
        %v3531 = vunpack.c.l.b16 %v1188
        %v3532 = vunpack.c.h.b16 %v1188
        %v3533 = vunpack.c.l.b16 %v1189
        %v3534 = vunpack.c.h.b16 %v1189
        %v3535 = vunpack.c.l.b16 %v1190
        %v3536 = vunpack.c.h.b16 %v1190
        %v3537 = vunpack.c.l.b16 %v1191
        %v3538 = vunpack.c.h.b16 %v1191
        %v3539 = vunpack.c.l.b16 %v1192
        %v3540 = vunpack.c.h.b16 %v1192
        %v3541 = vunpack.c.l.b16 %v1193
        %v3542 = vunpack.c.h.b16 %v1193
        %v3543 = vunpack.c.l.b16 %v1194
        %v3544 = vunpack.c.h.b16 %v1194
        %v3545 = vunpack.c.l.b16 %v1195
        %v3546 = vunpack.c.h.b16 %v1195
        %v3547 = vunpack.c.l.b16 %v1196
        %v3548 = vunpack.c.h.b16 %v1196
        %v3549 = vunpack.c.l.b16 %v1197
        %v3550 = vunpack.c.h.b16 %v1197
        %v3551 = vunpack.c.l.b16 %v1198
        %v3552 = vunpack.c.h.b16 %v1198
        %v3553 = vunpack.c.l.b16 %v1199
        %v3554 = vunpack.c.h.b16 %v1199
        %v3555 = vunpack.c.l.b16 %v1200
        %v3556 = vunpack.c.h.b16 %v1200
        %v3557 = vunpack.c.l.b16 %v1201
        %v3558 = vunpack.c.h.b16 %v1201
        %v3559 = vunpack.c.l.b16 %v1202
        %v3560 = vunpack.c.h.b16 %v1202
        %v3561 = vunpack.c.l.b16 %v1203
        %v3562 = vunpack.c.h.b16 %v1203
        %v3563 = vunpack.c.l.b16 %v1204
        %v3564 = vunpack.c.h.b16 %v1204
        %v3565 = vunpack.c.l.b16 %v1205
        %v3566 = vunpack.c.h.b16 %v1205
        %v3567 = vunpack.c.l.b16 %v1206
        %v3568 = vunpack.c.h.b16 %v1206
        %v3569 = vunpack.c.l.b16 %v1207
        %v3570 = vunpack.c.h.b16 %v1207
        %v3571 = vunpack.c.l.b16 %v1208
        %v3572 = vunpack.c.h.b16 %v1208
        %v3573 = vunpack.c.l.b16 %v1209
        %v3574 = vunpack.c.h.b16 %v1209
        %v3575 = vunpack.c.l.b16 %v1210
        %v3576 = vunpack.c.h.b16 %v1210
        %v3577 = vunpack.c.l.b16 %v1211
        %v3578 = vunpack.c.h.b16 %v1211
        %v3579 = vunpack.c.l.b16 %v1212
        %v3580 = vunpack.c.h.b16 %v1212
        %v3581 = vunpack.c.l.b16 %v1213
        %v3582 = vunpack.c.h.b16 %v1213
        %v3583 = vunpack.c.l.b16 %v1214
        %v3584 = vunpack.c.h.b16 %v1214
        %v3585 = vunpack.c.l.b16 %v1215
        %v3586 = vunpack.c.h.b16 %v1215
        %v3587 = vunpack.c.l.b16 %v1216
        %v3588 = vunpack.c.h.b16 %v1216
        %v3589 = vunpack.c.l.b16 %v1217
        %v3590 = vunpack.c.h.b16 %v1217
        %v3591 = vunpack.c.l.b16 %v1218
        %v3592 = vunpack.c.h.b16 %v1218
        %v3593 = vunpack.c.l.b16 %v1219
        %v3594 = vunpack.c.h.b16 %v1219
        %v3595 = vunpack.c.l.b16 %v1220
        %v3596 = vunpack.c.h.b16 %v1220
        %v3597 = vunpack.c.l.b16 %v1221
        %v3598 = vunpack.c.h.b16 %v1221
        %v3599 = vunpack.c.l.b16 %v1222
        %v3600 = vunpack.c.h.b16 %v1222
        %v3601 = vunpack.c.l.b16 %v1223
        %v3602 = vunpack.c.h.b16 %v1223
        %v3603 = vunpack.c.l.b16 %v1224
        %v3604 = vunpack.c.h.b16 %v1224
        %v3605 = vunpack.c.l.b16 %v1225
        %v3606 = vunpack.c.h.b16 %v1225
        %v3607 = vunpack.c.l.b16 %v1226
        %v3608 = vunpack.c.h.b16 %v1226
        %v3609 = vunpack.c.l.b16 %v1227
        %v3610 = vunpack.c.h.b16 %v1227
        %v3611 = vunpack.c.l.b16 %v1228
        %v3612 = vunpack.c.h.b16 %v1228
        %v3613 = vunpack.c.l.b16 %v1229
        %v3614 = vunpack.c.h.b16 %v1229
        %v3615 = vunpack.c.l.b16 %v1230
        %v3616 = vunpack.c.h.b16 %v1230
        %v3617 = vunpack.c.l.b16 %v1231
        %v3618 = vunpack.c.h.b16 %v1231
        %v3619 = vunpack.c.l.b16 %v1232
        %v3620 = vunpack.c.h.b16 %v1232
        %v3621 = vunpack.c.l.b16 %v1233
        %v3622 = vunpack.c.h.b16 %v1233
        %v3623 = vunpack.c.l.b16 %v1234
        %v3624 = vunpack.c.h.b16 %v1234
        %v3625 = vunpack.c.l.b16 %v1235
        %v3626 = vunpack.c.h.b16 %v1235
        %v3627 = vunpack.c.l.b16 %v1236
        %v3628 = vunpack.c.h.b16 %v1236
        %v3629 = vunpack.c.l.b16 %v1237
        %v3630 = vunpack.c.h.b16 %v1237
        %v3631 = vunpack.c.l.b16 %v1238
        %v3632 = vunpack.c.h.b16 %v1238
        %v3633 = vunpack.c.l.b16 %v1239
        %v3634 = vunpack.c.h.b16 %v1239
        %v3635 = vunpack.c.l.b16 %v1240
        %v3636 = vunpack.c.h.b16 %v1240
        %v3637 = vunpack.c.l.b16 %v1241
        %v3638 = vunpack.c.h.b16 %v1241
        %v3639 = vunpack.c.l.b16 %v1242
        %v3640 = vunpack.c.h.b16 %v1242
        %v3641 = vunpack.c.l.b16 %v1243
        %v3642 = vunpack.c.h.b16 %v1243
        %v3643 = vunpack.c.l.b16 %v1244
        %v3644 = vunpack.c.h.b16 %v1244
        %v3645 = vunpack.c.l.b16 %v1245
        %v3646 = vunpack.c.h.b16 %v1245
        %v3647 = vunpack.c.l.b16 %v1246
        %v3648 = vunpack.c.h.b16 %v1246
        %v3649 = vunpack.c.l.b16 %v1247
        %v3650 = vunpack.c.h.b16 %v1247
        %v3651 = vunpack.c.l.b16 %v1248
        %v3652 = vunpack.c.h.b16 %v1248
        %v3653 = vunpack.c.l.b16 %v1249
        %v3654 = vunpack.c.h.b16 %v1249
        %v3655 = vunpack.c.l.b16 %v1250
        %v3656 = vunpack.c.h.b16 %v1250
        %v3657 = vunpack.c.l.b16 %v1251
        %v3658 = vunpack.c.h.b16 %v1251
        %v3659 = vunpack.c.l.b16 %v1252
        %v3660 = vunpack.c.h.b16 %v1252
        %v3661 = vunpack.c.l.b16 %v1253
        %v3662 = vunpack.c.h.b16 %v1253
        %v3663 = vunpack.c.l.b16 %v1254
        %v3664 = vunpack.c.h.b16 %v1254
        %v3665 = vunpack.c.l.b16 %v1255
        %v3666 = vunpack.c.h.b16 %v1255
        %v3667 = vunpack.c.l.b16 %v1256
        %v3668 = vunpack.c.h.b16 %v1256
        %v3669 = vunpack.c.l.b16 %v1257
        %v3670 = vunpack.c.h.b16 %v1257
        %v3671 = vunpack.c.l.b16 %v1258
        %v3672 = vunpack.c.h.b16 %v1258
        %v3673 = vunpack.c.l.b16 %v1259
        %v3674 = vunpack.c.h.b16 %v1259
        %v3675 = vunpack.c.l.b16 %v1260
        %v3676 = vunpack.c.h.b16 %v1260
        %v3677 = vunpack.c.l.b16 %v1261
        %v3678 = vunpack.c.h.b16 %v1261
        %v3679 = vunpack.c.l.b16 %v1262
        %v3680 = vunpack.c.h.b16 %v1262
        %v3681 = vunpack.c.l.b16 %v1263
        %v3682 = vunpack.c.h.b16 %v1263
        %v3683 = vunpack.c.l.b16 %v1264
        %v3684 = vunpack.c.h.b16 %v1264
        %v3685 = vunpack.c.l.b16 %v1265
        %v3686 = vunpack.c.h.b16 %v1265
        %v3687 = vunpack.c.l.b16 %v1266
        %v3688 = vunpack.c.h.b16 %v1266
        %v3689 = vunpack.c.l.b16 %v1267
        %v3690 = vunpack.c.h.b16 %v1267
        %v3691 = vunpack.c.l.b16 %v1268
        %v3692 = vunpack.c.h.b16 %v1268
        %v3693 = vunpack.c.l.b16 %v1269
        %v3694 = vunpack.c.h.b16 %v1269
        %v3695 = vunpack.c.l.b16 %v1270
        %v3696 = vunpack.c.h.b16 %v1270
        %v3697 = vunpack.c.l.b16 %v1271
        %v3698 = vunpack.c.h.b16 %v1271
        %v3699 = vunpack.c.l.b16 %v1272
        %v3700 = vunpack.c.h.b16 %v1272
        %v3701 = vunpack.c.l.b16 %v1273
        %v3702 = vunpack.c.h.b16 %v1273
        %v3703 = vunpack.c.l.b16 %v1274
        %v3704 = vunpack.c.h.b16 %v1274
        %v3705 = vunpack.c.l.b16 %v1275
        %v3706 = vunpack.c.h.b16 %v1275
        %v3707 = vunpack.c.l.b16 %v1276
        %v3708 = vunpack.c.h.b16 %v1276
        %v3709 = vunpack.c.l.b16 %v1277
        %v3710 = vunpack.c.h.b16 %v1277
        %v3711 = vunpack.c.l.b16 %v1278
        %v3712 = vunpack.c.h.b16 %v1278
        %v3713 = vunpack.c.l.b16 %v1279
        %v3714 = vunpack.c.h.b16 %v1279
        %v3715 = vunpack.c.l.b16 %v1280
        %v3716 = vunpack.c.h.b16 %v1280
        %v3717 = vunpack.c.l.b16 %v1281
        %v3718 = vunpack.c.h.b16 %v1281
        %v3719 = vunpack.c.l.b16 %v1282
        %v3720 = vunpack.c.h.b16 %v1282
        %v3721 = vunpack.c.l.b16 %v1283
        %v3722 = vunpack.c.h.b16 %v1283
        %v3723 = vunpack.c.l.b16 %v1284
        %v3724 = vunpack.c.h.b16 %v1284
        %v3725 = vunpack.c.l.b16 %v1285
        %v3726 = vunpack.c.h.b16 %v1285
        %v3727 = vunpack.c.l.b16 %v1286
        %v3728 = vunpack.c.h.b16 %v1286
        %v3729 = vunpack.c.l.b16 %v1287
        %v3730 = vunpack.c.h.b16 %v1287
        %v3731 = vunpack.c.l.b16 %v1288
        %v3732 = vunpack.c.h.b16 %v1288
        %v3733 = vunpack.c.l.b16 %v1289
        %v3734 = vunpack.c.h.b16 %v1289
        %v3735 = vunpack.c.l.b16 %v1290
        %v3736 = vunpack.c.h.b16 %v1290
        %v3737 = vunpack.c.l.b16 %v1291
        %v3738 = vunpack.c.h.b16 %v1291
        %v3739 = vunpack.c.l.b16 %v1292
        %v3740 = vunpack.c.h.b16 %v1292
        %v3741 = vunpack.c.l.b16 %v1293
        %v3742 = vunpack.c.h.b16 %v1293
        %v3743 = vunpack.c.l.b16 %v1294
        %v3744 = vunpack.c.h.b16 %v1294
        %v3745 = vunpack.c.l.b16 %v1295
        %v3746 = vunpack.c.h.b16 %v1295
        %v3747 = vunpack.c.l.b16 %v1296
        %v3748 = vunpack.c.h.b16 %v1296
        %v3749 = vunpack.c.l.b16 %v1297
        %v3750 = vunpack.c.h.b16 %v1297
        %v3751 = vunpack.c.l.b16 %v1298
        %v3752 = vunpack.c.h.b16 %v1298
        %v3753 = vunpack.c.l.b16 %v1299
        %v3754 = vunpack.c.h.b16 %v1299
        %v3755 = vunpack.c.l.b16 %v1300
        %v3756 = vunpack.c.h.b16 %v1300
        %v3757 = vunpack.c.l.b16 %v1301
        %v3758 = vunpack.c.h.b16 %v1301
        %v3759 = vunpack.c.l.b16 %v1302
        %v3760 = vunpack.c.h.b16 %v1302
        %v3761 = vunpack.c.l.b16 %v1303
        %v3762 = vunpack.c.h.b16 %v1303
        %v3763 = vunpack.c.l.b16 %v1304
        %v3764 = vunpack.c.h.b16 %v1304
        %v3765 = vunpack.c.l.b16 %v1305
        %v3766 = vunpack.c.h.b16 %v1305
        %v3767 = vunpack.c.l.b16 %v1306
        %v3768 = vunpack.c.h.b16 %v1306
        %v3769 = vunpack.c.l.b16 %v1307
        %v3770 = vunpack.c.h.b16 %v1307
        %v3771 = vunpack.c.l.b16 %v1308
        %v3772 = vunpack.c.h.b16 %v1308
        %v3773 = vunpack.c.l.b16 %v1309
        %v3774 = vunpack.c.h.b16 %v1309
        %v3775 = vunpack.c.l.b16 %v1310
        %v3776 = vunpack.c.h.b16 %v1310
        %v3777 = vunpack.c.l.b16 %v1311
        %v3778 = vunpack.c.h.b16 %v1311
        %v3779 = vunpack.c.l.b16 %v1312
        %v3780 = vunpack.c.h.b16 %v1312
        %v3781 = vunpack.c.l.b16 %v1313
        %v3782 = vunpack.c.h.b16 %v1313
        %v3783 = vunpack.c.l.b16 %v1314
        %v3784 = vunpack.c.h.b16 %v1314
        %v3785 = vunpack.c.l.b16 %v1315
        %v3786 = vunpack.c.h.b16 %v1315
        %v3787 = vunpack.c.l.b16 %v1316
        %v3788 = vunpack.c.h.b16 %v1316
        %v3789 = vunpack.c.l.b16 %v1317
        %v3790 = vunpack.c.h.b16 %v1317
        %v3791 = vunpack.c.l.b16 %v1318
        %v3792 = vunpack.c.h.b16 %v1318
        %v3793 = vunpack.c.l.b16 %v1319
        %v3794 = vunpack.c.h.b16 %v1319
        %v3795 = vunpack.c.l.b16 %v1320
        %v3796 = vunpack.c.h.b16 %v1320
        %v3797 = vunpack.c.l.b16 %v1321
        %v3798 = vunpack.c.h.b16 %v1321
        %v3799 = vunpack.c.l.b16 %v1322
        %v3800 = vunpack.c.h.b16 %v1322
        %v3801 = vunpack.c.l.b16 %v1323
        %v3802 = vunpack.c.h.b16 %v1323
        %v3803 = vunpack.c.l.b16 %v1324
        %v3804 = vunpack.c.h.b16 %v1324
        %v3805 = vunpack.c.l.b16 %v1325
        %v3806 = vunpack.c.h.b16 %v1325
        %v3807 = vunpack.c.l.b16 %v1326
        %v3808 = vunpack.c.h.b16 %v1326
        %v3809 = vunpack.c.l.b16 %v1327
        %v3810 = vunpack.c.h.b16 %v1327
        %v3811 = vunpack.c.l.b16 %v1328
        %v3812 = vunpack.c.h.b16 %v1328
        %v3813 = vunpack.c.l.b16 %v1329
        %v3814 = vunpack.c.h.b16 %v1329
        %v3815 = vunpack.c.l.b16 %v1330
        %v3816 = vunpack.c.h.b16 %v1330
        %v3817 = vunpack.c.l.b16 %v1331
        %v3818 = vunpack.c.h.b16 %v1331
        %v3819 = vunpack.c.l.b16 %v1332
        %v3820 = vunpack.c.h.b16 %v1332
        %v3821 = vunpack.c.l.b16 %v1333
        %v3822 = vunpack.c.h.b16 %v1333
        %v3823 = vunpack.c.l.b16 %v1334
        %v3824 = vunpack.c.h.b16 %v1334
        %v3825 = vunpack.c.l.b16 %v1335
        %v3826 = vunpack.c.h.b16 %v1335
        %v3827 = vunpack.c.l.b16 %v1336
        %v3828 = vunpack.c.h.b16 %v1336
        %v3829 = vunpack.c.l.b16 %v1337
        %v3830 = vunpack.c.h.b16 %v1337
        %v3831 = vunpack.c.l.b16 %v1338
        %v3832 = vunpack.c.h.b16 %v1338
        %v3833 = vunpack.c.l.b16 %v1339
        %v3834 = vunpack.c.h.b16 %v1339
        %v3835 = vunpack.c.l.b16 %v1340
        %v3836 = vunpack.c.h.b16 %v1340
        %v3837 = vunpack.c.l.b16 %v1341
        %v3838 = vunpack.c.h.b16 %v1341
        %v3839 = vunpack.c.l.b16 %v1342
        %v3840 = vunpack.c.h.b16 %v1342
        %v3841 = vunpack.c.l.b16 %v1343
        %v3842 = vunpack.c.h.b16 %v1343
        %v3843 = vunpack.c.l.b16 %v1344
        %v3844 = vunpack.c.h.b16 %v1344
        %v3845 = vunpack.c.l.b16 %v1345
        %v3846 = vunpack.c.h.b16 %v1345
        %v3847 = vunpack.c.l.b16 %v1346
        %v3848 = vunpack.c.h.b16 %v1346
        %v3849 = vunpack.c.l.b16 %v1347
        %v3850 = vunpack.c.h.b16 %v1347
        %v3851 = vunpack.c.l.b16 %v1348
        %v3852 = vunpack.c.h.b16 %v1348
        %v3853 = vunpack.c.l.b16 %v1349
        %v3854 = vunpack.c.h.b16 %v1349
        %v3855 = vunpack.c.l.b16 %v1350
        %v3856 = vunpack.c.h.b16 %v1350
        %v3857 = vunpack.c.l.b16 %v1351
        %v3858 = vunpack.c.h.b16 %v1351
        %v3859 = vunpack.c.l.b16 %v1352
        %v3860 = vunpack.c.h.b16 %v1352
        %v3861 = vunpack.c.l.b16 %v1353
        %v3862 = vunpack.c.h.b16 %v1353
        %v3863 = vunpack.c.l.b16 %v1354
        %v3864 = vunpack.c.h.b16 %v1354
        %v3865 = vunpack.c.l.b16 %v1355
        %v3866 = vunpack.c.h.b16 %v1355
        %v3867 = vunpack.c.l.b16 %v1356
        %v3868 = vunpack.c.h.b16 %v1356
        %v3869 = vunpack.c.l.b16 %v1357
        %v3870 = vunpack.c.h.b16 %v1357
        %v3871 = vunpack.c.l.b16 %v1358
        %v3872 = vunpack.c.h.b16 %v1358
        %v3873 = vunpack.c.l.b16 %v1359
        %v3874 = vunpack.c.h.b16 %v1359
        %v3875 = vunpack.c.l.b16 %v1360
        %v3876 = vunpack.c.h.b16 %v1360
        %v3877 = vunpack.c.l.b16 %v1361
        %v3878 = vunpack.c.h.b16 %v1361
        %v3879 = vunpack.c.l.b16 %v1362
        %v3880 = vunpack.c.h.b16 %v1362
        %v3881 = vunpack.c.l.b16 %v1363
        %v3882 = vunpack.c.h.b16 %v1363
        %v3883 = vunpack.c.l.b16 %v1364
        %v3884 = vunpack.c.h.b16 %v1364
        %v3885 = vunpack.c.l.b16 %v1365
        %v3886 = vunpack.c.h.b16 %v1365
        %v3887 = vunpack.c.l.b16 %v1366
        %v3888 = vunpack.c.h.b16 %v1366
        %v3889 = vunpack.c.l.b16 %v1367
        %v3890 = vunpack.c.h.b16 %v1367
        %v3891 = vunpack.c.l.b16 %v1368
        %v3892 = vunpack.c.h.b16 %v1368
        %v3893 = vunpack.c.l.b16 %v1369
        %v3894 = vunpack.c.h.b16 %v1369
        %v3895 = vunpack.c.l.b16 %v1370
        %v3896 = vunpack.c.h.b16 %v1370
        %v3897 = vunpack.c.l.b16 %v1371
        %v3898 = vunpack.c.h.b16 %v1371
        %v3899 = vunpack.c.l.b16 %v1372
        %v3900 = vunpack.c.h.b16 %v1372
        %v3901 = vunpack.c.l.b16 %v1373
        %v3902 = vunpack.c.h.b16 %v1373
        %v3903 = vunpack.c.l.b16 %v1374
        %v3904 = vunpack.c.h.b16 %v1374
        %v3905 = vunpack.c.l.b16 %v1375
        %v3906 = vunpack.c.h.b16 %v1375
        %v3907 = vunpack.c.l.b16 %v1376
        %v3908 = vunpack.c.h.b16 %v1376
        %v3909 = vunpack.c.l.b16 %v1377
        %v3910 = vunpack.c.h.b16 %v1377
        %v3911 = vunpack.c.l.b16 %v1378
        %v3912 = vunpack.c.h.b16 %v1378
        %v3913 = vunpack.c.l.b16 %v1379
        %v3914 = vunpack.c.h.b16 %v1379
        %v3915 = vunpack.c.l.b16 %v1380
        %v3916 = vunpack.c.h.b16 %v1380
        %v3917 = vunpack.c.l.b16 %v1381
        %v3918 = vunpack.c.h.b16 %v1381
        %v3919 = vunpack.c.l.b16 %v1382
        %v3920 = vunpack.c.h.b16 %v1382
        %v3921 = vunpack.c.l.b16 %v1383
        %v3922 = vunpack.c.h.b16 %v1383
        %v3923 = vunpack.c.l.b16 %v1384
        %v3924 = vunpack.c.h.b16 %v1384
        %v3925 = vunpack.c.l.b16 %v1385
        %v3926 = vunpack.c.h.b16 %v1385
        %v3927 = vunpack.c.l.b16 %v1386
        %v3928 = vunpack.c.h.b16 %v1386
        %v3929 = vunpack.c.l.b16 %v1387
        %v3930 = vunpack.c.h.b16 %v1387
        %v3931 = vunpack.c.l.b16 %v1388
        %v3932 = vunpack.c.h.b16 %v1388
        %v3933 = vunpack.c.l.b16 %v1389
        %v3934 = vunpack.c.h.b16 %v1389
        %v3935 = vunpack.c.l.b16 %v1390
        %v3936 = vunpack.c.h.b16 %v1390
        %v3937 = vunpack.c.l.b16 %v1391
        %v3938 = vunpack.c.h.b16 %v1391
        %v3939 = vunpack.c.l.b16 %v1392
        %v3940 = vunpack.c.h.b16 %v1392
        %v3941 = vunpack.c.l.b16 %v1393
        %v3942 = vunpack.c.h.b16 %v1393
        %v3943 = vunpack.c.l.b16 %v1394
        %v3944 = vunpack.c.h.b16 %v1394
        %v3945 = vunpack.c.l.b16 %v1395
        %v3946 = vunpack.c.h.b16 %v1395
        %v3947 = vunpack.c.l.b16 %v1396
        %v3948 = vunpack.c.h.b16 %v1396
        %v3949 = vunpack.c.l.b16 %v1397
        %v3950 = vunpack.c.h.b16 %v1397
        %v3951 = vunpack.c.l.b16 %v1398
        %v3952 = vunpack.c.h.b16 %v1398
        %v3953 = vunpack.c.l.b16 %v1399
        %v3954 = vunpack.c.h.b16 %v1399
        %v3955 = vunpack.c.l.b16 %v1400
        %v3956 = vunpack.c.h.b16 %v1400
        %v3957 = vunpack.c.l.b16 %v1401
        %v3958 = vunpack.c.h.b16 %v1401
        %v3959 = vunpack.c.l.b16 %v1402
        %v3960 = vunpack.c.h.b16 %v1402
        %v3961 = vunpack.c.l.b16 %v1403
        %v3962 = vunpack.c.h.b16 %v1403
        %v3963 = vunpack.c.l.b16 %v1404
        %v3964 = vunpack.c.h.b16 %v1404
        %v3965 = vunpack.c.l.b16 %v1405
        %v3966 = vunpack.c.h.b16 %v1405
        %v3967 = vunpack.c.l.b16 %v1406
        %v3968 = vunpack.c.h.b16 %v1406
        %v3969 = vunpack.c.l.b16 %v1407
        %v3970 = vunpack.c.h.b16 %v1407
        %v3971 = vunpack.c.l.b16 %v1408
        %v3972 = vunpack.c.h.b16 %v1408
        %v3973 = vunpack.c.l.b16 %v1409
        %v3974 = vunpack.c.h.b16 %v1409
        %v3975 = vunpack.c.l.b16 %v1410
        %v3976 = vunpack.c.h.b16 %v1410
        %v3977 = vunpack.c.l.b16 %v1411
        %v3978 = vunpack.c.h.b16 %v1411
        %v3979 = vunpack.c.l.b16 %v1412
        %v3980 = vunpack.c.h.b16 %v1412
        %v3981 = vunpack.c.l.b16 %v1413
        %v3982 = vunpack.c.h.b16 %v1413
        %v3983 = vunpack.c.l.b16 %v1414
        %v3984 = vunpack.c.h.b16 %v1414
        %v3985 = vunpack.c.l.b16 %v1415
        %v3986 = vunpack.c.h.b16 %v1415
        %v3987 = vunpack.c.l.b16 %v1416
        %v3988 = vunpack.c.h.b16 %v1416
        %v3989 = vunpack.c.l.b16 %v1417
        %v3990 = vunpack.c.h.b16 %v1417
        %v3991 = vunpack.c.l.b16 %v1418
        %v3992 = vunpack.c.h.b16 %v1418
        %v3993 = vunpack.c.l.b16 %v1419
        %v3994 = vunpack.c.h.b16 %v1419
        %v3995 = vunpack.c.l.b16 %v1420
        %v3996 = vunpack.c.h.b16 %v1420
        %v3997 = vunpack.c.l.b16 %v1421
        %v3998 = vunpack.c.h.b16 %v1421
        %v3999 = vunpack.c.l.b16 %v1422
        %v4000 = vunpack.c.h.b16 %v1422
        %v4001 = vunpack.c.l.b16 %v1423
        %v4002 = vunpack.c.h.b16 %v1423
        %v4003 = vunpack.c.l.b16 %v1424
        %v4004 = vunpack.c.h.b16 %v1424
        %v4005 = vunpack.c.l.b16 %v1425
        %v4006 = vunpack.c.h.b16 %v1425
        %v4007 = vunpack.c.l.b16 %v1426
        %v4008 = vunpack.c.h.b16 %v1426
        %v4009 = vunpack.c.l.b16 %v1427
        %v4010 = vunpack.c.h.b16 %v1427
        %v4011 = vunpack.c.l.b16 %v1428
        %v4012 = vunpack.c.h.b16 %v1428
        %v4013 = vunpack.c.l.b16 %v1429
        %v4014 = vunpack.c.h.b16 %v1429
        %v4015 = vunpack.c.l.b16 %v1430
        %v4016 = vunpack.c.h.b16 %v1430
        %v4017 = vunpack.c.l.b16 %v1431
        %v4018 = vunpack.c.h.b16 %v1431
        %v4019 = vunpack.c.l.b16 %v1432
        %v4020 = vunpack.c.h.b16 %v1432
        %v4021 = vunpack.c.l.b16 %v1433
        %v4022 = vunpack.c.h.b16 %v1433
        %v4023 = vunpack.c.l.b16 %v1434
        %v4024 = vunpack.c.h.b16 %v1434
        %v4025 = vunpack.c.l.b16 %v1435
        %v4026 = vunpack.c.h.b16 %v1435
        %v4027 = vunpack.c.l.b16 %v1436
        %v4028 = vunpack.c.h.b16 %v1436
        %v4029 = vunpack.c.l.b16 %v1437
        %v4030 = vunpack.c.h.b16 %v1437
        %v4031 = vunpack.c.l.b16 %v1438
        %v4032 = vunpack.c.h.b16 %v1438
        %v4033 = vunpack.c.l.b16 %v1439
        %v4034 = vunpack.c.h.b16 %v1439
        %v4035 = vunpack.c.l.b16 %v1440
        %v4036 = vunpack.c.h.b16 %v1440
        %v4037 = vunpack.c.l.b16 %v1441
        %v4038 = vunpack.c.h.b16 %v1441
        %v4039 = vunpack.c.l.b16 %v1442
        %v4040 = vunpack.c.h.b16 %v1442
        %v4041 = vunpack.c.l.b16 %v1443
        %v4042 = vunpack.c.h.b16 %v1443
        %v4043 = vunpack.c.l.b16 %v1444
        %v4044 = vunpack.c.h.b16 %v1444
        %v4045 = vunpack.c.l.b16 %v1445
        %v4046 = vunpack.c.h.b16 %v1445
        %v4047 = vunpack.c.l.b16 %v1446
        %v4048 = vunpack.c.h.b16 %v1446
        %v4049 = vunpack.c.l.b16 %v1447
        %v4050 = vunpack.c.h.b16 %v1447
        %v4051 = vunpack.c.l.b16 %v1448
        %v4052 = vunpack.c.h.b16 %v1448
        %v4053 = vunpack.c.l.b16 %v1449
        %v4054 = vunpack.c.h.b16 %v1449
        %v4055 = vunpack.c.l.b16 %v1450
        %v4056 = vunpack.c.h.b16 %v1450
        %v4057 = vunpack.c.l.b16 %v1451
        %v4058 = vunpack.c.h.b16 %v1451
        %v4059 = vunpack.c.l.b16 %v1452
        %v4060 = vunpack.c.h.b16 %v1452
        %v4061 = vunpack.c.l.b16 %v1453
        %v4062 = vunpack.c.h.b16 %v1453
        %v4063 = vunpack.c.l.b16 %v1454
        %v4064 = vunpack.c.h.b16 %v1454
        %v4065 = vunpack.c.l.b16 %v1455
        %v4066 = vunpack.c.h.b16 %v1455
        %v4067 = vunpack.c.l.b16 %v1456
        %v4068 = vunpack.c.h.b16 %v1456
        %v4069 = vunpack.c.l.b16 %v1457
        %v4070 = vunpack.c.h.b16 %v1457
        %v4071 = vpack.c.b16 %v2361, %v2343
        %v4072 = vpack.c.b16 %v2362, %v2344
        %v4073 = vpack.c.b16 %v2363, %v2345
        %v4074 = vpack.c.b16 %v2364, %v2346
        %v4075 = vpack.c.b16 %v2365, %v2347
        %v4076 = vpack.c.b16 %v2366, %v2348
        %v4077 = vpack.c.b16 %v2367, %v2349
        %v4078 = vpack.c.b16 %v2368, %v2350
        %v4079 = vpack.c.b16 %v2369, %v2351
        %v4080 = vpack.c.b16 %v2370, %v2352
        %v4081 = vpack.c.b16 %v2371, %v2353
        %v4082 = vpack.c.b16 %v2372, %v2354
        %v4083 = vpack.c.b16 %v2373, %v2355
        %v4084 = vpack.c.b16 %v2374, %v2356
        %v4085 = vpack.c.b16 %v2375, %v2357
        %v4086 = vpack.c.b16 %v2376, %v2358
        %v4087 = vpack.c.b16 %v2377, %v2359
        %v4088 = vpack.c.b16 %v2378, %v2360
        %v4089 = vpack.c.b16 %v2397, %v2379
        %v4090 = vpack.c.b16 %v2398, %v2380
        %v4091 = vpack.c.b16 %v2399, %v2381
        %v4092 = vpack.c.b16 %v2400, %v2382
        %v4093 = vpack.c.b16 %v2401, %v2383
        %v4094 = vpack.c.b16 %v2402, %v2384
        %v4095 = vpack.c.b16 %v2403, %v2385
        %v4096 = vpack.c.b16 %v2404, %v2386
        %v4097 = vpack.c.b16 %v2405, %v2387
        %v4098 = vpack.c.b16 %v2406, %v2388
        %v4099 = vpack.c.b16 %v2407, %v2389
        %v4100 = vpack.c.b16 %v2408, %v2390
        %v4101 = vpack.c.b16 %v2409, %v2391
        %v4102 = vpack.c.b16 %v2410, %v2392
        %v4103 = vpack.c.b16 %v2411, %v2393
        %v4104 = vpack.c.b16 %v2412, %v2394
        %v4105 = vpack.c.b16 %v2413, %v2395
        %v4106 = vpack.c.b16 %v2414, %v2396
        %v4107 = vpack.c.b16 %v2433, %v2415
        %v4108 = vpack.c.b16 %v2434, %v2416
        %v4109 = vpack.c.b16 %v2435, %v2417
        %v4110 = vpack.c.b16 %v2436, %v2418
        %v4111 = vpack.c.b16 %v2437, %v2419
        %v4112 = vpack.c.b16 %v2438, %v2420
        %v4113 = vpack.c.b16 %v2439, %v2421
        %v4114 = vpack.c.b16 %v2440, %v2422
        %v4115 = vpack.c.b16 %v2441, %v2423
        %v4116 = vpack.c.b16 %v2442, %v2424
        %v4117 = vpack.c.b16 %v2443, %v2425
        %v4118 = vpack.c.b16 %v2444, %v2426
        %v4119 = vpack.c.b16 %v2445, %v2427
        %v4120 = vpack.c.b16 %v2446, %v2428
        %v4121 = vpack.c.b16 %v2447, %v2429
        %v4122 = vpack.c.b16 %v2448, %v2430
        %v4123 = vpack.c.b16 %v2449, %v2431
        %v4124 = vpack.c.b16 %v2450, %v2432
        %v4125 = vpack.c.b16 %v2469, %v2451
        %v4126 = vpack.c.b16 %v2470, %v2452
        %v4127 = vpack.c.b16 %v2471, %v2453
        %v4128 = vpack.c.b16 %v2472, %v2454
        %v4129 = vpack.c.b16 %v2473, %v2455
        %v4130 = vpack.c.b16 %v2474, %v2456
        %v4131 = vpack.c.b16 %v2475, %v2457
        %v4132 = vpack.c.b16 %v2476, %v2458
        %v4133 = vpack.c.b16 %v2477, %v2459
        %v4134 = vpack.c.b16 %v2478, %v2460
        %v4135 = vpack.c.b16 %v2479, %v2461
        %v4136 = vpack.c.b16 %v2480, %v2462
        %v4137 = vpack.c.b16 %v2481, %v2463
        %v4138 = vpack.c.b16 %v2482, %v2464
        %v4139 = vpack.c.b16 %v2483, %v2465
        %v4140 = vpack.c.b16 %v2484, %v2466
        %v4141 = vpack.c.b16 %v2485, %v2467
        %v4142 = vpack.c.b16 %v2486, %v2468
        %v4143 = vpack.c.b16 %v2505, %v2487
        %v4144 = vpack.c.b16 %v2506, %v2488
        %v4145 = vpack.c.b16 %v2507, %v2489
        %v4146 = vpack.c.b16 %v2508, %v2490
        %v4147 = vpack.c.b16 %v2509, %v2491
        %v4148 = vpack.c.b16 %v2510, %v2492
        %v4149 = vpack.c.b16 %v2511, %v2493
        %v4150 = vpack.c.b16 %v2512, %v2494
        %v4151 = vpack.c.b16 %v2513, %v2495
        %v4152 = vpack.c.b16 %v2514, %v2496
        %v4153 = vpack.c.b16 %v2515, %v2497
        %v4154 = vpack.c.b16 %v2516, %v2498
        %v4155 = vpack.c.b16 %v2517, %v2499
        %v4156 = vpack.c.b16 %v2518, %v2500
        %v4157 = vpack.c.b16 %v2519, %v2501
        %v4158 = vpack.c.b16 %v2520, %v2502
        %v4159 = vpack.c.b16 %v2521, %v2503
        %v4160 = vpack.c.b16 %v2522, %v2504
        %v4161 = vpack.c.b16 %v2541, %v2523
        %v4162 = vpack.c.b16 %v2542, %v2524
        %v4163 = vpack.c.b16 %v2543, %v2525
        %v4164 = vpack.c.b16 %v2544, %v2526
        %v4165 = vpack.c.b16 %v2545, %v2527
        %v4166 = vpack.c.b16 %v2546, %v2528
        %v4167 = vpack.c.b16 %v2547, %v2529
        %v4168 = vpack.c.b16 %v2548, %v2530
        %v4169 = vpack.c.b16 %v2549, %v2531
        %v4170 = vpack.c.b16 %v2550, %v2532
        %v4171 = vpack.c.b16 %v2551, %v2533
        %v4172 = vpack.c.b16 %v2552, %v2534
        %v4173 = vpack.c.b16 %v2553, %v2535
        %v4174 = vpack.c.b16 %v2554, %v2536
        %v4175 = vpack.c.b16 %v2555, %v2537
        %v4176 = vpack.c.b16 %v2556, %v2538
        %v4177 = vpack.c.b16 %v2557, %v2539
        %v4178 = vpack.c.b16 %v2558, %v2540
        %v4179 = vpack.c.b16 %v2577, %v2559
        %v4180 = vpack.c.b16 %v2578, %v2560
        %v4181 = vpack.c.b16 %v2579, %v2561
        %v4182 = vpack.c.b16 %v2580, %v2562
        %v4183 = vpack.c.b16 %v2581, %v2563
        %v4184 = vpack.c.b16 %v2582, %v2564
        %v4185 = vpack.c.b16 %v2583, %v2565
        %v4186 = vpack.c.b16 %v2584, %v2566
        %v4187 = vpack.c.b16 %v2585, %v2567
        %v4188 = vpack.c.b16 %v2586, %v2568
        %v4189 = vpack.c.b16 %v2587, %v2569
        %v4190 = vpack.c.b16 %v2588, %v2570
        %v4191 = vpack.c.b16 %v2589, %v2571
        %v4192 = vpack.c.b16 %v2590, %v2572
        %v4193 = vpack.c.b16 %v2591, %v2573
        %v4194 = vpack.c.b16 %v2592, %v2574
        %v4195 = vpack.c.b16 %v2593, %v2575
        %v4196 = vpack.c.b16 %v2594, %v2576
        %v4197 = vpack.c.b16 %v2613, %v2595
        %v4198 = vpack.c.b16 %v2614, %v2596
        %v4199 = vpack.c.b16 %v2615, %v2597
        %v4200 = vpack.c.b16 %v2616, %v2598
        %v4201 = vpack.c.b16 %v2617, %v2599
        %v4202 = vpack.c.b16 %v2618, %v2600
        %v4203 = vpack.c.b16 %v2619, %v2601
        %v4204 = vpack.c.b16 %v2620, %v2602
        %v4205 = vpack.c.b16 %v2621, %v2603
        %v4206 = vpack.c.b16 %v2622, %v2604
        %v4207 = vpack.c.b16 %v2623, %v2605
        %v4208 = vpack.c.b16 %v2624, %v2606
        %v4209 = vpack.c.b16 %v2625, %v2607
        %v4210 = vpack.c.b16 %v2626, %v2608
        %v4211 = vpack.c.b16 %v2627, %v2609
        %v4212 = vpack.c.b16 %v2628, %v2610
        %v4213 = vpack.c.b16 %v2629, %v2611
        %v4214 = vpack.c.b16 %v2630, %v2612
        %v4215 = vpack.c.b16 %v2649, %v2631
        %v4216 = vpack.c.b16 %v2650, %v2632
        %v4217 = vpack.c.b16 %v2651, %v2633
        %v4218 = vpack.c.b16 %v2652, %v2634
        %v4219 = vpack.c.b16 %v2653, %v2635
        %v4220 = vpack.c.b16 %v2654, %v2636
        %v4221 = vpack.c.b16 %v2655, %v2637
        %v4222 = vpack.c.b16 %v2656, %v2638
        %v4223 = vpack.c.b16 %v2657, %v2639
        %v4224 = vpack.c.b16 %v2658, %v2640
        %v4225 = vpack.c.b16 %v2659, %v2641
        %v4226 = vpack.c.b16 %v2660, %v2642
        %v4227 = vpack.c.b16 %v2661, %v2643
        %v4228 = vpack.c.b16 %v2662, %v2644
        %v4229 = vpack.c.b16 %v2663, %v2645
        %v4230 = vpack.c.b16 %v2664, %v2646
        %v4231 = vpack.c.b16 %v2665, %v2647
        %v4232 = vpack.c.b16 %v2666, %v2648
        %v4233 = vpack.c.b16 %v2685, %v2667
        %v4234 = vpack.c.b16 %v2686, %v2668
        %v4235 = vpack.c.b16 %v2687, %v2669
        %v4236 = vpack.c.b16 %v2688, %v2670
        %v4237 = vpack.c.b16 %v2689, %v2671
        %v4238 = vpack.c.b16 %v2690, %v2672
        %v4239 = vpack.c.b16 %v2691, %v2673
        %v4240 = vpack.c.b16 %v2692, %v2674
        %v4241 = vpack.c.b16 %v2693, %v2675
        %v4242 = vpack.c.b16 %v2694, %v2676
        %v4243 = vpack.c.b16 %v2695, %v2677
        %v4244 = vpack.c.b16 %v2696, %v2678
        %v4245 = vpack.c.b16 %v2697, %v2679
        %v4246 = vpack.c.b16 %v2698, %v2680
        %v4247 = vpack.c.b16 %v2699, %v2681
        %v4248 = vpack.c.b16 %v2700, %v2682
        %v4249 = vpack.c.b16 %v2701, %v2683
        %v4250 = vpack.c.b16 %v2702, %v2684
        %v4251 = vpack.c.b16 %v2721, %v2703
        %v4252 = vpack.c.b16 %v2722, %v2704
        %v4253 = vpack.c.b16 %v2723, %v2705
        %v4254 = vpack.c.b16 %v2724, %v2706
        %v4255 = vpack.c.b16 %v2725, %v2707
        %v4256 = vpack.c.b16 %v2726, %v2708
        %v4257 = vpack.c.b16 %v2727, %v2709
        %v4258 = vpack.c.b16 %v2728, %v2710
        %v4259 = vpack.c.b16 %v2729, %v2711
        %v4260 = vpack.c.b16 %v2730, %v2712
        %v4261 = vpack.c.b16 %v2731, %v2713
        %v4262 = vpack.c.b16 %v2732, %v2714
        %v4263 = vpack.c.b16 %v2733, %v2715
        %v4264 = vpack.c.b16 %v2734, %v2716
        %v4265 = vpack.c.b16 %v2735, %v2717
        %v4266 = vpack.c.b16 %v2736, %v2718
        %v4267 = vpack.c.b16 %v2737, %v2719
        %v4268 = vpack.c.b16 %v2738, %v2720
        %v4269 = vpack.c.b16 %v2757, %v2739
        %v4270 = vpack.c.b16 %v2758, %v2740
        %v4271 = vpack.c.b16 %v2759, %v2741
        %v4272 = vpack.c.b16 %v2760, %v2742
        %v4273 = vpack.c.b16 %v2761, %v2743
        %v4274 = vpack.c.b16 %v2762, %v2744
        %v4275 = vpack.c.b16 %v2763, %v2745
        %v4276 = vpack.c.b16 %v2764, %v2746
        %v4277 = vpack.c.b16 %v2765, %v2747
        %v4278 = vpack.c.b16 %v2766, %v2748
        %v4279 = vpack.c.b16 %v2767, %v2749
        %v4280 = vpack.c.b16 %v2768, %v2750
        %v4281 = vpack.c.b16 %v2769, %v2751
        %v4282 = vpack.c.b16 %v2770, %v2752
        %v4283 = vpack.c.b16 %v2771, %v2753
        %v4284 = vpack.c.b16 %v2772, %v2754
        %v4285 = vpack.c.b16 %v2773, %v2755
        %v4286 = vpack.c.b16 %v2774, %v2756
        %v4287 = vpack.c.b16 %v2793, %v2775
        %v4288 = vpack.c.b16 %v2794, %v2776
        %v4289 = vpack.c.b16 %v2795, %v2777
        %v4290 = vpack.c.b16 %v2796, %v2778
        %v4291 = vpack.c.b16 %v2797, %v2779
        %v4292 = vpack.c.b16 %v2798, %v2780
        %v4293 = vpack.c.b16 %v2799, %v2781
        %v4294 = vpack.c.b16 %v2800, %v2782
        %v4295 = vpack.c.b16 %v2801, %v2783
        %v4296 = vpack.c.b16 %v2802, %v2784
        %v4297 = vpack.c.b16 %v2803, %v2785
        %v4298 = vpack.c.b16 %v2804, %v2786
        %v4299 = vpack.c.b16 %v2805, %v2787
        %v4300 = vpack.c.b16 %v2806, %v2788
        %v4301 = vpack.c.b16 %v2807, %v2789
        %v4302 = vpack.c.b16 %v2808, %v2790
        %v4303 = vpack.c.b16 %v2809, %v2791
        %v4304 = vpack.c.b16 %v2810, %v2792
        %v4305 = vpack.c.b16 %v2829, %v2811
        %v4306 = vpack.c.b16 %v2830, %v2812
        %v4307 = vpack.c.b16 %v2831, %v2813
        %v4308 = vpack.c.b16 %v2832, %v2814
        %v4309 = vpack.c.b16 %v2833, %v2815
        %v4310 = vpack.c.b16 %v2834, %v2816
        %v4311 = vpack.c.b16 %v2835, %v2817
        %v4312 = vpack.c.b16 %v2836, %v2818
        %v4313 = vpack.c.b16 %v2837, %v2819
        %v4314 = vpack.c.b16 %v2838, %v2820
        %v4315 = vpack.c.b16 %v2839, %v2821
        %v4316 = vpack.c.b16 %v2840, %v2822
        %v4317 = vpack.c.b16 %v2841, %v2823
        %v4318 = vpack.c.b16 %v2842, %v2824
        %v4319 = vpack.c.b16 %v2843, %v2825
        %v4320 = vpack.c.b16 %v2844, %v2826
        %v4321 = vpack.c.b16 %v2845, %v2827
        %v4322 = vpack.c.b16 %v2846, %v2828
        %v4323 = vpack.c.b16 %v2865, %v2847
        %v4324 = vpack.c.b16 %v2866, %v2848
        %v4325 = vpack.c.b16 %v2867, %v2849
        %v4326 = vpack.c.b16 %v2868, %v2850
        %v4327 = vpack.c.b16 %v2869, %v2851
        %v4328 = vpack.c.b16 %v2870, %v2852
        %v4329 = vpack.c.b16 %v2871, %v2853
        %v4330 = vpack.c.b16 %v2872, %v2854
        %v4331 = vpack.c.b16 %v2873, %v2855
        %v4332 = vpack.c.b16 %v2874, %v2856
        %v4333 = vpack.c.b16 %v2875, %v2857
        %v4334 = vpack.c.b16 %v2876, %v2858
        %v4335 = vpack.c.b16 %v2877, %v2859
        %v4336 = vpack.c.b16 %v2878, %v2860
        %v4337 = vpack.c.b16 %v2879, %v2861
        %v4338 = vpack.c.b16 %v2880, %v2862
        %v4339 = vpack.c.b16 %v2881, %v2863
        %v4340 = vpack.c.b16 %v2882, %v2864
        %v4341 = vpack.c.b16 %v2901, %v2883
        %v4342 = vpack.c.b16 %v2902, %v2884
        %v4343 = vpack.c.b16 %v2903, %v2885
        %v4344 = vpack.c.b16 %v2904, %v2886
        %v4345 = vpack.c.b16 %v2905, %v2887
        %v4346 = vpack.c.b16 %v2906, %v2888
        %v4347 = vpack.c.b16 %v2907, %v2889
        %v4348 = vpack.c.b16 %v2908, %v2890
        %v4349 = vpack.c.b16 %v2909, %v2891
        %v4350 = vpack.c.b16 %v2910, %v2892
        %v4351 = vpack.c.b16 %v2911, %v2893
        %v4352 = vpack.c.b16 %v2912, %v2894
        %v4353 = vpack.c.b16 %v2913, %v2895
        %v4354 = vpack.c.b16 %v2914, %v2896
        %v4355 = vpack.c.b16 %v2915, %v2897
        %v4356 = vpack.c.b16 %v2916, %v2898
        %v4357 = vpack.c.b16 %v2917, %v2899
        %v4358 = vpack.c.b16 %v2918, %v2900
        %v4359 = vpack.c.b16 %v2937, %v2919
        %v4360 = vpack.c.b16 %v2938, %v2920
        %v4361 = vpack.c.b16 %v2939, %v2921
        %v4362 = vpack.c.b16 %v2940, %v2922
        %v4363 = vpack.c.b16 %v2941, %v2923
        %v4364 = vpack.c.b16 %v2942, %v2924
        %v4365 = vpack.c.b16 %v2943, %v2925
        %v4366 = vpack.c.b16 %v2944, %v2926
        %v4367 = vpack.c.b16 %v2945, %v2927
        %v4368 = vpack.c.b16 %v2946, %v2928
        %v4369 = vpack.c.b16 %v2947, %v2929
        %v4370 = vpack.c.b16 %v2948, %v2930
        %v4371 = vpack.c.b16 %v2949, %v2931
        %v4372 = vpack.c.b16 %v2950, %v2932
        %v4373 = vpack.c.b16 %v2951, %v2933
        %v4374 = vpack.c.b16 %v2952, %v2934
        %v4375 = vpack.c.b16 %v2953, %v2935
        %v4376 = vpack.c.b16 %v2954, %v2936
        %v4377 = vpack.c.b16 %v2973, %v2955
        %v4378 = vpack.c.b16 %v2974, %v2956
        %v4379 = vpack.c.b16 %v2975, %v2957
        %v4380 = vpack.c.b16 %v2976, %v2958
        %v4381 = vpack.c.b16 %v2977, %v2959
        %v4382 = vpack.c.b16 %v2978, %v2960
        %v4383 = vpack.c.b16 %v2979, %v2961
        %v4384 = vpack.c.b16 %v2980, %v2962
        %v4385 = vpack.c.b16 %v2981, %v2963
        %v4386 = vpack.c.b16 %v2982, %v2964
        %v4387 = vpack.c.b16 %v2983, %v2965
        %v4388 = vpack.c.b16 %v2984, %v2966
        %v4389 = vpack.c.b16 %v2985, %v2967
        %v4390 = vpack.c.b16 %v2986, %v2968
        %v4391 = vpack.c.b16 %v2987, %v2969
        %v4392 = vpack.c.b16 %v2988, %v2970
        %v4393 = vpack.c.b16 %v2989, %v2971
        %v4394 = vpack.c.b16 %v2990, %v2972
        %v4395 = vpack.c.b16 %v3009, %v2991
        %v4396 = vpack.c.b16 %v3010, %v2992
        %v4397 = vpack.c.b16 %v3011, %v2993
        %v4398 = vpack.c.b16 %v3012, %v2994
        %v4399 = vpack.c.b16 %v3013, %v2995
        %v4400 = vpack.c.b16 %v3014, %v2996
        %v4401 = vpack.c.b16 %v3015, %v2997
        %v4402 = vpack.c.b16 %v3016, %v2998
        %v4403 = vpack.c.b16 %v3017, %v2999
        %v4404 = vpack.c.b16 %v3018, %v3000
        %v4405 = vpack.c.b16 %v3019, %v3001
        %v4406 = vpack.c.b16 %v3020, %v3002
        %v4407 = vpack.c.b16 %v3021, %v3003
        %v4408 = vpack.c.b16 %v3022, %v3004
        %v4409 = vpack.c.b16 %v3023, %v3005
        %v4410 = vpack.c.b16 %v3024, %v3006
        %v4411 = vpack.c.b16 %v3025, %v3007
        %v4412 = vpack.c.b16 %v3026, %v3008
        %v4413 = vpack.c.b16 %v3045, %v3027
        %v4414 = vpack.c.b16 %v3046, %v3028
        %v4415 = vpack.c.b16 %v3047, %v3029
        %v4416 = vpack.c.b16 %v3048, %v3030
        %v4417 = vpack.c.b16 %v3049, %v3031
        %v4418 = vpack.c.b16 %v3050, %v3032
        %v4419 = vpack.c.b16 %v3051, %v3033
        %v4420 = vpack.c.b16 %v3052, %v3034
        %v4421 = vpack.c.b16 %v3053, %v3035
        %v4422 = vpack.c.b16 %v3054, %v3036
        %v4423 = vpack.c.b16 %v3055, %v3037
        %v4424 = vpack.c.b16 %v3056, %v3038
        %v4425 = vpack.c.b16 %v3057, %v3039
        %v4426 = vpack.c.b16 %v3058, %v3040
        %v4427 = vpack.c.b16 %v3059, %v3041
        %v4428 = vpack.c.b16 %v3060, %v3042
        %v4429 = vpack.c.b16 %v3061, %v3043
        %v4430 = vpack.c.b16 %v3062, %v3044
        %v4431 = vpack.c.b16 %v3081, %v3063
        %v4432 = vpack.c.b16 %v3082, %v3064
        %v4433 = vpack.c.b16 %v3083, %v3065
        %v4434 = vpack.c.b16 %v3084, %v3066
        %v4435 = vpack.c.b16 %v3085, %v3067
        %v4436 = vpack.c.b16 %v3086, %v3068
        %v4437 = vpack.c.b16 %v3087, %v3069
        %v4438 = vpack.c.b16 %v3088, %v3070
        %v4439 = vpack.c.b16 %v3089, %v3071
        %v4440 = vpack.c.b16 %v3090, %v3072
        %v4441 = vpack.c.b16 %v3091, %v3073
        %v4442 = vpack.c.b16 %v3092, %v3074
        %v4443 = vpack.c.b16 %v3093, %v3075
        %v4444 = vpack.c.b16 %v3094, %v3076
        %v4445 = vpack.c.b16 %v3095, %v3077
        %v4446 = vpack.c.b16 %v3096, %v3078
        %v4447 = vpack.c.b16 %v3097, %v3079
        %v4448 = vpack.c.b16 %v3098, %v3080
        %v4449 = vpack.c.b16 %v3117, %v3099
        %v4450 = vpack.c.b16 %v3118, %v3100
        %v4451 = vpack.c.b16 %v3119, %v3101
        %v4452 = vpack.c.b16 %v3120, %v3102
        %v4453 = vpack.c.b16 %v3121, %v3103
        %v4454 = vpack.c.b16 %v3122, %v3104
        %v4455 = vpack.c.b16 %v3123, %v3105
        %v4456 = vpack.c.b16 %v3124, %v3106
        %v4457 = vpack.c.b16 %v3125, %v3107
        %v4458 = vpack.c.b16 %v3126, %v3108
        %v4459 = vpack.c.b16 %v3127, %v3109
        %v4460 = vpack.c.b16 %v3128, %v3110
        %v4461 = vpack.c.b16 %v3129, %v3111
        %v4462 = vpack.c.b16 %v3130, %v3112
        %v4463 = vpack.c.b16 %v3131, %v3113
        %v4464 = vpack.c.b16 %v3132, %v3114
        %v4465 = vpack.c.b16 %v3133, %v3115
        %v4466 = vpack.c.b16 %v3134, %v3116
        %v4467 = vpack.c.b16 %v3153, %v3135
        %v4468 = vpack.c.b16 %v3154, %v3136
        %v4469 = vpack.c.b16 %v3155, %v3137
        %v4470 = vpack.c.b16 %v3156, %v3138
        %v4471 = vpack.c.b16 %v3157, %v3139
        %v4472 = vpack.c.b16 %v3158, %v3140
        %v4473 = vpack.c.b16 %v3159, %v3141
        %v4474 = vpack.c.b16 %v3160, %v3142
        %v4475 = vpack.c.b16 %v3161, %v3143
        %v4476 = vpack.c.b16 %v3162, %v3144
        %v4477 = vpack.c.b16 %v3163, %v3145
        %v4478 = vpack.c.b16 %v3164, %v3146
        %v4479 = vpack.c.b16 %v3165, %v3147
        %v4480 = vpack.c.b16 %v3166, %v3148
        %v4481 = vpack.c.b16 %v3167, %v3149
        %v4482 = vpack.c.b16 %v3168, %v3150
        %v4483 = vpack.c.b16 %v3169, %v3151
        %v4484 = vpack.c.b16 %v3170, %v3152
        %v4485 = vpack.c.b16 %v3189, %v3171
        %v4486 = vpack.c.b16 %v3190, %v3172
        %v4487 = vpack.c.b16 %v3191, %v3173
        %v4488 = vpack.c.b16 %v3192, %v3174
        %v4489 = vpack.c.b16 %v3193, %v3175
        %v4490 = vpack.c.b16 %v3194, %v3176
        %v4491 = vpack.c.b16 %v3195, %v3177
        %v4492 = vpack.c.b16 %v3196, %v3178
        %v4493 = vpack.c.b16 %v3197, %v3179
        %v4494 = vpack.c.b16 %v3198, %v3180
        %v4495 = vpack.c.b16 %v3199, %v3181
        %v4496 = vpack.c.b16 %v3200, %v3182
        %v4497 = vpack.c.b16 %v3201, %v3183
        %v4498 = vpack.c.b16 %v3202, %v3184
        %v4499 = vpack.c.b16 %v3203, %v3185
        %v4500 = vpack.c.b16 %v3204, %v3186
        %v4501 = vpack.c.b16 %v3205, %v3187
        %v4502 = vpack.c.b16 %v3206, %v3188
        %v4503 = vpack.c.b16 %v3225, %v3207
        %v4504 = vpack.c.b16 %v3226, %v3208
        %v4505 = vpack.c.b16 %v3227, %v3209
        %v4506 = vpack.c.b16 %v3228, %v3210
        %v4507 = vpack.c.b16 %v3229, %v3211
        %v4508 = vpack.c.b16 %v3230, %v3212
        %v4509 = vpack.c.b16 %v3231, %v3213
        %v4510 = vpack.c.b16 %v3232, %v3214
        %v4511 = vpack.c.b16 %v3233, %v3215
        %v4512 = vpack.c.b16 %v3234, %v3216
        %v4513 = vpack.c.b16 %v3235, %v3217
        %v4514 = vpack.c.b16 %v3236, %v3218
        %v4515 = vpack.c.b16 %v3237, %v3219
        %v4516 = vpack.c.b16 %v3238, %v3220
        %v4517 = vpack.c.b16 %v3239, %v3221
        %v4518 = vpack.c.b16 %v3240, %v3222
        %v4519 = vpack.c.b16 %v3241, %v3223
        %v4520 = vpack.c.b16 %v3242, %v3224
        %v4521 = vpack.c.b16 %v3261, %v3243
        %v4522 = vpack.c.b16 %v3262, %v3244
        %v4523 = vpack.c.b16 %v3263, %v3245
        %v4524 = vpack.c.b16 %v3264, %v3246
        %v4525 = vpack.c.b16 %v3265, %v3247
        %v4526 = vpack.c.b16 %v3266, %v3248
        %v4527 = vpack.c.b16 %v3267, %v3249
        %v4528 = vpack.c.b16 %v3268, %v3250
        %v4529 = vpack.c.b16 %v3269, %v3251
        %v4530 = vpack.c.b16 %v3270, %v3252
        %v4531 = vpack.c.b16 %v3271, %v3253
        %v4532 = vpack.c.b16 %v3272, %v3254
        %v4533 = vpack.c.b16 %v3273, %v3255
        %v4534 = vpack.c.b16 %v3274, %v3256
        %v4535 = vpack.c.b16 %v3275, %v3257
        %v4536 = vpack.c.b16 %v3276, %v3258
        %v4537 = vpack.c.b16 %v3277, %v3259
        %v4538 = vpack.c.b16 %v3278, %v3260
        %v4539 = vpack.c.b16 %v3297, %v3279
        %v4540 = vpack.c.b16 %v3298, %v3280
        %v4541 = vpack.c.b16 %v3299, %v3281
        %v4542 = vpack.c.b16 %v3300, %v3282
        %v4543 = vpack.c.b16 %v3301, %v3283
        %v4544 = vpack.c.b16 %v3302, %v3284
        %v4545 = vpack.c.b16 %v3303, %v3285
        %v4546 = vpack.c.b16 %v3304, %v3286
        %v4547 = vpack.c.b16 %v3305, %v3287
        %v4548 = vpack.c.b16 %v3306, %v3288
        %v4549 = vpack.c.b16 %v3307, %v3289
        %v4550 = vpack.c.b16 %v3308, %v3290
        %v4551 = vpack.c.b16 %v3309, %v3291
        %v4552 = vpack.c.b16 %v3310, %v3292
        %v4553 = vpack.c.b16 %v3311, %v3293
        %v4554 = vpack.c.b16 %v3312, %v3294
        %v4555 = vpack.c.b16 %v3313, %v3295
        %v4556 = vpack.c.b16 %v3314, %v3296
        %v4557 = vpack.c.b16 %v3333, %v3315
        %v4558 = vpack.c.b16 %v3334, %v3316
        %v4559 = vpack.c.b16 %v3335, %v3317
        %v4560 = vpack.c.b16 %v3336, %v3318
        %v4561 = vpack.c.b16 %v3337, %v3319
        %v4562 = vpack.c.b16 %v3338, %v3320
        %v4563 = vpack.c.b16 %v3339, %v3321
        %v4564 = vpack.c.b16 %v3340, %v3322
        %v4565 = vpack.c.b16 %v3341, %v3323
        %v4566 = vpack.c.b16 %v3342, %v3324
        %v4567 = vpack.c.b16 %v3343, %v3325
        %v4568 = vpack.c.b16 %v3344, %v3326
        %v4569 = vpack.c.b16 %v3345, %v3327
        %v4570 = vpack.c.b16 %v3346, %v3328
        %v4571 = vpack.c.b16 %v3347, %v3329
        %v4572 = vpack.c.b16 %v3348, %v3330
        %v4573 = vpack.c.b16 %v3349, %v3331
        %v4574 = vpack.c.b16 %v3350, %v3332
        %v4575 = vpack.c.b16 %v3369, %v3351
        %v4576 = vpack.c.b16 %v3370, %v3352
        %v4577 = vpack.c.b16 %v3371, %v3353
        %v4578 = vpack.c.b16 %v3372, %v3354
        %v4579 = vpack.c.b16 %v3373, %v3355
        %v4580 = vpack.c.b16 %v3374, %v3356
        %v4581 = vpack.c.b16 %v3375, %v3357
        %v4582 = vpack.c.b16 %v3376, %v3358
        %v4583 = vpack.c.b16 %v3377, %v3359
        %v4584 = vpack.c.b16 %v3378, %v3360
        %v4585 = vpack.c.b16 %v3379, %v3361
        %v4586 = vpack.c.b16 %v3380, %v3362
        %v4587 = vpack.c.b16 %v3381, %v3363
        %v4588 = vpack.c.b16 %v3382, %v3364
        %v4589 = vpack.c.b16 %v3383, %v3365
        %v4590 = vpack.c.b16 %v3384, %v3366
        %v4591 = vpack.c.b16 %v3385, %v3367
        %v4592 = vpack.c.b16 %v3386, %v3368
        %v4593 = vpack.c.b16 %v3405, %v3387
        %v4594 = vpack.c.b16 %v3406, %v3388
        %v4595 = vpack.c.b16 %v3407, %v3389
        %v4596 = vpack.c.b16 %v3408, %v3390
        %v4597 = vpack.c.b16 %v3409, %v3391
        %v4598 = vpack.c.b16 %v3410, %v3392
        %v4599 = vpack.c.b16 %v3411, %v3393
        %v4600 = vpack.c.b16 %v3412, %v3394
        %v4601 = vpack.c.b16 %v3413, %v3395
        %v4602 = vpack.c.b16 %v3414, %v3396
        %v4603 = vpack.c.b16 %v3415, %v3397
        %v4604 = vpack.c.b16 %v3416, %v3398
        %v4605 = vpack.c.b16 %v3417, %v3399
        %v4606 = vpack.c.b16 %v3418, %v3400
        %v4607 = vpack.c.b16 %v3419, %v3401
        %v4608 = vpack.c.b16 %v3420, %v3402
        %v4609 = vpack.c.b16 %v3421, %v3403
        %v4610 = vpack.c.b16 %v3422, %v3404
        %v4611 = vpack.c.b16 %v3441, %v3423
        %v4612 = vpack.c.b16 %v3442, %v3424
        %v4613 = vpack.c.b16 %v3443, %v3425
        %v4614 = vpack.c.b16 %v3444, %v3426
        %v4615 = vpack.c.b16 %v3445, %v3427
        %v4616 = vpack.c.b16 %v3446, %v3428
        %v4617 = vpack.c.b16 %v3447, %v3429
        %v4618 = vpack.c.b16 %v3448, %v3430
        %v4619 = vpack.c.b16 %v3449, %v3431
        %v4620 = vpack.c.b16 %v3450, %v3432
        %v4621 = vpack.c.b16 %v3451, %v3433
        %v4622 = vpack.c.b16 %v3452, %v3434
        %v4623 = vpack.c.b16 %v3453, %v3435
        %v4624 = vpack.c.b16 %v3454, %v3436
        %v4625 = vpack.c.b16 %v3455, %v3437
        %v4626 = vpack.c.b16 %v3456, %v3438
        %v4627 = vpack.c.b16 %v3457, %v3439
        %v4628 = vpack.c.b16 %v3458, %v3440
        %v4629 = vpack.c.b16 %v3477, %v3459
        %v4630 = vpack.c.b16 %v3478, %v3460
        %v4631 = vpack.c.b16 %v3479, %v3461
        %v4632 = vpack.c.b16 %v3480, %v3462
        %v4633 = vpack.c.b16 %v3481, %v3463
        %v4634 = vpack.c.b16 %v3482, %v3464
        %v4635 = vpack.c.b16 %v3483, %v3465
        %v4636 = vpack.c.b16 %v3484, %v3466
        %v4637 = vpack.c.b16 %v3485, %v3467
        %v4638 = vpack.c.b16 %v3486, %v3468
        %v4639 = vpack.c.b16 %v3487, %v3469
        %v4640 = vpack.c.b16 %v3488, %v3470
        %v4641 = vpack.c.b16 %v3489, %v3471
        %v4642 = vpack.c.b16 %v3490, %v3472
        %v4643 = vpack.c.b16 %v3491, %v3473
        %v4644 = vpack.c.b16 %v3492, %v3474
        %v4645 = vpack.c.b16 %v3493, %v3475
        %v4646 = vpack.c.b16 %v3494, %v3476
        %v4647 = vpack.c.b16 %v3513, %v3495
        %v4648 = vpack.c.b16 %v3514, %v3496
        %v4649 = vpack.c.b16 %v3515, %v3497
        %v4650 = vpack.c.b16 %v3516, %v3498
        %v4651 = vpack.c.b16 %v3517, %v3499
        %v4652 = vpack.c.b16 %v3518, %v3500
        %v4653 = vpack.c.b16 %v3519, %v3501
        %v4654 = vpack.c.b16 %v3520, %v3502
        %v4655 = vpack.c.b16 %v3521, %v3503
        %v4656 = vpack.c.b16 %v3522, %v3504
        %v4657 = vpack.c.b16 %v3523, %v3505
        %v4658 = vpack.c.b16 %v3524, %v3506
        %v4659 = vpack.c.b16 %v3525, %v3507
        %v4660 = vpack.c.b16 %v3526, %v3508
        %v4661 = vpack.c.b16 %v3527, %v3509
        %v4662 = vpack.c.b16 %v3528, %v3510
        %v4663 = vpack.c.b16 %v3529, %v3511
        %v4664 = vpack.c.b16 %v3530, %v3512
        %v4665 = vpack.c.b16 %v3549, %v3531
        %v4666 = vpack.c.b16 %v3550, %v3532
        %v4667 = vpack.c.b16 %v3551, %v3533
        %v4668 = vpack.c.b16 %v3552, %v3534
        %v4669 = vpack.c.b16 %v3553, %v3535
        %v4670 = vpack.c.b16 %v3554, %v3536
        %v4671 = vpack.c.b16 %v3555, %v3537
        %v4672 = vpack.c.b16 %v3556, %v3538
        %v4673 = vpack.c.b16 %v3557, %v3539
        %v4674 = vpack.c.b16 %v3558, %v3540
        %v4675 = vpack.c.b16 %v3559, %v3541
        %v4676 = vpack.c.b16 %v3560, %v3542
        %v4677 = vpack.c.b16 %v3561, %v3543
        %v4678 = vpack.c.b16 %v3562, %v3544
        %v4679 = vpack.c.b16 %v3563, %v3545
        %v4680 = vpack.c.b16 %v3564, %v3546
        %v4681 = vpack.c.b16 %v3565, %v3547
        %v4682 = vpack.c.b16 %v3566, %v3548
        %v4683 = vpack.c.b16 %v3585, %v3567
        %v4684 = vpack.c.b16 %v3586, %v3568
        %v4685 = vpack.c.b16 %v3587, %v3569
        %v4686 = vpack.c.b16 %v3588, %v3570
        %v4687 = vpack.c.b16 %v3589, %v3571
        %v4688 = vpack.c.b16 %v3590, %v3572
        %v4689 = vpack.c.b16 %v3591, %v3573
        %v4690 = vpack.c.b16 %v3592, %v3574
        %v4691 = vpack.c.b16 %v3593, %v3575
        %v4692 = vpack.c.b16 %v3594, %v3576
        %v4693 = vpack.c.b16 %v3595, %v3577
        %v4694 = vpack.c.b16 %v3596, %v3578
        %v4695 = vpack.c.b16 %v3597, %v3579
        %v4696 = vpack.c.b16 %v3598, %v3580
        %v4697 = vpack.c.b16 %v3599, %v3581
        %v4698 = vpack.c.b16 %v3600, %v3582
        %v4699 = vpack.c.b16 %v3601, %v3583
        %v4700 = vpack.c.b16 %v3602, %v3584
        %v4701 = vpack.c.b16 %v3621, %v3603
        %v4702 = vpack.c.b16 %v3622, %v3604
        %v4703 = vpack.c.b16 %v3623, %v3605
        %v4704 = vpack.c.b16 %v3624, %v3606
        %v4705 = vpack.c.b16 %v3625, %v3607
        %v4706 = vpack.c.b16 %v3626, %v3608
        %v4707 = vpack.c.b16 %v3627, %v3609
        %v4708 = vpack.c.b16 %v3628, %v3610
        %v4709 = vpack.c.b16 %v3629, %v3611
        %v4710 = vpack.c.b16 %v3630, %v3612
        %v4711 = vpack.c.b16 %v3631, %v3613
        %v4712 = vpack.c.b16 %v3632, %v3614
        %v4713 = vpack.c.b16 %v3633, %v3615
        %v4714 = vpack.c.b16 %v3634, %v3616
        %v4715 = vpack.c.b16 %v3635, %v3617
        %v4716 = vpack.c.b16 %v3636, %v3618
        %v4717 = vpack.c.b16 %v3637, %v3619
        %v4718 = vpack.c.b16 %v3638, %v3620
        %v4719 = vpack.c.b16 %v3657, %v3639
        %v4720 = vpack.c.b16 %v3658, %v3640
        %v4721 = vpack.c.b16 %v3659, %v3641
        %v4722 = vpack.c.b16 %v3660, %v3642
        %v4723 = vpack.c.b16 %v3661, %v3643
        %v4724 = vpack.c.b16 %v3662, %v3644
        %v4725 = vpack.c.b16 %v3663, %v3645
        %v4726 = vpack.c.b16 %v3664, %v3646
        %v4727 = vpack.c.b16 %v3665, %v3647
        %v4728 = vpack.c.b16 %v3666, %v3648
        %v4729 = vpack.c.b16 %v3667, %v3649
        %v4730 = vpack.c.b16 %v3668, %v3650
        %v4731 = vpack.c.b16 %v3669, %v3651
        %v4732 = vpack.c.b16 %v3670, %v3652
        %v4733 = vpack.c.b16 %v3671, %v3653
        %v4734 = vpack.c.b16 %v3672, %v3654
        %v4735 = vpack.c.b16 %v3673, %v3655
        %v4736 = vpack.c.b16 %v3674, %v3656
        %v4737 = vpack.c.b16 %v3693, %v3675
        %v4738 = vpack.c.b16 %v3694, %v3676
        %v4739 = vpack.c.b16 %v3695, %v3677
        %v4740 = vpack.c.b16 %v3696, %v3678
        %v4741 = vpack.c.b16 %v3697, %v3679
        %v4742 = vpack.c.b16 %v3698, %v3680
        %v4743 = vpack.c.b16 %v3699, %v3681
        %v4744 = vpack.c.b16 %v3700, %v3682
        %v4745 = vpack.c.b16 %v3701, %v3683
        %v4746 = vpack.c.b16 %v3702, %v3684
        %v4747 = vpack.c.b16 %v3703, %v3685
        %v4748 = vpack.c.b16 %v3704, %v3686
        %v4749 = vpack.c.b16 %v3705, %v3687
        %v4750 = vpack.c.b16 %v3706, %v3688
        %v4751 = vpack.c.b16 %v3707, %v3689
        %v4752 = vpack.c.b16 %v3708, %v3690
        %v4753 = vpack.c.b16 %v3709, %v3691
        %v4754 = vpack.c.b16 %v3710, %v3692
        %v4755 = vpack.c.b16 %v3729, %v3711
        %v4756 = vpack.c.b16 %v3730, %v3712
        %v4757 = vpack.c.b16 %v3731, %v3713
        %v4758 = vpack.c.b16 %v3732, %v3714
        %v4759 = vpack.c.b16 %v3733, %v3715
        %v4760 = vpack.c.b16 %v3734, %v3716
        %v4761 = vpack.c.b16 %v3735, %v3717
        %v4762 = vpack.c.b16 %v3736, %v3718
        %v4763 = vpack.c.b16 %v3737, %v3719
        %v4764 = vpack.c.b16 %v3738, %v3720
        %v4765 = vpack.c.b16 %v3739, %v3721
        %v4766 = vpack.c.b16 %v3740, %v3722
        %v4767 = vpack.c.b16 %v3741, %v3723
        %v4768 = vpack.c.b16 %v3742, %v3724
        %v4769 = vpack.c.b16 %v3743, %v3725
        %v4770 = vpack.c.b16 %v3744, %v3726
        %v4771 = vpack.c.b16 %v3745, %v3727
        %v4772 = vpack.c.b16 %v3746, %v3728
        %v4773 = vpack.c.b16 %v3765, %v3747
        %v4774 = vpack.c.b16 %v3766, %v3748
        %v4775 = vpack.c.b16 %v3767, %v3749
        %v4776 = vpack.c.b16 %v3768, %v3750
        %v4777 = vpack.c.b16 %v3769, %v3751
        %v4778 = vpack.c.b16 %v3770, %v3752
        %v4779 = vpack.c.b16 %v3771, %v3753
        %v4780 = vpack.c.b16 %v3772, %v3754
        %v4781 = vpack.c.b16 %v3773, %v3755
        %v4782 = vpack.c.b16 %v3774, %v3756
        %v4783 = vpack.c.b16 %v3775, %v3757
        %v4784 = vpack.c.b16 %v3776, %v3758
        %v4785 = vpack.c.b16 %v3777, %v3759
        %v4786 = vpack.c.b16 %v3778, %v3760
        %v4787 = vpack.c.b16 %v3779, %v3761
        %v4788 = vpack.c.b16 %v3780, %v3762
        %v4789 = vpack.c.b16 %v3781, %v3763
        %v4790 = vpack.c.b16 %v3782, %v3764
        %v4791 = vpack.c.b16 %v3801, %v3783
        %v4792 = vpack.c.b16 %v3802, %v3784
        %v4793 = vpack.c.b16 %v3803, %v3785
        %v4794 = vpack.c.b16 %v3804, %v3786
        %v4795 = vpack.c.b16 %v3805, %v3787
        %v4796 = vpack.c.b16 %v3806, %v3788
        %v4797 = vpack.c.b16 %v3807, %v3789
        %v4798 = vpack.c.b16 %v3808, %v3790
        %v4799 = vpack.c.b16 %v3809, %v3791
        %v4800 = vpack.c.b16 %v3810, %v3792
        %v4801 = vpack.c.b16 %v3811, %v3793
        %v4802 = vpack.c.b16 %v3812, %v3794
        %v4803 = vpack.c.b16 %v3813, %v3795
        %v4804 = vpack.c.b16 %v3814, %v3796
        %v4805 = vpack.c.b16 %v3815, %v3797
        %v4806 = vpack.c.b16 %v3816, %v3798
        %v4807 = vpack.c.b16 %v3817, %v3799
        %v4808 = vpack.c.b16 %v3818, %v3800
        %v4809 = vpack.c.b16 %v3837, %v3819
        %v4810 = vpack.c.b16 %v3838, %v3820
        %v4811 = vpack.c.b16 %v3839, %v3821
        %v4812 = vpack.c.b16 %v3840, %v3822
        %v4813 = vpack.c.b16 %v3841, %v3823
        %v4814 = vpack.c.b16 %v3842, %v3824
        %v4815 = vpack.c.b16 %v3843, %v3825
        %v4816 = vpack.c.b16 %v3844, %v3826
        %v4817 = vpack.c.b16 %v3845, %v3827
        %v4818 = vpack.c.b16 %v3846, %v3828
        %v4819 = vpack.c.b16 %v3847, %v3829
        %v4820 = vpack.c.b16 %v3848, %v3830
        %v4821 = vpack.c.b16 %v3849, %v3831
        %v4822 = vpack.c.b16 %v3850, %v3832
        %v4823 = vpack.c.b16 %v3851, %v3833
        %v4824 = vpack.c.b16 %v3852, %v3834
        %v4825 = vpack.c.b16 %v3853, %v3835
        %v4826 = vpack.c.b16 %v3854, %v3836
        %v4827 = vpack.c.b16 %v3873, %v3855
        %v4828 = vpack.c.b16 %v3874, %v3856
        %v4829 = vpack.c.b16 %v3875, %v3857
        %v4830 = vpack.c.b16 %v3876, %v3858
        %v4831 = vpack.c.b16 %v3877, %v3859
        %v4832 = vpack.c.b16 %v3878, %v3860
        %v4833 = vpack.c.b16 %v3879, %v3861
        %v4834 = vpack.c.b16 %v3880, %v3862
        %v4835 = vpack.c.b16 %v3881, %v3863
        %v4836 = vpack.c.b16 %v3882, %v3864
        %v4837 = vpack.c.b16 %v3883, %v3865
        %v4838 = vpack.c.b16 %v3884, %v3866
        %v4839 = vpack.c.b16 %v3885, %v3867
        %v4840 = vpack.c.b16 %v3886, %v3868
        %v4841 = vpack.c.b16 %v3887, %v3869
        %v4842 = vpack.c.b16 %v3888, %v3870
        %v4843 = vpack.c.b16 %v3889, %v3871
        %v4844 = vpack.c.b16 %v3890, %v3872
        %v4845 = vpack.c.b16 %v3909, %v3891
        %v4846 = vpack.c.b16 %v3910, %v3892
        %v4847 = vpack.c.b16 %v3911, %v3893
        %v4848 = vpack.c.b16 %v3912, %v3894
        %v4849 = vpack.c.b16 %v3913, %v3895
        %v4850 = vpack.c.b16 %v3914, %v3896
        %v4851 = vpack.c.b16 %v3915, %v3897
        %v4852 = vpack.c.b16 %v3916, %v3898
        %v4853 = vpack.c.b16 %v3917, %v3899
        %v4854 = vpack.c.b16 %v3918, %v3900
        %v4855 = vpack.c.b16 %v3919, %v3901
        %v4856 = vpack.c.b16 %v3920, %v3902
        %v4857 = vpack.c.b16 %v3921, %v3903
        %v4858 = vpack.c.b16 %v3922, %v3904
        %v4859 = vpack.c.b16 %v3923, %v3905
        %v4860 = vpack.c.b16 %v3924, %v3906
        %v4861 = vpack.c.b16 %v3925, %v3907
        %v4862 = vpack.c.b16 %v3926, %v3908
        %v4863 = vpack.c.b16 %v3945, %v3927
        %v4864 = vpack.c.b16 %v3946, %v3928
        %v4865 = vpack.c.b16 %v3947, %v3929
        %v4866 = vpack.c.b16 %v3948, %v3930
        %v4867 = vpack.c.b16 %v3949, %v3931
        %v4868 = vpack.c.b16 %v3950, %v3932
        %v4869 = vpack.c.b16 %v3951, %v3933
        %v4870 = vpack.c.b16 %v3952, %v3934
        %v4871 = vpack.c.b16 %v3953, %v3935
        %v4872 = vpack.c.b16 %v3954, %v3936
        %v4873 = vpack.c.b16 %v3955, %v3937
        %v4874 = vpack.c.b16 %v3956, %v3938
        %v4875 = vpack.c.b16 %v3957, %v3939
        %v4876 = vpack.c.b16 %v3958, %v3940
        %v4877 = vpack.c.b16 %v3959, %v3941
        %v4878 = vpack.c.b16 %v3960, %v3942
        %v4879 = vpack.c.b16 %v3961, %v3943
        %v4880 = vpack.c.b16 %v3962, %v3944
        %v4881 = vpack.c.b16 %v3981, %v3963
        %v4882 = vpack.c.b16 %v3982, %v3964
        %v4883 = vpack.c.b16 %v3983, %v3965
        %v4884 = vpack.c.b16 %v3984, %v3966
        %v4885 = vpack.c.b16 %v3985, %v3967
        %v4886 = vpack.c.b16 %v3986, %v3968
        %v4887 = vpack.c.b16 %v3987, %v3969
        %v4888 = vpack.c.b16 %v3988, %v3970
        %v4889 = vpack.c.b16 %v3989, %v3971
        %v4890 = vpack.c.b16 %v3990, %v3972
        %v4891 = vpack.c.b16 %v3991, %v3973
        %v4892 = vpack.c.b16 %v3992, %v3974
        %v4893 = vpack.c.b16 %v3993, %v3975
        %v4894 = vpack.c.b16 %v3994, %v3976
        %v4895 = vpack.c.b16 %v3995, %v3977
        %v4896 = vpack.c.b16 %v3996, %v3978
        %v4897 = vpack.c.b16 %v3997, %v3979
        %v4898 = vpack.c.b16 %v3998, %v3980
        %v4899 = vpack.c.b16 %v4017, %v3999
        %v4900 = vpack.c.b16 %v4018, %v4000
        %v4901 = vpack.c.b16 %v4019, %v4001
        %v4902 = vpack.c.b16 %v4020, %v4002
        %v4903 = vpack.c.b16 %v4021, %v4003
        %v4904 = vpack.c.b16 %v4022, %v4004
        %v4905 = vpack.c.b16 %v4023, %v4005
        %v4906 = vpack.c.b16 %v4024, %v4006
        %v4907 = vpack.c.b16 %v4025, %v4007
        %v4908 = vpack.c.b16 %v4026, %v4008
        %v4909 = vpack.c.b16 %v4027, %v4009
        %v4910 = vpack.c.b16 %v4028, %v4010
        %v4911 = vpack.c.b16 %v4029, %v4011
        %v4912 = vpack.c.b16 %v4030, %v4012
        %v4913 = vpack.c.b16 %v4031, %v4013
        %v4914 = vpack.c.b16 %v4032, %v4014
        %v4915 = vpack.c.b16 %v4033, %v4015
        %v4916 = vpack.c.b16 %v4034, %v4016
        %v4917 = vpack.c.b16 %v4053, %v4035
        %v4918 = vpack.c.b16 %v4054, %v4036
        %v4919 = vpack.c.b16 %v4055, %v4037
        %v4920 = vpack.c.b16 %v4056, %v4038
        %v4921 = vpack.c.b16 %v4057, %v4039
        %v4922 = vpack.c.b16 %v4058, %v4040
        %v4923 = vpack.c.b16 %v4059, %v4041
        %v4924 = vpack.c.b16 %v4060, %v4042
        %v4925 = vpack.c.b16 %v4061, %v4043
        %v4926 = vpack.c.b16 %v4062, %v4044
        %v4927 = vpack.c.b16 %v4063, %v4045
        %v4928 = vpack.c.b16 %v4064, %v4046
        %v4929 = vpack.c.b16 %v4065, %v4047
        %v4930 = vpack.c.b16 %v4066, %v4048
        %v4931 = vpack.c.b16 %v4067, %v4049
        %v4932 = vpack.c.b16 %v4068, %v4050
        %v4933 = vpack.c.b16 %v4069, %v4051
        %v4934 = vpack.c.b16 %v4070, %v4052
        %5799 = vmatprep.subr.bf16.mxu0 %v4198
        %5800 = vmatpush1.bf16.msra.mxu0 %v4197
        %5801 = vmatprep.subr.bf16.mxu0 %v4180
        %5802 = vmatpush1.bf16.msra.mxu0 %v4179
        %5803 = vmatprep.subr.bf16.mxu0 %v4162
        %5804 = vmatpush1.bf16.msra.mxu0 %v4161
        %5805 = vmatprep.subr.bf16.mxu0 %v4144
        %5806 = vmatpush1.bf16.msra.mxu0 %v4143
        %5807 = vmatprep.subr.bf16.mxu0 %v4126
        %5808 = vmatpush1.bf16.msra.mxu0 %v4125
        %5809 = vmatprep.subr.bf16.mxu0 %v4108
        %5810 = vmatpush1.bf16.msra.mxu0 %v4107
        %5811 = vmatprep.subr.bf16.mxu0 %v4090
        %5812 = vmatpush1.bf16.msra.mxu0 %v4089
        %5813 = vmatprep.subr.bf16.mxu0 %v4072
        %5814 = vmatpush1.bf16.msra.mxu0 %v4071
        %5815 = vmatprep.subr.bf16.mxu0 %v4342
        %5816 = vmatpush2.bf16.msra.mxu0 %v4341
        %5817 = vmatprep.subr.bf16.mxu0 %v4324
        %5818 = vmatpush2.bf16.msra.mxu0 %v4323
        %5819 = vmatprep.subr.bf16.mxu0 %v4306
        %5820 = vmatpush2.bf16.msra.mxu0 %v4305
        %5821 = vmatprep.subr.bf16.mxu0 %v4288
        %5822 = vmatpush2.bf16.msra.mxu0 %v4287
        %5823 = vmatprep.subr.bf16.mxu0 %v4270
        %5824 = vmatpush2.bf16.msra.mxu0 %v4269
        %5825 = vmatprep.subr.bf16.mxu0 %v4252
        %5826 = vmatpush2.bf16.msra.mxu0 %v4251
        %5827 = vmatprep.subr.bf16.mxu0 %v4234
        %5828 = vmatpush2.bf16.msra.mxu0 %v4233
        %5829 = vmatprep.subr.bf16.mxu0 %v4216
        %5830 = vmatpush2.bf16.msra.mxu0 %v4215
        %5831 = vmatprep.mubr.bf16.mxu0 %v1468
        %5832 = vmatmul.mubr.bf16.gmra.mxu0 %v1467
        %v5833 = vpop.f32.mrf.mxu0
        %v5834 = vadd.f32 0.0, %v5833
        %v5835 = vpop.f32.mrf.mxu0
        %v5836 = vadd.f32 0.0, %v5835
        %v5837 = vpop.f32.mrf.mxu0
        %v5838 = vpop.f32.mrf.mxu0
        %5839 = vdwg.mxu0
        %5840 = vmatprep.subr.bf16.mxu0 %v4486
        %5841 = vmatpush1.bf16.msra.mxu0 %v4485
        %5842 = vmatprep.subr.bf16.mxu0 %v4468
        %5843 = vmatpush1.bf16.msra.mxu0 %v4467
        %5844 = vmatprep.subr.bf16.mxu0 %v4450
        %5845 = vmatpush1.bf16.msra.mxu0 %v4449
        %5846 = vmatprep.subr.bf16.mxu0 %v4432
        %5847 = vmatpush1.bf16.msra.mxu0 %v4431
        %5848 = vmatprep.subr.bf16.mxu0 %v4414
        %5849 = vmatpush1.bf16.msra.mxu0 %v4413
        %5850 = vmatprep.subr.bf16.mxu0 %v4396
        %5851 = vmatpush1.bf16.msra.mxu0 %v4395
        %5852 = vmatprep.subr.bf16.mxu0 %v4378
        %5853 = vmatpush1.bf16.msra.mxu0 %v4377
        %5854 = vmatprep.subr.bf16.mxu0 %v4360
        %5855 = vmatpush1.bf16.msra.mxu0 %v4359
        %5856 = vmatprep.subr.bf16.mxu0 %v4630
        %5857 = vmatpush2.bf16.msra.mxu0 %v4629
        %5858 = vmatprep.subr.bf16.mxu0 %v4612
        %5859 = vmatpush2.bf16.msra.mxu0 %v4611
        %5860 = vmatprep.subr.bf16.mxu0 %v4594
        %5861 = vmatpush2.bf16.msra.mxu0 %v4593
        %5862 = vmatprep.subr.bf16.mxu0 %v4576
        %5863 = vmatpush2.bf16.msra.mxu0 %v4575
        %5864 = vmatprep.subr.bf16.mxu0 %v4558
        %5865 = vmatpush2.bf16.msra.mxu0 %v4557
        %5866 = vmatprep.subr.bf16.mxu0 %v4540
        %5867 = vmatpush2.bf16.msra.mxu0 %v4539
        %5868 = vmatprep.subr.bf16.mxu0 %v4522
        %5869 = vmatpush2.bf16.msra.mxu0 %v4521
        %5870 = vmatprep.subr.bf16.mxu0 %v4504
        %5871 = vmatpush2.bf16.msra.mxu0 %v4503
        %5872 = vmatprep.mubr.bf16.mxu0 %v1470
        %5873 = vmatmul.mubr.bf16.gmra.mxu0 %v1469
        %v5874 = vpop.f32.mrf.mxu0
        %v5875 = vadd.f32 %v5834, %v5874
        %v5876 = vpop.f32.mrf.mxu0
        %v5877 = vadd.f32 %v5836, %v5876
        %v5878 = vpop.f32.mrf.mxu0
        %v5879 = vpop.f32.mrf.mxu0
        %5880 = vdwg.mxu0
        %5881 = vmatprep.subr.bf16.mxu0 %v4774
        %5882 = vmatpush1.bf16.msra.mxu0 %v4773
        %5883 = vmatprep.subr.bf16.mxu0 %v4756
        %5884 = vmatpush1.bf16.msra.mxu0 %v4755
        %5885 = vmatprep.subr.bf16.mxu0 %v4738
        %5886 = vmatpush1.bf16.msra.mxu0 %v4737
        %5887 = vmatprep.subr.bf16.mxu0 %v4720
        %5888 = vmatpush1.bf16.msra.mxu0 %v4719
        %5889 = vmatprep.subr.bf16.mxu0 %v4702
        %5890 = vmatpush1.bf16.msra.mxu0 %v4701
        %5891 = vmatprep.subr.bf16.mxu0 %v4684
        %5892 = vmatpush1.bf16.msra.mxu0 %v4683
        %5893 = vmatprep.subr.bf16.mxu0 %v4666
        %5894 = vmatpush1.bf16.msra.mxu0 %v4665
        %5895 = vmatprep.subr.bf16.mxu0 %v4648
        %5896 = vmatpush1.bf16.msra.mxu0 %v4647
        %5897 = vmatprep.subr.bf16.mxu0 %v4918
        %5898 = vmatpush2.bf16.msra.mxu0 %v4917
        %5899 = vmatprep.subr.bf16.mxu0 %v4900
        %5900 = vmatpush2.bf16.msra.mxu0 %v4899
        %5901 = vmatprep.subr.bf16.mxu0 %v4882
        %5902 = vmatpush2.bf16.msra.mxu0 %v4881
        %5903 = vmatprep.subr.bf16.mxu0 %v4864
        %5904 = vmatpush2.bf16.msra.mxu0 %v4863
        %5905 = vmatprep.subr.bf16.mxu0 %v4846
        %5906 = vmatpush2.bf16.msra.mxu0 %v4845
        %5907 = vmatprep.subr.bf16.mxu0 %v4828
        %5908 = vmatpush2.bf16.msra.mxu0 %v4827
        %5909 = vmatprep.subr.bf16.mxu0 %v4810
        %5910 = vmatpush2.bf16.msra.mxu0 %v4809
        %5911 = vmatprep.subr.bf16.mxu0 %v4792
        %5912 = vmatpush2.bf16.msra.mxu0 %v4791
        %5913 = vmatprep.mubr.bf16.mxu0 %v1472
        %5914 = vmatmul.mubr.bf16.gmra.mxu0 %v1471
        %v5915 = vpop.f32.mrf.mxu0
        %v5916 = vadd.f32 %v5875, %v5915
        %v5917 = vpop.f32.mrf.mxu0
        %v5918 = vadd.f32 %v5877, %v5917
        %v5919 = vpop.f32.mrf.mxu0
        %v5920 = vpop.f32.mrf.mxu0
        %5921 = vdwg.mxu0
        %5922 = vmatprep.subr.bf16.mxu0 %v4200
        %5923 = vmatpush1.bf16.msra.mxu0 %v4199
        %5924 = vmatprep.subr.bf16.mxu0 %v4182
        %5925 = vmatpush1.bf16.msra.mxu0 %v4181
        %5926 = vmatprep.subr.bf16.mxu0 %v4164
        %5927 = vmatpush1.bf16.msra.mxu0 %v4163
        %5928 = vmatprep.subr.bf16.mxu0 %v4146
        %5929 = vmatpush1.bf16.msra.mxu0 %v4145
        %5930 = vmatprep.subr.bf16.mxu0 %v4128
        %5931 = vmatpush1.bf16.msra.mxu0 %v4127
        %5932 = vmatprep.subr.bf16.mxu0 %v4110
        %5933 = vmatpush1.bf16.msra.mxu0 %v4109
        %5934 = vmatprep.subr.bf16.mxu0 %v4092
        %5935 = vmatpush1.bf16.msra.mxu0 %v4091
        %5936 = vmatprep.subr.bf16.mxu0 %v4074
        %5937 = vmatpush1.bf16.msra.mxu0 %v4073
        %5938 = vmatprep.subr.bf16.mxu0 %v4344
        %5939 = vmatpush2.bf16.msra.mxu0 %v4343
        %5940 = vmatprep.subr.bf16.mxu0 %v4326
        %5941 = vmatpush2.bf16.msra.mxu0 %v4325
        %5942 = vmatprep.subr.bf16.mxu0 %v4308
        %5943 = vmatpush2.bf16.msra.mxu0 %v4307
        %5944 = vmatprep.subr.bf16.mxu0 %v4290
        %5945 = vmatpush2.bf16.msra.mxu0 %v4289
        %5946 = vmatprep.subr.bf16.mxu0 %v4272
        %5947 = vmatpush2.bf16.msra.mxu0 %v4271
        %5948 = vmatprep.subr.bf16.mxu0 %v4254
        %5949 = vmatpush2.bf16.msra.mxu0 %v4253
        %5950 = vmatprep.subr.bf16.mxu0 %v4236
        %5951 = vmatpush2.bf16.msra.mxu0 %v4235
        %5952 = vmatprep.subr.bf16.mxu0 %v4218
        %5953 = vmatpush2.bf16.msra.mxu0 %v4217
        %5954 = vmatprep.mubr.bf16.mxu0 %v1468
        %5955 = vmatmul.mubr.bf16.gmra.mxu0 %v1467
        %v5956 = vpop.f32.mrf.mxu0
        %v5957 = vadd.f32 0.0, %v5956
        %v5958 = vpop.f32.mrf.mxu0
        %v5959 = vadd.f32 0.0, %v5958
        %v5960 = vpop.f32.mrf.mxu0
        %v5961 = vpop.f32.mrf.mxu0
        %5962 = vdwg.mxu0
        %5963 = vmatprep.subr.bf16.mxu0 %v4488
        %5964 = vmatpush1.bf16.msra.mxu0 %v4487
        %5965 = vmatprep.subr.bf16.mxu0 %v4470
        %5966 = vmatpush1.bf16.msra.mxu0 %v4469
        %5967 = vmatprep.subr.bf16.mxu0 %v4452
        %5968 = vmatpush1.bf16.msra.mxu0 %v4451
        %5969 = vmatprep.subr.bf16.mxu0 %v4434
        %5970 = vmatpush1.bf16.msra.mxu0 %v4433
        %5971 = vmatprep.subr.bf16.mxu0 %v4416
        %5972 = vmatpush1.bf16.msra.mxu0 %v4415
        %5973 = vmatprep.subr.bf16.mxu0 %v4398
        %5974 = vmatpush1.bf16.msra.mxu0 %v4397
        %5975 = vmatprep.subr.bf16.mxu0 %v4380
        %5976 = vmatpush1.bf16.msra.mxu0 %v4379
        %5977 = vmatprep.subr.bf16.mxu0 %v4362
        %5978 = vmatpush1.bf16.msra.mxu0 %v4361
        %5979 = vmatprep.subr.bf16.mxu0 %v4632
        %5980 = vmatpush2.bf16.msra.mxu0 %v4631
        %5981 = vmatprep.subr.bf16.mxu0 %v4614
        %5982 = vmatpush2.bf16.msra.mxu0 %v4613
        %5983 = vmatprep.subr.bf16.mxu0 %v4596
        %5984 = vmatpush2.bf16.msra.mxu0 %v4595
        %5985 = vmatprep.subr.bf16.mxu0 %v4578
        %5986 = vmatpush2.bf16.msra.mxu0 %v4577
        %5987 = vmatprep.subr.bf16.mxu0 %v4560
        %5988 = vmatpush2.bf16.msra.mxu0 %v4559
        %5989 = vmatprep.subr.bf16.mxu0 %v4542
        %5990 = vmatpush2.bf16.msra.mxu0 %v4541
        %5991 = vmatprep.subr.bf16.mxu0 %v4524
        %5992 = vmatpush2.bf16.msra.mxu0 %v4523
        %5993 = vmatprep.subr.bf16.mxu0 %v4506
        %5994 = vmatpush2.bf16.msra.mxu0 %v4505
        %5995 = vmatprep.mubr.bf16.mxu0 %v1470
        %5996 = vmatmul.mubr.bf16.gmra.mxu0 %v1469
        %v5997 = vpop.f32.mrf.mxu0
        %v5998 = vadd.f32 %v5957, %v5997
        %v5999 = vpop.f32.mrf.mxu0
        %v6000 = vadd.f32 %v5959, %v5999
        %v6001 = vpop.f32.mrf.mxu0
        %v6002 = vpop.f32.mrf.mxu0
        %6003 = vdwg.mxu0
        %6004 = vmatprep.subr.bf16.mxu0 %v4776
        %6005 = vmatpush1.bf16.msra.mxu0 %v4775
        %6006 = vmatprep.subr.bf16.mxu0 %v4758
        %6007 = vmatpush1.bf16.msra.mxu0 %v4757
        %6008 = vmatprep.subr.bf16.mxu0 %v4740
        %6009 = vmatpush1.bf16.msra.mxu0 %v4739
        %6010 = vmatprep.subr.bf16.mxu0 %v4722
        %6011 = vmatpush1.bf16.msra.mxu0 %v4721
        %6012 = vmatprep.subr.bf16.mxu0 %v4704
        %6013 = vmatpush1.bf16.msra.mxu0 %v4703
        %6014 = vmatprep.subr.bf16.mxu0 %v4686
        %6015 = vmatpush1.bf16.msra.mxu0 %v4685
        %6016 = vmatprep.subr.bf16.mxu0 %v4668
        %6017 = vmatpush1.bf16.msra.mxu0 %v4667
        %6018 = vmatprep.subr.bf16.mxu0 %v4650
        %6019 = vmatpush1.bf16.msra.mxu0 %v4649
        %6020 = vmatprep.subr.bf16.mxu0 %v4920
        %6021 = vmatpush2.bf16.msra.mxu0 %v4919
        %6022 = vmatprep.subr.bf16.mxu0 %v4902
        %6023 = vmatpush2.bf16.msra.mxu0 %v4901
        %6024 = vmatprep.subr.bf16.mxu0 %v4884
        %6025 = vmatpush2.bf16.msra.mxu0 %v4883
        %6026 = vmatprep.subr.bf16.mxu0 %v4866
        %6027 = vmatpush2.bf16.msra.mxu0 %v4865
        %6028 = vmatprep.subr.bf16.mxu0 %v4848
        %6029 = vmatpush2.bf16.msra.mxu0 %v4847
        %6030 = vmatprep.subr.bf16.mxu0 %v4830
        %6031 = vmatpush2.bf16.msra.mxu0 %v4829
        %6032 = vmatprep.subr.bf16.mxu0 %v4812
        %6033 = vmatpush2.bf16.msra.mxu0 %v4811
        %6034 = vmatprep.subr.bf16.mxu0 %v4794
        %6035 = vmatpush2.bf16.msra.mxu0 %v4793
        %6036 = vmatprep.mubr.bf16.mxu0 %v1472
        %6037 = vmatmul.mubr.bf16.gmra.mxu0 %v1471
        %v6038 = vpop.f32.mrf.mxu0
        %v6039 = vadd.f32 %v5998, %v6038
        %v6040 = vpop.f32.mrf.mxu0
        %v6041 = vadd.f32 %v6000, %v6040
        %v6042 = vpop.f32.mrf.mxu0
        %v6043 = vpop.f32.mrf.mxu0
        %6044 = vdwg.mxu0
        %6045 = vmatprep.subr.bf16.mxu0 %v4202
        %6046 = vmatpush1.bf16.msra.mxu0 %v4201
        %6047 = vmatprep.subr.bf16.mxu0 %v4184
        %6048 = vmatpush1.bf16.msra.mxu0 %v4183
        %6049 = vmatprep.subr.bf16.mxu0 %v4166
        %6050 = vmatpush1.bf16.msra.mxu0 %v4165
        %6051 = vmatprep.subr.bf16.mxu0 %v4148
        %6052 = vmatpush1.bf16.msra.mxu0 %v4147
        %6053 = vmatprep.subr.bf16.mxu0 %v4130
        %6054 = vmatpush1.bf16.msra.mxu0 %v4129
        %6055 = vmatprep.subr.bf16.mxu0 %v4112
        %6056 = vmatpush1.bf16.msra.mxu0 %v4111
        %6057 = vmatprep.subr.bf16.mxu0 %v4094
        %6058 = vmatpush1.bf16.msra.mxu0 %v4093
        %6059 = vmatprep.subr.bf16.mxu0 %v4076
        %6060 = vmatpush1.bf16.msra.mxu0 %v4075
        %6061 = vmatprep.subr.bf16.mxu0 %v4346
        %6062 = vmatpush2.bf16.msra.mxu0 %v4345
        %6063 = vmatprep.subr.bf16.mxu0 %v4328
        %6064 = vmatpush2.bf16.msra.mxu0 %v4327
        %6065 = vmatprep.subr.bf16.mxu0 %v4310
        %6066 = vmatpush2.bf16.msra.mxu0 %v4309
        %6067 = vmatprep.subr.bf16.mxu0 %v4292
        %6068 = vmatpush2.bf16.msra.mxu0 %v4291
        %6069 = vmatprep.subr.bf16.mxu0 %v4274
        %6070 = vmatpush2.bf16.msra.mxu0 %v4273
        %6071 = vmatprep.subr.bf16.mxu0 %v4256
        %6072 = vmatpush2.bf16.msra.mxu0 %v4255
        %6073 = vmatprep.subr.bf16.mxu0 %v4238
        %6074 = vmatpush2.bf16.msra.mxu0 %v4237
        %6075 = vmatprep.subr.bf16.mxu0 %v4220
        %6076 = vmatpush2.bf16.msra.mxu0 %v4219
        %6077 = vmatprep.mubr.bf16.mxu0 %v1468
        %6078 = vmatmul.mubr.bf16.gmra.mxu0 %v1467
        %v6079 = vpop.f32.mrf.mxu0
        %v6080 = vadd.f32 0.0, %v6079
        %v6081 = vpop.f32.mrf.mxu0
        %v6082 = vadd.f32 0.0, %v6081
        %v6083 = vpop.f32.mrf.mxu0
        %v6084 = vpop.f32.mrf.mxu0
        %6085 = vdwg.mxu0
        %6086 = vmatprep.subr.bf16.mxu0 %v4490
        %6087 = vmatpush1.bf16.msra.mxu0 %v4489
        %6088 = vmatprep.subr.bf16.mxu0 %v4472
        %6089 = vmatpush1.bf16.msra.mxu0 %v4471
        %6090 = vmatprep.subr.bf16.mxu0 %v4454
        %6091 = vmatpush1.bf16.msra.mxu0 %v4453
        %6092 = vmatprep.subr.bf16.mxu0 %v4436
        %6093 = vmatpush1.bf16.msra.mxu0 %v4435
        %6094 = vmatprep.subr.bf16.mxu0 %v4418
        %6095 = vmatpush1.bf16.msra.mxu0 %v4417
        %6096 = vmatprep.subr.bf16.mxu0 %v4400
        %6097 = vmatpush1.bf16.msra.mxu0 %v4399
        %6098 = vmatprep.subr.bf16.mxu0 %v4382
        %6099 = vmatpush1.bf16.msra.mxu0 %v4381
        %6100 = vmatprep.subr.bf16.mxu0 %v4364
        %6101 = vmatpush1.bf16.msra.mxu0 %v4363
        %6102 = vmatprep.subr.bf16.mxu0 %v4634
        %6103 = vmatpush2.bf16.msra.mxu0 %v4633
        %6104 = vmatprep.subr.bf16.mxu0 %v4616
        %6105 = vmatpush2.bf16.msra.mxu0 %v4615
        %6106 = vmatprep.subr.bf16.mxu0 %v4598
        %6107 = vmatpush2.bf16.msra.mxu0 %v4597
        %6108 = vmatprep.subr.bf16.mxu0 %v4580
        %6109 = vmatpush2.bf16.msra.mxu0 %v4579
        %6110 = vmatprep.subr.bf16.mxu0 %v4562
        %6111 = vmatpush2.bf16.msra.mxu0 %v4561
        %6112 = vmatprep.subr.bf16.mxu0 %v4544
        %6113 = vmatpush2.bf16.msra.mxu0 %v4543
        %6114 = vmatprep.subr.bf16.mxu0 %v4526
        %6115 = vmatpush2.bf16.msra.mxu0 %v4525
        %6116 = vmatprep.subr.bf16.mxu0 %v4508
        %6117 = vmatpush2.bf16.msra.mxu0 %v4507
        %6118 = vmatprep.mubr.bf16.mxu0 %v1470
        %6119 = vmatmul.mubr.bf16.gmra.mxu0 %v1469
        %v6120 = vpop.f32.mrf.mxu0
        %v6121 = vadd.f32 %v6080, %v6120
        %v6122 = vpop.f32.mrf.mxu0
        %v6123 = vadd.f32 %v6082, %v6122
        %v6124 = vpop.f32.mrf.mxu0
        %v6125 = vpop.f32.mrf.mxu0
        %6126 = vdwg.mxu0
        %6127 = vmatprep.subr.bf16.mxu0 %v4778
        %6128 = vmatpush1.bf16.msra.mxu0 %v4777
        %6129 = vmatprep.subr.bf16.mxu0 %v4760
        %6130 = vmatpush1.bf16.msra.mxu0 %v4759
        %6131 = vmatprep.subr.bf16.mxu0 %v4742
        %6132 = vmatpush1.bf16.msra.mxu0 %v4741
        %6133 = vmatprep.subr.bf16.mxu0 %v4724
        %6134 = vmatpush1.bf16.msra.mxu0 %v4723
        %6135 = vmatprep.subr.bf16.mxu0 %v4706
        %6136 = vmatpush1.bf16.msra.mxu0 %v4705
        %6137 = vmatprep.subr.bf16.mxu0 %v4688
        %6138 = vmatpush1.bf16.msra.mxu0 %v4687
        %6139 = vmatprep.subr.bf16.mxu0 %v4670
        %6140 = vmatpush1.bf16.msra.mxu0 %v4669
        %6141 = vmatprep.subr.bf16.mxu0 %v4652
        %6142 = vmatpush1.bf16.msra.mxu0 %v4651
        %6143 = vmatprep.subr.bf16.mxu0 %v4922
        %6144 = vmatpush2.bf16.msra.mxu0 %v4921
        %6145 = vmatprep.subr.bf16.mxu0 %v4904
        %6146 = vmatpush2.bf16.msra.mxu0 %v4903
        %6147 = vmatprep.subr.bf16.mxu0 %v4886
        %6148 = vmatpush2.bf16.msra.mxu0 %v4885
        %6149 = vmatprep.subr.bf16.mxu0 %v4868
        %6150 = vmatpush2.bf16.msra.mxu0 %v4867
        %6151 = vmatprep.subr.bf16.mxu0 %v4850
        %6152 = vmatpush2.bf16.msra.mxu0 %v4849
        %6153 = vmatprep.subr.bf16.mxu0 %v4832
        %6154 = vmatpush2.bf16.msra.mxu0 %v4831
        %6155 = vmatprep.subr.bf16.mxu0 %v4814
        %6156 = vmatpush2.bf16.msra.mxu0 %v4813
        %6157 = vmatprep.subr.bf16.mxu0 %v4796
        %6158 = vmatpush2.bf16.msra.mxu0 %v4795
        %6159 = vmatprep.mubr.bf16.mxu0 %v1472
        %6160 = vmatmul.mubr.bf16.gmra.mxu0 %v1471
        %v6161 = vpop.f32.mrf.mxu0
        %v6162 = vadd.f32 %v6121, %v6161
        %v6163 = vpop.f32.mrf.mxu0
        %v6164 = vadd.f32 %v6123, %v6163
        %v6165 = vpop.f32.mrf.mxu0
        %v6166 = vpop.f32.mrf.mxu0
        %6167 = vdwg.mxu0
        %6168 = vmatprep.subr.bf16.mxu0 %v4204
        %6169 = vmatpush1.bf16.msra.mxu0 %v4203
        %6170 = vmatprep.subr.bf16.mxu0 %v4186
        %6171 = vmatpush1.bf16.msra.mxu0 %v4185
        %6172 = vmatprep.subr.bf16.mxu0 %v4168
        %6173 = vmatpush1.bf16.msra.mxu0 %v4167
        %6174 = vmatprep.subr.bf16.mxu0 %v4150
        %6175 = vmatpush1.bf16.msra.mxu0 %v4149
        %6176 = vmatprep.subr.bf16.mxu0 %v4132
        %6177 = vmatpush1.bf16.msra.mxu0 %v4131
        %6178 = vmatprep.subr.bf16.mxu0 %v4114
        %6179 = vmatpush1.bf16.msra.mxu0 %v4113
        %6180 = vmatprep.subr.bf16.mxu0 %v4096
        %6181 = vmatpush1.bf16.msra.mxu0 %v4095
        %6182 = vmatprep.subr.bf16.mxu0 %v4078
        %6183 = vmatpush1.bf16.msra.mxu0 %v4077
        %6184 = vmatprep.subr.bf16.mxu0 %v4348
        %6185 = vmatpush2.bf16.msra.mxu0 %v4347
        %6186 = vmatprep.subr.bf16.mxu0 %v4330
        %6187 = vmatpush2.bf16.msra.mxu0 %v4329
        %6188 = vmatprep.subr.bf16.mxu0 %v4312
        %6189 = vmatpush2.bf16.msra.mxu0 %v4311
        %6190 = vmatprep.subr.bf16.mxu0 %v4294
        %6191 = vmatpush2.bf16.msra.mxu0 %v4293
        %6192 = vmatprep.subr.bf16.mxu0 %v4276
        %6193 = vmatpush2.bf16.msra.mxu0 %v4275
        %6194 = vmatprep.subr.bf16.mxu0 %v4258
        %6195 = vmatpush2.bf16.msra.mxu0 %v4257
        %6196 = vmatprep.subr.bf16.mxu0 %v4240
        %6197 = vmatpush2.bf16.msra.mxu0 %v4239
        %6198 = vmatprep.subr.bf16.mxu0 %v4222
        %6199 = vmatpush2.bf16.msra.mxu0 %v4221
        %6200 = vmatprep.mubr.bf16.mxu0 %v1468
        %6201 = vmatmul.mubr.bf16.gmra.mxu0 %v1467
        %v6202 = vpop.f32.mrf.mxu0
        %v6203 = vadd.f32 0.0, %v6202
        %v6204 = vpop.f32.mrf.mxu0
        %v6205 = vadd.f32 0.0, %v6204
        %v6206 = vpop.f32.mrf.mxu0
        %v6207 = vpop.f32.mrf.mxu0
        %6208 = vdwg.mxu0
        %6209 = vmatprep.subr.bf16.mxu0 %v4492
        %6210 = vmatpush1.bf16.msra.mxu0 %v4491
        %6211 = vmatprep.subr.bf16.mxu0 %v4474
        %6212 = vmatpush1.bf16.msra.mxu0 %v4473
        %6213 = vmatprep.subr.bf16.mxu0 %v4456
        %6214 = vmatpush1.bf16.msra.mxu0 %v4455
        %6215 = vmatprep.subr.bf16.mxu0 %v4438
        %6216 = vmatpush1.bf16.msra.mxu0 %v4437
        %6217 = vmatprep.subr.bf16.mxu0 %v4420
        %6218 = vmatpush1.bf16.msra.mxu0 %v4419
        %6219 = vmatprep.subr.bf16.mxu0 %v4402
        %6220 = vmatpush1.bf16.msra.mxu0 %v4401
        %6221 = vmatprep.subr.bf16.mxu0 %v4384
        %6222 = vmatpush1.bf16.msra.mxu0 %v4383
        %6223 = vmatprep.subr.bf16.mxu0 %v4366
        %6224 = vmatpush1.bf16.msra.mxu0 %v4365
        %6225 = vmatprep.subr.bf16.mxu0 %v4636
        %6226 = vmatpush2.bf16.msra.mxu0 %v4635
        %6227 = vmatprep.subr.bf16.mxu0 %v4618
        %6228 = vmatpush2.bf16.msra.mxu0 %v4617
        %6229 = vmatprep.subr.bf16.mxu0 %v4600
        %6230 = vmatpush2.bf16.msra.mxu0 %v4599
        %6231 = vmatprep.subr.bf16.mxu0 %v4582
        %6232 = vmatpush2.bf16.msra.mxu0 %v4581
        %6233 = vmatprep.subr.bf16.mxu0 %v4564
        %6234 = vmatpush2.bf16.msra.mxu0 %v4563
        %6235 = vmatprep.subr.bf16.mxu0 %v4546
        %6236 = vmatpush2.bf16.msra.mxu0 %v4545
        %6237 = vmatprep.subr.bf16.mxu0 %v4528
        %6238 = vmatpush2.bf16.msra.mxu0 %v4527
        %6239 = vmatprep.subr.bf16.mxu0 %v4510
        %6240 = vmatpush2.bf16.msra.mxu0 %v4509
        %6241 = vmatprep.mubr.bf16.mxu0 %v1470
        %6242 = vmatmul.mubr.bf16.gmra.mxu0 %v1469
        %v6243 = vpop.f32.mrf.mxu0
        %v6244 = vadd.f32 %v6203, %v6243
        %v6245 = vpop.f32.mrf.mxu0
        %v6246 = vadd.f32 %v6205, %v6245
        %v6247 = vpop.f32.mrf.mxu0
        %v6248 = vpop.f32.mrf.mxu0
        %6249 = vdwg.mxu0
        %6250 = vmatprep.subr.bf16.mxu0 %v4780
        %6251 = vmatpush1.bf16.msra.mxu0 %v4779
        %6252 = vmatprep.subr.bf16.mxu0 %v4762
        %6253 = vmatpush1.bf16.msra.mxu0 %v4761
        %6254 = vmatprep.subr.bf16.mxu0 %v4744
        %6255 = vmatpush1.bf16.msra.mxu0 %v4743
        %6256 = vmatprep.subr.bf16.mxu0 %v4726
        %6257 = vmatpush1.bf16.msra.mxu0 %v4725
        %6258 = vmatprep.subr.bf16.mxu0 %v4708
        %6259 = vmatpush1.bf16.msra.mxu0 %v4707
        %6260 = vmatprep.subr.bf16.mxu0 %v4690
        %6261 = vmatpush1.bf16.msra.mxu0 %v4689
        %6262 = vmatprep.subr.bf16.mxu0 %v4672
        %6263 = vmatpush1.bf16.msra.mxu0 %v4671
        %6264 = vmatprep.subr.bf16.mxu0 %v4654
        %6265 = vmatpush1.bf16.msra.mxu0 %v4653
        %6266 = vmatprep.subr.bf16.mxu0 %v4924
        %6267 = vmatpush2.bf16.msra.mxu0 %v4923
        %6268 = vmatprep.subr.bf16.mxu0 %v4906
        %6269 = vmatpush2.bf16.msra.mxu0 %v4905
        %6270 = vmatprep.subr.bf16.mxu0 %v4888
        %6271 = vmatpush2.bf16.msra.mxu0 %v4887
        %6272 = vmatprep.subr.bf16.mxu0 %v4870
        %6273 = vmatpush2.bf16.msra.mxu0 %v4869
        %6274 = vmatprep.subr.bf16.mxu0 %v4852
        %6275 = vmatpush2.bf16.msra.mxu0 %v4851
        %6276 = vmatprep.subr.bf16.mxu0 %v4834
        %6277 = vmatpush2.bf16.msra.mxu0 %v4833
        %6278 = vmatprep.subr.bf16.mxu0 %v4816
        %6279 = vmatpush2.bf16.msra.mxu0 %v4815
        %6280 = vmatprep.subr.bf16.mxu0 %v4798
        %6281 = vmatpush2.bf16.msra.mxu0 %v4797
        %6282 = vmatprep.mubr.bf16.mxu0 %v1472
        %6283 = vmatmul.mubr.bf16.gmra.mxu0 %v1471
        %v6284 = vpop.f32.mrf.mxu0
        %v6285 = vadd.f32 %v6244, %v6284
        %v6286 = vpop.f32.mrf.mxu0
        %v6287 = vadd.f32 %v6246, %v6286
        %v6288 = vpop.f32.mrf.mxu0
        %v6289 = vpop.f32.mrf.mxu0
        %6290 = vdwg.mxu0
        %6291 = vmatprep.subr.bf16.mxu0 %v4206
        %6292 = vmatpush1.bf16.msra.mxu0 %v4205
        %6293 = vmatprep.subr.bf16.mxu0 %v4188
        %6294 = vmatpush1.bf16.msra.mxu0 %v4187
        %6295 = vmatprep.subr.bf16.mxu0 %v4170
        %6296 = vmatpush1.bf16.msra.mxu0 %v4169
        %6297 = vmatprep.subr.bf16.mxu0 %v4152
        %6298 = vmatpush1.bf16.msra.mxu0 %v4151
        %6299 = vmatprep.subr.bf16.mxu0 %v4134
        %6300 = vmatpush1.bf16.msra.mxu0 %v4133
        %6301 = vmatprep.subr.bf16.mxu0 %v4116
        %6302 = vmatpush1.bf16.msra.mxu0 %v4115
        %6303 = vmatprep.subr.bf16.mxu0 %v4098
        %6304 = vmatpush1.bf16.msra.mxu0 %v4097
        %6305 = vmatprep.subr.bf16.mxu0 %v4080
        %6306 = vmatpush1.bf16.msra.mxu0 %v4079
        %6307 = vmatprep.subr.bf16.mxu0 %v4350
        %6308 = vmatpush2.bf16.msra.mxu0 %v4349
        %6309 = vmatprep.subr.bf16.mxu0 %v4332
        %6310 = vmatpush2.bf16.msra.mxu0 %v4331
        %6311 = vmatprep.subr.bf16.mxu0 %v4314
        %6312 = vmatpush2.bf16.msra.mxu0 %v4313
        %6313 = vmatprep.subr.bf16.mxu0 %v4296
        %6314 = vmatpush2.bf16.msra.mxu0 %v4295
        %6315 = vmatprep.subr.bf16.mxu0 %v4278
        %6316 = vmatpush2.bf16.msra.mxu0 %v4277
        %6317 = vmatprep.subr.bf16.mxu0 %v4260
        %6318 = vmatpush2.bf16.msra.mxu0 %v4259
        %6319 = vmatprep.subr.bf16.mxu0 %v4242
        %6320 = vmatpush2.bf16.msra.mxu0 %v4241
        %6321 = vmatprep.subr.bf16.mxu0 %v4224
        %6322 = vmatpush2.bf16.msra.mxu0 %v4223
        %6323 = vmatprep.mubr.bf16.mxu0 %v1468
        %6324 = vmatmul.mubr.bf16.gmra.mxu0 %v1467
        %v6325 = vpop.f32.mrf.mxu0
        %v6326 = vadd.f32 0.0, %v6325
        %v6327 = vpop.f32.mrf.mxu0
        %v6328 = vadd.f32 0.0, %v6327
        %v6329 = vpop.f32.mrf.mxu0
        %v6330 = vpop.f32.mrf.mxu0
        %6331 = vdwg.mxu0
        %6332 = vmatprep.subr.bf16.mxu0 %v4494
        %6333 = vmatpush1.bf16.msra.mxu0 %v4493
        %6334 = vmatprep.subr.bf16.mxu0 %v4476
        %6335 = vmatpush1.bf16.msra.mxu0 %v4475
        %6336 = vmatprep.subr.bf16.mxu0 %v4458
        %6337 = vmatpush1.bf16.msra.mxu0 %v4457
        %6338 = vmatprep.subr.bf16.mxu0 %v4440
        %6339 = vmatpush1.bf16.msra.mxu0 %v4439
        %6340 = vmatprep.subr.bf16.mxu0 %v4422
        %6341 = vmatpush1.bf16.msra.mxu0 %v4421
        %6342 = vmatprep.subr.bf16.mxu0 %v4404
        %6343 = vmatpush1.bf16.msra.mxu0 %v4403
        %6344 = vmatprep.subr.bf16.mxu0 %v4386
        %6345 = vmatpush1.bf16.msra.mxu0 %v4385
        %6346 = vmatprep.subr.bf16.mxu0 %v4368
        %6347 = vmatpush1.bf16.msra.mxu0 %v4367
        %6348 = vmatprep.subr.bf16.mxu0 %v4638
        %6349 = vmatpush2.bf16.msra.mxu0 %v4637
        %6350 = vmatprep.subr.bf16.mxu0 %v4620
        %6351 = vmatpush2.bf16.msra.mxu0 %v4619
        %6352 = vmatprep.subr.bf16.mxu0 %v4602
        %6353 = vmatpush2.bf16.msra.mxu0 %v4601
        %6354 = vmatprep.subr.bf16.mxu0 %v4584
        %6355 = vmatpush2.bf16.msra.mxu0 %v4583
        %6356 = vmatprep.subr.bf16.mxu0 %v4566
        %6357 = vmatpush2.bf16.msra.mxu0 %v4565
        %6358 = vmatprep.subr.bf16.mxu0 %v4548
        %6359 = vmatpush2.bf16.msra.mxu0 %v4547
        %6360 = vmatprep.subr.bf16.mxu0 %v4530
        %6361 = vmatpush2.bf16.msra.mxu0 %v4529
        %6362 = vmatprep.subr.bf16.mxu0 %v4512
        %6363 = vmatpush2.bf16.msra.mxu0 %v4511
        %6364 = vmatprep.mubr.bf16.mxu0 %v1470
        %6365 = vmatmul.mubr.bf16.gmra.mxu0 %v1469
        %v6366 = vpop.f32.mrf.mxu0
        %v6367 = vadd.f32 %v6326, %v6366
        %v6368 = vpop.f32.mrf.mxu0
        %v6369 = vadd.f32 %v6328, %v6368
        %v6370 = vpop.f32.mrf.mxu0
        %v6371 = vpop.f32.mrf.mxu0
        %6372 = vdwg.mxu0
        %6373 = vmatprep.subr.bf16.mxu0 %v4782
        %6374 = vmatpush1.bf16.msra.mxu0 %v4781
        %6375 = vmatprep.subr.bf16.mxu0 %v4764
        %6376 = vmatpush1.bf16.msra.mxu0 %v4763
        %6377 = vmatprep.subr.bf16.mxu0 %v4746
        %6378 = vmatpush1.bf16.msra.mxu0 %v4745
        %6379 = vmatprep.subr.bf16.mxu0 %v4728
        %6380 = vmatpush1.bf16.msra.mxu0 %v4727
        %6381 = vmatprep.subr.bf16.mxu0 %v4710
        %6382 = vmatpush1.bf16.msra.mxu0 %v4709
        %6383 = vmatprep.subr.bf16.mxu0 %v4692
        %6384 = vmatpush1.bf16.msra.mxu0 %v4691
        %6385 = vmatprep.subr.bf16.mxu0 %v4674
        %6386 = vmatpush1.bf16.msra.mxu0 %v4673
        %6387 = vmatprep.subr.bf16.mxu0 %v4656
        %6388 = vmatpush1.bf16.msra.mxu0 %v4655
        %6389 = vmatprep.subr.bf16.mxu0 %v4926
        %6390 = vmatpush2.bf16.msra.mxu0 %v4925
        %6391 = vmatprep.subr.bf16.mxu0 %v4908
        %6392 = vmatpush2.bf16.msra.mxu0 %v4907
        %6393 = vmatprep.subr.bf16.mxu0 %v4890
        %6394 = vmatpush2.bf16.msra.mxu0 %v4889
        %6395 = vmatprep.subr.bf16.mxu0 %v4872
        %6396 = vmatpush2.bf16.msra.mxu0 %v4871
        %6397 = vmatprep.subr.bf16.mxu0 %v4854
        %6398 = vmatpush2.bf16.msra.mxu0 %v4853
        %6399 = vmatprep.subr.bf16.mxu0 %v4836
        %6400 = vmatpush2.bf16.msra.mxu0 %v4835
        %6401 = vmatprep.subr.bf16.mxu0 %v4818
        %6402 = vmatpush2.bf16.msra.mxu0 %v4817
        %6403 = vmatprep.subr.bf16.mxu0 %v4800
        %6404 = vmatpush2.bf16.msra.mxu0 %v4799
        %6405 = vmatprep.mubr.bf16.mxu0 %v1472
        %6406 = vmatmul.mubr.bf16.gmra.mxu0 %v1471
        %v6407 = vpop.f32.mrf.mxu0
        %v6408 = vadd.f32 %v6367, %v6407
        %v6409 = vpop.f32.mrf.mxu0
        %v6410 = vadd.f32 %v6369, %v6409
        %v6411 = vpop.f32.mrf.mxu0
        %v6412 = vpop.f32.mrf.mxu0
        %6413 = vdwg.mxu0
        %6414 = vmatprep.subr.bf16.mxu0 %v4208
        %6415 = vmatpush1.bf16.msra.mxu0 %v4207
        %6416 = vmatprep.subr.bf16.mxu0 %v4190
        %6417 = vmatpush1.bf16.msra.mxu0 %v4189
        %6418 = vmatprep.subr.bf16.mxu0 %v4172
        %6419 = vmatpush1.bf16.msra.mxu0 %v4171
        %6420 = vmatprep.subr.bf16.mxu0 %v4154
        %6421 = vmatpush1.bf16.msra.mxu0 %v4153
        %6422 = vmatprep.subr.bf16.mxu0 %v4136
        %6423 = vmatpush1.bf16.msra.mxu0 %v4135
        %6424 = vmatprep.subr.bf16.mxu0 %v4118
        %6425 = vmatpush1.bf16.msra.mxu0 %v4117
        %6426 = vmatprep.subr.bf16.mxu0 %v4100
        %6427 = vmatpush1.bf16.msra.mxu0 %v4099
        %6428 = vmatprep.subr.bf16.mxu0 %v4082
        %6429 = vmatpush1.bf16.msra.mxu0 %v4081
        %6430 = vmatprep.subr.bf16.mxu0 %v4352
        %6431 = vmatpush2.bf16.msra.mxu0 %v4351
        %6432 = vmatprep.subr.bf16.mxu0 %v4334
        %6433 = vmatpush2.bf16.msra.mxu0 %v4333
        %6434 = vmatprep.subr.bf16.mxu0 %v4316
        %6435 = vmatpush2.bf16.msra.mxu0 %v4315
        %6436 = vmatprep.subr.bf16.mxu0 %v4298
        %6437 = vmatpush2.bf16.msra.mxu0 %v4297
        %6438 = vmatprep.subr.bf16.mxu0 %v4280
        %6439 = vmatpush2.bf16.msra.mxu0 %v4279
        %6440 = vmatprep.subr.bf16.mxu0 %v4262
        %6441 = vmatpush2.bf16.msra.mxu0 %v4261
        %6442 = vmatprep.subr.bf16.mxu0 %v4244
        %6443 = vmatpush2.bf16.msra.mxu0 %v4243
        %6444 = vmatprep.subr.bf16.mxu0 %v4226
        %6445 = vmatpush2.bf16.msra.mxu0 %v4225
        %6446 = vmatprep.mubr.bf16.mxu0 %v1468
        %6447 = vmatmul.mubr.bf16.gmra.mxu0 %v1467
        %v6448 = vpop.f32.mrf.mxu0
        %v6449 = vadd.f32 0.0, %v6448
        %v6450 = vpop.f32.mrf.mxu0
        %v6451 = vadd.f32 0.0, %v6450
        %v6452 = vpop.f32.mrf.mxu0
        %v6453 = vpop.f32.mrf.mxu0
        %6454 = vdwg.mxu0
        %6455 = vmatprep.subr.bf16.mxu0 %v4496
        %6456 = vmatpush1.bf16.msra.mxu0 %v4495
        %6457 = vmatprep.subr.bf16.mxu0 %v4478
        %6458 = vmatpush1.bf16.msra.mxu0 %v4477
        %6459 = vmatprep.subr.bf16.mxu0 %v4460
        %6460 = vmatpush1.bf16.msra.mxu0 %v4459
        %6461 = vmatprep.subr.bf16.mxu0 %v4442
        %6462 = vmatpush1.bf16.msra.mxu0 %v4441
        %6463 = vmatprep.subr.bf16.mxu0 %v4424
        %6464 = vmatpush1.bf16.msra.mxu0 %v4423
        %6465 = vmatprep.subr.bf16.mxu0 %v4406
        %6466 = vmatpush1.bf16.msra.mxu0 %v4405
        %6467 = vmatprep.subr.bf16.mxu0 %v4388
        %6468 = vmatpush1.bf16.msra.mxu0 %v4387
        %6469 = vmatprep.subr.bf16.mxu0 %v4370
        %6470 = vmatpush1.bf16.msra.mxu0 %v4369
        %6471 = vmatprep.subr.bf16.mxu0 %v4640
        %6472 = vmatpush2.bf16.msra.mxu0 %v4639
        %6473 = vmatprep.subr.bf16.mxu0 %v4622
        %6474 = vmatpush2.bf16.msra.mxu0 %v4621
        %6475 = vmatprep.subr.bf16.mxu0 %v4604
        %6476 = vmatpush2.bf16.msra.mxu0 %v4603
        %6477 = vmatprep.subr.bf16.mxu0 %v4586
        %6478 = vmatpush2.bf16.msra.mxu0 %v4585
        %6479 = vmatprep.subr.bf16.mxu0 %v4568
        %6480 = vmatpush2.bf16.msra.mxu0 %v4567
        %6481 = vmatprep.subr.bf16.mxu0 %v4550
        %6482 = vmatpush2.bf16.msra.mxu0 %v4549
        %6483 = vmatprep.subr.bf16.mxu0 %v4532
        %6484 = vmatpush2.bf16.msra.mxu0 %v4531
        %6485 = vmatprep.subr.bf16.mxu0 %v4514
        %6486 = vmatpush2.bf16.msra.mxu0 %v4513
        %6487 = vmatprep.mubr.bf16.mxu0 %v1470
        %6488 = vmatmul.mubr.bf16.gmra.mxu0 %v1469
        %v6489 = vpop.f32.mrf.mxu0
        %v6490 = vadd.f32 %v6449, %v6489
        %v6491 = vpop.f32.mrf.mxu0
        %v6492 = vadd.f32 %v6451, %v6491
        %v6493 = vpop.f32.mrf.mxu0
        %v6494 = vpop.f32.mrf.mxu0
        %6495 = vdwg.mxu0
        %6496 = vmatprep.subr.bf16.mxu0 %v4784
        %6497 = vmatpush1.bf16.msra.mxu0 %v4783
        %6498 = vmatprep.subr.bf16.mxu0 %v4766
        %6499 = vmatpush1.bf16.msra.mxu0 %v4765
        %6500 = vmatprep.subr.bf16.mxu0 %v4748
        %6501 = vmatpush1.bf16.msra.mxu0 %v4747
        %6502 = vmatprep.subr.bf16.mxu0 %v4730
        %6503 = vmatpush1.bf16.msra.mxu0 %v4729
        %6504 = vmatprep.subr.bf16.mxu0 %v4712
        %6505 = vmatpush1.bf16.msra.mxu0 %v4711
        %6506 = vmatprep.subr.bf16.mxu0 %v4694
        %6507 = vmatpush1.bf16.msra.mxu0 %v4693
        %6508 = vmatprep.subr.bf16.mxu0 %v4676
        %6509 = vmatpush1.bf16.msra.mxu0 %v4675
        %6510 = vmatprep.subr.bf16.mxu0 %v4658
        %6511 = vmatpush1.bf16.msra.mxu0 %v4657
        %6512 = vmatprep.subr.bf16.mxu0 %v4928
        %6513 = vmatpush2.bf16.msra.mxu0 %v4927
        %6514 = vmatprep.subr.bf16.mxu0 %v4910
        %6515 = vmatpush2.bf16.msra.mxu0 %v4909
        %6516 = vmatprep.subr.bf16.mxu0 %v4892
        %6517 = vmatpush2.bf16.msra.mxu0 %v4891
        %6518 = vmatprep.subr.bf16.mxu0 %v4874
        %6519 = vmatpush2.bf16.msra.mxu0 %v4873
        %6520 = vmatprep.subr.bf16.mxu0 %v4856
        %6521 = vmatpush2.bf16.msra.mxu0 %v4855
        %6522 = vmatprep.subr.bf16.mxu0 %v4838
        %6523 = vmatpush2.bf16.msra.mxu0 %v4837
        %6524 = vmatprep.subr.bf16.mxu0 %v4820
        %6525 = vmatpush2.bf16.msra.mxu0 %v4819
        %6526 = vmatprep.subr.bf16.mxu0 %v4802
        %6527 = vmatpush2.bf16.msra.mxu0 %v4801
        %6528 = vmatprep.mubr.bf16.mxu0 %v1472
        %6529 = vmatmul.mubr.bf16.gmra.mxu0 %v1471
        %v6530 = vpop.f32.mrf.mxu0
        %v6531 = vadd.f32 %v6490, %v6530
        %v6532 = vpop.f32.mrf.mxu0
        %v6533 = vadd.f32 %v6492, %v6532
        %v6534 = vpop.f32.mrf.mxu0
        %v6535 = vpop.f32.mrf.mxu0
        %6536 = vdwg.mxu0
        %6537 = vmatprep.subr.bf16.mxu0 %v4210
        %6538 = vmatpush1.bf16.msra.mxu0 %v4209
        %6539 = vmatprep.subr.bf16.mxu0 %v4192
        %6540 = vmatpush1.bf16.msra.mxu0 %v4191
        %6541 = vmatprep.subr.bf16.mxu0 %v4174
        %6542 = vmatpush1.bf16.msra.mxu0 %v4173
        %6543 = vmatprep.subr.bf16.mxu0 %v4156
        %6544 = vmatpush1.bf16.msra.mxu0 %v4155
        %6545 = vmatprep.subr.bf16.mxu0 %v4138
        %6546 = vmatpush1.bf16.msra.mxu0 %v4137
        %6547 = vmatprep.subr.bf16.mxu0 %v4120
        %6548 = vmatpush1.bf16.msra.mxu0 %v4119
        %6549 = vmatprep.subr.bf16.mxu0 %v4102
        %6550 = vmatpush1.bf16.msra.mxu0 %v4101
        %6551 = vmatprep.subr.bf16.mxu0 %v4084
        %6552 = vmatpush1.bf16.msra.mxu0 %v4083
        %6553 = vmatprep.subr.bf16.mxu0 %v4354
        %6554 = vmatpush2.bf16.msra.mxu0 %v4353
        %6555 = vmatprep.subr.bf16.mxu0 %v4336
        %6556 = vmatpush2.bf16.msra.mxu0 %v4335
        %6557 = vmatprep.subr.bf16.mxu0 %v4318
        %6558 = vmatpush2.bf16.msra.mxu0 %v4317
        %6559 = vmatprep.subr.bf16.mxu0 %v4300
        %6560 = vmatpush2.bf16.msra.mxu0 %v4299
        %6561 = vmatprep.subr.bf16.mxu0 %v4282
        %6562 = vmatpush2.bf16.msra.mxu0 %v4281
        %6563 = vmatprep.subr.bf16.mxu0 %v4264
        %6564 = vmatpush2.bf16.msra.mxu0 %v4263
        %6565 = vmatprep.subr.bf16.mxu0 %v4246
        %6566 = vmatpush2.bf16.msra.mxu0 %v4245
        %6567 = vmatprep.subr.bf16.mxu0 %v4228
        %6568 = vmatpush2.bf16.msra.mxu0 %v4227
        %6569 = vmatprep.mubr.bf16.mxu0 %v1468
        %6570 = vmatmul.mubr.bf16.gmra.mxu0 %v1467
        %v6571 = vpop.f32.mrf.mxu0
        %v6572 = vadd.f32 0.0, %v6571
        %v6573 = vpop.f32.mrf.mxu0
        %v6574 = vadd.f32 0.0, %v6573
        %v6575 = vpop.f32.mrf.mxu0
        %v6576 = vpop.f32.mrf.mxu0
        %6577 = vdwg.mxu0
        %6578 = vmatprep.subr.bf16.mxu0 %v4498
        %6579 = vmatpush1.bf16.msra.mxu0 %v4497
        %6580 = vmatprep.subr.bf16.mxu0 %v4480
        %6581 = vmatpush1.bf16.msra.mxu0 %v4479
        %6582 = vmatprep.subr.bf16.mxu0 %v4462
        %6583 = vmatpush1.bf16.msra.mxu0 %v4461
        %6584 = vmatprep.subr.bf16.mxu0 %v4444
        %6585 = vmatpush1.bf16.msra.mxu0 %v4443
        %6586 = vmatprep.subr.bf16.mxu0 %v4426
        %6587 = vmatpush1.bf16.msra.mxu0 %v4425
        %6588 = vmatprep.subr.bf16.mxu0 %v4408
        %6589 = vmatpush1.bf16.msra.mxu0 %v4407
        %6590 = vmatprep.subr.bf16.mxu0 %v4390
        %6591 = vmatpush1.bf16.msra.mxu0 %v4389
        %6592 = vmatprep.subr.bf16.mxu0 %v4372
        %6593 = vmatpush1.bf16.msra.mxu0 %v4371
        %6594 = vmatprep.subr.bf16.mxu0 %v4642
        %6595 = vmatpush2.bf16.msra.mxu0 %v4641
        %6596 = vmatprep.subr.bf16.mxu0 %v4624
        %6597 = vmatpush2.bf16.msra.mxu0 %v4623
        %6598 = vmatprep.subr.bf16.mxu0 %v4606
        %6599 = vmatpush2.bf16.msra.mxu0 %v4605
        %6600 = vmatprep.subr.bf16.mxu0 %v4588
        %6601 = vmatpush2.bf16.msra.mxu0 %v4587
        %6602 = vmatprep.subr.bf16.mxu0 %v4570
        %6603 = vmatpush2.bf16.msra.mxu0 %v4569
        %6604 = vmatprep.subr.bf16.mxu0 %v4552
        %6605 = vmatpush2.bf16.msra.mxu0 %v4551
        %6606 = vmatprep.subr.bf16.mxu0 %v4534
        %6607 = vmatpush2.bf16.msra.mxu0 %v4533
        %6608 = vmatprep.subr.bf16.mxu0 %v4516
        %6609 = vmatpush2.bf16.msra.mxu0 %v4515
        %6610 = vmatprep.mubr.bf16.mxu0 %v1470
        %6611 = vmatmul.mubr.bf16.gmra.mxu0 %v1469
        %v6612 = vpop.f32.mrf.mxu0
        %v6613 = vadd.f32 %v6572, %v6612
        %v6614 = vpop.f32.mrf.mxu0
        %v6615 = vadd.f32 %v6574, %v6614
        %v6616 = vpop.f32.mrf.mxu0
        %v6617 = vpop.f32.mrf.mxu0
        %6618 = vdwg.mxu0
        %6619 = vmatprep.subr.bf16.mxu0 %v4786
        %6620 = vmatpush1.bf16.msra.mxu0 %v4785
        %6621 = vmatprep.subr.bf16.mxu0 %v4768
        %6622 = vmatpush1.bf16.msra.mxu0 %v4767
        %6623 = vmatprep.subr.bf16.mxu0 %v4750
        %6624 = vmatpush1.bf16.msra.mxu0 %v4749
        %6625 = vmatprep.subr.bf16.mxu0 %v4732
        %6626 = vmatpush1.bf16.msra.mxu0 %v4731
        %6627 = vmatprep.subr.bf16.mxu0 %v4714
        %6628 = vmatpush1.bf16.msra.mxu0 %v4713
        %6629 = vmatprep.subr.bf16.mxu0 %v4696
        %6630 = vmatpush1.bf16.msra.mxu0 %v4695
        %6631 = vmatprep.subr.bf16.mxu0 %v4678
        %6632 = vmatpush1.bf16.msra.mxu0 %v4677
        %6633 = vmatprep.subr.bf16.mxu0 %v4660
        %6634 = vmatpush1.bf16.msra.mxu0 %v4659
        %6635 = vmatprep.subr.bf16.mxu0 %v4930
        %6636 = vmatpush2.bf16.msra.mxu0 %v4929
        %6637 = vmatprep.subr.bf16.mxu0 %v4912
        %6638 = vmatpush2.bf16.msra.mxu0 %v4911
        %6639 = vmatprep.subr.bf16.mxu0 %v4894
        %6640 = vmatpush2.bf16.msra.mxu0 %v4893
        %6641 = vmatprep.subr.bf16.mxu0 %v4876
        %6642 = vmatpush2.bf16.msra.mxu0 %v4875
        %6643 = vmatprep.subr.bf16.mxu0 %v4858
        %6644 = vmatpush2.bf16.msra.mxu0 %v4857
        %6645 = vmatprep.subr.bf16.mxu0 %v4840
        %6646 = vmatpush2.bf16.msra.mxu0 %v4839
        %6647 = vmatprep.subr.bf16.mxu0 %v4822
        %6648 = vmatpush2.bf16.msra.mxu0 %v4821
        %6649 = vmatprep.subr.bf16.mxu0 %v4804
        %6650 = vmatpush2.bf16.msra.mxu0 %v4803
        %6651 = vmatprep.mubr.bf16.mxu0 %v1472
        %6652 = vmatmul.mubr.bf16.gmra.mxu0 %v1471
        %v6653 = vpop.f32.mrf.mxu0
        %v6654 = vadd.f32 %v6613, %v6653
        %v6655 = vpop.f32.mrf.mxu0
        %v6656 = vadd.f32 %v6615, %v6655
        %v6657 = vpop.f32.mrf.mxu0
        %v6658 = vpop.f32.mrf.mxu0
        %6659 = vdwg.mxu0
        %6660 = vmatprep.subr.bf16.mxu0 %v4212
        %6661 = vmatpush1.bf16.msra.mxu0 %v4211
        %6662 = vmatprep.subr.bf16.mxu0 %v4194
        %6663 = vmatpush1.bf16.msra.mxu0 %v4193
        %6664 = vmatprep.subr.bf16.mxu0 %v4176
        %6665 = vmatpush1.bf16.msra.mxu0 %v4175
        %6666 = vmatprep.subr.bf16.mxu0 %v4158
        %6667 = vmatpush1.bf16.msra.mxu0 %v4157
        %6668 = vmatprep.subr.bf16.mxu0 %v4140
        %6669 = vmatpush1.bf16.msra.mxu0 %v4139
        %6670 = vmatprep.subr.bf16.mxu0 %v4122
        %6671 = vmatpush1.bf16.msra.mxu0 %v4121
        %6672 = vmatprep.subr.bf16.mxu0 %v4104
        %6673 = vmatpush1.bf16.msra.mxu0 %v4103
        %6674 = vmatprep.subr.bf16.mxu0 %v4086
        %6675 = vmatpush1.bf16.msra.mxu0 %v4085
        %6676 = vmatprep.subr.bf16.mxu0 %v4356
        %6677 = vmatpush2.bf16.msra.mxu0 %v4355
        %6678 = vmatprep.subr.bf16.mxu0 %v4338
        %6679 = vmatpush2.bf16.msra.mxu0 %v4337
        %6680 = vmatprep.subr.bf16.mxu0 %v4320
        %6681 = vmatpush2.bf16.msra.mxu0 %v4319
        %6682 = vmatprep.subr.bf16.mxu0 %v4302
        %6683 = vmatpush2.bf16.msra.mxu0 %v4301
        %6684 = vmatprep.subr.bf16.mxu0 %v4284
        %6685 = vmatpush2.bf16.msra.mxu0 %v4283
        %6686 = vmatprep.subr.bf16.mxu0 %v4266
        %6687 = vmatpush2.bf16.msra.mxu0 %v4265
        %6688 = vmatprep.subr.bf16.mxu0 %v4248
        %6689 = vmatpush2.bf16.msra.mxu0 %v4247
        %6690 = vmatprep.subr.bf16.mxu0 %v4230
        %6691 = vmatpush2.bf16.msra.mxu0 %v4229
        %6692 = vmatprep.mubr.bf16.mxu0 %v1468
        %6693 = vmatmul.mubr.bf16.gmra.mxu0 %v1467
        %v6694 = vpop.f32.mrf.mxu0
        %v6695 = vadd.f32 0.0, %v6694
        %v6696 = vpop.f32.mrf.mxu0
        %v6697 = vadd.f32 0.0, %v6696
        %v6698 = vpop.f32.mrf.mxu0
        %v6699 = vpop.f32.mrf.mxu0
        %6700 = vdwg.mxu0
        %6701 = vmatprep.subr.bf16.mxu0 %v4500
        %6702 = vmatpush1.bf16.msra.mxu0 %v4499
        %6703 = vmatprep.subr.bf16.mxu0 %v4482
        %6704 = vmatpush1.bf16.msra.mxu0 %v4481
        %6705 = vmatprep.subr.bf16.mxu0 %v4464
        %6706 = vmatpush1.bf16.msra.mxu0 %v4463
        %6707 = vmatprep.subr.bf16.mxu0 %v4446
        %6708 = vmatpush1.bf16.msra.mxu0 %v4445
        %6709 = vmatprep.subr.bf16.mxu0 %v4428
        %6710 = vmatpush1.bf16.msra.mxu0 %v4427
        %6711 = vmatprep.subr.bf16.mxu0 %v4410
        %6712 = vmatpush1.bf16.msra.mxu0 %v4409
        %6713 = vmatprep.subr.bf16.mxu0 %v4392
        %6714 = vmatpush1.bf16.msra.mxu0 %v4391
        %6715 = vmatprep.subr.bf16.mxu0 %v4374
        %6716 = vmatpush1.bf16.msra.mxu0 %v4373
        %6717 = vmatprep.subr.bf16.mxu0 %v4644
        %6718 = vmatpush2.bf16.msra.mxu0 %v4643
        %6719 = vmatprep.subr.bf16.mxu0 %v4626
        %6720 = vmatpush2.bf16.msra.mxu0 %v4625
        %6721 = vmatprep.subr.bf16.mxu0 %v4608
        %6722 = vmatpush2.bf16.msra.mxu0 %v4607
        %6723 = vmatprep.subr.bf16.mxu0 %v4590
        %6724 = vmatpush2.bf16.msra.mxu0 %v4589
        %6725 = vmatprep.subr.bf16.mxu0 %v4572
        %6726 = vmatpush2.bf16.msra.mxu0 %v4571
        %6727 = vmatprep.subr.bf16.mxu0 %v4554
        %6728 = vmatpush2.bf16.msra.mxu0 %v4553
        %6729 = vmatprep.subr.bf16.mxu0 %v4536
        %6730 = vmatpush2.bf16.msra.mxu0 %v4535
        %6731 = vmatprep.subr.bf16.mxu0 %v4518
        %6732 = vmatpush2.bf16.msra.mxu0 %v4517
        %6733 = vmatprep.mubr.bf16.mxu0 %v1470
        %6734 = vmatmul.mubr.bf16.gmra.mxu0 %v1469
        %v6735 = vpop.f32.mrf.mxu0
        %v6736 = vadd.f32 %v6695, %v6735
        %v6737 = vpop.f32.mrf.mxu0
        %v6738 = vadd.f32 %v6697, %v6737
        %v6739 = vpop.f32.mrf.mxu0
        %v6740 = vpop.f32.mrf.mxu0
        %6741 = vdwg.mxu0
        %6742 = vmatprep.subr.bf16.mxu0 %v4788
        %6743 = vmatpush1.bf16.msra.mxu0 %v4787
        %6744 = vmatprep.subr.bf16.mxu0 %v4770
        %6745 = vmatpush1.bf16.msra.mxu0 %v4769
        %6746 = vmatprep.subr.bf16.mxu0 %v4752
        %6747 = vmatpush1.bf16.msra.mxu0 %v4751
        %6748 = vmatprep.subr.bf16.mxu0 %v4734
        %6749 = vmatpush1.bf16.msra.mxu0 %v4733
        %6750 = vmatprep.subr.bf16.mxu0 %v4716
        %6751 = vmatpush1.bf16.msra.mxu0 %v4715
        %6752 = vmatprep.subr.bf16.mxu0 %v4698
        %6753 = vmatpush1.bf16.msra.mxu0 %v4697
        %6754 = vmatprep.subr.bf16.mxu0 %v4680
        %6755 = vmatpush1.bf16.msra.mxu0 %v4679
        %6756 = vmatprep.subr.bf16.mxu0 %v4662
        %6757 = vmatpush1.bf16.msra.mxu0 %v4661
        %6758 = vmatprep.subr.bf16.mxu0 %v4932
        %6759 = vmatpush2.bf16.msra.mxu0 %v4931
        %6760 = vmatprep.subr.bf16.mxu0 %v4914
        %6761 = vmatpush2.bf16.msra.mxu0 %v4913
        %6762 = vmatprep.subr.bf16.mxu0 %v4896
        %6763 = vmatpush2.bf16.msra.mxu0 %v4895
        %6764 = vmatprep.subr.bf16.mxu0 %v4878
        %6765 = vmatpush2.bf16.msra.mxu0 %v4877
        %6766 = vmatprep.subr.bf16.mxu0 %v4860
        %6767 = vmatpush2.bf16.msra.mxu0 %v4859
        %6768 = vmatprep.subr.bf16.mxu0 %v4842
        %6769 = vmatpush2.bf16.msra.mxu0 %v4841
        %6770 = vmatprep.subr.bf16.mxu0 %v4824
        %6771 = vmatpush2.bf16.msra.mxu0 %v4823
        %6772 = vmatprep.subr.bf16.mxu0 %v4806
        %6773 = vmatpush2.bf16.msra.mxu0 %v4805
        %6774 = vmatprep.mubr.bf16.mxu0 %v1472
        %6775 = vmatmul.mubr.bf16.gmra.mxu0 %v1471
        %v6776 = vpop.f32.mrf.mxu0
        %v6777 = vadd.f32 %v6736, %v6776
        %v6778 = vpop.f32.mrf.mxu0
        %v6779 = vadd.f32 %v6738, %v6778
        %v6780 = vpop.f32.mrf.mxu0
        %v6781 = vpop.f32.mrf.mxu0
        %6782 = vdwg.mxu0
        %6783 = vmatprep.subr.bf16.mxu0 %v4214
        %6784 = vmatpush1.bf16.msra.mxu0 %v4213
        %6785 = vmatprep.subr.bf16.mxu0 %v4196
        %6786 = vmatpush1.bf16.msra.mxu0 %v4195
        %6787 = vmatprep.subr.bf16.mxu0 %v4178
        %6788 = vmatpush1.bf16.msra.mxu0 %v4177
        %6789 = vmatprep.subr.bf16.mxu0 %v4160
        %6790 = vmatpush1.bf16.msra.mxu0 %v4159
        %6791 = vmatprep.subr.bf16.mxu0 %v4142
        %6792 = vmatpush1.bf16.msra.mxu0 %v4141
        %6793 = vmatprep.subr.bf16.mxu0 %v4124
        %6794 = vmatpush1.bf16.msra.mxu0 %v4123
        %6795 = vmatprep.subr.bf16.mxu0 %v4106
        %6796 = vmatpush1.bf16.msra.mxu0 %v4105
        %6797 = vmatprep.subr.bf16.mxu0 %v4088
        %6798 = vmatpush1.bf16.msra.mxu0 %v4087
        %6799 = vmatprep.subr.bf16.mxu0 %v4358
        %6800 = vmatpush2.bf16.msra.mxu0 %v4357
        %6801 = vmatprep.subr.bf16.mxu0 %v4340
        %6802 = vmatpush2.bf16.msra.mxu0 %v4339
        %6803 = vmatprep.subr.bf16.mxu0 %v4322
        %6804 = vmatpush2.bf16.msra.mxu0 %v4321
        %6805 = vmatprep.subr.bf16.mxu0 %v4304
        %6806 = vmatpush2.bf16.msra.mxu0 %v4303
        %6807 = vmatprep.subr.bf16.mxu0 %v4286
        %6808 = vmatpush2.bf16.msra.mxu0 %v4285
        %6809 = vmatprep.subr.bf16.mxu0 %v4268
        %6810 = vmatpush2.bf16.msra.mxu0 %v4267
        %6811 = vmatprep.subr.bf16.mxu0 %v4250
        %6812 = vmatpush2.bf16.msra.mxu0 %v4249
        %6813 = vmatprep.subr.bf16.mxu0 %v4232
        %6814 = vmatpush2.bf16.msra.mxu0 %v4231
        %6815 = vmatprep.mubr.bf16.mxu0 %v1468
        %6816 = vmatmul.mubr.bf16.gmra.mxu0 %v1467
        %v6817 = vpop.f32.mrf.mxu0
        %v6818 = vadd.f32 0.0, %v6817
        %v6819 = vpop.f32.mrf.mxu0
        %v6820 = vadd.f32 0.0, %v6819
        %v6821 = vpop.f32.mrf.mxu0
        %v6822 = vpop.f32.mrf.mxu0
        %6823 = vdwg.mxu0
        %6824 = vmatprep.subr.bf16.mxu0 %v4502
        %6825 = vmatpush1.bf16.msra.mxu0 %v4501
        %6826 = vmatprep.subr.bf16.mxu0 %v4484
        %6827 = vmatpush1.bf16.msra.mxu0 %v4483
        %6828 = vmatprep.subr.bf16.mxu0 %v4466
        %6829 = vmatpush1.bf16.msra.mxu0 %v4465
        %6830 = vmatprep.subr.bf16.mxu0 %v4448
        %6831 = vmatpush1.bf16.msra.mxu0 %v4447
        %6832 = vmatprep.subr.bf16.mxu0 %v4430
        %6833 = vmatpush1.bf16.msra.mxu0 %v4429
        %6834 = vmatprep.subr.bf16.mxu0 %v4412
        %6835 = vmatpush1.bf16.msra.mxu0 %v4411
        %6836 = vmatprep.subr.bf16.mxu0 %v4394
        %6837 = vmatpush1.bf16.msra.mxu0 %v4393
        %6838 = vmatprep.subr.bf16.mxu0 %v4376
        %6839 = vmatpush1.bf16.msra.mxu0 %v4375
        %6840 = vmatprep.subr.bf16.mxu0 %v4646
        %6841 = vmatpush2.bf16.msra.mxu0 %v4645
        %6842 = vmatprep.subr.bf16.mxu0 %v4628
        %6843 = vmatpush2.bf16.msra.mxu0 %v4627
        %6844 = vmatprep.subr.bf16.mxu0 %v4610
        %6845 = vmatpush2.bf16.msra.mxu0 %v4609
        %6846 = vmatprep.subr.bf16.mxu0 %v4592
        %6847 = vmatpush2.bf16.msra.mxu0 %v4591
        %6848 = vmatprep.subr.bf16.mxu0 %v4574
        %6849 = vmatpush2.bf16.msra.mxu0 %v4573
        %6850 = vmatprep.subr.bf16.mxu0 %v4556
        %6851 = vmatpush2.bf16.msra.mxu0 %v4555
        %6852 = vmatprep.subr.bf16.mxu0 %v4538
        %6853 = vmatpush2.bf16.msra.mxu0 %v4537
        %6854 = vmatprep.subr.bf16.mxu0 %v4520
        %6855 = vmatpush2.bf16.msra.mxu0 %v4519
        %6856 = vmatprep.mubr.bf16.mxu0 %v1470
        %6857 = vmatmul.mubr.bf16.gmra.mxu0 %v1469
        %v6858 = vpop.f32.mrf.mxu0
        %v6859 = vadd.f32 %v6818, %v6858
        %v6860 = vpop.f32.mrf.mxu0
        %v6861 = vadd.f32 %v6820, %v6860
        %v6862 = vpop.f32.mrf.mxu0
        %v6863 = vpop.f32.mrf.mxu0
        %6864 = vdwg.mxu0
        %6865 = vmatprep.subr.bf16.mxu0 %v4790
        %6866 = vmatpush1.bf16.msra.mxu0 %v4789
        %6867 = vmatprep.subr.bf16.mxu0 %v4772
        %6868 = vmatpush1.bf16.msra.mxu0 %v4771
        %6869 = vmatprep.subr.bf16.mxu0 %v4754
        %6870 = vmatpush1.bf16.msra.mxu0 %v4753
        %6871 = vmatprep.subr.bf16.mxu0 %v4736
        %6872 = vmatpush1.bf16.msra.mxu0 %v4735
        %6873 = vmatprep.subr.bf16.mxu0 %v4718
        %6874 = vmatpush1.bf16.msra.mxu0 %v4717
        %6875 = vmatprep.subr.bf16.mxu0 %v4700
        %6876 = vmatpush1.bf16.msra.mxu0 %v4699
        %6877 = vmatprep.subr.bf16.mxu0 %v4682
        %6878 = vmatpush1.bf16.msra.mxu0 %v4681
        %6879 = vmatprep.subr.bf16.mxu0 %v4664
        %6880 = vmatpush1.bf16.msra.mxu0 %v4663
        %6881 = vmatprep.subr.bf16.mxu0 %v4934
        %6882 = vmatpush2.bf16.msra.mxu0 %v4933
        %6883 = vmatprep.subr.bf16.mxu0 %v4916
        %6884 = vmatpush2.bf16.msra.mxu0 %v4915
        %6885 = vmatprep.subr.bf16.mxu0 %v4898
        %6886 = vmatpush2.bf16.msra.mxu0 %v4897
        %6887 = vmatprep.subr.bf16.mxu0 %v4880
        %6888 = vmatpush2.bf16.msra.mxu0 %v4879
        %6889 = vmatprep.subr.bf16.mxu0 %v4862
        %6890 = vmatpush2.bf16.msra.mxu0 %v4861
        %6891 = vmatprep.subr.bf16.mxu0 %v4844
        %6892 = vmatpush2.bf16.msra.mxu0 %v4843
        %6893 = vmatprep.subr.bf16.mxu0 %v4826
        %6894 = vmatpush2.bf16.msra.mxu0 %v4825
        %6895 = vmatprep.subr.bf16.mxu0 %v4808
        %6896 = vmatpush2.bf16.msra.mxu0 %v4807
        %6897 = vmatprep.mubr.bf16.mxu0 %v1472
        %6898 = vmatmul.mubr.bf16.gmra.mxu0 %v1471
        %v6899 = vpop.f32.mrf.mxu0
        %v6900 = vadd.f32 %v6859, %v6899
        %v6901 = vpop.f32.mrf.mxu0
        %v6902 = vadd.f32 %v6861, %v6901
        %v6903 = vpop.f32.mrf.mxu0
        %v6904 = vpop.f32.mrf.mxu0
        %6905 = vdwg.mxu0
        %v6906 = vpack.c.bf16 %v5916, %v5916
        %v6907 = vpack.c.bf16 %v5918, %v5918
        %v6908 = vpack.c.bf16 %v6039, %v6039
        %v6909 = vpack.c.bf16 %v6041, %v6041
        %v6910 = vpack.c.bf16 %v6162, %v6162
        %v6911 = vpack.c.bf16 %v6164, %v6164
        %v6912 = vpack.c.bf16 %v6285, %v6285
        %v6913 = vpack.c.bf16 %v6287, %v6287
        %v6914 = vpack.c.bf16 %v6408, %v6408
        %v6915 = vpack.c.bf16 %v6410, %v6410
        %v6916 = vpack.c.bf16 %v6531, %v6531
        %v6917 = vpack.c.bf16 %v6533, %v6533
        %v6918 = vpack.c.bf16 %v6654, %v6654
        %v6919 = vpack.c.bf16 %v6656, %v6656
        %v6920 = vpack.c.bf16 %v6777, %v6777
        %v6921 = vpack.c.bf16 %v6779, %v6779
        %v6922 = vpack.c.bf16 %v6900, %v6900
        %v6923 = vpack.c.bf16 %v6902, %v6902
        %v6924 = vld [vmem:[%s495] sm:$0x1]
        %v6926 = vlaneseq
        %v6927 = vshrl.u32 %v6926, 7
        %v6928 = vsub.s32 0, %v6927
        %v6929 = vrot.slane %v6924, %v6928
        %6931 = vmatprep.subr.bf16.mxu0 0
        %6932 = vmatpush1.bf16.xpose.msra.mxu0 0
        %6933 = vmatprep.subr.bf16.mxu0 0
        %6934 = vmatpush1.bf16.xpose.msra.mxu0 0
        %6935 = vmatprep.subr.bf16.mxu0 0
        %6936 = vmatpush1.bf16.xpose.msra.mxu0 0
        %6937 = vmatprep.subr.bf16.mxu0 0
        %6938 = vmatpush1.bf16.xpose.msra.mxu0 0
        %6939 = vmatprep.subr.bf16.mxu0 0
        %6940 = vmatpush1.bf16.xpose.msra.mxu0 0
        %6941 = vmatprep.subr.bf16.mxu0 0
        %6942 = vmatpush1.bf16.xpose.msra.mxu0 0
        %6943 = vmatprep.subr.bf16.mxu0 0
        %6944 = vmatpush1.bf16.xpose.msra.mxu0 0
        %6945 = vmatprep.subr.bf16.mxu0 %v6913
        %6946 = vmatpush1.bf16.xpose.msra.mxu0 %v6912
        %6947 = vmatprep.subr.bf16.mxu0 0
        %6948 = vmatpush2.bf16.xpose.msra.mxu0 0
        %6949 = vmatprep.subr.bf16.mxu0 0
        %6950 = vmatpush2.bf16.xpose.msra.mxu0 0
        %6951 = vmatprep.subr.bf16.mxu0 0
        %6952 = vmatpush2.bf16.xpose.msra.mxu0 0
        %6953 = vmatprep.subr.bf16.mxu0 0
        %6954 = vmatpush2.bf16.xpose.msra.mxu0 0
        %6955 = vmatprep.subr.bf16.mxu0 0
        %6956 = vmatpush2.bf16.xpose.msra.mxu0 0
        %6957 = vmatprep.subr.bf16.mxu0 0
        %6958 = vmatpush2.bf16.xpose.msra.mxu0 0
        %6959 = vmatprep.subr.bf16.mxu0 0
        %6960 = vmatpush2.bf16.xpose.msra.mxu0 0
        %6961 = vmatprep.subr.bf16.mxu0 0
        %6962 = vmatpush2.bf16.xpose.msra.mxu0 0
        %6963 = vmatprep.mubr.bf16.mxu0 %v6907
        %6964 = vmatmul.mubr.bf16.gmra.mxu0 %v6906
        %v6965 = vpop.f32.mrf.mxu0
        %v6966 = vadd.f32 %v6929, %v6965
        %v6967 = vpop.f32.mrf.mxu0
        %v6968 = vpop.f32.mrf.mxu0
        %v6969 = vpop.f32.mrf.mxu0
        %6970 = vdwg.mxu0
        %6971 = vmatprep.subr.bf16.mxu0 0
        %6972 = vmatpush1.bf16.xpose.msra.mxu0 0
        %6973 = vmatprep.subr.bf16.mxu0 0
        %6974 = vmatpush1.bf16.xpose.msra.mxu0 0
        %6975 = vmatprep.subr.bf16.mxu0 0
        %6976 = vmatpush1.bf16.xpose.msra.mxu0 0
        %6977 = vmatprep.subr.bf16.mxu0 0
        %6978 = vmatpush1.bf16.xpose.msra.mxu0 0
        %6979 = vmatprep.subr.bf16.mxu0 0
        %6980 = vmatpush1.bf16.xpose.msra.mxu0 0
        %6981 = vmatprep.subr.bf16.mxu0 0
        %6982 = vmatpush1.bf16.xpose.msra.mxu0 0
        %6983 = vmatprep.subr.bf16.mxu0 0
        %6984 = vmatpush1.bf16.xpose.msra.mxu0 0
        %6985 = vmatprep.subr.bf16.mxu0 %v6915
        %6986 = vmatpush1.bf16.xpose.msra.mxu0 %v6914
        %6987 = vmatprep.subr.bf16.mxu0 0
        %6988 = vmatpush2.bf16.xpose.msra.mxu0 0
        %6989 = vmatprep.subr.bf16.mxu0 0
        %6990 = vmatpush2.bf16.xpose.msra.mxu0 0
        %6991 = vmatprep.subr.bf16.mxu0 0
        %6992 = vmatpush2.bf16.xpose.msra.mxu0 0
        %6993 = vmatprep.subr.bf16.mxu0 0
        %6994 = vmatpush2.bf16.xpose.msra.mxu0 0
        %6995 = vmatprep.subr.bf16.mxu0 0
        %6996 = vmatpush2.bf16.xpose.msra.mxu0 0
        %6997 = vmatprep.subr.bf16.mxu0 0
        %6998 = vmatpush2.bf16.xpose.msra.mxu0 0
        %6999 = vmatprep.subr.bf16.mxu0 0
        %7000 = vmatpush2.bf16.xpose.msra.mxu0 0
        %7001 = vmatprep.subr.bf16.mxu0 0
        %7002 = vmatpush2.bf16.xpose.msra.mxu0 0
        %7003 = vmatprep.mubr.bf16.mxu0 %v6909
        %7004 = vmatmul.mubr.bf16.gmra.mxu0 %v6908
        %v7005 = vpop.f32.mrf.mxu0
        %v7006 = vadd.f32 %v6966, %v7005
        %v7007 = vpop.f32.mrf.mxu0
        %v7008 = vpop.f32.mrf.mxu0
        %v7009 = vpop.f32.mrf.mxu0
        %7010 = vdwg.mxu0
        %7011 = vmatprep.subr.bf16.mxu0 0
        %7012 = vmatpush1.bf16.xpose.msra.mxu0 0
        %7013 = vmatprep.subr.bf16.mxu0 0
        %7014 = vmatpush1.bf16.xpose.msra.mxu0 0
        %7015 = vmatprep.subr.bf16.mxu0 0
        %7016 = vmatpush1.bf16.xpose.msra.mxu0 0
        %7017 = vmatprep.subr.bf16.mxu0 0
        %7018 = vmatpush1.bf16.xpose.msra.mxu0 0
        %7019 = vmatprep.subr.bf16.mxu0 0
        %7020 = vmatpush1.bf16.xpose.msra.mxu0 0
        %7021 = vmatprep.subr.bf16.mxu0 0
        %7022 = vmatpush1.bf16.xpose.msra.mxu0 0
        %7023 = vmatprep.subr.bf16.mxu0 0
        %7024 = vmatpush1.bf16.xpose.msra.mxu0 0
        %7025 = vmatprep.subr.bf16.mxu0 %v6917
        %7026 = vmatpush1.bf16.xpose.msra.mxu0 %v6916
        %7027 = vmatprep.subr.bf16.mxu0 0
        %7028 = vmatpush2.bf16.xpose.msra.mxu0 0
        %7029 = vmatprep.subr.bf16.mxu0 0
        %7030 = vmatpush2.bf16.xpose.msra.mxu0 0
        %7031 = vmatprep.subr.bf16.mxu0 0
        %7032 = vmatpush2.bf16.xpose.msra.mxu0 0
        %7033 = vmatprep.subr.bf16.mxu0 0
        %7034 = vmatpush2.bf16.xpose.msra.mxu0 0
        %7035 = vmatprep.subr.bf16.mxu0 0
        %7036 = vmatpush2.bf16.xpose.msra.mxu0 0
        %7037 = vmatprep.subr.bf16.mxu0 0
        %7038 = vmatpush2.bf16.xpose.msra.mxu0 0
        %7039 = vmatprep.subr.bf16.mxu0 0
        %7040 = vmatpush2.bf16.xpose.msra.mxu0 0
        %7041 = vmatprep.subr.bf16.mxu0 0
        %7042 = vmatpush2.bf16.xpose.msra.mxu0 0
        %7043 = vmatprep.mubr.bf16.mxu0 %v6911
        %7044 = vmatmul.mubr.bf16.gmra.mxu0 %v6910
        %v7045 = vpop.f32.mrf.mxu0
        %v7046 = vadd.f32 %v7006, %v7045
        %v7047 = vpop.f32.mrf.mxu0
        %v7048 = vpop.f32.mrf.mxu0
        %v7049 = vpop.f32.mrf.mxu0
        %7050 = vdwg.mxu0
        %vm7051 = vcmask 64512
        %v7052 = vsel %vm7051, %v7046, -inf
        %7053 = vmax.xlane.f32.xlu0 %v7052
        %v7054 = vpop.xlane.xlu0 %7053
        %v7055 = vsub.f32 %v7046, %v7054
        %v7056 = vmul.f32 %v7055, 1.442695
        %v7057 = vpow.pop %v7056
        %v7058 = vsel %vm7051, %v7057, 0.0
        %7059 = vadd.xlane.f32.xlu0 %v7058
        %v7060 = vpop.xlane.xlu0 %7059
        %v7061 = vrcp.pop %v7060
        %v7062 = vmul.f32 %v7057, %v7061
        %v7063 = vpack.c.bf16 %v7062, %v7062
        %v7065 = vsel %vm7051, %v7063, 0
        %vm7067 = vcmask 1043456
        %v7069 = vsel %vm7067, %v6918, 0
        %v7072 = vsel %vm7067, %v6919, 0
        %v7075 = vsel %vm7067, %v6920, 0
        %v7078 = vsel %vm7067, %v6921, 0
        %v7081 = vsel %vm7067, %v6922, 0
        %v7084 = vsel %vm7067, %v6923, 0
        %7086 = vmatprep.subr.bf16.mxu0 0
        %7087 = vmatpush1.bf16.msra.mxu0 0
        %7088 = vmatprep.subr.bf16.mxu0 0
        %7089 = vmatpush1.bf16.msra.mxu0 0
        %7090 = vmatprep.subr.bf16.mxu0 0
        %7091 = vmatpush1.bf16.msra.mxu0 0
        %7092 = vmatprep.subr.bf16.mxu0 0
        %7093 = vmatpush1.bf16.msra.mxu0 0
        %7094 = vmatprep.subr.bf16.mxu0 0
        %7095 = vmatpush1.bf16.msra.mxu0 0
        %7096 = vmatprep.subr.bf16.mxu0 0
        %7097 = vmatpush1.bf16.msra.mxu0 0
        %7098 = vmatprep.subr.bf16.mxu0 0
        %7099 = vmatpush1.bf16.msra.mxu0 0
        %7100 = vmatprep.subr.bf16.mxu0 %v7072
        %7101 = vmatpush1.bf16.msra.mxu0 %v7069
        %7102 = vmatprep.subr.bf16.mxu0 0
        %7103 = vmatpush2.bf16.msra.mxu0 0
        %7104 = vmatprep.subr.bf16.mxu0 0
        %7105 = vmatpush2.bf16.msra.mxu0 0
        %7106 = vmatprep.subr.bf16.mxu0 0
        %7107 = vmatpush2.bf16.msra.mxu0 0
        %7108 = vmatprep.subr.bf16.mxu0 0
        %7109 = vmatpush2.bf16.msra.mxu0 0
        %7110 = vmatprep.subr.bf16.mxu0 0
        %7111 = vmatpush2.bf16.msra.mxu0 0
        %7112 = vmatprep.subr.bf16.mxu0 0
        %7113 = vmatpush2.bf16.msra.mxu0 0
        %7114 = vmatprep.subr.bf16.mxu0 0
        %7115 = vmatpush2.bf16.msra.mxu0 0
        %7116 = vmatprep.subr.bf16.mxu0 0
        %7117 = vmatpush2.bf16.msra.mxu0 0
        %7118 = vmatprep.mubr.bf16.mxu0 0
        %7119 = vmatmul.mubr.bf16.gmra.mxu0 %v7065
        %v7120 = vpop.f32.mrf.mxu0
        %v7121 = vadd.f32 0.0, %v7120
        %v7122 = vpop.f32.mrf.mxu0
        %v7123 = vadd.f32 0.0, %v7122
        %v7124 = vpop.f32.mrf.mxu0
        %v7125 = vpop.f32.mrf.mxu0
        %7126 = vdwg.mxu0
        %7127 = vmatprep.subr.bf16.mxu0 0
        %7128 = vmatpush1.bf16.msra.mxu0 0
        %7129 = vmatprep.subr.bf16.mxu0 0
        %7130 = vmatpush1.bf16.msra.mxu0 0
        %7131 = vmatprep.subr.bf16.mxu0 0
        %7132 = vmatpush1.bf16.msra.mxu0 0
        %7133 = vmatprep.subr.bf16.mxu0 0
        %7134 = vmatpush1.bf16.msra.mxu0 0
        %7135 = vmatprep.subr.bf16.mxu0 0
        %7136 = vmatpush1.bf16.msra.mxu0 0
        %7137 = vmatprep.subr.bf16.mxu0 0
        %7138 = vmatpush1.bf16.msra.mxu0 0
        %7139 = vmatprep.subr.bf16.mxu0 0
        %7140 = vmatpush1.bf16.msra.mxu0 0
        %7141 = vmatprep.subr.bf16.mxu0 %v7078
        %7142 = vmatpush1.bf16.msra.mxu0 %v7075
        %7143 = vmatprep.subr.bf16.mxu0 0
        %7144 = vmatpush2.bf16.msra.mxu0 0
        %7145 = vmatprep.subr.bf16.mxu0 0
        %7146 = vmatpush2.bf16.msra.mxu0 0
        %7147 = vmatprep.subr.bf16.mxu0 0
        %7148 = vmatpush2.bf16.msra.mxu0 0
        %7149 = vmatprep.subr.bf16.mxu0 0
        %7150 = vmatpush2.bf16.msra.mxu0 0
        %7151 = vmatprep.subr.bf16.mxu0 0
        %7152 = vmatpush2.bf16.msra.mxu0 0
        %7153 = vmatprep.subr.bf16.mxu0 0
        %7154 = vmatpush2.bf16.msra.mxu0 0
        %7155 = vmatprep.subr.bf16.mxu0 0
        %7156 = vmatpush2.bf16.msra.mxu0 0
        %7157 = vmatprep.subr.bf16.mxu0 0
        %7158 = vmatpush2.bf16.msra.mxu0 0
        %7159 = vmatprep.mubr.bf16.mxu0 0
        %7160 = vmatmul.mubr.bf16.gmra.mxu0 %v7065
        %v7161 = vpop.f32.mrf.mxu0
        %v7162 = vadd.f32 0.0, %v7161
        %v7163 = vpop.f32.mrf.mxu0
        %v7164 = vadd.f32 0.0, %v7163
        %v7165 = vpop.f32.mrf.mxu0
        %v7166 = vpop.f32.mrf.mxu0
        %7167 = vdwg.mxu0
        %7168 = vmatprep.subr.bf16.mxu0 0
        %7169 = vmatpush1.bf16.msra.mxu0 0
        %7170 = vmatprep.subr.bf16.mxu0 0
        %7171 = vmatpush1.bf16.msra.mxu0 0
        %7172 = vmatprep.subr.bf16.mxu0 0
        %7173 = vmatpush1.bf16.msra.mxu0 0
        %7174 = vmatprep.subr.bf16.mxu0 0
        %7175 = vmatpush1.bf16.msra.mxu0 0
        %7176 = vmatprep.subr.bf16.mxu0 0
        %7177 = vmatpush1.bf16.msra.mxu0 0
        %7178 = vmatprep.subr.bf16.mxu0 0
        %7179 = vmatpush1.bf16.msra.mxu0 0
        %7180 = vmatprep.subr.bf16.mxu0 0
        %7181 = vmatpush1.bf16.msra.mxu0 0
        %7182 = vmatprep.subr.bf16.mxu0 %v7084
        %7183 = vmatpush1.bf16.msra.mxu0 %v7081
        %7184 = vmatprep.subr.bf16.mxu0 0
        %7185 = vmatpush2.bf16.msra.mxu0 0
        %7186 = vmatprep.subr.bf16.mxu0 0
        %7187 = vmatpush2.bf16.msra.mxu0 0
        %7188 = vmatprep.subr.bf16.mxu0 0
        %7189 = vmatpush2.bf16.msra.mxu0 0
        %7190 = vmatprep.subr.bf16.mxu0 0
        %7191 = vmatpush2.bf16.msra.mxu0 0
        %7192 = vmatprep.subr.bf16.mxu0 0
        %7193 = vmatpush2.bf16.msra.mxu0 0
        %7194 = vmatprep.subr.bf16.mxu0 0
        %7195 = vmatpush2.bf16.msra.mxu0 0
        %7196 = vmatprep.subr.bf16.mxu0 0
        %7197 = vmatpush2.bf16.msra.mxu0 0
        %7198 = vmatprep.subr.bf16.mxu0 0
        %7199 = vmatpush2.bf16.msra.mxu0 0
        %7200 = vmatprep.mubr.bf16.mxu0 0
        %7201 = vmatmul.mubr.bf16.gmra.mxu0 %v7065
        %v7202 = vpop.f32.mrf.mxu0
        %v7203 = vadd.f32 0.0, %v7202
        %v7204 = vpop.f32.mrf.mxu0
        %v7205 = vadd.f32 0.0, %v7204
        %v7206 = vpop.f32.mrf.mxu0
        %v7207 = vpop.f32.mrf.mxu0
        %7208 = vdwg.mxu0
        %v7209 = vpack.c.bf16 %v7121, %v7121
        %v7210 = vpack.c.bf16 %v7123, %v7123
        %v7211 = vpack.c.bf16 %v7162, %v7162
        %v7212 = vpack.c.bf16 %v7164, %v7164
        %v7213 = vpack.c.bf16 %v7203, %v7203
        %v7214 = vpack.c.bf16 %v7205, %v7205
        %v7215 = vld [vmem:[#allocation9] sm:$0xff]
        %v7216 = vld [vmem:[#allocation9 + $0x8] sm:$0xff]
        %v7217 = vld [vmem:[#allocation9 + $0x10] sm:$0xff]
        %v7218 = vld [vmem:[#allocation9 + $0x18] sm:$0xff]
        %v7219 = vld [vmem:[#allocation9 + $0x20] sm:$0xff]
        %v7220 = vld [vmem:[#allocation9 + $0x28] sm:$0xff]
        %v7221 = vld [vmem:[#allocation9 + $0x30] sm:$0xff]
        %v7222 = vld [vmem:[#allocation9 + $0x38] sm:$0xff]
        %v7223 = vld [vmem:[#allocation9 + $0x40] sm:$0xff]
        %v7224 = vld [vmem:[#allocation9 + $0x48] sm:$0xff]
        %v7225 = vld [vmem:[#allocation9 + $0x50] sm:$0xff]
        %v7226 = vld [vmem:[#allocation9 + $0x58] sm:$0xff]
        %v7227 = vld [vmem:[#allocation9 + $0x60] sm:$0xff]
        %v7228 = vld [vmem:[#allocation9 + $0x68] sm:$0xff]
        %v7229 = vld [vmem:[#allocation9 + $0x70] sm:$0xff]
        %v7230 = vld [vmem:[#allocation9 + $0x78] sm:$0xff]
        %v7231 = vld [vmem:[#allocation9 + $0x80] sm:$0xff]
        %v7232 = vld [vmem:[#allocation9 + $0x88] sm:$0xff]
        %v7233 = vld [vmem:[#allocation9 + $0x90] sm:$0xff]
        %v7234 = vld [vmem:[#allocation9 + $0x98] sm:$0xff]
        %v7235 = vld [vmem:[#allocation9 + $0xa0] sm:$0xff]
        %v7236 = vld [vmem:[#allocation9 + $0xa8] sm:$0xff]
        %v7237 = vld [vmem:[#allocation9 + $0xb0] sm:$0xff]
        %v7238 = vld [vmem:[#allocation9 + $0xb8] sm:$0xff]
        %v7239 = vld [vmem:[#allocation9 + $0xc0] sm:$0xff]
        %v7240 = vld [vmem:[#allocation9 + $0xc8] sm:$0xff]
        %v7241 = vld [vmem:[#allocation9 + $0xd0] sm:$0xff]
        %v7242 = vld [vmem:[#allocation9 + $0xd8] sm:$0xff]
        %v7243 = vld [vmem:[#allocation9 + $0xe0] sm:$0xff]
        %v7244 = vld [vmem:[#allocation9 + $0xe8] sm:$0xff]
        %v7245 = vld [vmem:[#allocation9 + $0xf0] sm:$0xff]
        %v7246 = vld [vmem:[#allocation9 + $0xf8] sm:$0xff]
        %v7247 = vld [vmem:[#allocation9 + $0x100] sm:$0xff]
        %v7248 = vld [vmem:[#allocation9 + $0x108] sm:$0xff]
        %v7249 = vld [vmem:[#allocation9 + $0x110] sm:$0xff]
        %v7250 = vld [vmem:[#allocation9 + $0x118] sm:$0xff]
        %v7251 = vld [vmem:[#allocation9 + $0x120] sm:$0xff]
        %v7252 = vld [vmem:[#allocation9 + $0x128] sm:$0xff]
        %v7253 = vld [vmem:[#allocation9 + $0x130] sm:$0xff]
        %v7254 = vld [vmem:[#allocation9 + $0x138] sm:$0xff]
        %v7255 = vld [vmem:[#allocation9 + $0x140] sm:$0xff]
        %v7256 = vld [vmem:[#allocation9 + $0x148] sm:$0xff]
        %v7257 = vld [vmem:[#allocation9 + $0x150] sm:$0xff]
        %v7258 = vld [vmem:[#allocation9 + $0x158] sm:$0xff]
        %v7259 = vld [vmem:[#allocation9 + $0x160] sm:$0xff]
        %v7260 = vld [vmem:[#allocation9 + $0x168] sm:$0xff]
        %v7261 = vld [vmem:[#allocation9 + $0x170] sm:$0xff]
        %v7262 = vld [vmem:[#allocation9 + $0x178] sm:$0xff]
        %v7263 = vld [vmem:[#allocation9 + $0x180] sm:$0xff]
        %v7264 = vld [vmem:[#allocation9 + $0x188] sm:$0xff]
        %v7265 = vld [vmem:[#allocation9 + $0x190] sm:$0xff]
        %v7266 = vld [vmem:[#allocation9 + $0x198] sm:$0xff]
        %v7267 = vld [vmem:[#allocation9 + $0x1a0] sm:$0xff]
        %v7268 = vld [vmem:[#allocation9 + $0x1a8] sm:$0xff]
        %v7269 = vld [vmem:[#allocation9 + $0x1b0] sm:$0xff]
        %v7270 = vld [vmem:[#allocation9 + $0x1b8] sm:$0xff]
        %v7271 = vld [vmem:[#allocation9 + $0x1c0] sm:$0xff]
        %v7272 = vld [vmem:[#allocation9 + $0x1c8] sm:$0xff]
        %v7273 = vld [vmem:[#allocation9 + $0x1d0] sm:$0xff]
        %v7274 = vld [vmem:[#allocation9 + $0x1d8] sm:$0xff]
        %v7275 = vld [vmem:[#allocation9 + $0x1e0] sm:$0xff]
        %v7276 = vld [vmem:[#allocation9 + $0x1e8] sm:$0xff]
        %v7277 = vld [vmem:[#allocation9 + $0x1f0] sm:$0xff]
        %v7278 = vld [vmem:[#allocation9 + $0x1f8] sm:$0xff]
        %v7279 = vld [vmem:[#allocation9 + $0x200] sm:$0xff]
        %v7280 = vld [vmem:[#allocation9 + $0x208] sm:$0xff]
        %v7281 = vld [vmem:[#allocation9 + $0x210] sm:$0xff]
        %v7282 = vld [vmem:[#allocation9 + $0x218] sm:$0xff]
        %v7283 = vld [vmem:[#allocation9 + $0x220] sm:$0xff]
        %v7284 = vld [vmem:[#allocation9 + $0x228] sm:$0xff]
        %v7285 = vld [vmem:[#allocation9 + $0x230] sm:$0xff]
        %v7286 = vld [vmem:[#allocation9 + $0x238] sm:$0xff]
        %v7287 = vld [vmem:[#allocation9 + $0x240] sm:$0xff]
        %v7288 = vld [vmem:[#allocation9 + $0x248] sm:$0xff]
        %v7289 = vld [vmem:[#allocation9 + $0x250] sm:$0xff]
        %v7290 = vld [vmem:[#allocation9 + $0x258] sm:$0xff]
        %v7291 = vld [vmem:[#allocation9 + $0x260] sm:$0xff]
        %v7292 = vld [vmem:[#allocation9 + $0x268] sm:$0xff]
        %v7293 = vld [vmem:[#allocation9 + $0x270] sm:$0xff]
        %v7294 = vld [vmem:[#allocation9 + $0x278] sm:$0xff]
        %v7295 = vld [vmem:[#allocation9 + $0x280] sm:$0xff]
        %v7296 = vld [vmem:[#allocation9 + $0x288] sm:$0xff]
        %v7297 = vld [vmem:[#allocation9 + $0x290] sm:$0xff]
        %v7298 = vld [vmem:[#allocation9 + $0x298] sm:$0xff]
        %v7299 = vld [vmem:[#allocation9 + $0x2a0] sm:$0xff]
        %v7300 = vld [vmem:[#allocation9 + $0x2a8] sm:$0xff]
        %v7301 = vld [vmem:[#allocation9 + $0x2b0] sm:$0xff]
        %v7302 = vld [vmem:[#allocation9 + $0x2b8] sm:$0xff]
        %v7303 = vld [vmem:[#allocation9 + $0x2c0] sm:$0xff]
        %v7304 = vld [vmem:[#allocation9 + $0x2c8] sm:$0xff]
        %v7305 = vld [vmem:[#allocation9 + $0x2d0] sm:$0xff]
        %v7306 = vld [vmem:[#allocation9 + $0x2d8] sm:$0xff]
        %v7307 = vld [vmem:[#allocation9 + $0x2e0] sm:$0xff]
        %v7308 = vld [vmem:[#allocation9 + $0x2e8] sm:$0xff]
        %v7309 = vld [vmem:[#allocation9 + $0x2f0] sm:$0xff]
        %v7310 = vld [vmem:[#allocation9 + $0x2f8] sm:$0xff]
        %v7311 = vld [vmem:[#allocation9 + $0x300] sm:$0xff]
        %v7312 = vld [vmem:[#allocation9 + $0x308] sm:$0xff]
        %v7313 = vld [vmem:[#allocation9 + $0x310] sm:$0xff]
        %v7314 = vld [vmem:[#allocation9 + $0x318] sm:$0xff]
        %v7315 = vld [vmem:[#allocation9 + $0x320] sm:$0xff]
        %v7316 = vld [vmem:[#allocation9 + $0x328] sm:$0xff]
        %v7317 = vld [vmem:[#allocation9 + $0x330] sm:$0xff]
        %v7318 = vld [vmem:[#allocation9 + $0x338] sm:$0xff]
        %v7319 = vld [vmem:[#allocation9 + $0x340] sm:$0xff]
        %v7320 = vld [vmem:[#allocation9 + $0x348] sm:$0xff]
        %v7321 = vld [vmem:[#allocation9 + $0x350] sm:$0xff]
        %v7322 = vld [vmem:[#allocation9 + $0x358] sm:$0xff]
        %v7323 = vld [vmem:[#allocation9 + $0x360] sm:$0xff]
        %v7324 = vld [vmem:[#allocation9 + $0x368] sm:$0xff]
        %v7325 = vld [vmem:[#allocation9 + $0x370] sm:$0xff]
        %v7326 = vld [vmem:[#allocation9 + $0x378] sm:$0xff]
        %v7327 = vld [vmem:[#allocation9 + $0x380] sm:$0xff]
        %v7328 = vld [vmem:[#allocation9 + $0x388] sm:$0xff]
        %v7329 = vld [vmem:[#allocation9 + $0x390] sm:$0xff]
        %v7330 = vld [vmem:[#allocation9 + $0x398] sm:$0xff]
        %v7331 = vld [vmem:[#allocation9 + $0x3a0] sm:$0xff]
        %v7332 = vld [vmem:[#allocation9 + $0x3a8] sm:$0xff]
        %v7333 = vld [vmem:[#allocation9 + $0x3b0] sm:$0xff]
        %v7334 = vld [vmem:[#allocation9 + $0x3b8] sm:$0xff]
        %v7335 = vld [vmem:[#allocation9 + $0x3c0] sm:$0xff]
        %v7336 = vld [vmem:[#allocation9 + $0x3c8] sm:$0xff]
        %v7337 = vld [vmem:[#allocation9 + $0x3d0] sm:$0xff]
        %v7338 = vld [vmem:[#allocation9 + $0x3d8] sm:$0xff]
        %v7339 = vld [vmem:[#allocation9 + $0x3e0] sm:$0xff]
        %v7340 = vld [vmem:[#allocation9 + $0x3e8] sm:$0xff]
        %v7341 = vld [vmem:[#allocation9 + $0x3f0] sm:$0xff]
        %v7342 = vld [vmem:[#allocation9 + $0x3f8] sm:$0xff]
        %v7343 = vld [vmem:[#allocation9 + $0x400] sm:$0xff]
        %v7344 = vld [vmem:[#allocation9 + $0x408] sm:$0xff]
        %v7345 = vld [vmem:[#allocation9 + $0x410] sm:$0xff]
        %v7346 = vld [vmem:[#allocation9 + $0x418] sm:$0xff]
        %v7347 = vld [vmem:[#allocation9 + $0x420] sm:$0xff]
        %v7348 = vld [vmem:[#allocation9 + $0x428] sm:$0xff]
        %v7349 = vld [vmem:[#allocation9 + $0x430] sm:$0xff]
        %v7350 = vld [vmem:[#allocation9 + $0x438] sm:$0xff]
        %v7351 = vld [vmem:[#allocation9 + $0x440] sm:$0xff]
        %v7352 = vld [vmem:[#allocation9 + $0x448] sm:$0xff]
        %v7353 = vld [vmem:[#allocation9 + $0x450] sm:$0xff]
        %v7354 = vld [vmem:[#allocation9 + $0x458] sm:$0xff]
        %v7355 = vld [vmem:[#allocation9 + $0x460] sm:$0xff]
        %v7356 = vld [vmem:[#allocation9 + $0x468] sm:$0xff]
        %v7357 = vld [vmem:[#allocation9 + $0x470] sm:$0xff]
        %v7358 = vld [vmem:[#allocation9 + $0x478] sm:$0xff]
        %v7359 = vld [vmem:[#allocation9 + $0x480] sm:$0xff]
        %v7360 = vld [vmem:[#allocation9 + $0x488] sm:$0xff]
        %v7361 = vld [vmem:[#allocation9 + $0x490] sm:$0xff]
        %v7362 = vld [vmem:[#allocation9 + $0x498] sm:$0xff]
        %v7363 = vld [vmem:[#allocation9 + $0x4a0] sm:$0xff]
        %v7364 = vld [vmem:[#allocation9 + $0x4a8] sm:$0xff]
        %v7365 = vld [vmem:[#allocation9 + $0x4b0] sm:$0xff]
        %v7366 = vld [vmem:[#allocation9 + $0x4b8] sm:$0xff]
        %v7367 = vld [vmem:[#allocation9 + $0x4c0] sm:$0xff]
        %v7368 = vld [vmem:[#allocation9 + $0x4c8] sm:$0xff]
        %v7369 = vld [vmem:[#allocation9 + $0x4d0] sm:$0xff]
        %v7370 = vld [vmem:[#allocation9 + $0x4d8] sm:$0xff]
        %v7371 = vld [vmem:[#allocation9 + $0x4e0] sm:$0xff]
        %v7372 = vld [vmem:[#allocation9 + $0x4e8] sm:$0xff]
        %v7373 = vld [vmem:[#allocation9 + $0x4f0] sm:$0xff]
        %v7374 = vld [vmem:[#allocation9 + $0x4f8] sm:$0xff]
        %v7375 = vld [vmem:[#allocation9 + $0x500] sm:$0xff]
        %v7376 = vld [vmem:[#allocation9 + $0x508] sm:$0xff]
        %v7377 = vld [vmem:[#allocation9 + $0x510] sm:$0xff]
        %v7378 = vld [vmem:[#allocation9 + $0x518] sm:$0xff]
        %v7379 = vld [vmem:[#allocation9 + $0x520] sm:$0xff]
        %v7380 = vld [vmem:[#allocation9 + $0x528] sm:$0xff]
        %v7381 = vld [vmem:[#allocation9 + $0x530] sm:$0xff]
        %v7382 = vld [vmem:[#allocation9 + $0x538] sm:$0xff]
        %v7383 = vld [vmem:[#allocation9 + $0x540] sm:$0xff]
        %v7384 = vld [vmem:[#allocation9 + $0x548] sm:$0xff]
        %v7385 = vld [vmem:[#allocation9 + $0x550] sm:$0xff]
        %v7386 = vld [vmem:[#allocation9 + $0x558] sm:$0xff]
        %v7387 = vld [vmem:[#allocation9 + $0x560] sm:$0xff]
        %v7388 = vld [vmem:[#allocation9 + $0x568] sm:$0xff]
        %v7389 = vld [vmem:[#allocation9 + $0x570] sm:$0xff]
        %v7390 = vld [vmem:[#allocation9 + $0x578] sm:$0xff]
        %v7391 = vld [vmem:[#allocation9 + $0x580] sm:$0xff]
        %v7392 = vld [vmem:[#allocation9 + $0x588] sm:$0xff]
        %v7393 = vld [vmem:[#allocation9 + $0x590] sm:$0xff]
        %v7394 = vld [vmem:[#allocation9 + $0x598] sm:$0xff]
        %v7395 = vld [vmem:[#allocation9 + $0x5a0] sm:$0xff]
        %v7396 = vld [vmem:[#allocation9 + $0x5a8] sm:$0xff]
        %v7397 = vld [vmem:[#allocation9 + $0x5b0] sm:$0xff]
        %v7398 = vld [vmem:[#allocation9 + $0x5b8] sm:$0xff]
        %v7399 = vld [vmem:[#allocation9 + $0x5c0] sm:$0xff]
        %v7400 = vld [vmem:[#allocation9 + $0x5c8] sm:$0xff]
        %v7401 = vld [vmem:[#allocation9 + $0x5d0] sm:$0xff]
        %v7402 = vld [vmem:[#allocation9 + $0x5d8] sm:$0xff]
        %v7403 = vld [vmem:[#allocation9 + $0x5e0] sm:$0xff]
        %v7404 = vld [vmem:[#allocation9 + $0x5e8] sm:$0xff]
        %v7405 = vld [vmem:[#allocation9 + $0x5f0] sm:$0xff]
        %v7406 = vld [vmem:[#allocation9 + $0x5f8] sm:$0xff]
        %v7407 = vld [vmem:[#allocation9 + $0x600] sm:$0xff]
        %v7408 = vld [vmem:[#allocation9 + $0x608] sm:$0xff]
        %v7409 = vld [vmem:[#allocation9 + $0x610] sm:$0xff]
        %v7410 = vld [vmem:[#allocation9 + $0x618] sm:$0xff]
        %v7411 = vld [vmem:[#allocation9 + $0x620] sm:$0xff]
        %v7412 = vld [vmem:[#allocation9 + $0x628] sm:$0xff]
        %v7413 = vld [vmem:[#allocation9 + $0x630] sm:$0xff]
        %v7414 = vld [vmem:[#allocation9 + $0x638] sm:$0xff]
        %v7415 = vld [vmem:[#allocation9 + $0x640] sm:$0xff]
        %v7416 = vld [vmem:[#allocation9 + $0x648] sm:$0xff]
        %v7417 = vld [vmem:[#allocation9 + $0x650] sm:$0xff]
        %v7418 = vld [vmem:[#allocation9 + $0x658] sm:$0xff]
        %v7419 = vld [vmem:[#allocation9 + $0x660] sm:$0xff]
        %v7420 = vld [vmem:[#allocation9 + $0x668] sm:$0xff]
        %v7421 = vld [vmem:[#allocation9 + $0x670] sm:$0xff]
        %v7422 = vld [vmem:[#allocation9 + $0x678] sm:$0xff]
        %v7423 = vld [vmem:[#allocation9 + $0x680] sm:$0xff]
        %v7424 = vld [vmem:[#allocation9 + $0x688] sm:$0xff]
        %v7425 = vld [vmem:[#allocation9 + $0x690] sm:$0xff]
        %v7426 = vld [vmem:[#allocation9 + $0x698] sm:$0xff]
        %v7427 = vld [vmem:[#allocation9 + $0x6a0] sm:$0xff]
        %v7428 = vld [vmem:[#allocation9 + $0x6a8] sm:$0xff]
        %v7429 = vld [vmem:[#allocation9 + $0x6b0] sm:$0xff]
        %v7430 = vld [vmem:[#allocation9 + $0x6b8] sm:$0xff]
        %v7431 = vld [vmem:[#allocation9 + $0x6c0] sm:$0xff]
        %v7432 = vld [vmem:[#allocation9 + $0x6c8] sm:$0xff]
        %v7433 = vld [vmem:[#allocation9 + $0x6d0] sm:$0xff]
        %v7434 = vld [vmem:[#allocation9 + $0x6d8] sm:$0xff]
        %v7435 = vld [vmem:[#allocation9 + $0x6e0] sm:$0xff]
        %v7436 = vld [vmem:[#allocation9 + $0x6e8] sm:$0xff]
        %v7437 = vld [vmem:[#allocation9 + $0x6f0] sm:$0xff]
        %v7438 = vld [vmem:[#allocation9 + $0x6f8] sm:$0xff]
        %v7439 = vld [vmem:[#allocation9 + $0x700] sm:$0xff]
        %v7440 = vld [vmem:[#allocation9 + $0x708] sm:$0xff]
        %v7441 = vld [vmem:[#allocation9 + $0x710] sm:$0xff]
        %v7442 = vld [vmem:[#allocation9 + $0x718] sm:$0xff]
        %v7443 = vld [vmem:[#allocation9 + $0x720] sm:$0xff]
        %v7444 = vld [vmem:[#allocation9 + $0x728] sm:$0xff]
        %v7445 = vld [vmem:[#allocation9 + $0x730] sm:$0xff]
        %v7446 = vld [vmem:[#allocation9 + $0x738] sm:$0xff]
        %v7447 = vld [vmem:[#allocation9 + $0x740] sm:$0xff]
        %v7448 = vld [vmem:[#allocation9 + $0x748] sm:$0xff]
        %v7449 = vld [vmem:[#allocation9 + $0x750] sm:$0xff]
        %v7450 = vld [vmem:[#allocation9 + $0x758] sm:$0xff]
        %v7451 = vld [vmem:[#allocation9 + $0x760] sm:$0xff]
        %v7452 = vld [vmem:[#allocation9 + $0x768] sm:$0xff]
        %v7453 = vld [vmem:[#allocation9 + $0x770] sm:$0xff]
        %v7454 = vld [vmem:[#allocation9 + $0x778] sm:$0xff]
        %v7455 = vld [vmem:[#allocation9 + $0x780] sm:$0xff]
        %v7456 = vld [vmem:[#allocation9 + $0x788] sm:$0xff]
        %v7457 = vld [vmem:[#allocation9 + $0x790] sm:$0xff]
        %v7458 = vld [vmem:[#allocation9 + $0x798] sm:$0xff]
        %v7459 = vld [vmem:[#allocation9 + $0x7a0] sm:$0xff]
        %v7460 = vld [vmem:[#allocation9 + $0x7a8] sm:$0xff]
        %v7461 = vld [vmem:[#allocation9 + $0x7b0] sm:$0xff]
        %v7462 = vld [vmem:[#allocation9 + $0x7b8] sm:$0xff]
        %v7463 = vld [vmem:[#allocation9 + $0x7c0] sm:$0xff]
        %v7464 = vld [vmem:[#allocation9 + $0x7c8] sm:$0xff]
        %v7465 = vld [vmem:[#allocation9 + $0x7d0] sm:$0xff]
        %v7466 = vld [vmem:[#allocation9 + $0x7d8] sm:$0xff]
        %v7467 = vld [vmem:[#allocation9 + $0x7e0] sm:$0xff]
        %v7468 = vld [vmem:[#allocation9 + $0x7e8] sm:$0xff]
        %v7469 = vld [vmem:[#allocation9 + $0x7f0] sm:$0xff]
        %v7470 = vld [vmem:[#allocation9 + $0x7f8] sm:$0xff]
        %v7471 = vld [vmem:[#allocation9 + $0x800] sm:$0xff]
        %v7472 = vld [vmem:[#allocation9 + $0x808] sm:$0xff]
        %v7473 = vld [vmem:[#allocation9 + $0x810] sm:$0xff]
        %v7474 = vld [vmem:[#allocation9 + $0x818] sm:$0xff]
        %v7475 = vld [vmem:[#allocation9 + $0x820] sm:$0xff]
        %v7476 = vld [vmem:[#allocation9 + $0x828] sm:$0xff]
        %v7477 = vld [vmem:[#allocation9 + $0x830] sm:$0xff]
        %v7478 = vld [vmem:[#allocation9 + $0x838] sm:$0xff]
        %v7479 = vld [vmem:[#allocation9 + $0x840] sm:$0xff]
        %v7480 = vld [vmem:[#allocation9 + $0x848] sm:$0xff]
        %v7481 = vld [vmem:[#allocation9 + $0x850] sm:$0xff]
        %v7482 = vld [vmem:[#allocation9 + $0x858] sm:$0xff]
        %v7483 = vld [vmem:[#allocation9 + $0x860] sm:$0xff]
        %v7484 = vld [vmem:[#allocation9 + $0x868] sm:$0xff]
        %v7485 = vld [vmem:[#allocation9 + $0x870] sm:$0xff]
        %v7486 = vld [vmem:[#allocation9 + $0x878] sm:$0xff]
        %v7487 = vld [vmem:[#allocation9 + $0x880] sm:$0xff]
        %v7488 = vld [vmem:[#allocation9 + $0x888] sm:$0xff]
        %v7489 = vld [vmem:[#allocation9 + $0x890] sm:$0xff]
        %v7490 = vld [vmem:[#allocation9 + $0x898] sm:$0xff]
        %v7491 = vld [vmem:[#allocation9 + $0x8a0] sm:$0xff]
        %v7492 = vld [vmem:[#allocation9 + $0x8a8] sm:$0xff]
        %v7493 = vld [vmem:[#allocation9 + $0x8b0] sm:$0xff]
        %v7494 = vld [vmem:[#allocation9 + $0x8b8] sm:$0xff]
        %v7495 = vld [vmem:[#allocation9 + $0x8c0] sm:$0xff]
        %v7496 = vld [vmem:[#allocation9 + $0x8c8] sm:$0xff]
        %v7497 = vld [vmem:[#allocation9 + $0x8d0] sm:$0xff]
        %v7498 = vld [vmem:[#allocation9 + $0x8d8] sm:$0xff]
        %v7499 = vld [vmem:[#allocation9 + $0x8e0] sm:$0xff]
        %v7500 = vld [vmem:[#allocation9 + $0x8e8] sm:$0xff]
        %v7501 = vld [vmem:[#allocation9 + $0x8f0] sm:$0xff]
        %v7502 = vld [vmem:[#allocation9 + $0x8f8] sm:$0xff]
        %v7791 = vunpack.c.l.b16 %v7215
        %v7792 = vunpack.c.h.b16 %v7215
        %v7793 = vunpack.c.l.b16 %v7216
        %v7794 = vunpack.c.h.b16 %v7216
        %v7795 = vunpack.c.l.b16 %v7217
        %v7796 = vunpack.c.h.b16 %v7217
        %v7797 = vunpack.c.l.b16 %v7218
        %v7798 = vunpack.c.h.b16 %v7218
        %v7799 = vunpack.c.l.b16 %v7219
        %v7800 = vunpack.c.h.b16 %v7219
        %v7801 = vunpack.c.l.b16 %v7220
        %v7802 = vunpack.c.h.b16 %v7220
        %v7803 = vunpack.c.l.b16 %v7221
        %v7804 = vunpack.c.h.b16 %v7221
        %v7805 = vunpack.c.l.b16 %v7222
        %v7806 = vunpack.c.h.b16 %v7222
        %v7807 = vunpack.c.l.b16 %v7223
        %v7808 = vunpack.c.h.b16 %v7223
        %v7809 = vunpack.c.l.b16 %v7224
        %v7810 = vunpack.c.h.b16 %v7224
        %v7811 = vunpack.c.l.b16 %v7225
        %v7812 = vunpack.c.h.b16 %v7225
        %v7813 = vunpack.c.l.b16 %v7226
        %v7814 = vunpack.c.h.b16 %v7226
        %v7815 = vunpack.c.l.b16 %v7227
        %v7816 = vunpack.c.h.b16 %v7227
        %v7817 = vunpack.c.l.b16 %v7228
        %v7818 = vunpack.c.h.b16 %v7228
        %v7819 = vunpack.c.l.b16 %v7229
        %v7820 = vunpack.c.h.b16 %v7229
        %v7821 = vunpack.c.l.b16 %v7230
        %v7822 = vunpack.c.h.b16 %v7230
        %v7823 = vunpack.c.l.b16 %v7231
        %v7824 = vunpack.c.h.b16 %v7231
        %v7825 = vunpack.c.l.b16 %v7232
        %v7826 = vunpack.c.h.b16 %v7232
        %v7827 = vunpack.c.l.b16 %v7233
        %v7828 = vunpack.c.h.b16 %v7233
        %v7829 = vunpack.c.l.b16 %v7234
        %v7830 = vunpack.c.h.b16 %v7234
        %v7831 = vunpack.c.l.b16 %v7235
        %v7832 = vunpack.c.h.b16 %v7235
        %v7833 = vunpack.c.l.b16 %v7236
        %v7834 = vunpack.c.h.b16 %v7236
        %v7835 = vunpack.c.l.b16 %v7237
        %v7836 = vunpack.c.h.b16 %v7237
        %v7837 = vunpack.c.l.b16 %v7238
        %v7838 = vunpack.c.h.b16 %v7238
        %v7839 = vunpack.c.l.b16 %v7239
        %v7840 = vunpack.c.h.b16 %v7239
        %v7841 = vunpack.c.l.b16 %v7240
        %v7842 = vunpack.c.h.b16 %v7240
        %v7843 = vunpack.c.l.b16 %v7241
        %v7844 = vunpack.c.h.b16 %v7241
        %v7845 = vunpack.c.l.b16 %v7242
        %v7846 = vunpack.c.h.b16 %v7242
        %v7847 = vunpack.c.l.b16 %v7243
        %v7848 = vunpack.c.h.b16 %v7243
        %v7849 = vunpack.c.l.b16 %v7244
        %v7850 = vunpack.c.h.b16 %v7244
        %v7851 = vunpack.c.l.b16 %v7245
        %v7852 = vunpack.c.h.b16 %v7245
        %v7853 = vunpack.c.l.b16 %v7246
        %v7854 = vunpack.c.h.b16 %v7246
        %v7855 = vunpack.c.l.b16 %v7247
        %v7856 = vunpack.c.h.b16 %v7247
        %v7857 = vunpack.c.l.b16 %v7248
        %v7858 = vunpack.c.h.b16 %v7248
        %v7859 = vunpack.c.l.b16 %v7249
        %v7860 = vunpack.c.h.b16 %v7249
        %v7861 = vunpack.c.l.b16 %v7250
        %v7862 = vunpack.c.h.b16 %v7250
        %v7863 = vunpack.c.l.b16 %v7251
        %v7864 = vunpack.c.h.b16 %v7251
        %v7865 = vunpack.c.l.b16 %v7252
        %v7866 = vunpack.c.h.b16 %v7252
        %v7867 = vunpack.c.l.b16 %v7253
        %v7868 = vunpack.c.h.b16 %v7253
        %v7869 = vunpack.c.l.b16 %v7254
        %v7870 = vunpack.c.h.b16 %v7254
        %v7871 = vunpack.c.l.b16 %v7255
        %v7872 = vunpack.c.h.b16 %v7255
        %v7873 = vunpack.c.l.b16 %v7256
        %v7874 = vunpack.c.h.b16 %v7256
        %v7875 = vunpack.c.l.b16 %v7257
        %v7876 = vunpack.c.h.b16 %v7257
        %v7877 = vunpack.c.l.b16 %v7258
        %v7878 = vunpack.c.h.b16 %v7258
        %v7879 = vunpack.c.l.b16 %v7259
        %v7880 = vunpack.c.h.b16 %v7259
        %v7881 = vunpack.c.l.b16 %v7260
        %v7882 = vunpack.c.h.b16 %v7260
        %v7883 = vunpack.c.l.b16 %v7261
        %v7884 = vunpack.c.h.b16 %v7261
        %v7885 = vunpack.c.l.b16 %v7262
        %v7886 = vunpack.c.h.b16 %v7262
        %v7887 = vunpack.c.l.b16 %v7263
        %v7888 = vunpack.c.h.b16 %v7263
        %v7889 = vunpack.c.l.b16 %v7264
        %v7890 = vunpack.c.h.b16 %v7264
        %v7891 = vunpack.c.l.b16 %v7265
        %v7892 = vunpack.c.h.b16 %v7265
        %v7893 = vunpack.c.l.b16 %v7266
        %v7894 = vunpack.c.h.b16 %v7266
        %v7895 = vunpack.c.l.b16 %v7267
        %v7896 = vunpack.c.h.b16 %v7267
        %v7897 = vunpack.c.l.b16 %v7268
        %v7898 = vunpack.c.h.b16 %v7268
        %v7899 = vunpack.c.l.b16 %v7269
        %v7900 = vunpack.c.h.b16 %v7269
        %v7901 = vunpack.c.l.b16 %v7270
        %v7902 = vunpack.c.h.b16 %v7270
        %v7903 = vunpack.c.l.b16 %v7271
        %v7904 = vunpack.c.h.b16 %v7271
        %v7905 = vunpack.c.l.b16 %v7272
        %v7906 = vunpack.c.h.b16 %v7272
        %v7907 = vunpack.c.l.b16 %v7273
        %v7908 = vunpack.c.h.b16 %v7273
        %v7909 = vunpack.c.l.b16 %v7274
        %v7910 = vunpack.c.h.b16 %v7274
        %v7911 = vunpack.c.l.b16 %v7275
        %v7912 = vunpack.c.h.b16 %v7275
        %v7913 = vunpack.c.l.b16 %v7276
        %v7914 = vunpack.c.h.b16 %v7276
        %v7915 = vunpack.c.l.b16 %v7277
        %v7916 = vunpack.c.h.b16 %v7277
        %v7917 = vunpack.c.l.b16 %v7278
        %v7918 = vunpack.c.h.b16 %v7278
        %v7919 = vunpack.c.l.b16 %v7279
        %v7920 = vunpack.c.h.b16 %v7279
        %v7921 = vunpack.c.l.b16 %v7280
        %v7922 = vunpack.c.h.b16 %v7280
        %v7923 = vunpack.c.l.b16 %v7281
        %v7924 = vunpack.c.h.b16 %v7281
        %v7925 = vunpack.c.l.b16 %v7282
        %v7926 = vunpack.c.h.b16 %v7282
        %v7927 = vunpack.c.l.b16 %v7283
        %v7928 = vunpack.c.h.b16 %v7283
        %v7929 = vunpack.c.l.b16 %v7284
        %v7930 = vunpack.c.h.b16 %v7284
        %v7931 = vunpack.c.l.b16 %v7285
        %v7932 = vunpack.c.h.b16 %v7285
        %v7933 = vunpack.c.l.b16 %v7286
        %v7934 = vunpack.c.h.b16 %v7286
        %v7935 = vunpack.c.l.b16 %v7287
        %v7936 = vunpack.c.h.b16 %v7287
        %v7937 = vunpack.c.l.b16 %v7288
        %v7938 = vunpack.c.h.b16 %v7288
        %v7939 = vunpack.c.l.b16 %v7289
        %v7940 = vunpack.c.h.b16 %v7289
        %v7941 = vunpack.c.l.b16 %v7290
        %v7942 = vunpack.c.h.b16 %v7290
        %v7943 = vunpack.c.l.b16 %v7291
        %v7944 = vunpack.c.h.b16 %v7291
        %v7945 = vunpack.c.l.b16 %v7292
        %v7946 = vunpack.c.h.b16 %v7292
        %v7947 = vunpack.c.l.b16 %v7293
        %v7948 = vunpack.c.h.b16 %v7293
        %v7949 = vunpack.c.l.b16 %v7294
        %v7950 = vunpack.c.h.b16 %v7294
        %v7951 = vunpack.c.l.b16 %v7295
        %v7952 = vunpack.c.h.b16 %v7295
        %v7953 = vunpack.c.l.b16 %v7296
        %v7954 = vunpack.c.h.b16 %v7296
        %v7955 = vunpack.c.l.b16 %v7297
        %v7956 = vunpack.c.h.b16 %v7297
        %v7957 = vunpack.c.l.b16 %v7298
        %v7958 = vunpack.c.h.b16 %v7298
        %v7959 = vunpack.c.l.b16 %v7299
        %v7960 = vunpack.c.h.b16 %v7299
        %v7961 = vunpack.c.l.b16 %v7300
        %v7962 = vunpack.c.h.b16 %v7300
        %v7963 = vunpack.c.l.b16 %v7301
        %v7964 = vunpack.c.h.b16 %v7301
        %v7965 = vunpack.c.l.b16 %v7302
        %v7966 = vunpack.c.h.b16 %v7302
        %v7967 = vunpack.c.l.b16 %v7303
        %v7968 = vunpack.c.h.b16 %v7303
        %v7969 = vunpack.c.l.b16 %v7304
        %v7970 = vunpack.c.h.b16 %v7304
        %v7971 = vunpack.c.l.b16 %v7305
        %v7972 = vunpack.c.h.b16 %v7305
        %v7973 = vunpack.c.l.b16 %v7306
        %v7974 = vunpack.c.h.b16 %v7306
        %v7975 = vunpack.c.l.b16 %v7307
        %v7976 = vunpack.c.h.b16 %v7307
        %v7977 = vunpack.c.l.b16 %v7308
        %v7978 = vunpack.c.h.b16 %v7308
        %v7979 = vunpack.c.l.b16 %v7309
        %v7980 = vunpack.c.h.b16 %v7309
        %v7981 = vunpack.c.l.b16 %v7310
        %v7982 = vunpack.c.h.b16 %v7310
        %v7983 = vunpack.c.l.b16 %v7311
        %v7984 = vunpack.c.h.b16 %v7311
        %v7985 = vunpack.c.l.b16 %v7312
        %v7986 = vunpack.c.h.b16 %v7312
        %v7987 = vunpack.c.l.b16 %v7313
        %v7988 = vunpack.c.h.b16 %v7313
        %v7989 = vunpack.c.l.b16 %v7314
        %v7990 = vunpack.c.h.b16 %v7314
        %v7991 = vunpack.c.l.b16 %v7315
        %v7992 = vunpack.c.h.b16 %v7315
        %v7993 = vunpack.c.l.b16 %v7316
        %v7994 = vunpack.c.h.b16 %v7316
        %v7995 = vunpack.c.l.b16 %v7317
        %v7996 = vunpack.c.h.b16 %v7317
        %v7997 = vunpack.c.l.b16 %v7318
        %v7998 = vunpack.c.h.b16 %v7318
        %v7999 = vunpack.c.l.b16 %v7319
        %v8000 = vunpack.c.h.b16 %v7319
        %v8001 = vunpack.c.l.b16 %v7320
        %v8002 = vunpack.c.h.b16 %v7320
        %v8003 = vunpack.c.l.b16 %v7321
        %v8004 = vunpack.c.h.b16 %v7321
        %v8005 = vunpack.c.l.b16 %v7322
        %v8006 = vunpack.c.h.b16 %v7322
        %v8007 = vunpack.c.l.b16 %v7323
        %v8008 = vunpack.c.h.b16 %v7323
        %v8009 = vunpack.c.l.b16 %v7324
        %v8010 = vunpack.c.h.b16 %v7324
        %v8011 = vunpack.c.l.b16 %v7325
        %v8012 = vunpack.c.h.b16 %v7325
        %v8013 = vunpack.c.l.b16 %v7326
        %v8014 = vunpack.c.h.b16 %v7326
        %v8015 = vunpack.c.l.b16 %v7327
        %v8016 = vunpack.c.h.b16 %v7327
        %v8017 = vunpack.c.l.b16 %v7328
        %v8018 = vunpack.c.h.b16 %v7328
        %v8019 = vunpack.c.l.b16 %v7329
        %v8020 = vunpack.c.h.b16 %v7329
        %v8021 = vunpack.c.l.b16 %v7330
        %v8022 = vunpack.c.h.b16 %v7330
        %v8023 = vunpack.c.l.b16 %v7331
        %v8024 = vunpack.c.h.b16 %v7331
        %v8025 = vunpack.c.l.b16 %v7332
        %v8026 = vunpack.c.h.b16 %v7332
        %v8027 = vunpack.c.l.b16 %v7333
        %v8028 = vunpack.c.h.b16 %v7333
        %v8029 = vunpack.c.l.b16 %v7334
        %v8030 = vunpack.c.h.b16 %v7334
        %v8031 = vunpack.c.l.b16 %v7335
        %v8032 = vunpack.c.h.b16 %v7335
        %v8033 = vunpack.c.l.b16 %v7336
        %v8034 = vunpack.c.h.b16 %v7336
        %v8035 = vunpack.c.l.b16 %v7337
        %v8036 = vunpack.c.h.b16 %v7337
        %v8037 = vunpack.c.l.b16 %v7338
        %v8038 = vunpack.c.h.b16 %v7338
        %v8039 = vunpack.c.l.b16 %v7339
        %v8040 = vunpack.c.h.b16 %v7339
        %v8041 = vunpack.c.l.b16 %v7340
        %v8042 = vunpack.c.h.b16 %v7340
        %v8043 = vunpack.c.l.b16 %v7341
        %v8044 = vunpack.c.h.b16 %v7341
        %v8045 = vunpack.c.l.b16 %v7342
        %v8046 = vunpack.c.h.b16 %v7342
        %v8047 = vunpack.c.l.b16 %v7343
        %v8048 = vunpack.c.h.b16 %v7343
        %v8049 = vunpack.c.l.b16 %v7344
        %v8050 = vunpack.c.h.b16 %v7344
        %v8051 = vunpack.c.l.b16 %v7345
        %v8052 = vunpack.c.h.b16 %v7345
        %v8053 = vunpack.c.l.b16 %v7346
        %v8054 = vunpack.c.h.b16 %v7346
        %v8055 = vunpack.c.l.b16 %v7347
        %v8056 = vunpack.c.h.b16 %v7347
        %v8057 = vunpack.c.l.b16 %v7348
        %v8058 = vunpack.c.h.b16 %v7348
        %v8059 = vunpack.c.l.b16 %v7349
        %v8060 = vunpack.c.h.b16 %v7349
        %v8061 = vunpack.c.l.b16 %v7350
        %v8062 = vunpack.c.h.b16 %v7350
        %v8063 = vunpack.c.l.b16 %v7351
        %v8064 = vunpack.c.h.b16 %v7351
        %v8065 = vunpack.c.l.b16 %v7352
        %v8066 = vunpack.c.h.b16 %v7352
        %v8067 = vunpack.c.l.b16 %v7353
        %v8068 = vunpack.c.h.b16 %v7353
        %v8069 = vunpack.c.l.b16 %v7354
        %v8070 = vunpack.c.h.b16 %v7354
        %v8071 = vunpack.c.l.b16 %v7355
        %v8072 = vunpack.c.h.b16 %v7355
        %v8073 = vunpack.c.l.b16 %v7356
        %v8074 = vunpack.c.h.b16 %v7356
        %v8075 = vunpack.c.l.b16 %v7357
        %v8076 = vunpack.c.h.b16 %v7357
        %v8077 = vunpack.c.l.b16 %v7358
        %v8078 = vunpack.c.h.b16 %v7358
        %v8079 = vunpack.c.l.b16 %v7359
        %v8080 = vunpack.c.h.b16 %v7359
        %v8081 = vunpack.c.l.b16 %v7360
        %v8082 = vunpack.c.h.b16 %v7360
        %v8083 = vunpack.c.l.b16 %v7361
        %v8084 = vunpack.c.h.b16 %v7361
        %v8085 = vunpack.c.l.b16 %v7362
        %v8086 = vunpack.c.h.b16 %v7362
        %v8087 = vunpack.c.l.b16 %v7363
        %v8088 = vunpack.c.h.b16 %v7363
        %v8089 = vunpack.c.l.b16 %v7364
        %v8090 = vunpack.c.h.b16 %v7364
        %v8091 = vunpack.c.l.b16 %v7365
        %v8092 = vunpack.c.h.b16 %v7365
        %v8093 = vunpack.c.l.b16 %v7366
        %v8094 = vunpack.c.h.b16 %v7366
        %v8095 = vunpack.c.l.b16 %v7367
        %v8096 = vunpack.c.h.b16 %v7367
        %v8097 = vunpack.c.l.b16 %v7368
        %v8098 = vunpack.c.h.b16 %v7368
        %v8099 = vunpack.c.l.b16 %v7369
        %v8100 = vunpack.c.h.b16 %v7369
        %v8101 = vunpack.c.l.b16 %v7370
        %v8102 = vunpack.c.h.b16 %v7370
        %v8103 = vunpack.c.l.b16 %v7371
        %v8104 = vunpack.c.h.b16 %v7371
        %v8105 = vunpack.c.l.b16 %v7372
        %v8106 = vunpack.c.h.b16 %v7372
        %v8107 = vunpack.c.l.b16 %v7373
        %v8108 = vunpack.c.h.b16 %v7373
        %v8109 = vunpack.c.l.b16 %v7374
        %v8110 = vunpack.c.h.b16 %v7374
        %v8111 = vunpack.c.l.b16 %v7375
        %v8112 = vunpack.c.h.b16 %v7375
        %v8113 = vunpack.c.l.b16 %v7376
        %v8114 = vunpack.c.h.b16 %v7376
        %v8115 = vunpack.c.l.b16 %v7377
        %v8116 = vunpack.c.h.b16 %v7377
        %v8117 = vunpack.c.l.b16 %v7378
        %v8118 = vunpack.c.h.b16 %v7378
        %v8119 = vunpack.c.l.b16 %v7379
        %v8120 = vunpack.c.h.b16 %v7379
        %v8121 = vunpack.c.l.b16 %v7380
        %v8122 = vunpack.c.h.b16 %v7380
        %v8123 = vunpack.c.l.b16 %v7381
        %v8124 = vunpack.c.h.b16 %v7381
        %v8125 = vunpack.c.l.b16 %v7382
        %v8126 = vunpack.c.h.b16 %v7382
        %v8127 = vunpack.c.l.b16 %v7383
        %v8128 = vunpack.c.h.b16 %v7383
        %v8129 = vunpack.c.l.b16 %v7384
        %v8130 = vunpack.c.h.b16 %v7384
        %v8131 = vunpack.c.l.b16 %v7385
        %v8132 = vunpack.c.h.b16 %v7385
        %v8133 = vunpack.c.l.b16 %v7386
        %v8134 = vunpack.c.h.b16 %v7386
        %v8135 = vunpack.c.l.b16 %v7387
        %v8136 = vunpack.c.h.b16 %v7387
        %v8137 = vunpack.c.l.b16 %v7388
        %v8138 = vunpack.c.h.b16 %v7388
        %v8139 = vunpack.c.l.b16 %v7389
        %v8140 = vunpack.c.h.b16 %v7389
        %v8141 = vunpack.c.l.b16 %v7390
        %v8142 = vunpack.c.h.b16 %v7390
        %v8143 = vunpack.c.l.b16 %v7391
        %v8144 = vunpack.c.h.b16 %v7391
        %v8145 = vunpack.c.l.b16 %v7392
        %v8146 = vunpack.c.h.b16 %v7392
        %v8147 = vunpack.c.l.b16 %v7393
        %v8148 = vunpack.c.h.b16 %v7393
        %v8149 = vunpack.c.l.b16 %v7394
        %v8150 = vunpack.c.h.b16 %v7394
        %v8151 = vunpack.c.l.b16 %v7395
        %v8152 = vunpack.c.h.b16 %v7395
        %v8153 = vunpack.c.l.b16 %v7396
        %v8154 = vunpack.c.h.b16 %v7396
        %v8155 = vunpack.c.l.b16 %v7397
        %v8156 = vunpack.c.h.b16 %v7397
        %v8157 = vunpack.c.l.b16 %v7398
        %v8158 = vunpack.c.h.b16 %v7398
        %v8159 = vunpack.c.l.b16 %v7399
        %v8160 = vunpack.c.h.b16 %v7399
        %v8161 = vunpack.c.l.b16 %v7400
        %v8162 = vunpack.c.h.b16 %v7400
        %v8163 = vunpack.c.l.b16 %v7401
        %v8164 = vunpack.c.h.b16 %v7401
        %v8165 = vunpack.c.l.b16 %v7402
        %v8166 = vunpack.c.h.b16 %v7402
        %v8167 = vunpack.c.l.b16 %v7403
        %v8168 = vunpack.c.h.b16 %v7403
        %v8169 = vunpack.c.l.b16 %v7404
        %v8170 = vunpack.c.h.b16 %v7404
        %v8171 = vunpack.c.l.b16 %v7405
        %v8172 = vunpack.c.h.b16 %v7405
        %v8173 = vunpack.c.l.b16 %v7406
        %v8174 = vunpack.c.h.b16 %v7406
        %v8175 = vunpack.c.l.b16 %v7407
        %v8176 = vunpack.c.h.b16 %v7407
        %v8177 = vunpack.c.l.b16 %v7408
        %v8178 = vunpack.c.h.b16 %v7408
        %v8179 = vunpack.c.l.b16 %v7409
        %v8180 = vunpack.c.h.b16 %v7409
        %v8181 = vunpack.c.l.b16 %v7410
        %v8182 = vunpack.c.h.b16 %v7410
        %v8183 = vunpack.c.l.b16 %v7411
        %v8184 = vunpack.c.h.b16 %v7411
        %v8185 = vunpack.c.l.b16 %v7412
        %v8186 = vunpack.c.h.b16 %v7412
        %v8187 = vunpack.c.l.b16 %v7413
        %v8188 = vunpack.c.h.b16 %v7413
        %v8189 = vunpack.c.l.b16 %v7414
        %v8190 = vunpack.c.h.b16 %v7414
        %v8191 = vunpack.c.l.b16 %v7415
        %v8192 = vunpack.c.h.b16 %v7415
        %v8193 = vunpack.c.l.b16 %v7416
        %v8194 = vunpack.c.h.b16 %v7416
        %v8195 = vunpack.c.l.b16 %v7417
        %v8196 = vunpack.c.h.b16 %v7417
        %v8197 = vunpack.c.l.b16 %v7418
        %v8198 = vunpack.c.h.b16 %v7418
        %v8199 = vunpack.c.l.b16 %v7419
        %v8200 = vunpack.c.h.b16 %v7419
        %v8201 = vunpack.c.l.b16 %v7420
        %v8202 = vunpack.c.h.b16 %v7420
        %v8203 = vunpack.c.l.b16 %v7421
        %v8204 = vunpack.c.h.b16 %v7421
        %v8205 = vunpack.c.l.b16 %v7422
        %v8206 = vunpack.c.h.b16 %v7422
        %v8207 = vunpack.c.l.b16 %v7423
        %v8208 = vunpack.c.h.b16 %v7423
        %v8209 = vunpack.c.l.b16 %v7424
        %v8210 = vunpack.c.h.b16 %v7424
        %v8211 = vunpack.c.l.b16 %v7425
        %v8212 = vunpack.c.h.b16 %v7425
        %v8213 = vunpack.c.l.b16 %v7426
        %v8214 = vunpack.c.h.b16 %v7426
        %v8215 = vunpack.c.l.b16 %v7427
        %v8216 = vunpack.c.h.b16 %v7427
        %v8217 = vunpack.c.l.b16 %v7428
        %v8218 = vunpack.c.h.b16 %v7428
        %v8219 = vunpack.c.l.b16 %v7429
        %v8220 = vunpack.c.h.b16 %v7429
        %v8221 = vunpack.c.l.b16 %v7430
        %v8222 = vunpack.c.h.b16 %v7430
        %v8223 = vunpack.c.l.b16 %v7431
        %v8224 = vunpack.c.h.b16 %v7431
        %v8225 = vunpack.c.l.b16 %v7432
        %v8226 = vunpack.c.h.b16 %v7432
        %v8227 = vunpack.c.l.b16 %v7433
        %v8228 = vunpack.c.h.b16 %v7433
        %v8229 = vunpack.c.l.b16 %v7434
        %v8230 = vunpack.c.h.b16 %v7434
        %v8231 = vunpack.c.l.b16 %v7435
        %v8232 = vunpack.c.h.b16 %v7435
        %v8233 = vunpack.c.l.b16 %v7436
        %v8234 = vunpack.c.h.b16 %v7436
        %v8235 = vunpack.c.l.b16 %v7437
        %v8236 = vunpack.c.h.b16 %v7437
        %v8237 = vunpack.c.l.b16 %v7438
        %v8238 = vunpack.c.h.b16 %v7438
        %v8239 = vunpack.c.l.b16 %v7439
        %v8240 = vunpack.c.h.b16 %v7439
        %v8241 = vunpack.c.l.b16 %v7440
        %v8242 = vunpack.c.h.b16 %v7440
        %v8243 = vunpack.c.l.b16 %v7441
        %v8244 = vunpack.c.h.b16 %v7441
        %v8245 = vunpack.c.l.b16 %v7442
        %v8246 = vunpack.c.h.b16 %v7442
        %v8247 = vunpack.c.l.b16 %v7443
        %v8248 = vunpack.c.h.b16 %v7443
        %v8249 = vunpack.c.l.b16 %v7444
        %v8250 = vunpack.c.h.b16 %v7444
        %v8251 = vunpack.c.l.b16 %v7445
        %v8252 = vunpack.c.h.b16 %v7445
        %v8253 = vunpack.c.l.b16 %v7446
        %v8254 = vunpack.c.h.b16 %v7446
        %v8255 = vunpack.c.l.b16 %v7447
        %v8256 = vunpack.c.h.b16 %v7447
        %v8257 = vunpack.c.l.b16 %v7448
        %v8258 = vunpack.c.h.b16 %v7448
        %v8259 = vunpack.c.l.b16 %v7449
        %v8260 = vunpack.c.h.b16 %v7449
        %v8261 = vunpack.c.l.b16 %v7450
        %v8262 = vunpack.c.h.b16 %v7450
        %v8263 = vunpack.c.l.b16 %v7451
        %v8264 = vunpack.c.h.b16 %v7451
        %v8265 = vunpack.c.l.b16 %v7452
        %v8266 = vunpack.c.h.b16 %v7452
        %v8267 = vunpack.c.l.b16 %v7453
        %v8268 = vunpack.c.h.b16 %v7453
        %v8269 = vunpack.c.l.b16 %v7454
        %v8270 = vunpack.c.h.b16 %v7454
        %v8271 = vunpack.c.l.b16 %v7455
        %v8272 = vunpack.c.h.b16 %v7455
        %v8273 = vunpack.c.l.b16 %v7456
        %v8274 = vunpack.c.h.b16 %v7456
        %v8275 = vunpack.c.l.b16 %v7457
        %v8276 = vunpack.c.h.b16 %v7457
        %v8277 = vunpack.c.l.b16 %v7458
        %v8278 = vunpack.c.h.b16 %v7458
        %v8279 = vunpack.c.l.b16 %v7459
        %v8280 = vunpack.c.h.b16 %v7459
        %v8281 = vunpack.c.l.b16 %v7460
        %v8282 = vunpack.c.h.b16 %v7460
        %v8283 = vunpack.c.l.b16 %v7461
        %v8284 = vunpack.c.h.b16 %v7461
        %v8285 = vunpack.c.l.b16 %v7462
        %v8286 = vunpack.c.h.b16 %v7462
        %v8287 = vunpack.c.l.b16 %v7463
        %v8288 = vunpack.c.h.b16 %v7463
        %v8289 = vunpack.c.l.b16 %v7464
        %v8290 = vunpack.c.h.b16 %v7464
        %v8291 = vunpack.c.l.b16 %v7465
        %v8292 = vunpack.c.h.b16 %v7465
        %v8293 = vunpack.c.l.b16 %v7466
        %v8294 = vunpack.c.h.b16 %v7466
        %v8295 = vunpack.c.l.b16 %v7467
        %v8296 = vunpack.c.h.b16 %v7467
        %v8297 = vunpack.c.l.b16 %v7468
        %v8298 = vunpack.c.h.b16 %v7468
        %v8299 = vunpack.c.l.b16 %v7469
        %v8300 = vunpack.c.h.b16 %v7469
        %v8301 = vunpack.c.l.b16 %v7470
        %v8302 = vunpack.c.h.b16 %v7470
        %v8303 = vunpack.c.l.b16 %v7471
        %v8304 = vunpack.c.h.b16 %v7471
        %v8305 = vunpack.c.l.b16 %v7472
        %v8306 = vunpack.c.h.b16 %v7472
        %v8307 = vunpack.c.l.b16 %v7473
        %v8308 = vunpack.c.h.b16 %v7473
        %v8309 = vunpack.c.l.b16 %v7474
        %v8310 = vunpack.c.h.b16 %v7474
        %v8311 = vunpack.c.l.b16 %v7475
        %v8312 = vunpack.c.h.b16 %v7475
        %v8313 = vunpack.c.l.b16 %v7476
        %v8314 = vunpack.c.h.b16 %v7476
        %v8315 = vunpack.c.l.b16 %v7477
        %v8316 = vunpack.c.h.b16 %v7477
        %v8317 = vunpack.c.l.b16 %v7478
        %v8318 = vunpack.c.h.b16 %v7478
        %v8319 = vunpack.c.l.b16 %v7479
        %v8320 = vunpack.c.h.b16 %v7479
        %v8321 = vunpack.c.l.b16 %v7480
        %v8322 = vunpack.c.h.b16 %v7480
        %v8323 = vunpack.c.l.b16 %v7481
        %v8324 = vunpack.c.h.b16 %v7481
        %v8325 = vunpack.c.l.b16 %v7482
        %v8326 = vunpack.c.h.b16 %v7482
        %v8327 = vunpack.c.l.b16 %v7483
        %v8328 = vunpack.c.h.b16 %v7483
        %v8329 = vunpack.c.l.b16 %v7484
        %v8330 = vunpack.c.h.b16 %v7484
        %v8331 = vunpack.c.l.b16 %v7485
        %v8332 = vunpack.c.h.b16 %v7485
        %v8333 = vunpack.c.l.b16 %v7486
        %v8334 = vunpack.c.h.b16 %v7486
        %v8335 = vunpack.c.l.b16 %v7487
        %v8336 = vunpack.c.h.b16 %v7487
        %v8337 = vunpack.c.l.b16 %v7488
        %v8338 = vunpack.c.h.b16 %v7488
        %v8339 = vunpack.c.l.b16 %v7489
        %v8340 = vunpack.c.h.b16 %v7489
        %v8341 = vunpack.c.l.b16 %v7490
        %v8342 = vunpack.c.h.b16 %v7490
        %v8343 = vunpack.c.l.b16 %v7491
        %v8344 = vunpack.c.h.b16 %v7491
        %v8345 = vunpack.c.l.b16 %v7492
        %v8346 = vunpack.c.h.b16 %v7492
        %v8347 = vunpack.c.l.b16 %v7493
        %v8348 = vunpack.c.h.b16 %v7493
        %v8349 = vunpack.c.l.b16 %v7494
        %v8350 = vunpack.c.h.b16 %v7494
        %v8351 = vunpack.c.l.b16 %v7495
        %v8352 = vunpack.c.h.b16 %v7495
        %v8353 = vunpack.c.l.b16 %v7496
        %v8354 = vunpack.c.h.b16 %v7496
        %v8355 = vunpack.c.l.b16 %v7497
        %v8356 = vunpack.c.h.b16 %v7497
        %v8357 = vunpack.c.l.b16 %v7498
        %v8358 = vunpack.c.h.b16 %v7498
        %v8359 = vunpack.c.l.b16 %v7499
        %v8360 = vunpack.c.h.b16 %v7499
        %v8361 = vunpack.c.l.b16 %v7500
        %v8362 = vunpack.c.h.b16 %v7500
        %v8363 = vunpack.c.l.b16 %v7501
        %v8364 = vunpack.c.h.b16 %v7501
        %v8365 = vunpack.c.l.b16 %v7502
        %v8366 = vunpack.c.h.b16 %v7502
        %v8367 = vpack.c.b16 %v7797, %v7791
        %v8368 = vpack.c.b16 %v7798, %v7792
        %v8369 = vpack.c.b16 %v7799, %v7793
        %v8370 = vpack.c.b16 %v7800, %v7794
        %v8371 = vpack.c.b16 %v7801, %v7795
        %v8372 = vpack.c.b16 %v7802, %v7796
        %v8373 = vpack.c.b16 %v7809, %v7803
        %v8374 = vpack.c.b16 %v7810, %v7804
        %v8375 = vpack.c.b16 %v7811, %v7805
        %v8376 = vpack.c.b16 %v7812, %v7806
        %v8377 = vpack.c.b16 %v7813, %v7807
        %v8378 = vpack.c.b16 %v7814, %v7808
        %v8379 = vpack.c.b16 %v7821, %v7815
        %v8380 = vpack.c.b16 %v7822, %v7816
        %v8381 = vpack.c.b16 %v7823, %v7817
        %v8382 = vpack.c.b16 %v7824, %v7818
        %v8383 = vpack.c.b16 %v7825, %v7819
        %v8384 = vpack.c.b16 %v7826, %v7820
        %v8385 = vpack.c.b16 %v7833, %v7827
        %v8386 = vpack.c.b16 %v7834, %v7828
        %v8387 = vpack.c.b16 %v7835, %v7829
        %v8388 = vpack.c.b16 %v7836, %v7830
        %v8389 = vpack.c.b16 %v7837, %v7831
        %v8390 = vpack.c.b16 %v7838, %v7832
        %v8391 = vpack.c.b16 %v7845, %v7839
        %v8392 = vpack.c.b16 %v7846, %v7840
        %v8393 = vpack.c.b16 %v7847, %v7841
        %v8394 = vpack.c.b16 %v7848, %v7842
        %v8395 = vpack.c.b16 %v7849, %v7843
        %v8396 = vpack.c.b16 %v7850, %v7844
        %v8397 = vpack.c.b16 %v7857, %v7851
        %v8398 = vpack.c.b16 %v7858, %v7852
        %v8399 = vpack.c.b16 %v7859, %v7853
        %v8400 = vpack.c.b16 %v7860, %v7854
        %v8401 = vpack.c.b16 %v7861, %v7855
        %v8402 = vpack.c.b16 %v7862, %v7856
        %v8403 = vpack.c.b16 %v7869, %v7863
        %v8404 = vpack.c.b16 %v7870, %v7864
        %v8405 = vpack.c.b16 %v7871, %v7865
        %v8406 = vpack.c.b16 %v7872, %v7866
        %v8407 = vpack.c.b16 %v7873, %v7867
        %v8408 = vpack.c.b16 %v7874, %v7868
        %v8409 = vpack.c.b16 %v7881, %v7875
        %v8410 = vpack.c.b16 %v7882, %v7876
        %v8411 = vpack.c.b16 %v7883, %v7877
        %v8412 = vpack.c.b16 %v7884, %v7878
        %v8413 = vpack.c.b16 %v7885, %v7879
        %v8414 = vpack.c.b16 %v7886, %v7880
        %v8415 = vpack.c.b16 %v7893, %v7887
        %v8416 = vpack.c.b16 %v7894, %v7888
        %v8417 = vpack.c.b16 %v7895, %v7889
        %v8418 = vpack.c.b16 %v7896, %v7890
        %v8419 = vpack.c.b16 %v7897, %v7891
        %v8420 = vpack.c.b16 %v7898, %v7892
        %v8421 = vpack.c.b16 %v7905, %v7899
        %v8422 = vpack.c.b16 %v7906, %v7900
        %v8423 = vpack.c.b16 %v7907, %v7901
        %v8424 = vpack.c.b16 %v7908, %v7902
        %v8425 = vpack.c.b16 %v7909, %v7903
        %v8426 = vpack.c.b16 %v7910, %v7904
        %v8427 = vpack.c.b16 %v7917, %v7911
        %v8428 = vpack.c.b16 %v7918, %v7912
        %v8429 = vpack.c.b16 %v7919, %v7913
        %v8430 = vpack.c.b16 %v7920, %v7914
        %v8431 = vpack.c.b16 %v7921, %v7915
        %v8432 = vpack.c.b16 %v7922, %v7916
        %v8433 = vpack.c.b16 %v7929, %v7923
        %v8434 = vpack.c.b16 %v7930, %v7924
        %v8435 = vpack.c.b16 %v7931, %v7925
        %v8436 = vpack.c.b16 %v7932, %v7926
        %v8437 = vpack.c.b16 %v7933, %v7927
        %v8438 = vpack.c.b16 %v7934, %v7928
        %v8439 = vpack.c.b16 %v7941, %v7935
        %v8440 = vpack.c.b16 %v7942, %v7936
        %v8441 = vpack.c.b16 %v7943, %v7937
        %v8442 = vpack.c.b16 %v7944, %v7938
        %v8443 = vpack.c.b16 %v7945, %v7939
        %v8444 = vpack.c.b16 %v7946, %v7940
        %v8445 = vpack.c.b16 %v7953, %v7947
        %v8446 = vpack.c.b16 %v7954, %v7948
        %v8447 = vpack.c.b16 %v7955, %v7949
        %v8448 = vpack.c.b16 %v7956, %v7950
        %v8449 = vpack.c.b16 %v7957, %v7951
        %v8450 = vpack.c.b16 %v7958, %v7952
        %v8451 = vpack.c.b16 %v7965, %v7959
        %v8452 = vpack.c.b16 %v7966, %v7960
        %v8453 = vpack.c.b16 %v7967, %v7961
        %v8454 = vpack.c.b16 %v7968, %v7962
        %v8455 = vpack.c.b16 %v7969, %v7963
        %v8456 = vpack.c.b16 %v7970, %v7964
        %v8457 = vpack.c.b16 %v7977, %v7971
        %v8458 = vpack.c.b16 %v7978, %v7972
        %v8459 = vpack.c.b16 %v7979, %v7973
        %v8460 = vpack.c.b16 %v7980, %v7974
        %v8461 = vpack.c.b16 %v7981, %v7975
        %v8462 = vpack.c.b16 %v7982, %v7976
        %v8463 = vpack.c.b16 %v7989, %v7983
        %v8464 = vpack.c.b16 %v7990, %v7984
        %v8465 = vpack.c.b16 %v7991, %v7985
        %v8466 = vpack.c.b16 %v7992, %v7986
        %v8467 = vpack.c.b16 %v7993, %v7987
        %v8468 = vpack.c.b16 %v7994, %v7988
        %v8469 = vpack.c.b16 %v8001, %v7995
        %v8470 = vpack.c.b16 %v8002, %v7996
        %v8471 = vpack.c.b16 %v8003, %v7997
        %v8472 = vpack.c.b16 %v8004, %v7998
        %v8473 = vpack.c.b16 %v8005, %v7999
        %v8474 = vpack.c.b16 %v8006, %v8000
        %v8475 = vpack.c.b16 %v8013, %v8007
        %v8476 = vpack.c.b16 %v8014, %v8008
        %v8477 = vpack.c.b16 %v8015, %v8009
        %v8478 = vpack.c.b16 %v8016, %v8010
        %v8479 = vpack.c.b16 %v8017, %v8011
        %v8480 = vpack.c.b16 %v8018, %v8012
        %v8481 = vpack.c.b16 %v8025, %v8019
        %v8482 = vpack.c.b16 %v8026, %v8020
        %v8483 = vpack.c.b16 %v8027, %v8021
        %v8484 = vpack.c.b16 %v8028, %v8022
        %v8485 = vpack.c.b16 %v8029, %v8023
        %v8486 = vpack.c.b16 %v8030, %v8024
        %v8487 = vpack.c.b16 %v8037, %v8031
        %v8488 = vpack.c.b16 %v8038, %v8032
        %v8489 = vpack.c.b16 %v8039, %v8033
        %v8490 = vpack.c.b16 %v8040, %v8034
        %v8491 = vpack.c.b16 %v8041, %v8035
        %v8492 = vpack.c.b16 %v8042, %v8036
        %v8493 = vpack.c.b16 %v8049, %v8043
        %v8494 = vpack.c.b16 %v8050, %v8044
        %v8495 = vpack.c.b16 %v8051, %v8045
        %v8496 = vpack.c.b16 %v8052, %v8046
        %v8497 = vpack.c.b16 %v8053, %v8047
        %v8498 = vpack.c.b16 %v8054, %v8048
        %v8499 = vpack.c.b16 %v8061, %v8055
        %v8500 = vpack.c.b16 %v8062, %v8056
        %v8501 = vpack.c.b16 %v8063, %v8057
        %v8502 = vpack.c.b16 %v8064, %v8058
        %v8503 = vpack.c.b16 %v8065, %v8059
        %v8504 = vpack.c.b16 %v8066, %v8060
        %v8505 = vpack.c.b16 %v8073, %v8067
        %v8506 = vpack.c.b16 %v8074, %v8068
        %v8507 = vpack.c.b16 %v8075, %v8069
        %v8508 = vpack.c.b16 %v8076, %v8070
        %v8509 = vpack.c.b16 %v8077, %v8071
        %v8510 = vpack.c.b16 %v8078, %v8072
        %v8511 = vpack.c.b16 %v8085, %v8079
        %v8512 = vpack.c.b16 %v8086, %v8080
        %v8513 = vpack.c.b16 %v8087, %v8081
        %v8514 = vpack.c.b16 %v8088, %v8082
        %v8515 = vpack.c.b16 %v8089, %v8083
        %v8516 = vpack.c.b16 %v8090, %v8084
        %v8517 = vpack.c.b16 %v8097, %v8091
        %v8518 = vpack.c.b16 %v8098, %v8092
        %v8519 = vpack.c.b16 %v8099, %v8093
        %v8520 = vpack.c.b16 %v8100, %v8094
        %v8521 = vpack.c.b16 %v8101, %v8095
        %v8522 = vpack.c.b16 %v8102, %v8096
        %v8523 = vpack.c.b16 %v8109, %v8103
        %v8524 = vpack.c.b16 %v8110, %v8104
        %v8525 = vpack.c.b16 %v8111, %v8105
        %v8526 = vpack.c.b16 %v8112, %v8106
        %v8527 = vpack.c.b16 %v8113, %v8107
        %v8528 = vpack.c.b16 %v8114, %v8108
        %v8529 = vpack.c.b16 %v8121, %v8115
        %v8530 = vpack.c.b16 %v8122, %v8116
        %v8531 = vpack.c.b16 %v8123, %v8117
        %v8532 = vpack.c.b16 %v8124, %v8118
        %v8533 = vpack.c.b16 %v8125, %v8119
        %v8534 = vpack.c.b16 %v8126, %v8120
        %v8535 = vpack.c.b16 %v8133, %v8127
        %v8536 = vpack.c.b16 %v8134, %v8128
        %v8537 = vpack.c.b16 %v8135, %v8129
        %v8538 = vpack.c.b16 %v8136, %v8130
        %v8539 = vpack.c.b16 %v8137, %v8131
        %v8540 = vpack.c.b16 %v8138, %v8132
        %v8541 = vpack.c.b16 %v8145, %v8139
        %v8542 = vpack.c.b16 %v8146, %v8140
        %v8543 = vpack.c.b16 %v8147, %v8141
        %v8544 = vpack.c.b16 %v8148, %v8142
        %v8545 = vpack.c.b16 %v8149, %v8143
        %v8546 = vpack.c.b16 %v8150, %v8144
        %v8547 = vpack.c.b16 %v8157, %v8151
        %v8548 = vpack.c.b16 %v8158, %v8152
        %v8549 = vpack.c.b16 %v8159, %v8153
        %v8550 = vpack.c.b16 %v8160, %v8154
        %v8551 = vpack.c.b16 %v8161, %v8155
        %v8552 = vpack.c.b16 %v8162, %v8156
        %v8553 = vpack.c.b16 %v8169, %v8163
        %v8554 = vpack.c.b16 %v8170, %v8164
        %v8555 = vpack.c.b16 %v8171, %v8165
        %v8556 = vpack.c.b16 %v8172, %v8166
        %v8557 = vpack.c.b16 %v8173, %v8167
        %v8558 = vpack.c.b16 %v8174, %v8168
        %v8559 = vpack.c.b16 %v8181, %v8175
        %v8560 = vpack.c.b16 %v8182, %v8176
        %v8561 = vpack.c.b16 %v8183, %v8177
        %v8562 = vpack.c.b16 %v8184, %v8178
        %v8563 = vpack.c.b16 %v8185, %v8179
        %v8564 = vpack.c.b16 %v8186, %v8180
        %v8565 = vpack.c.b16 %v8193, %v8187
        %v8566 = vpack.c.b16 %v8194, %v8188
        %v8567 = vpack.c.b16 %v8195, %v8189
        %v8568 = vpack.c.b16 %v8196, %v8190
        %v8569 = vpack.c.b16 %v8197, %v8191
        %v8570 = vpack.c.b16 %v8198, %v8192
        %v8571 = vpack.c.b16 %v8205, %v8199
        %v8572 = vpack.c.b16 %v8206, %v8200
        %v8573 = vpack.c.b16 %v8207, %v8201
        %v8574 = vpack.c.b16 %v8208, %v8202
        %v8575 = vpack.c.b16 %v8209, %v8203
        %v8576 = vpack.c.b16 %v8210, %v8204
        %v8577 = vpack.c.b16 %v8217, %v8211
        %v8578 = vpack.c.b16 %v8218, %v8212
        %v8579 = vpack.c.b16 %v8219, %v8213
        %v8580 = vpack.c.b16 %v8220, %v8214
        %v8581 = vpack.c.b16 %v8221, %v8215
        %v8582 = vpack.c.b16 %v8222, %v8216
        %v8583 = vpack.c.b16 %v8229, %v8223
        %v8584 = vpack.c.b16 %v8230, %v8224
        %v8585 = vpack.c.b16 %v8231, %v8225
        %v8586 = vpack.c.b16 %v8232, %v8226
        %v8587 = vpack.c.b16 %v8233, %v8227
        %v8588 = vpack.c.b16 %v8234, %v8228
        %v8589 = vpack.c.b16 %v8241, %v8235
        %v8590 = vpack.c.b16 %v8242, %v8236
        %v8591 = vpack.c.b16 %v8243, %v8237
        %v8592 = vpack.c.b16 %v8244, %v8238
        %v8593 = vpack.c.b16 %v8245, %v8239
        %v8594 = vpack.c.b16 %v8246, %v8240
        %v8595 = vpack.c.b16 %v8253, %v8247
        %v8596 = vpack.c.b16 %v8254, %v8248
        %v8597 = vpack.c.b16 %v8255, %v8249
        %v8598 = vpack.c.b16 %v8256, %v8250
        %v8599 = vpack.c.b16 %v8257, %v8251
        %v8600 = vpack.c.b16 %v8258, %v8252
        %v8601 = vpack.c.b16 %v8265, %v8259
        %v8602 = vpack.c.b16 %v8266, %v8260
        %v8603 = vpack.c.b16 %v8267, %v8261
        %v8604 = vpack.c.b16 %v8268, %v8262
        %v8605 = vpack.c.b16 %v8269, %v8263
        %v8606 = vpack.c.b16 %v8270, %v8264
        %v8607 = vpack.c.b16 %v8277, %v8271
        %v8608 = vpack.c.b16 %v8278, %v8272
        %v8609 = vpack.c.b16 %v8279, %v8273
        %v8610 = vpack.c.b16 %v8280, %v8274
        %v8611 = vpack.c.b16 %v8281, %v8275
        %v8612 = vpack.c.b16 %v8282, %v8276
        %v8613 = vpack.c.b16 %v8289, %v8283
        %v8614 = vpack.c.b16 %v8290, %v8284
        %v8615 = vpack.c.b16 %v8291, %v8285
        %v8616 = vpack.c.b16 %v8292, %v8286
        %v8617 = vpack.c.b16 %v8293, %v8287
        %v8618 = vpack.c.b16 %v8294, %v8288
        %v8619 = vpack.c.b16 %v8301, %v8295
        %v8620 = vpack.c.b16 %v8302, %v8296
        %v8621 = vpack.c.b16 %v8303, %v8297
        %v8622 = vpack.c.b16 %v8304, %v8298
        %v8623 = vpack.c.b16 %v8305, %v8299
        %v8624 = vpack.c.b16 %v8306, %v8300
        %v8625 = vpack.c.b16 %v8313, %v8307
        %v8626 = vpack.c.b16 %v8314, %v8308
        %v8627 = vpack.c.b16 %v8315, %v8309
        %v8628 = vpack.c.b16 %v8316, %v8310
        %v8629 = vpack.c.b16 %v8317, %v8311
        %v8630 = vpack.c.b16 %v8318, %v8312
        %v8631 = vpack.c.b16 %v8325, %v8319
        %v8632 = vpack.c.b16 %v8326, %v8320
        %v8633 = vpack.c.b16 %v8327, %v8321
        %v8634 = vpack.c.b16 %v8328, %v8322
        %v8635 = vpack.c.b16 %v8329, %v8323
        %v8636 = vpack.c.b16 %v8330, %v8324
        %v8637 = vpack.c.b16 %v8337, %v8331
        %v8638 = vpack.c.b16 %v8338, %v8332
        %v8639 = vpack.c.b16 %v8339, %v8333
        %v8640 = vpack.c.b16 %v8340, %v8334
        %v8641 = vpack.c.b16 %v8341, %v8335
        %v8642 = vpack.c.b16 %v8342, %v8336
        %v8643 = vpack.c.b16 %v8349, %v8343
        %v8644 = vpack.c.b16 %v8350, %v8344
        %v8645 = vpack.c.b16 %v8351, %v8345
        %v8646 = vpack.c.b16 %v8352, %v8346
        %v8647 = vpack.c.b16 %v8353, %v8347
        %v8648 = vpack.c.b16 %v8354, %v8348
        %v8649 = vpack.c.b16 %v8361, %v8355
        %v8650 = vpack.c.b16 %v8362, %v8356
        %v8651 = vpack.c.b16 %v8363, %v8357
        %v8652 = vpack.c.b16 %v8364, %v8358
        %v8653 = vpack.c.b16 %v8365, %v8359
        %v8654 = vpack.c.b16 %v8366, %v8360
        %8943 = vmatprep.subr.bf16.mxu0 %v8410
        %8944 = vmatpush1.bf16.msra.mxu0 %v8409
        %8945 = vmatprep.subr.bf16.mxu0 %v8404
        %8946 = vmatpush1.bf16.msra.mxu0 %v8403
        %8947 = vmatprep.subr.bf16.mxu0 %v8398
        %8948 = vmatpush1.bf16.msra.mxu0 %v8397
        %8949 = vmatprep.subr.bf16.mxu0 %v8392
        %8950 = vmatpush1.bf16.msra.mxu0 %v8391
        %8951 = vmatprep.subr.bf16.mxu0 %v8386
        %8952 = vmatpush1.bf16.msra.mxu0 %v8385
        %8953 = vmatprep.subr.bf16.mxu0 %v8380
        %8954 = vmatpush1.bf16.msra.mxu0 %v8379
        %8955 = vmatprep.subr.bf16.mxu0 %v8374
        %8956 = vmatpush1.bf16.msra.mxu0 %v8373
        %8957 = vmatprep.subr.bf16.mxu0 %v8368
        %8958 = vmatpush1.bf16.msra.mxu0 %v8367
        %8959 = vmatprep.subr.bf16.mxu0 %v8458
        %8960 = vmatpush2.bf16.msra.mxu0 %v8457
        %8961 = vmatprep.subr.bf16.mxu0 %v8452
        %8962 = vmatpush2.bf16.msra.mxu0 %v8451
        %8963 = vmatprep.subr.bf16.mxu0 %v8446
        %8964 = vmatpush2.bf16.msra.mxu0 %v8445
        %8965 = vmatprep.subr.bf16.mxu0 %v8440
        %8966 = vmatpush2.bf16.msra.mxu0 %v8439
        %8967 = vmatprep.subr.bf16.mxu0 %v8434
        %8968 = vmatpush2.bf16.msra.mxu0 %v8433
        %8969 = vmatprep.subr.bf16.mxu0 %v8428
        %8970 = vmatpush2.bf16.msra.mxu0 %v8427
        %8971 = vmatprep.subr.bf16.mxu0 %v8422
        %8972 = vmatpush2.bf16.msra.mxu0 %v8421
        %8973 = vmatprep.subr.bf16.mxu0 %v8416
        %8974 = vmatpush2.bf16.msra.mxu0 %v8415
        %8975 = vmatprep.mubr.bf16.mxu0 %v7210
        %8976 = vmatmul.mubr.bf16.gmra.mxu0 %v7209
        %v8977 = vpop.f32.mrf.mxu0
        %v8978 = vadd.f32 0.0, %v8977
        %v8979 = vpop.f32.mrf.mxu0
        %v8980 = vadd.f32 0.0, %v8979
        %v8981 = vpop.f32.mrf.mxu0
        %v8982 = vpop.f32.mrf.mxu0
        %8983 = vdwg.mxu0
        %8984 = vmatprep.subr.bf16.mxu0 %v8506
        %8985 = vmatpush1.bf16.msra.mxu0 %v8505
        %8986 = vmatprep.subr.bf16.mxu0 %v8500
        %8987 = vmatpush1.bf16.msra.mxu0 %v8499
        %8988 = vmatprep.subr.bf16.mxu0 %v8494
        %8989 = vmatpush1.bf16.msra.mxu0 %v8493
        %8990 = vmatprep.subr.bf16.mxu0 %v8488
        %8991 = vmatpush1.bf16.msra.mxu0 %v8487
        %8992 = vmatprep.subr.bf16.mxu0 %v8482
        %8993 = vmatpush1.bf16.msra.mxu0 %v8481
        %8994 = vmatprep.subr.bf16.mxu0 %v8476
        %8995 = vmatpush1.bf16.msra.mxu0 %v8475
        %8996 = vmatprep.subr.bf16.mxu0 %v8470
        %8997 = vmatpush1.bf16.msra.mxu0 %v8469
        %8998 = vmatprep.subr.bf16.mxu0 %v8464
        %8999 = vmatpush1.bf16.msra.mxu0 %v8463
        %9000 = vmatprep.subr.bf16.mxu0 %v8554
        %9001 = vmatpush2.bf16.msra.mxu0 %v8553
        %9002 = vmatprep.subr.bf16.mxu0 %v8548
        %9003 = vmatpush2.bf16.msra.mxu0 %v8547
        %9004 = vmatprep.subr.bf16.mxu0 %v8542
        %9005 = vmatpush2.bf16.msra.mxu0 %v8541
        %9006 = vmatprep.subr.bf16.mxu0 %v8536
        %9007 = vmatpush2.bf16.msra.mxu0 %v8535
        %9008 = vmatprep.subr.bf16.mxu0 %v8530
        %9009 = vmatpush2.bf16.msra.mxu0 %v8529
        %9010 = vmatprep.subr.bf16.mxu0 %v8524
        %9011 = vmatpush2.bf16.msra.mxu0 %v8523
        %9012 = vmatprep.subr.bf16.mxu0 %v8518
        %9013 = vmatpush2.bf16.msra.mxu0 %v8517
        %9014 = vmatprep.subr.bf16.mxu0 %v8512
        %9015 = vmatpush2.bf16.msra.mxu0 %v8511
        %9016 = vmatprep.mubr.bf16.mxu0 %v7212
        %9017 = vmatmul.mubr.bf16.gmra.mxu0 %v7211
        %v9018 = vpop.f32.mrf.mxu0
        %v9019 = vadd.f32 %v8978, %v9018
        %v9020 = vpop.f32.mrf.mxu0
        %v9021 = vadd.f32 %v8980, %v9020
        %v9022 = vpop.f32.mrf.mxu0
        %v9023 = vpop.f32.mrf.mxu0
        %9024 = vdwg.mxu0
        %9025 = vmatprep.subr.bf16.mxu0 %v8602
        %9026 = vmatpush1.bf16.msra.mxu0 %v8601
        %9027 = vmatprep.subr.bf16.mxu0 %v8596
        %9028 = vmatpush1.bf16.msra.mxu0 %v8595
        %9029 = vmatprep.subr.bf16.mxu0 %v8590
        %9030 = vmatpush1.bf16.msra.mxu0 %v8589
        %9031 = vmatprep.subr.bf16.mxu0 %v8584
        %9032 = vmatpush1.bf16.msra.mxu0 %v8583
        %9033 = vmatprep.subr.bf16.mxu0 %v8578
        %9034 = vmatpush1.bf16.msra.mxu0 %v8577
        %9035 = vmatprep.subr.bf16.mxu0 %v8572
        %9036 = vmatpush1.bf16.msra.mxu0 %v8571
        %9037 = vmatprep.subr.bf16.mxu0 %v8566
        %9038 = vmatpush1.bf16.msra.mxu0 %v8565
        %9039 = vmatprep.subr.bf16.mxu0 %v8560
        %9040 = vmatpush1.bf16.msra.mxu0 %v8559
        %9041 = vmatprep.subr.bf16.mxu0 %v8650
        %9042 = vmatpush2.bf16.msra.mxu0 %v8649
        %9043 = vmatprep.subr.bf16.mxu0 %v8644
        %9044 = vmatpush2.bf16.msra.mxu0 %v8643
        %9045 = vmatprep.subr.bf16.mxu0 %v8638
        %9046 = vmatpush2.bf16.msra.mxu0 %v8637
        %9047 = vmatprep.subr.bf16.mxu0 %v8632
        %9048 = vmatpush2.bf16.msra.mxu0 %v8631
        %9049 = vmatprep.subr.bf16.mxu0 %v8626
        %9050 = vmatpush2.bf16.msra.mxu0 %v8625
        %9051 = vmatprep.subr.bf16.mxu0 %v8620
        %9052 = vmatpush2.bf16.msra.mxu0 %v8619
        %9053 = vmatprep.subr.bf16.mxu0 %v8614
        %9054 = vmatpush2.bf16.msra.mxu0 %v8613
        %9055 = vmatprep.subr.bf16.mxu0 %v8608
        %9056 = vmatpush2.bf16.msra.mxu0 %v8607
        %9057 = vmatprep.mubr.bf16.mxu0 %v7214
        %9058 = vmatmul.mubr.bf16.gmra.mxu0 %v7213
        %v9059 = vpop.f32.mrf.mxu0
        %v9060 = vadd.f32 %v9019, %v9059
        %v9061 = vpop.f32.mrf.mxu0
        %v9062 = vadd.f32 %v9021, %v9061
        %v9063 = vpop.f32.mrf.mxu0
        %v9064 = vpop.f32.mrf.mxu0
        %9065 = vdwg.mxu0
        %9066 = vmatprep.subr.bf16.mxu0 %v8412
        %9067 = vmatpush1.bf16.msra.mxu0 %v8411
        %9068 = vmatprep.subr.bf16.mxu0 %v8406
        %9069 = vmatpush1.bf16.msra.mxu0 %v8405
        %9070 = vmatprep.subr.bf16.mxu0 %v8400
        %9071 = vmatpush1.bf16.msra.mxu0 %v8399
        %9072 = vmatprep.subr.bf16.mxu0 %v8394
        %9073 = vmatpush1.bf16.msra.mxu0 %v8393
        %9074 = vmatprep.subr.bf16.mxu0 %v8388
        %9075 = vmatpush1.bf16.msra.mxu0 %v8387
        %9076 = vmatprep.subr.bf16.mxu0 %v8382
        %9077 = vmatpush1.bf16.msra.mxu0 %v8381
        %9078 = vmatprep.subr.bf16.mxu0 %v8376
        %9079 = vmatpush1.bf16.msra.mxu0 %v8375
        %9080 = vmatprep.subr.bf16.mxu0 %v8370
        %9081 = vmatpush1.bf16.msra.mxu0 %v8369
        %9082 = vmatprep.subr.bf16.mxu0 %v8460
        %9083 = vmatpush2.bf16.msra.mxu0 %v8459
        %9084 = vmatprep.subr.bf16.mxu0 %v8454
        %9085 = vmatpush2.bf16.msra.mxu0 %v8453
        %9086 = vmatprep.subr.bf16.mxu0 %v8448
        %9087 = vmatpush2.bf16.msra.mxu0 %v8447
        %9088 = vmatprep.subr.bf16.mxu0 %v8442
        %9089 = vmatpush2.bf16.msra.mxu0 %v8441
        %9090 = vmatprep.subr.bf16.mxu0 %v8436
        %9091 = vmatpush2.bf16.msra.mxu0 %v8435
        %9092 = vmatprep.subr.bf16.mxu0 %v8430
        %9093 = vmatpush2.bf16.msra.mxu0 %v8429
        %9094 = vmatprep.subr.bf16.mxu0 %v8424
        %9095 = vmatpush2.bf16.msra.mxu0 %v8423
        %9096 = vmatprep.subr.bf16.mxu0 %v8418
        %9097 = vmatpush2.bf16.msra.mxu0 %v8417
        %9098 = vmatprep.mubr.bf16.mxu0 %v7210
        %9099 = vmatmul.mubr.bf16.gmra.mxu0 %v7209
        %v9100 = vpop.f32.mrf.mxu0
        %v9101 = vadd.f32 0.0, %v9100
        %v9102 = vpop.f32.mrf.mxu0
        %v9103 = vadd.f32 0.0, %v9102
        %v9104 = vpop.f32.mrf.mxu0
        %v9105 = vpop.f32.mrf.mxu0
        %9106 = vdwg.mxu0
        %9107 = vmatprep.subr.bf16.mxu0 %v8508
        %9108 = vmatpush1.bf16.msra.mxu0 %v8507
        %9109 = vmatprep.subr.bf16.mxu0 %v8502
        %9110 = vmatpush1.bf16.msra.mxu0 %v8501
        %9111 = vmatprep.subr.bf16.mxu0 %v8496
        %9112 = vmatpush1.bf16.msra.mxu0 %v8495
        %9113 = vmatprep.subr.bf16.mxu0 %v8490
        %9114 = vmatpush1.bf16.msra.mxu0 %v8489
        %9115 = vmatprep.subr.bf16.mxu0 %v8484
        %9116 = vmatpush1.bf16.msra.mxu0 %v8483
        %9117 = vmatprep.subr.bf16.mxu0 %v8478
        %9118 = vmatpush1.bf16.msra.mxu0 %v8477
        %9119 = vmatprep.subr.bf16.mxu0 %v8472
        %9120 = vmatpush1.bf16.msra.mxu0 %v8471
        %9121 = vmatprep.subr.bf16.mxu0 %v8466
        %9122 = vmatpush1.bf16.msra.mxu0 %v8465
        %9123 = vmatprep.subr.bf16.mxu0 %v8556
        %9124 = vmatpush2.bf16.msra.mxu0 %v8555
        %9125 = vmatprep.subr.bf16.mxu0 %v8550
        %9126 = vmatpush2.bf16.msra.mxu0 %v8549
        %9127 = vmatprep.subr.bf16.mxu0 %v8544
        %9128 = vmatpush2.bf16.msra.mxu0 %v8543
        %9129 = vmatprep.subr.bf16.mxu0 %v8538
        %9130 = vmatpush2.bf16.msra.mxu0 %v8537
        %9131 = vmatprep.subr.bf16.mxu0 %v8532
        %9132 = vmatpush2.bf16.msra.mxu0 %v8531
        %9133 = vmatprep.subr.bf16.mxu0 %v8526
        %9134 = vmatpush2.bf16.msra.mxu0 %v8525
        %9135 = vmatprep.subr.bf16.mxu0 %v8520
        %9136 = vmatpush2.bf16.msra.mxu0 %v8519
        %9137 = vmatprep.subr.bf16.mxu0 %v8514
        %9138 = vmatpush2.bf16.msra.mxu0 %v8513
        %9139 = vmatprep.mubr.bf16.mxu0 %v7212
        %9140 = vmatmul.mubr.bf16.gmra.mxu0 %v7211
        %v9141 = vpop.f32.mrf.mxu0
        %v9142 = vadd.f32 %v9101, %v9141
        %v9143 = vpop.f32.mrf.mxu0
        %v9144 = vadd.f32 %v9103, %v9143
        %v9145 = vpop.f32.mrf.mxu0
        %v9146 = vpop.f32.mrf.mxu0
        %9147 = vdwg.mxu0
        %9148 = vmatprep.subr.bf16.mxu0 %v8604
        %9149 = vmatpush1.bf16.msra.mxu0 %v8603
        %9150 = vmatprep.subr.bf16.mxu0 %v8598
        %9151 = vmatpush1.bf16.msra.mxu0 %v8597
        %9152 = vmatprep.subr.bf16.mxu0 %v8592
        %9153 = vmatpush1.bf16.msra.mxu0 %v8591
        %9154 = vmatprep.subr.bf16.mxu0 %v8586
        %9155 = vmatpush1.bf16.msra.mxu0 %v8585
        %9156 = vmatprep.subr.bf16.mxu0 %v8580
        %9157 = vmatpush1.bf16.msra.mxu0 %v8579
        %9158 = vmatprep.subr.bf16.mxu0 %v8574
        %9159 = vmatpush1.bf16.msra.mxu0 %v8573
        %9160 = vmatprep.subr.bf16.mxu0 %v8568
        %9161 = vmatpush1.bf16.msra.mxu0 %v8567
        %9162 = vmatprep.subr.bf16.mxu0 %v8562
        %9163 = vmatpush1.bf16.msra.mxu0 %v8561
        %9164 = vmatprep.subr.bf16.mxu0 %v8652
        %9165 = vmatpush2.bf16.msra.mxu0 %v8651
        %9166 = vmatprep.subr.bf16.mxu0 %v8646
        %9167 = vmatpush2.bf16.msra.mxu0 %v8645
        %9168 = vmatprep.subr.bf16.mxu0 %v8640
        %9169 = vmatpush2.bf16.msra.mxu0 %v8639
        %9170 = vmatprep.subr.bf16.mxu0 %v8634
        %9171 = vmatpush2.bf16.msra.mxu0 %v8633
        %9172 = vmatprep.subr.bf16.mxu0 %v8628
        %9173 = vmatpush2.bf16.msra.mxu0 %v8627
        %9174 = vmatprep.subr.bf16.mxu0 %v8622
        %9175 = vmatpush2.bf16.msra.mxu0 %v8621
        %9176 = vmatprep.subr.bf16.mxu0 %v8616
        %9177 = vmatpush2.bf16.msra.mxu0 %v8615
        %9178 = vmatprep.subr.bf16.mxu0 %v8610
        %9179 = vmatpush2.bf16.msra.mxu0 %v8609
        %9180 = vmatprep.mubr.bf16.mxu0 %v7214
        %9181 = vmatmul.mubr.bf16.gmra.mxu0 %v7213
        %v9182 = vpop.f32.mrf.mxu0
        %v9183 = vadd.f32 %v9142, %v9182
        %v9184 = vpop.f32.mrf.mxu0
        %v9185 = vadd.f32 %v9144, %v9184
        %v9186 = vpop.f32.mrf.mxu0
        %v9187 = vpop.f32.mrf.mxu0
        %9188 = vdwg.mxu0
        %9189 = vmatprep.subr.bf16.mxu0 %v8414
        %9190 = vmatpush1.bf16.msra.mxu0 %v8413
        %9191 = vmatprep.subr.bf16.mxu0 %v8408
        %9192 = vmatpush1.bf16.msra.mxu0 %v8407
        %9193 = vmatprep.subr.bf16.mxu0 %v8402
        %9194 = vmatpush1.bf16.msra.mxu0 %v8401
        %9195 = vmatprep.subr.bf16.mxu0 %v8396
        %9196 = vmatpush1.bf16.msra.mxu0 %v8395
        %9197 = vmatprep.subr.bf16.mxu0 %v8390
        %9198 = vmatpush1.bf16.msra.mxu0 %v8389
        %9199 = vmatprep.subr.bf16.mxu0 %v8384
        %9200 = vmatpush1.bf16.msra.mxu0 %v8383
        %9201 = vmatprep.subr.bf16.mxu0 %v8378
        %9202 = vmatpush1.bf16.msra.mxu0 %v8377
        %9203 = vmatprep.subr.bf16.mxu0 %v8372
        %9204 = vmatpush1.bf16.msra.mxu0 %v8371
        %9205 = vmatprep.subr.bf16.mxu0 %v8462
        %9206 = vmatpush2.bf16.msra.mxu0 %v8461
        %9207 = vmatprep.subr.bf16.mxu0 %v8456
        %9208 = vmatpush2.bf16.msra.mxu0 %v8455
        %9209 = vmatprep.subr.bf16.mxu0 %v8450
        %9210 = vmatpush2.bf16.msra.mxu0 %v8449
        %9211 = vmatprep.subr.bf16.mxu0 %v8444
        %9212 = vmatpush2.bf16.msra.mxu0 %v8443
        %9213 = vmatprep.subr.bf16.mxu0 %v8438
        %9214 = vmatpush2.bf16.msra.mxu0 %v8437
        %9215 = vmatprep.subr.bf16.mxu0 %v8432
        %9216 = vmatpush2.bf16.msra.mxu0 %v8431
        %9217 = vmatprep.subr.bf16.mxu0 %v8426
        %9218 = vmatpush2.bf16.msra.mxu0 %v8425
        %9219 = vmatprep.subr.bf16.mxu0 %v8420
        %9220 = vmatpush2.bf16.msra.mxu0 %v8419
        %9221 = vmatprep.mubr.bf16.mxu0 %v7210
        %9222 = vmatmul.mubr.bf16.gmra.mxu0 %v7209
        %v9223 = vpop.f32.mrf.mxu0
        %v9224 = vadd.f32 0.0, %v9223
        %v9225 = vpop.f32.mrf.mxu0
        %v9226 = vadd.f32 0.0, %v9225
        %v9227 = vpop.f32.mrf.mxu0
        %v9228 = vpop.f32.mrf.mxu0
        %9229 = vdwg.mxu0
        %9230 = vmatprep.subr.bf16.mxu0 %v8510
        %9231 = vmatpush1.bf16.msra.mxu0 %v8509
        %9232 = vmatprep.subr.bf16.mxu0 %v8504
        %9233 = vmatpush1.bf16.msra.mxu0 %v8503
        %9234 = vmatprep.subr.bf16.mxu0 %v8498
        %9235 = vmatpush1.bf16.msra.mxu0 %v8497
        %9236 = vmatprep.subr.bf16.mxu0 %v8492
        %9237 = vmatpush1.bf16.msra.mxu0 %v8491
        %9238 = vmatprep.subr.bf16.mxu0 %v8486
        %9239 = vmatpush1.bf16.msra.mxu0 %v8485
        %9240 = vmatprep.subr.bf16.mxu0 %v8480
        %9241 = vmatpush1.bf16.msra.mxu0 %v8479
        %9242 = vmatprep.subr.bf16.mxu0 %v8474
        %9243 = vmatpush1.bf16.msra.mxu0 %v8473
        %9244 = vmatprep.subr.bf16.mxu0 %v8468
        %9245 = vmatpush1.bf16.msra.mxu0 %v8467
        %9246 = vmatprep.subr.bf16.mxu0 %v8558
        %9247 = vmatpush2.bf16.msra.mxu0 %v8557
        %9248 = vmatprep.subr.bf16.mxu0 %v8552
        %9249 = vmatpush2.bf16.msra.mxu0 %v8551
        %9250 = vmatprep.subr.bf16.mxu0 %v8546
        %9251 = vmatpush2.bf16.msra.mxu0 %v8545
        %9252 = vmatprep.subr.bf16.mxu0 %v8540
        %9253 = vmatpush2.bf16.msra.mxu0 %v8539
        %9254 = vmatprep.subr.bf16.mxu0 %v8534
        %9255 = vmatpush2.bf16.msra.mxu0 %v8533
        %9256 = vmatprep.subr.bf16.mxu0 %v8528
        %9257 = vmatpush2.bf16.msra.mxu0 %v8527
        %9258 = vmatprep.subr.bf16.mxu0 %v8522
        %9259 = vmatpush2.bf16.msra.mxu0 %v8521
        %9260 = vmatprep.subr.bf16.mxu0 %v8516
        %9261 = vmatpush2.bf16.msra.mxu0 %v8515
        %9262 = vmatprep.mubr.bf16.mxu0 %v7212
        %9263 = vmatmul.mubr.bf16.gmra.mxu0 %v7211
        %v9264 = vpop.f32.mrf.mxu0
        %v9265 = vadd.f32 %v9224, %v9264
        %v9266 = vpop.f32.mrf.mxu0
        %v9267 = vadd.f32 %v9226, %v9266
        %v9268 = vpop.f32.mrf.mxu0
        %v9269 = vpop.f32.mrf.mxu0
        %9270 = vdwg.mxu0
        %9271 = vmatprep.subr.bf16.mxu0 %v8606
        %9272 = vmatpush1.bf16.msra.mxu0 %v8605
        %9273 = vmatprep.subr.bf16.mxu0 %v8600
        %9274 = vmatpush1.bf16.msra.mxu0 %v8599
        %9275 = vmatprep.subr.bf16.mxu0 %v8594
        %9276 = vmatpush1.bf16.msra.mxu0 %v8593
        %9277 = vmatprep.subr.bf16.mxu0 %v8588
        %9278 = vmatpush1.bf16.msra.mxu0 %v8587
        %9279 = vmatprep.subr.bf16.mxu0 %v8582
        %9280 = vmatpush1.bf16.msra.mxu0 %v8581
        %9281 = vmatprep.subr.bf16.mxu0 %v8576
        %9282 = vmatpush1.bf16.msra.mxu0 %v8575
        %9283 = vmatprep.subr.bf16.mxu0 %v8570
        %9284 = vmatpush1.bf16.msra.mxu0 %v8569
        %9285 = vmatprep.subr.bf16.mxu0 %v8564
        %9286 = vmatpush1.bf16.msra.mxu0 %v8563
        %9287 = vmatprep.subr.bf16.mxu0 %v8654
        %9288 = vmatpush2.bf16.msra.mxu0 %v8653
        %9289 = vmatprep.subr.bf16.mxu0 %v8648
        %9290 = vmatpush2.bf16.msra.mxu0 %v8647
        %9291 = vmatprep.subr.bf16.mxu0 %v8642
        %9292 = vmatpush2.bf16.msra.mxu0 %v8641
        %9293 = vmatprep.subr.bf16.mxu0 %v8636
        %9294 = vmatpush2.bf16.msra.mxu0 %v8635
        %9295 = vmatprep.subr.bf16.mxu0 %v8630
        %9296 = vmatpush2.bf16.msra.mxu0 %v8629
        %9297 = vmatprep.subr.bf16.mxu0 %v8624
        %9298 = vmatpush2.bf16.msra.mxu0 %v8623
        %9299 = vmatprep.subr.bf16.mxu0 %v8618
        %9300 = vmatpush2.bf16.msra.mxu0 %v8617
        %9301 = vmatprep.subr.bf16.mxu0 %v8612
        %9302 = vmatpush2.bf16.msra.mxu0 %v8611
        %9303 = vmatprep.mubr.bf16.mxu0 %v7214
        %9304 = vmatmul.mubr.bf16.gmra.mxu0 %v7213
        %v9305 = vpop.f32.mrf.mxu0
        %v9306 = vadd.f32 %v9265, %v9305
        %v9307 = vpop.f32.mrf.mxu0
        %v9308 = vadd.f32 %v9267, %v9307
        %v9309 = vpop.f32.mrf.mxu0
        %v9310 = vpop.f32.mrf.mxu0
        %9311 = vdwg.mxu0
        %v9312 = vadd.f32 %v588, %v9060
        %v9313 = vadd.f32 %v589, %v9062
        %v9314 = vadd.f32 %v590, %v9183
        %v9315 = vadd.f32 %v591, %v9185
        %v9316 = vadd.f32 %v592, %v9306
        %v9317 = vadd.f32 %v593, %v9308
        %v9318 = vld [vmem:[#allocation14] sm:$0x3f]
        %v9319 = vld [vmem:[#allocation15] sm:$0x3f]
        %v9320 = vadd.f32 %v9312, %v9313
        %v9321 = vadd.f32 %v9320, %v9314
        %v9322 = vadd.f32 %v9321, %v9315
        %v9323 = vadd.f32 %v9322, %v9316
        %v9324 = vadd.f32 %v9323, %v9317
        %9325 = vadd.xlane.f32.xlu0 %v9324
        %v9326 = vpop.xlane.xlu0 %9325
        %v9327 = vrcp.pop 768.0
        %v9328 = vmul.f32 %v9326, %v9327
        %v9329 = vsub.f32 %v9312, %v9328
        %v9330 = vsub.f32 %v9313, %v9328
        %v9331 = vsub.f32 %v9314, %v9328
        %v9332 = vsub.f32 %v9315, %v9328
        %v9333 = vsub.f32 %v9316, %v9328
        %v9334 = vsub.f32 %v9317, %v9328
        %v9335 = vmul.f32 %v9329, %v9329
        %v9336 = vmul.f32 %v9330, %v9330
        %v9337 = vmul.f32 %v9331, %v9331
        %v9338 = vmul.f32 %v9332, %v9332
        %v9339 = vmul.f32 %v9333, %v9333
        %v9340 = vmul.f32 %v9334, %v9334
        %v9341 = vadd.f32 %v9335, %v9336
        %v9342 = vadd.f32 %v9341, %v9337
        %v9343 = vadd.f32 %v9342, %v9338
        %v9344 = vadd.f32 %v9343, %v9339
        %v9345 = vadd.f32 %v9344, %v9340
        %9346 = vadd.xlane.f32.xlu0 %v9345
        %v9347 = vpop.xlane.xlu0 %9346
        %v9348 = vmul.f32 %v9347, %v9327
        %v9349 = vadd.f32 %v9348, 1e-12
        %v9350 = vrsqrt.pop %v9349
        %v9351 = vmul.f32 %v9329, %v9350
        %v9352 = vmul.f32 %v9330, %v9350
        %v9353 = vmul.f32 %v9331, %v9350
        %v9354 = vmul.f32 %v9332, %v9350
        %v9355 = vmul.f32 %v9333, %v9350
        %v9356 = vmul.f32 %v9334, %v9350
        %v9358 = vlaneseq
        %v9359 = vshrl.u32 %v9358, 7
        %v9360 = vsub.s32 0, %v9359
        %v9361 = vrot.slane %v9318, %v9360
        %v9362 = vlaneseq
        %v9363 = vshrl.u32 %v9362, 7
        %v9364 = vsub.s32 1, %v9363
        %v9365 = vrot.slane %v9318, %v9364
        %v9366 = vlaneseq
        %v9367 = vshrl.u32 %v9366, 7
        %v9368 = vsub.s32 2, %v9367
        %v9369 = vrot.slane %v9318, %v9368
        %v9370 = vlaneseq
        %v9371 = vshrl.u32 %v9370, 7
        %v9372 = vsub.s32 3, %v9371
        %v9373 = vrot.slane %v9318, %v9372
        %v9374 = vlaneseq
        %v9375 = vshrl.u32 %v9374, 7
        %v9376 = vsub.s32 4, %v9375
        %v9377 = vrot.slane %v9318, %v9376
        %v9378 = vlaneseq
        %v9379 = vshrl.u32 %v9378, 7
        %v9380 = vsub.s32 5, %v9379
        %v9381 = vrot.slane %v9318, %v9380
        %v9388 = vmul.f32 %v9351, %v9361
        %v9389 = vmul.f32 %v9352, %v9365
        %v9390 = vmul.f32 %v9353, %v9369
        %v9391 = vmul.f32 %v9354, %v9373
        %v9392 = vmul.f32 %v9355, %v9377
        %v9393 = vmul.f32 %v9356, %v9381
        %v9395 = vlaneseq
        %v9396 = vshrl.u32 %v9395, 7
        %v9397 = vsub.s32 0, %v9396
        %v9398 = vrot.slane %v9319, %v9397
        %v9399 = vlaneseq
        %v9400 = vshrl.u32 %v9399, 7
        %v9401 = vsub.s32 1, %v9400
        %v9402 = vrot.slane %v9319, %v9401
        %v9403 = vlaneseq
        %v9404 = vshrl.u32 %v9403, 7
        %v9405 = vsub.s32 2, %v9404
        %v9406 = vrot.slane %v9319, %v9405
        %v9407 = vlaneseq
        %v9408 = vshrl.u32 %v9407, 7
        %v9409 = vsub.s32 3, %v9408
        %v9410 = vrot.slane %v9319, %v9409
        %v9411 = vlaneseq
        %v9412 = vshrl.u32 %v9411, 7
        %v9413 = vsub.s32 4, %v9412
        %v9414 = vrot.slane %v9319, %v9413
        %v9415 = vlaneseq
        %v9416 = vshrl.u32 %v9415, 7
        %v9417 = vsub.s32 5, %v9416
        %v9418 = vrot.slane %v9319, %v9417
        %v9425 = vadd.f32 %v9388, %v9398
        %v9426 = vadd.f32 %v9389, %v9402
        %v9427 = vadd.f32 %v9390, %v9406
        %v9428 = vadd.f32 %v9391, %v9410
        %v9429 = vadd.f32 %v9392, %v9414
        %v9430 = vadd.f32 %v9393, %v9418
        %v9431 = vpack.c.bf16 %v9425, %v9425
        %v9432 = vpack.c.bf16 %v9426, %v9426
        %v9433 = vpack.c.bf16 %v9427, %v9427
        %v9434 = vpack.c.bf16 %v9428, %v9428
        %v9435 = vpack.c.bf16 %v9429, %v9429
        %v9436 = vpack.c.bf16 %v9430, %v9430
        %v9437 = vld [vmem:[#allocation11] sm:$0xff]
        %v9438 = vld [vmem:[#allocation11 + $0x8] sm:$0xff]
        %v9439 = vld [vmem:[#allocation11 + $0x10] sm:$0xff]
        %v9440 = vld [vmem:[#allocation11 + $0x18] sm:$0xff]
        %v9441 = vld [vmem:[#allocation11 + $0x20] sm:$0xff]
        %v9442 = vld [vmem:[#allocation11 + $0x28] sm:$0xff]
        %v9443 = vld [vmem:[#allocation11 + $0x30] sm:$0xff]
        %v9444 = vld [vmem:[#allocation11 + $0x38] sm:$0xff]
        %v9445 = vld [vmem:[#allocation11 + $0x40] sm:$0xff]
        %v9446 = vld [vmem:[#allocation11 + $0x48] sm:$0xff]
        %v9447 = vld [vmem:[#allocation11 + $0x50] sm:$0xff]
        %v9448 = vld [vmem:[#allocation11 + $0x58] sm:$0xff]
        %v9449 = vld [vmem:[#allocation11 + $0x60] sm:$0xff]
        %v9450 = vld [vmem:[#allocation11 + $0x68] sm:$0xff]
        %v9451 = vld [vmem:[#allocation11 + $0x70] sm:$0xff]
        %v9452 = vld [vmem:[#allocation11 + $0x78] sm:$0xff]
        %v9453 = vld [vmem:[#allocation11 + $0x80] sm:$0xff]
        %v9454 = vld [vmem:[#allocation11 + $0x88] sm:$0xff]
        %v9455 = vld [vmem:[#allocation11 + $0x90] sm:$0xff]
        %v9456 = vld [vmem:[#allocation11 + $0x98] sm:$0xff]
        %v9457 = vld [vmem:[#allocation11 + $0xa0] sm:$0xff]
        %v9458 = vld [vmem:[#allocation11 + $0xa8] sm:$0xff]
        %v9459 = vld [vmem:[#allocation11 + $0xb0] sm:$0xff]
        %v9460 = vld [vmem:[#allocation11 + $0xb8] sm:$0xff]
        %v9461 = vld [vmem:[#allocation11 + $0xc0] sm:$0xff]
        %v9462 = vld [vmem:[#allocation11 + $0xc8] sm:$0xff]
        %v9463 = vld [vmem:[#allocation11 + $0xd0] sm:$0xff]
        %v9464 = vld [vmem:[#allocation11 + $0xd8] sm:$0xff]
        %v9465 = vld [vmem:[#allocation11 + $0xe0] sm:$0xff]
        %v9466 = vld [vmem:[#allocation11 + $0xe8] sm:$0xff]
        %v9467 = vld [vmem:[#allocation11 + $0xf0] sm:$0xff]
        %v9468 = vld [vmem:[#allocation11 + $0xf8] sm:$0xff]
        %v9469 = vld [vmem:[#allocation11 + $0x100] sm:$0xff]
        %v9470 = vld [vmem:[#allocation11 + $0x108] sm:$0xff]
        %v9471 = vld [vmem:[#allocation11 + $0x110] sm:$0xff]
        %v9472 = vld [vmem:[#allocation11 + $0x118] sm:$0xff]
        %v9473 = vld [vmem:[#allocation11 + $0x120] sm:$0xff]
        %v9474 = vld [vmem:[#allocation11 + $0x128] sm:$0xff]
        %v9475 = vld [vmem:[#allocation11 + $0x130] sm:$0xff]
        %v9476 = vld [vmem:[#allocation11 + $0x138] sm:$0xff]
        %v9477 = vld [vmem:[#allocation11 + $0x140] sm:$0xff]
        %v9478 = vld [vmem:[#allocation11 + $0x148] sm:$0xff]
        %v9479 = vld [vmem:[#allocation11 + $0x150] sm:$0xff]
        %v9480 = vld [vmem:[#allocation11 + $0x158] sm:$0xff]
        %v9481 = vld [vmem:[#allocation11 + $0x160] sm:$0xff]
        %v9482 = vld [vmem:[#allocation11 + $0x168] sm:$0xff]
        %v9483 = vld [vmem:[#allocation11 + $0x170] sm:$0xff]
        %v9484 = vld [vmem:[#allocation11 + $0x178] sm:$0xff]
        %v9485 = vld [vmem:[#allocation11 + $0x180] sm:$0xff]
        %v9486 = vld [vmem:[#allocation11 + $0x188] sm:$0xff]
        %v9487 = vld [vmem:[#allocation11 + $0x190] sm:$0xff]
        %v9488 = vld [vmem:[#allocation11 + $0x198] sm:$0xff]
        %v9489 = vld [vmem:[#allocation11 + $0x1a0] sm:$0xff]
        %v9490 = vld [vmem:[#allocation11 + $0x1a8] sm:$0xff]
        %v9491 = vld [vmem:[#allocation11 + $0x1b0] sm:$0xff]
        %v9492 = vld [vmem:[#allocation11 + $0x1b8] sm:$0xff]
        %v9493 = vld [vmem:[#allocation11 + $0x1c0] sm:$0xff]
        %v9494 = vld [vmem:[#allocation11 + $0x1c8] sm:$0xff]
        %v9495 = vld [vmem:[#allocation11 + $0x1d0] sm:$0xff]
        %v9496 = vld [vmem:[#allocation11 + $0x1d8] sm:$0xff]
        %v9497 = vld [vmem:[#allocation11 + $0x1e0] sm:$0xff]
        %v9498 = vld [vmem:[#allocation11 + $0x1e8] sm:$0xff]
        %v9499 = vld [vmem:[#allocation11 + $0x1f0] sm:$0xff]
        %v9500 = vld [vmem:[#allocation11 + $0x1f8] sm:$0xff]
        %v9501 = vld [vmem:[#allocation11 + $0x200] sm:$0xff]
        %v9502 = vld [vmem:[#allocation11 + $0x208] sm:$0xff]
        %v9503 = vld [vmem:[#allocation11 + $0x210] sm:$0xff]
        %v9504 = vld [vmem:[#allocation11 + $0x218] sm:$0xff]
        %v9505 = vld [vmem:[#allocation11 + $0x220] sm:$0xff]
        %v9506 = vld [vmem:[#allocation11 + $0x228] sm:$0xff]
        %v9507 = vld [vmem:[#allocation11 + $0x230] sm:$0xff]
        %v9508 = vld [vmem:[#allocation11 + $0x238] sm:$0xff]
        %v9509 = vld [vmem:[#allocation11 + $0x240] sm:$0xff]
        %v9510 = vld [vmem:[#allocation11 + $0x248] sm:$0xff]
        %v9511 = vld [vmem:[#allocation11 + $0x250] sm:$0xff]
        %v9512 = vld [vmem:[#allocation11 + $0x258] sm:$0xff]
        %v9513 = vld [vmem:[#allocation11 + $0x260] sm:$0xff]
        %v9514 = vld [vmem:[#allocation11 + $0x268] sm:$0xff]
        %v9515 = vld [vmem:[#allocation11 + $0x270] sm:$0xff]
        %v9516 = vld [vmem:[#allocation11 + $0x278] sm:$0xff]
        %v9517 = vld [vmem:[#allocation11 + $0x280] sm:$0xff]
        %v9518 = vld [vmem:[#allocation11 + $0x288] sm:$0xff]
        %v9519 = vld [vmem:[#allocation11 + $0x290] sm:$0xff]
        %v9520 = vld [vmem:[#allocation11 + $0x298] sm:$0xff]
        %v9521 = vld [vmem:[#allocation11 + $0x2a0] sm:$0xff]
        %v9522 = vld [vmem:[#allocation11 + $0x2a8] sm:$0xff]
        %v9523 = vld [vmem:[#allocation11 + $0x2b0] sm:$0xff]
        %v9524 = vld [vmem:[#allocation11 + $0x2b8] sm:$0xff]
        %v9525 = vld [vmem:[#allocation11 + $0x2c0] sm:$0xff]
        %v9526 = vld [vmem:[#allocation11 + $0x2c8] sm:$0xff]
        %v9527 = vld [vmem:[#allocation11 + $0x2d0] sm:$0xff]
        %v9528 = vld [vmem:[#allocation11 + $0x2d8] sm:$0xff]
        %v9529 = vld [vmem:[#allocation11 + $0x2e0] sm:$0xff]
        %v9530 = vld [vmem:[#allocation11 + $0x2e8] sm:$0xff]
        %v9531 = vld [vmem:[#allocation11 + $0x2f0] sm:$0xff]
        %v9532 = vld [vmem:[#allocation11 + $0x2f8] sm:$0xff]
        %v9533 = vld [vmem:[#allocation11 + $0x300] sm:$0xff]
        %v9534 = vld [vmem:[#allocation11 + $0x308] sm:$0xff]
        %v9535 = vld [vmem:[#allocation11 + $0x310] sm:$0xff]
        %v9536 = vld [vmem:[#allocation11 + $0x318] sm:$0xff]
        %v9537 = vld [vmem:[#allocation11 + $0x320] sm:$0xff]
        %v9538 = vld [vmem:[#allocation11 + $0x328] sm:$0xff]
        %v9539 = vld [vmem:[#allocation11 + $0x330] sm:$0xff]
        %v9540 = vld [vmem:[#allocation11 + $0x338] sm:$0xff]
        %v9541 = vld [vmem:[#allocation11 + $0x340] sm:$0xff]
        %v9542 = vld [vmem:[#allocation11 + $0x348] sm:$0xff]
        %v9543 = vld [vmem:[#allocation11 + $0x350] sm:$0xff]
        %v9544 = vld [vmem:[#allocation11 + $0x358] sm:$0xff]
        %v9545 = vld [vmem:[#allocation11 + $0x360] sm:$0xff]
        %v9546 = vld [vmem:[#allocation11 + $0x368] sm:$0xff]
        %v9547 = vld [vmem:[#allocation11 + $0x370] sm:$0xff]
        %v9548 = vld [vmem:[#allocation11 + $0x378] sm:$0xff]
        %v9549 = vld [vmem:[#allocation11 + $0x380] sm:$0xff]
        %v9550 = vld [vmem:[#allocation11 + $0x388] sm:$0xff]
        %v9551 = vld [vmem:[#allocation11 + $0x390] sm:$0xff]
        %v9552 = vld [vmem:[#allocation11 + $0x398] sm:$0xff]
        %v9553 = vld [vmem:[#allocation11 + $0x3a0] sm:$0xff]
        %v9554 = vld [vmem:[#allocation11 + $0x3a8] sm:$0xff]
        %v9555 = vld [vmem:[#allocation11 + $0x3b0] sm:$0xff]
        %v9556 = vld [vmem:[#allocation11 + $0x3b8] sm:$0xff]
        %v9557 = vld [vmem:[#allocation11 + $0x3c0] sm:$0xff]
        %v9558 = vld [vmem:[#allocation11 + $0x3c8] sm:$0xff]
        %v9559 = vld [vmem:[#allocation11 + $0x3d0] sm:$0xff]
        %v9560 = vld [vmem:[#allocation11 + $0x3d8] sm:$0xff]
        %v9561 = vld [vmem:[#allocation11 + $0x3e0] sm:$0xff]
        %v9562 = vld [vmem:[#allocation11 + $0x3e8] sm:$0xff]
        %v9563 = vld [vmem:[#allocation11 + $0x3f0] sm:$0xff]
        %v9564 = vld [vmem:[#allocation11 + $0x3f8] sm:$0xff]
        %v9565 = vld [vmem:[#allocation11 + $0x400] sm:$0xff]
        %v9566 = vld [vmem:[#allocation11 + $0x408] sm:$0xff]
        %v9567 = vld [vmem:[#allocation11 + $0x410] sm:$0xff]
        %v9568 = vld [vmem:[#allocation11 + $0x418] sm:$0xff]
        %v9569 = vld [vmem:[#allocation11 + $0x420] sm:$0xff]
        %v9570 = vld [vmem:[#allocation11 + $0x428] sm:$0xff]
        %v9571 = vld [vmem:[#allocation11 + $0x430] sm:$0xff]
        %v9572 = vld [vmem:[#allocation11 + $0x438] sm:$0xff]
        %v9573 = vld [vmem:[#allocation11 + $0x440] sm:$0xff]
        %v9574 = vld [vmem:[#allocation11 + $0x448] sm:$0xff]
        %v9575 = vld [vmem:[#allocation11 + $0x450] sm:$0xff]
        %v9576 = vld [vmem:[#allocation11 + $0x458] sm:$0xff]
        %v9577 = vld [vmem:[#allocation11 + $0x460] sm:$0xff]
        %v9578 = vld [vmem:[#allocation11 + $0x468] sm:$0xff]
        %v9579 = vld [vmem:[#allocation11 + $0x470] sm:$0xff]
        %v9580 = vld [vmem:[#allocation11 + $0x478] sm:$0xff]
        %v9581 = vld [vmem:[#allocation11 + $0x480] sm:$0xff]
        %v9582 = vld [vmem:[#allocation11 + $0x488] sm:$0xff]
        %v9583 = vld [vmem:[#allocation11 + $0x490] sm:$0xff]
        %v9584 = vld [vmem:[#allocation11 + $0x498] sm:$0xff]
        %v9585 = vld [vmem:[#allocation11 + $0x4a0] sm:$0xff]
        %v9586 = vld [vmem:[#allocation11 + $0x4a8] sm:$0xff]
        %v9587 = vld [vmem:[#allocation11 + $0x4b0] sm:$0xff]
        %v9588 = vld [vmem:[#allocation11 + $0x4b8] sm:$0xff]
        %v9589 = vld [vmem:[#allocation11 + $0x4c0] sm:$0xff]
        %v9590 = vld [vmem:[#allocation11 + $0x4c8] sm:$0xff]
        %v9591 = vld [vmem:[#allocation11 + $0x4d0] sm:$0xff]
        %v9592 = vld [vmem:[#allocation11 + $0x4d8] sm:$0xff]
        %v9593 = vld [vmem:[#allocation11 + $0x4e0] sm:$0xff]
        %v9594 = vld [vmem:[#allocation11 + $0x4e8] sm:$0xff]
        %v9595 = vld [vmem:[#allocation11 + $0x4f0] sm:$0xff]
        %v9596 = vld [vmem:[#allocation11 + $0x4f8] sm:$0xff]
        %v9597 = vld [vmem:[#allocation11 + $0x500] sm:$0xff]
        %v9598 = vld [vmem:[#allocation11 + $0x508] sm:$0xff]
        %v9599 = vld [vmem:[#allocation11 + $0x510] sm:$0xff]
        %v9600 = vld [vmem:[#allocation11 + $0x518] sm:$0xff]
        %v9601 = vld [vmem:[#allocation11 + $0x520] sm:$0xff]
        %v9602 = vld [vmem:[#allocation11 + $0x528] sm:$0xff]
        %v9603 = vld [vmem:[#allocation11 + $0x530] sm:$0xff]
        %v9604 = vld [vmem:[#allocation11 + $0x538] sm:$0xff]
        %v9605 = vld [vmem:[#allocation11 + $0x540] sm:$0xff]
        %v9606 = vld [vmem:[#allocation11 + $0x548] sm:$0xff]
        %v9607 = vld [vmem:[#allocation11 + $0x550] sm:$0xff]
        %v9608 = vld [vmem:[#allocation11 + $0x558] sm:$0xff]
        %v9609 = vld [vmem:[#allocation11 + $0x560] sm:$0xff]
        %v9610 = vld [vmem:[#allocation11 + $0x568] sm:$0xff]
        %v9611 = vld [vmem:[#allocation11 + $0x570] sm:$0xff]
        %v9612 = vld [vmem:[#allocation11 + $0x578] sm:$0xff]
        %v9613 = vld [vmem:[#allocation11 + $0x580] sm:$0xff]
        %v9614 = vld [vmem:[#allocation11 + $0x588] sm:$0xff]
        %v9615 = vld [vmem:[#allocation11 + $0x590] sm:$0xff]
        %v9616 = vld [vmem:[#allocation11 + $0x598] sm:$0xff]
        %v9617 = vld [vmem:[#allocation11 + $0x5a0] sm:$0xff]
        %v9618 = vld [vmem:[#allocation11 + $0x5a8] sm:$0xff]
        %v9619 = vld [vmem:[#allocation11 + $0x5b0] sm:$0xff]
        %v9620 = vld [vmem:[#allocation11 + $0x5b8] sm:$0xff]
        %v9621 = vld [vmem:[#allocation11 + $0x5c0] sm:$0xff]
        %v9622 = vld [vmem:[#allocation11 + $0x5c8] sm:$0xff]
        %v9623 = vld [vmem:[#allocation11 + $0x5d0] sm:$0xff]
        %v9624 = vld [vmem:[#allocation11 + $0x5d8] sm:$0xff]
        %v9625 = vld [vmem:[#allocation11 + $0x5e0] sm:$0xff]
        %v9626 = vld [vmem:[#allocation11 + $0x5e8] sm:$0xff]
        %v9627 = vld [vmem:[#allocation11 + $0x5f0] sm:$0xff]
        %v9628 = vld [vmem:[#allocation11 + $0x5f8] sm:$0xff]
        %v9821 = vunpack.c.l.b16 %v9437
        %v9822 = vunpack.c.h.b16 %v9437
        %v9823 = vunpack.c.l.b16 %v9438
        %v9824 = vunpack.c.h.b16 %v9438
        %v9825 = vunpack.c.l.b16 %v9439
        %v9826 = vunpack.c.h.b16 %v9439
        %v9827 = vunpack.c.l.b16 %v9440
        %v9828 = vunpack.c.h.b16 %v9440
        %v9829 = vunpack.c.l.b16 %v9441
        %v9830 = vunpack.c.h.b16 %v9441
        %v9831 = vunpack.c.l.b16 %v9442
        %v9832 = vunpack.c.h.b16 %v9442
        %v9833 = vunpack.c.l.b16 %v9443
        %v9834 = vunpack.c.h.b16 %v9443
        %v9835 = vunpack.c.l.b16 %v9444
        %v9836 = vunpack.c.h.b16 %v9444
        %v9837 = vunpack.c.l.b16 %v9445
        %v9838 = vunpack.c.h.b16 %v9445
        %v9839 = vunpack.c.l.b16 %v9446
        %v9840 = vunpack.c.h.b16 %v9446
        %v9841 = vunpack.c.l.b16 %v9447
        %v9842 = vunpack.c.h.b16 %v9447
        %v9843 = vunpack.c.l.b16 %v9448
        %v9844 = vunpack.c.h.b16 %v9448
        %v9845 = vunpack.c.l.b16 %v9449
        %v9846 = vunpack.c.h.b16 %v9449
        %v9847 = vunpack.c.l.b16 %v9450
        %v9848 = vunpack.c.h.b16 %v9450
        %v9849 = vunpack.c.l.b16 %v9451
        %v9850 = vunpack.c.h.b16 %v9451
        %v9851 = vunpack.c.l.b16 %v9452
        %v9852 = vunpack.c.h.b16 %v9452
        %v9853 = vunpack.c.l.b16 %v9453
        %v9854 = vunpack.c.h.b16 %v9453
        %v9855 = vunpack.c.l.b16 %v9454
        %v9856 = vunpack.c.h.b16 %v9454
        %v9857 = vunpack.c.l.b16 %v9455
        %v9858 = vunpack.c.h.b16 %v9455
        %v9859 = vunpack.c.l.b16 %v9456
        %v9860 = vunpack.c.h.b16 %v9456
        %v9861 = vunpack.c.l.b16 %v9457
        %v9862 = vunpack.c.h.b16 %v9457
        %v9863 = vunpack.c.l.b16 %v9458
        %v9864 = vunpack.c.h.b16 %v9458
        %v9865 = vunpack.c.l.b16 %v9459
        %v9866 = vunpack.c.h.b16 %v9459
        %v9867 = vunpack.c.l.b16 %v9460
        %v9868 = vunpack.c.h.b16 %v9460
        %v9869 = vunpack.c.l.b16 %v9461
        %v9870 = vunpack.c.h.b16 %v9461
        %v9871 = vunpack.c.l.b16 %v9462
        %v9872 = vunpack.c.h.b16 %v9462
        %v9873 = vunpack.c.l.b16 %v9463
        %v9874 = vunpack.c.h.b16 %v9463
        %v9875 = vunpack.c.l.b16 %v9464
        %v9876 = vunpack.c.h.b16 %v9464
        %v9877 = vunpack.c.l.b16 %v9465
        %v9878 = vunpack.c.h.b16 %v9465
        %v9879 = vunpack.c.l.b16 %v9466
        %v9880 = vunpack.c.h.b16 %v9466
        %v9881 = vunpack.c.l.b16 %v9467
        %v9882 = vunpack.c.h.b16 %v9467
        %v9883 = vunpack.c.l.b16 %v9468
        %v9884 = vunpack.c.h.b16 %v9468
        %v9885 = vunpack.c.l.b16 %v9469
        %v9886 = vunpack.c.h.b16 %v9469
        %v9887 = vunpack.c.l.b16 %v9470
        %v9888 = vunpack.c.h.b16 %v9470
        %v9889 = vunpack.c.l.b16 %v9471
        %v9890 = vunpack.c.h.b16 %v9471
        %v9891 = vunpack.c.l.b16 %v9472
        %v9892 = vunpack.c.h.b16 %v9472
        %v9893 = vunpack.c.l.b16 %v9473
        %v9894 = vunpack.c.h.b16 %v9473
        %v9895 = vunpack.c.l.b16 %v9474
        %v9896 = vunpack.c.h.b16 %v9474
        %v9897 = vunpack.c.l.b16 %v9475
        %v9898 = vunpack.c.h.b16 %v9475
        %v9899 = vunpack.c.l.b16 %v9476
        %v9900 = vunpack.c.h.b16 %v9476
        %v9901 = vunpack.c.l.b16 %v9477
        %v9902 = vunpack.c.h.b16 %v9477
        %v9903 = vunpack.c.l.b16 %v9478
        %v9904 = vunpack.c.h.b16 %v9478
        %v9905 = vunpack.c.l.b16 %v9479
        %v9906 = vunpack.c.h.b16 %v9479
        %v9907 = vunpack.c.l.b16 %v9480
        %v9908 = vunpack.c.h.b16 %v9480
        %v9909 = vunpack.c.l.b16 %v9481
        %v9910 = vunpack.c.h.b16 %v9481
        %v9911 = vunpack.c.l.b16 %v9482
        %v9912 = vunpack.c.h.b16 %v9482
        %v9913 = vunpack.c.l.b16 %v9483
        %v9914 = vunpack.c.h.b16 %v9483
        %v9915 = vunpack.c.l.b16 %v9484
        %v9916 = vunpack.c.h.b16 %v9484
        %v9917 = vunpack.c.l.b16 %v9485
        %v9918 = vunpack.c.h.b16 %v9485
        %v9919 = vunpack.c.l.b16 %v9486
        %v9920 = vunpack.c.h.b16 %v9486
        %v9921 = vunpack.c.l.b16 %v9487
        %v9922 = vunpack.c.h.b16 %v9487
        %v9923 = vunpack.c.l.b16 %v9488
        %v9924 = vunpack.c.h.b16 %v9488
        %v9925 = vunpack.c.l.b16 %v9489
        %v9926 = vunpack.c.h.b16 %v9489
        %v9927 = vunpack.c.l.b16 %v9490
        %v9928 = vunpack.c.h.b16 %v9490
        %v9929 = vunpack.c.l.b16 %v9491
        %v9930 = vunpack.c.h.b16 %v9491
        %v9931 = vunpack.c.l.b16 %v9492
        %v9932 = vunpack.c.h.b16 %v9492
        %v9933 = vunpack.c.l.b16 %v9493
        %v9934 = vunpack.c.h.b16 %v9493
        %v9935 = vunpack.c.l.b16 %v9494
        %v9936 = vunpack.c.h.b16 %v9494
        %v9937 = vunpack.c.l.b16 %v9495
        %v9938 = vunpack.c.h.b16 %v9495
        %v9939 = vunpack.c.l.b16 %v9496
        %v9940 = vunpack.c.h.b16 %v9496
        %v9941 = vunpack.c.l.b16 %v9497
        %v9942 = vunpack.c.h.b16 %v9497
        %v9943 = vunpack.c.l.b16 %v9498
        %v9944 = vunpack.c.h.b16 %v9498
        %v9945 = vunpack.c.l.b16 %v9499
        %v9946 = vunpack.c.h.b16 %v9499
        %v9947 = vunpack.c.l.b16 %v9500
        %v9948 = vunpack.c.h.b16 %v9500
        %v9949 = vunpack.c.l.b16 %v9501
        %v9950 = vunpack.c.h.b16 %v9501
        %v9951 = vunpack.c.l.b16 %v9502
        %v9952 = vunpack.c.h.b16 %v9502
        %v9953 = vunpack.c.l.b16 %v9503
        %v9954 = vunpack.c.h.b16 %v9503
        %v9955 = vunpack.c.l.b16 %v9504
        %v9956 = vunpack.c.h.b16 %v9504
        %v9957 = vunpack.c.l.b16 %v9505
        %v9958 = vunpack.c.h.b16 %v9505
        %v9959 = vunpack.c.l.b16 %v9506
        %v9960 = vunpack.c.h.b16 %v9506
        %v9961 = vunpack.c.l.b16 %v9507
        %v9962 = vunpack.c.h.b16 %v9507
        %v9963 = vunpack.c.l.b16 %v9508
        %v9964 = vunpack.c.h.b16 %v9508
        %v9965 = vunpack.c.l.b16 %v9509
        %v9966 = vunpack.c.h.b16 %v9509
        %v9967 = vunpack.c.l.b16 %v9510
        %v9968 = vunpack.c.h.b16 %v9510
        %v9969 = vunpack.c.l.b16 %v9511
        %v9970 = vunpack.c.h.b16 %v9511
        %v9971 = vunpack.c.l.b16 %v9512
        %v9972 = vunpack.c.h.b16 %v9512
        %v9973 = vunpack.c.l.b16 %v9513
        %v9974 = vunpack.c.h.b16 %v9513
        %v9975 = vunpack.c.l.b16 %v9514
        %v9976 = vunpack.c.h.b16 %v9514
        %v9977 = vunpack.c.l.b16 %v9515
        %v9978 = vunpack.c.h.b16 %v9515
        %v9979 = vunpack.c.l.b16 %v9516
        %v9980 = vunpack.c.h.b16 %v9516
        %v9981 = vunpack.c.l.b16 %v9517
        %v9982 = vunpack.c.h.b16 %v9517
        %v9983 = vunpack.c.l.b16 %v9518
        %v9984 = vunpack.c.h.b16 %v9518
        %v9985 = vunpack.c.l.b16 %v9519
        %v9986 = vunpack.c.h.b16 %v9519
        %v9987 = vunpack.c.l.b16 %v9520
        %v9988 = vunpack.c.h.b16 %v9520
        %v9989 = vunpack.c.l.b16 %v9521
        %v9990 = vunpack.c.h.b16 %v9521
        %v9991 = vunpack.c.l.b16 %v9522
        %v9992 = vunpack.c.h.b16 %v9522
        %v9993 = vunpack.c.l.b16 %v9523
        %v9994 = vunpack.c.h.b16 %v9523
        %v9995 = vunpack.c.l.b16 %v9524
        %v9996 = vunpack.c.h.b16 %v9524
        %v9997 = vunpack.c.l.b16 %v9525
        %v9998 = vunpack.c.h.b16 %v9525
        %v9999 = vunpack.c.l.b16 %v9526
        %v10000 = vunpack.c.h.b16 %v9526
        %v10001 = vunpack.c.l.b16 %v9527
        %v10002 = vunpack.c.h.b16 %v9527
        %v10003 = vunpack.c.l.b16 %v9528
        %v10004 = vunpack.c.h.b16 %v9528
        %v10005 = vunpack.c.l.b16 %v9529
        %v10006 = vunpack.c.h.b16 %v9529
        %v10007 = vunpack.c.l.b16 %v9530
        %v10008 = vunpack.c.h.b16 %v9530
        %v10009 = vunpack.c.l.b16 %v9531
        %v10010 = vunpack.c.h.b16 %v9531
        %v10011 = vunpack.c.l.b16 %v9532
        %v10012 = vunpack.c.h.b16 %v9532
        %v10013 = vunpack.c.l.b16 %v9533
        %v10014 = vunpack.c.h.b16 %v9533
        %v10015 = vunpack.c.l.b16 %v9534
        %v10016 = vunpack.c.h.b16 %v9534
        %v10017 = vunpack.c.l.b16 %v9535
        %v10018 = vunpack.c.h.b16 %v9535
        %v10019 = vunpack.c.l.b16 %v9536
        %v10020 = vunpack.c.h.b16 %v9536
        %v10021 = vunpack.c.l.b16 %v9537
        %v10022 = vunpack.c.h.b16 %v9537
        %v10023 = vunpack.c.l.b16 %v9538
        %v10024 = vunpack.c.h.b16 %v9538
        %v10025 = vunpack.c.l.b16 %v9539
        %v10026 = vunpack.c.h.b16 %v9539
        %v10027 = vunpack.c.l.b16 %v9540
        %v10028 = vunpack.c.h.b16 %v9540
        %v10029 = vunpack.c.l.b16 %v9541
        %v10030 = vunpack.c.h.b16 %v9541
        %v10031 = vunpack.c.l.b16 %v9542
        %v10032 = vunpack.c.h.b16 %v9542
        %v10033 = vunpack.c.l.b16 %v9543
        %v10034 = vunpack.c.h.b16 %v9543
        %v10035 = vunpack.c.l.b16 %v9544
        %v10036 = vunpack.c.h.b16 %v9544
        %v10037 = vunpack.c.l.b16 %v9545
        %v10038 = vunpack.c.h.b16 %v9545
        %v10039 = vunpack.c.l.b16 %v9546
        %v10040 = vunpack.c.h.b16 %v9546
        %v10041 = vunpack.c.l.b16 %v9547
        %v10042 = vunpack.c.h.b16 %v9547
        %v10043 = vunpack.c.l.b16 %v9548
        %v10044 = vunpack.c.h.b16 %v9548
        %v10045 = vunpack.c.l.b16 %v9549
        %v10046 = vunpack.c.h.b16 %v9549
        %v10047 = vunpack.c.l.b16 %v9550
        %v10048 = vunpack.c.h.b16 %v9550
        %v10049 = vunpack.c.l.b16 %v9551
        %v10050 = vunpack.c.h.b16 %v9551
        %v10051 = vunpack.c.l.b16 %v9552
        %v10052 = vunpack.c.h.b16 %v9552
        %v10053 = vunpack.c.l.b16 %v9553
        %v10054 = vunpack.c.h.b16 %v9553
        %v10055 = vunpack.c.l.b16 %v9554
        %v10056 = vunpack.c.h.b16 %v9554
        %v10057 = vunpack.c.l.b16 %v9555
        %v10058 = vunpack.c.h.b16 %v9555
        %v10059 = vunpack.c.l.b16 %v9556
        %v10060 = vunpack.c.h.b16 %v9556
        %v10061 = vunpack.c.l.b16 %v9557
        %v10062 = vunpack.c.h.b16 %v9557
        %v10063 = vunpack.c.l.b16 %v9558
        %v10064 = vunpack.c.h.b16 %v9558
        %v10065 = vunpack.c.l.b16 %v9559
        %v10066 = vunpack.c.h.b16 %v9559
        %v10067 = vunpack.c.l.b16 %v9560
        %v10068 = vunpack.c.h.b16 %v9560
        %v10069 = vunpack.c.l.b16 %v9561
        %v10070 = vunpack.c.h.b16 %v9561
        %v10071 = vunpack.c.l.b16 %v9562
        %v10072 = vunpack.c.h.b16 %v9562
        %v10073 = vunpack.c.l.b16 %v9563
        %v10074 = vunpack.c.h.b16 %v9563
        %v10075 = vunpack.c.l.b16 %v9564
        %v10076 = vunpack.c.h.b16 %v9564
        %v10077 = vunpack.c.l.b16 %v9565
        %v10078 = vunpack.c.h.b16 %v9565
        %v10079 = vunpack.c.l.b16 %v9566
        %v10080 = vunpack.c.h.b16 %v9566
        %v10081 = vunpack.c.l.b16 %v9567
        %v10082 = vunpack.c.h.b16 %v9567
        %v10083 = vunpack.c.l.b16 %v9568
        %v10084 = vunpack.c.h.b16 %v9568
        %v10085 = vunpack.c.l.b16 %v9569
        %v10086 = vunpack.c.h.b16 %v9569
        %v10087 = vunpack.c.l.b16 %v9570
        %v10088 = vunpack.c.h.b16 %v9570
        %v10089 = vunpack.c.l.b16 %v9571
        %v10090 = vunpack.c.h.b16 %v9571
        %v10091 = vunpack.c.l.b16 %v9572
        %v10092 = vunpack.c.h.b16 %v9572
        %v10093 = vunpack.c.l.b16 %v9573
        %v10094 = vunpack.c.h.b16 %v9573
        %v10095 = vunpack.c.l.b16 %v9574
        %v10096 = vunpack.c.h.b16 %v9574
        %v10097 = vunpack.c.l.b16 %v9575
        %v10098 = vunpack.c.h.b16 %v9575
        %v10099 = vunpack.c.l.b16 %v9576
        %v10100 = vunpack.c.h.b16 %v9576
        %v10101 = vunpack.c.l.b16 %v9577
        %v10102 = vunpack.c.h.b16 %v9577
        %v10103 = vunpack.c.l.b16 %v9578
        %v10104 = vunpack.c.h.b16 %v9578
        %v10105 = vunpack.c.l.b16 %v9579
        %v10106 = vunpack.c.h.b16 %v9579
        %v10107 = vunpack.c.l.b16 %v9580
        %v10108 = vunpack.c.h.b16 %v9580
        %v10109 = vunpack.c.l.b16 %v9581
        %v10110 = vunpack.c.h.b16 %v9581
        %v10111 = vunpack.c.l.b16 %v9582
        %v10112 = vunpack.c.h.b16 %v9582
        %v10113 = vunpack.c.l.b16 %v9583
        %v10114 = vunpack.c.h.b16 %v9583
        %v10115 = vunpack.c.l.b16 %v9584
        %v10116 = vunpack.c.h.b16 %v9584
        %v10117 = vunpack.c.l.b16 %v9585
        %v10118 = vunpack.c.h.b16 %v9585
        %v10119 = vunpack.c.l.b16 %v9586
        %v10120 = vunpack.c.h.b16 %v9586
        %v10121 = vunpack.c.l.b16 %v9587
        %v10122 = vunpack.c.h.b16 %v9587
        %v10123 = vunpack.c.l.b16 %v9588
        %v10124 = vunpack.c.h.b16 %v9588
        %v10125 = vunpack.c.l.b16 %v9589
        %v10126 = vunpack.c.h.b16 %v9589
        %v10127 = vunpack.c.l.b16 %v9590
        %v10128 = vunpack.c.h.b16 %v9590
        %v10129 = vunpack.c.l.b16 %v9591
        %v10130 = vunpack.c.h.b16 %v9591
        %v10131 = vunpack.c.l.b16 %v9592
        %v10132 = vunpack.c.h.b16 %v9592
        %v10133 = vunpack.c.l.b16 %v9593
        %v10134 = vunpack.c.h.b16 %v9593
        %v10135 = vunpack.c.l.b16 %v9594
        %v10136 = vunpack.c.h.b16 %v9594
        %v10137 = vunpack.c.l.b16 %v9595
        %v10138 = vunpack.c.h.b16 %v9595
        %v10139 = vunpack.c.l.b16 %v9596
        %v10140 = vunpack.c.h.b16 %v9596
        %v10141 = vunpack.c.l.b16 %v9597
        %v10142 = vunpack.c.h.b16 %v9597
        %v10143 = vunpack.c.l.b16 %v9598
        %v10144 = vunpack.c.h.b16 %v9598
        %v10145 = vunpack.c.l.b16 %v9599
        %v10146 = vunpack.c.h.b16 %v9599
        %v10147 = vunpack.c.l.b16 %v9600
        %v10148 = vunpack.c.h.b16 %v9600
        %v10149 = vunpack.c.l.b16 %v9601
        %v10150 = vunpack.c.h.b16 %v9601
        %v10151 = vunpack.c.l.b16 %v9602
        %v10152 = vunpack.c.h.b16 %v9602
        %v10153 = vunpack.c.l.b16 %v9603
        %v10154 = vunpack.c.h.b16 %v9603
        %v10155 = vunpack.c.l.b16 %v9604
        %v10156 = vunpack.c.h.b16 %v9604
        %v10157 = vunpack.c.l.b16 %v9605
        %v10158 = vunpack.c.h.b16 %v9605
        %v10159 = vunpack.c.l.b16 %v9606
        %v10160 = vunpack.c.h.b16 %v9606
        %v10161 = vunpack.c.l.b16 %v9607
        %v10162 = vunpack.c.h.b16 %v9607
        %v10163 = vunpack.c.l.b16 %v9608
        %v10164 = vunpack.c.h.b16 %v9608
        %v10165 = vunpack.c.l.b16 %v9609
        %v10166 = vunpack.c.h.b16 %v9609
        %v10167 = vunpack.c.l.b16 %v9610
        %v10168 = vunpack.c.h.b16 %v9610
        %v10169 = vunpack.c.l.b16 %v9611
        %v10170 = vunpack.c.h.b16 %v9611
        %v10171 = vunpack.c.l.b16 %v9612
        %v10172 = vunpack.c.h.b16 %v9612
        %v10173 = vunpack.c.l.b16 %v9613
        %v10174 = vunpack.c.h.b16 %v9613
        %v10175 = vunpack.c.l.b16 %v9614
        %v10176 = vunpack.c.h.b16 %v9614
        %v10177 = vunpack.c.l.b16 %v9615
        %v10178 = vunpack.c.h.b16 %v9615
        %v10179 = vunpack.c.l.b16 %v9616
        %v10180 = vunpack.c.h.b16 %v9616
        %v10181 = vunpack.c.l.b16 %v9617
        %v10182 = vunpack.c.h.b16 %v9617
        %v10183 = vunpack.c.l.b16 %v9618
        %v10184 = vunpack.c.h.b16 %v9618
        %v10185 = vunpack.c.l.b16 %v9619
        %v10186 = vunpack.c.h.b16 %v9619
        %v10187 = vunpack.c.l.b16 %v9620
        %v10188 = vunpack.c.h.b16 %v9620
        %v10189 = vunpack.c.l.b16 %v9621
        %v10190 = vunpack.c.h.b16 %v9621
        %v10191 = vunpack.c.l.b16 %v9622
        %v10192 = vunpack.c.h.b16 %v9622
        %v10193 = vunpack.c.l.b16 %v9623
        %v10194 = vunpack.c.h.b16 %v9623
        %v10195 = vunpack.c.l.b16 %v9624
        %v10196 = vunpack.c.h.b16 %v9624
        %v10197 = vunpack.c.l.b16 %v9625
        %v10198 = vunpack.c.h.b16 %v9625
        %v10199 = vunpack.c.l.b16 %v9626
        %v10200 = vunpack.c.h.b16 %v9626
        %v10201 = vunpack.c.l.b16 %v9627
        %v10202 = vunpack.c.h.b16 %v9627
        %v10203 = vunpack.c.l.b16 %v9628
        %v10204 = vunpack.c.h.b16 %v9628
        %v10205 = vpack.c.b16 %v9825, %v9821
        %v10206 = vpack.c.b16 %v9826, %v9822
        %v10207 = vpack.c.b16 %v9827, %v9823
        %v10208 = vpack.c.b16 %v9828, %v9824
        %v10209 = vpack.c.b16 %v9833, %v9829
        %v10210 = vpack.c.b16 %v9834, %v9830
        %v10211 = vpack.c.b16 %v9835, %v9831
        %v10212 = vpack.c.b16 %v9836, %v9832
        %v10213 = vpack.c.b16 %v9841, %v9837
        %v10214 = vpack.c.b16 %v9842, %v9838
        %v10215 = vpack.c.b16 %v9843, %v9839
        %v10216 = vpack.c.b16 %v9844, %v9840
        %v10217 = vpack.c.b16 %v9849, %v9845
        %v10218 = vpack.c.b16 %v9850, %v9846
        %v10219 = vpack.c.b16 %v9851, %v9847
        %v10220 = vpack.c.b16 %v9852, %v9848
        %v10221 = vpack.c.b16 %v9857, %v9853
        %v10222 = vpack.c.b16 %v9858, %v9854
        %v10223 = vpack.c.b16 %v9859, %v9855
        %v10224 = vpack.c.b16 %v9860, %v9856
        %v10225 = vpack.c.b16 %v9865, %v9861
        %v10226 = vpack.c.b16 %v9866, %v9862
        %v10227 = vpack.c.b16 %v9867, %v9863
        %v10228 = vpack.c.b16 %v9868, %v9864
        %v10229 = vpack.c.b16 %v9873, %v9869
        %v10230 = vpack.c.b16 %v9874, %v9870
        %v10231 = vpack.c.b16 %v9875, %v9871
        %v10232 = vpack.c.b16 %v9876, %v9872
        %v10233 = vpack.c.b16 %v9881, %v9877
        %v10234 = vpack.c.b16 %v9882, %v9878
        %v10235 = vpack.c.b16 %v9883, %v9879
        %v10236 = vpack.c.b16 %v9884, %v9880
        %v10237 = vpack.c.b16 %v9889, %v9885
        %v10238 = vpack.c.b16 %v9890, %v9886
        %v10239 = vpack.c.b16 %v9891, %v9887
        %v10240 = vpack.c.b16 %v9892, %v9888
        %v10241 = vpack.c.b16 %v9897, %v9893
        %v10242 = vpack.c.b16 %v9898, %v9894
        %v10243 = vpack.c.b16 %v9899, %v9895
        %v10244 = vpack.c.b16 %v9900, %v9896
        %v10245 = vpack.c.b16 %v9905, %v9901
        %v10246 = vpack.c.b16 %v9906, %v9902
        %v10247 = vpack.c.b16 %v9907, %v9903
        %v10248 = vpack.c.b16 %v9908, %v9904
        %v10249 = vpack.c.b16 %v9913, %v9909
        %v10250 = vpack.c.b16 %v9914, %v9910
        %v10251 = vpack.c.b16 %v9915, %v9911
        %v10252 = vpack.c.b16 %v9916, %v9912
        %v10253 = vpack.c.b16 %v9921, %v9917
        %v10254 = vpack.c.b16 %v9922, %v9918
        %v10255 = vpack.c.b16 %v9923, %v9919
        %v10256 = vpack.c.b16 %v9924, %v9920
        %v10257 = vpack.c.b16 %v9929, %v9925
        %v10258 = vpack.c.b16 %v9930, %v9926
        %v10259 = vpack.c.b16 %v9931, %v9927
        %v10260 = vpack.c.b16 %v9932, %v9928
        %v10261 = vpack.c.b16 %v9937, %v9933
        %v10262 = vpack.c.b16 %v9938, %v9934
        %v10263 = vpack.c.b16 %v9939, %v9935
        %v10264 = vpack.c.b16 %v9940, %v9936
        %v10265 = vpack.c.b16 %v9945, %v9941
        %v10266 = vpack.c.b16 %v9946, %v9942
        %v10267 = vpack.c.b16 %v9947, %v9943
        %v10268 = vpack.c.b16 %v9948, %v9944
        %v10269 = vpack.c.b16 %v9953, %v9949
        %v10270 = vpack.c.b16 %v9954, %v9950
        %v10271 = vpack.c.b16 %v9955, %v9951
        %v10272 = vpack.c.b16 %v9956, %v9952
        %v10273 = vpack.c.b16 %v9961, %v9957
        %v10274 = vpack.c.b16 %v9962, %v9958
        %v10275 = vpack.c.b16 %v9963, %v9959
        %v10276 = vpack.c.b16 %v9964, %v9960
        %v10277 = vpack.c.b16 %v9969, %v9965
        %v10278 = vpack.c.b16 %v9970, %v9966
        %v10279 = vpack.c.b16 %v9971, %v9967
        %v10280 = vpack.c.b16 %v9972, %v9968
        %v10281 = vpack.c.b16 %v9977, %v9973
        %v10282 = vpack.c.b16 %v9978, %v9974
        %v10283 = vpack.c.b16 %v9979, %v9975
        %v10284 = vpack.c.b16 %v9980, %v9976
        %v10285 = vpack.c.b16 %v9985, %v9981
        %v10286 = vpack.c.b16 %v9986, %v9982
        %v10287 = vpack.c.b16 %v9987, %v9983
        %v10288 = vpack.c.b16 %v9988, %v9984
        %v10289 = vpack.c.b16 %v9993, %v9989
        %v10290 = vpack.c.b16 %v9994, %v9990
        %v10291 = vpack.c.b16 %v9995, %v9991
        %v10292 = vpack.c.b16 %v9996, %v9992
        %v10293 = vpack.c.b16 %v10001, %v9997
        %v10294 = vpack.c.b16 %v10002, %v9998
        %v10295 = vpack.c.b16 %v10003, %v9999
        %v10296 = vpack.c.b16 %v10004, %v10000
        %v10297 = vpack.c.b16 %v10009, %v10005
        %v10298 = vpack.c.b16 %v10010, %v10006
        %v10299 = vpack.c.b16 %v10011, %v10007
        %v10300 = vpack.c.b16 %v10012, %v10008
        %v10301 = vpack.c.b16 %v10017, %v10013
        %v10302 = vpack.c.b16 %v10018, %v10014
        %v10303 = vpack.c.b16 %v10019, %v10015
        %v10304 = vpack.c.b16 %v10020, %v10016
        %v10305 = vpack.c.b16 %v10025, %v10021
        %v10306 = vpack.c.b16 %v10026, %v10022
        %v10307 = vpack.c.b16 %v10027, %v10023
        %v10308 = vpack.c.b16 %v10028, %v10024
        %v10309 = vpack.c.b16 %v10033, %v10029
        %v10310 = vpack.c.b16 %v10034, %v10030
        %v10311 = vpack.c.b16 %v10035, %v10031
        %v10312 = vpack.c.b16 %v10036, %v10032
        %v10313 = vpack.c.b16 %v10041, %v10037
        %v10314 = vpack.c.b16 %v10042, %v10038
        %v10315 = vpack.c.b16 %v10043, %v10039
        %v10316 = vpack.c.b16 %v10044, %v10040
        %v10317 = vpack.c.b16 %v10049, %v10045
        %v10318 = vpack.c.b16 %v10050, %v10046
        %v10319 = vpack.c.b16 %v10051, %v10047
        %v10320 = vpack.c.b16 %v10052, %v10048
        %v10321 = vpack.c.b16 %v10057, %v10053
        %v10322 = vpack.c.b16 %v10058, %v10054
        %v10323 = vpack.c.b16 %v10059, %v10055
        %v10324 = vpack.c.b16 %v10060, %v10056
        %v10325 = vpack.c.b16 %v10065, %v10061
        %v10326 = vpack.c.b16 %v10066, %v10062
        %v10327 = vpack.c.b16 %v10067, %v10063
        %v10328 = vpack.c.b16 %v10068, %v10064
        %v10329 = vpack.c.b16 %v10073, %v10069
        %v10330 = vpack.c.b16 %v10074, %v10070
        %v10331 = vpack.c.b16 %v10075, %v10071
        %v10332 = vpack.c.b16 %v10076, %v10072
        %v10333 = vpack.c.b16 %v10081, %v10077
        %v10334 = vpack.c.b16 %v10082, %v10078
        %v10335 = vpack.c.b16 %v10083, %v10079
        %v10336 = vpack.c.b16 %v10084, %v10080
        %v10337 = vpack.c.b16 %v10089, %v10085
        %v10338 = vpack.c.b16 %v10090, %v10086
        %v10339 = vpack.c.b16 %v10091, %v10087
        %v10340 = vpack.c.b16 %v10092, %v10088
        %v10341 = vpack.c.b16 %v10097, %v10093
        %v10342 = vpack.c.b16 %v10098, %v10094
        %v10343 = vpack.c.b16 %v10099, %v10095
        %v10344 = vpack.c.b16 %v10100, %v10096
        %v10345 = vpack.c.b16 %v10105, %v10101
        %v10346 = vpack.c.b16 %v10106, %v10102
        %v10347 = vpack.c.b16 %v10107, %v10103
        %v10348 = vpack.c.b16 %v10108, %v10104
        %v10349 = vpack.c.b16 %v10113, %v10109
        %v10350 = vpack.c.b16 %v10114, %v10110
        %v10351 = vpack.c.b16 %v10115, %v10111
        %v10352 = vpack.c.b16 %v10116, %v10112
        %v10353 = vpack.c.b16 %v10121, %v10117
        %v10354 = vpack.c.b16 %v10122, %v10118
        %v10355 = vpack.c.b16 %v10123, %v10119
        %v10356 = vpack.c.b16 %v10124, %v10120
        %v10357 = vpack.c.b16 %v10129, %v10125
        %v10358 = vpack.c.b16 %v10130, %v10126
        %v10359 = vpack.c.b16 %v10131, %v10127
        %v10360 = vpack.c.b16 %v10132, %v10128
        %v10361 = vpack.c.b16 %v10137, %v10133
        %v10362 = vpack.c.b16 %v10138, %v10134
        %v10363 = vpack.c.b16 %v10139, %v10135
        %v10364 = vpack.c.b16 %v10140, %v10136
        %v10365 = vpack.c.b16 %v10145, %v10141
        %v10366 = vpack.c.b16 %v10146, %v10142
        %v10367 = vpack.c.b16 %v10147, %v10143
        %v10368 = vpack.c.b16 %v10148, %v10144
        %v10369 = vpack.c.b16 %v10153, %v10149
        %v10370 = vpack.c.b16 %v10154, %v10150
        %v10371 = vpack.c.b16 %v10155, %v10151
        %v10372 = vpack.c.b16 %v10156, %v10152
        %v10373 = vpack.c.b16 %v10161, %v10157
        %v10374 = vpack.c.b16 %v10162, %v10158
        %v10375 = vpack.c.b16 %v10163, %v10159
        %v10376 = vpack.c.b16 %v10164, %v10160
        %v10377 = vpack.c.b16 %v10169, %v10165
        %v10378 = vpack.c.b16 %v10170, %v10166
        %v10379 = vpack.c.b16 %v10171, %v10167
        %v10380 = vpack.c.b16 %v10172, %v10168
        %v10381 = vpack.c.b16 %v10177, %v10173
        %v10382 = vpack.c.b16 %v10178, %v10174
        %v10383 = vpack.c.b16 %v10179, %v10175
        %v10384 = vpack.c.b16 %v10180, %v10176
        %v10385 = vpack.c.b16 %v10185, %v10181
        %v10386 = vpack.c.b16 %v10186, %v10182
        %v10387 = vpack.c.b16 %v10187, %v10183
        %v10388 = vpack.c.b16 %v10188, %v10184
        %v10389 = vpack.c.b16 %v10193, %v10189
        %v10390 = vpack.c.b16 %v10194, %v10190
        %v10391 = vpack.c.b16 %v10195, %v10191
        %v10392 = vpack.c.b16 %v10196, %v10192
        %v10393 = vpack.c.b16 %v10201, %v10197
        %v10394 = vpack.c.b16 %v10202, %v10198
        %v10395 = vpack.c.b16 %v10203, %v10199
        %v10396 = vpack.c.b16 %v10204, %v10200
        %10589 = vmatprep.subr.bf16.mxu0 %v10234
        %10590 = vmatpush1.bf16.msra.mxu0 %v10233
        %10591 = vmatprep.subr.bf16.mxu0 %v10230
        %10592 = vmatpush1.bf16.msra.mxu0 %v10229
        %10593 = vmatprep.subr.bf16.mxu0 %v10226
        %10594 = vmatpush1.bf16.msra.mxu0 %v10225
        %10595 = vmatprep.subr.bf16.mxu0 %v10222
        %10596 = vmatpush1.bf16.msra.mxu0 %v10221
        %10597 = vmatprep.subr.bf16.mxu0 %v10218
        %10598 = vmatpush1.bf16.msra.mxu0 %v10217
        %10599 = vmatprep.subr.bf16.mxu0 %v10214
        %10600 = vmatpush1.bf16.msra.mxu0 %v10213
        %10601 = vmatprep.subr.bf16.mxu0 %v10210
        %10602 = vmatpush1.bf16.msra.mxu0 %v10209
        %10603 = vmatprep.subr.bf16.mxu0 %v10206
        %10604 = vmatpush1.bf16.msra.mxu0 %v10205
        %10605 = vmatprep.subr.bf16.mxu0 %v10266
        %10606 = vmatpush2.bf16.msra.mxu0 %v10265
        %10607 = vmatprep.subr.bf16.mxu0 %v10262
        %10608 = vmatpush2.bf16.msra.mxu0 %v10261
        %10609 = vmatprep.subr.bf16.mxu0 %v10258
        %10610 = vmatpush2.bf16.msra.mxu0 %v10257
        %10611 = vmatprep.subr.bf16.mxu0 %v10254
        %10612 = vmatpush2.bf16.msra.mxu0 %v10253
        %10613 = vmatprep.subr.bf16.mxu0 %v10250
        %10614 = vmatpush2.bf16.msra.mxu0 %v10249
        %10615 = vmatprep.subr.bf16.mxu0 %v10246
        %10616 = vmatpush2.bf16.msra.mxu0 %v10245
        %10617 = vmatprep.subr.bf16.mxu0 %v10242
        %10618 = vmatpush2.bf16.msra.mxu0 %v10241
        %10619 = vmatprep.subr.bf16.mxu0 %v10238
        %10620 = vmatpush2.bf16.msra.mxu0 %v10237
        %10621 = vmatprep.mubr.bf16.mxu0 %v9432
        %10622 = vmatmul.mubr.bf16.gmra.mxu0 %v9431
        %v10623 = vpop.f32.mrf.mxu0
        %v10624 = vadd.f32 0.0, %v10623
        %v10625 = vpop.f32.mrf.mxu0
        %v10626 = vadd.f32 0.0, %v10625
        %v10627 = vpop.f32.mrf.mxu0
        %v10628 = vpop.f32.mrf.mxu0
        %10629 = vdwg.mxu0
        %10630 = vmatprep.subr.bf16.mxu0 %v10298
        %10631 = vmatpush1.bf16.msra.mxu0 %v10297
        %10632 = vmatprep.subr.bf16.mxu0 %v10294
        %10633 = vmatpush1.bf16.msra.mxu0 %v10293
        %10634 = vmatprep.subr.bf16.mxu0 %v10290
        %10635 = vmatpush1.bf16.msra.mxu0 %v10289
        %10636 = vmatprep.subr.bf16.mxu0 %v10286
        %10637 = vmatpush1.bf16.msra.mxu0 %v10285
        %10638 = vmatprep.subr.bf16.mxu0 %v10282
        %10639 = vmatpush1.bf16.msra.mxu0 %v10281
        %10640 = vmatprep.subr.bf16.mxu0 %v10278
        %10641 = vmatpush1.bf16.msra.mxu0 %v10277
        %10642 = vmatprep.subr.bf16.mxu0 %v10274
        %10643 = vmatpush1.bf16.msra.mxu0 %v10273
        %10644 = vmatprep.subr.bf16.mxu0 %v10270
        %10645 = vmatpush1.bf16.msra.mxu0 %v10269
        %10646 = vmatprep.subr.bf16.mxu0 %v10330
        %10647 = vmatpush2.bf16.msra.mxu0 %v10329
        %10648 = vmatprep.subr.bf16.mxu0 %v10326
        %10649 = vmatpush2.bf16.msra.mxu0 %v10325
        %10650 = vmatprep.subr.bf16.mxu0 %v10322
        %10651 = vmatpush2.bf16.msra.mxu0 %v10321
        %10652 = vmatprep.subr.bf16.mxu0 %v10318
        %10653 = vmatpush2.bf16.msra.mxu0 %v10317
        %10654 = vmatprep.subr.bf16.mxu0 %v10314
        %10655 = vmatpush2.bf16.msra.mxu0 %v10313
        %10656 = vmatprep.subr.bf16.mxu0 %v10310
        %10657 = vmatpush2.bf16.msra.mxu0 %v10309
        %10658 = vmatprep.subr.bf16.mxu0 %v10306
        %10659 = vmatpush2.bf16.msra.mxu0 %v10305
        %10660 = vmatprep.subr.bf16.mxu0 %v10302
        %10661 = vmatpush2.bf16.msra.mxu0 %v10301
        %10662 = vmatprep.mubr.bf16.mxu0 %v9434
        %10663 = vmatmul.mubr.bf16.gmra.mxu0 %v9433
        %v10664 = vpop.f32.mrf.mxu0
        %v10665 = vadd.f32 %v10624, %v10664
        %v10666 = vpop.f32.mrf.mxu0
        %v10667 = vadd.f32 %v10626, %v10666
        %v10668 = vpop.f32.mrf.mxu0
        %v10669 = vpop.f32.mrf.mxu0
        %10670 = vdwg.mxu0
        %10671 = vmatprep.subr.bf16.mxu0 %v10362
        %10672 = vmatpush1.bf16.msra.mxu0 %v10361
        %10673 = vmatprep.subr.bf16.mxu0 %v10358
        %10674 = vmatpush1.bf16.msra.mxu0 %v10357
        %10675 = vmatprep.subr.bf16.mxu0 %v10354
        %10676 = vmatpush1.bf16.msra.mxu0 %v10353
        %10677 = vmatprep.subr.bf16.mxu0 %v10350
        %10678 = vmatpush1.bf16.msra.mxu0 %v10349
        %10679 = vmatprep.subr.bf16.mxu0 %v10346
        %10680 = vmatpush1.bf16.msra.mxu0 %v10345
        %10681 = vmatprep.subr.bf16.mxu0 %v10342
        %10682 = vmatpush1.bf16.msra.mxu0 %v10341
        %10683 = vmatprep.subr.bf16.mxu0 %v10338
        %10684 = vmatpush1.bf16.msra.mxu0 %v10337
        %10685 = vmatprep.subr.bf16.mxu0 %v10334
        %10686 = vmatpush1.bf16.msra.mxu0 %v10333
        %10687 = vmatprep.subr.bf16.mxu0 %v10394
        %10688 = vmatpush2.bf16.msra.mxu0 %v10393
        %10689 = vmatprep.subr.bf16.mxu0 %v10390
        %10690 = vmatpush2.bf16.msra.mxu0 %v10389
        %10691 = vmatprep.subr.bf16.mxu0 %v10386
        %10692 = vmatpush2.bf16.msra.mxu0 %v10385
        %10693 = vmatprep.subr.bf16.mxu0 %v10382
        %10694 = vmatpush2.bf16.msra.mxu0 %v10381
        %10695 = vmatprep.subr.bf16.mxu0 %v10378
        %10696 = vmatpush2.bf16.msra.mxu0 %v10377
        %10697 = vmatprep.subr.bf16.mxu0 %v10374
        %10698 = vmatpush2.bf16.msra.mxu0 %v10373
        %10699 = vmatprep.subr.bf16.mxu0 %v10370
        %10700 = vmatpush2.bf16.msra.mxu0 %v10369
        %10701 = vmatprep.subr.bf16.mxu0 %v10366
        %10702 = vmatpush2.bf16.msra.mxu0 %v10365
        %10703 = vmatprep.mubr.bf16.mxu0 %v9436
        %10704 = vmatmul.mubr.bf16.gmra.mxu0 %v9435
        %v10705 = vpop.f32.mrf.mxu0
        %v10706 = vadd.f32 %v10665, %v10705
        %v10707 = vpop.f32.mrf.mxu0
        %v10708 = vadd.f32 %v10667, %v10707
        %v10709 = vpop.f32.mrf.mxu0
        %v10710 = vpop.f32.mrf.mxu0
        %10711 = vdwg.mxu0
        %10712 = vmatprep.subr.bf16.mxu0 %v10236
        %10713 = vmatpush1.bf16.msra.mxu0 %v10235
        %10714 = vmatprep.subr.bf16.mxu0 %v10232
        %10715 = vmatpush1.bf16.msra.mxu0 %v10231
        %10716 = vmatprep.subr.bf16.mxu0 %v10228
        %10717 = vmatpush1.bf16.msra.mxu0 %v10227
        %10718 = vmatprep.subr.bf16.mxu0 %v10224
        %10719 = vmatpush1.bf16.msra.mxu0 %v10223
        %10720 = vmatprep.subr.bf16.mxu0 %v10220
        %10721 = vmatpush1.bf16.msra.mxu0 %v10219
        %10722 = vmatprep.subr.bf16.mxu0 %v10216
        %10723 = vmatpush1.bf16.msra.mxu0 %v10215
        %10724 = vmatprep.subr.bf16.mxu0 %v10212
        %10725 = vmatpush1.bf16.msra.mxu0 %v10211
        %10726 = vmatprep.subr.bf16.mxu0 %v10208
        %10727 = vmatpush1.bf16.msra.mxu0 %v10207
        %10728 = vmatprep.subr.bf16.mxu0 %v10268
        %10729 = vmatpush2.bf16.msra.mxu0 %v10267
        %10730 = vmatprep.subr.bf16.mxu0 %v10264
        %10731 = vmatpush2.bf16.msra.mxu0 %v10263
        %10732 = vmatprep.subr.bf16.mxu0 %v10260
        %10733 = vmatpush2.bf16.msra.mxu0 %v10259
        %10734 = vmatprep.subr.bf16.mxu0 %v10256
        %10735 = vmatpush2.bf16.msra.mxu0 %v10255
        %10736 = vmatprep.subr.bf16.mxu0 %v10252
        %10737 = vmatpush2.bf16.msra.mxu0 %v10251
        %10738 = vmatprep.subr.bf16.mxu0 %v10248
        %10739 = vmatpush2.bf16.msra.mxu0 %v10247
        %10740 = vmatprep.subr.bf16.mxu0 %v10244
        %10741 = vmatpush2.bf16.msra.mxu0 %v10243
        %10742 = vmatprep.subr.bf16.mxu0 %v10240
        %10743 = vmatpush2.bf16.msra.mxu0 %v10239
        %10744 = vmatprep.mubr.bf16.mxu0 %v9432
        %10745 = vmatmul.mubr.bf16.gmra.mxu0 %v9431
        %v10746 = vpop.f32.mrf.mxu0
        %v10747 = vadd.f32 0.0, %v10746
        %v10748 = vpop.f32.mrf.mxu0
        %v10749 = vadd.f32 0.0, %v10748
        %v10750 = vpop.f32.mrf.mxu0
        %v10751 = vpop.f32.mrf.mxu0
        %10752 = vdwg.mxu0
        %10753 = vmatprep.subr.bf16.mxu0 %v10300
        %10754 = vmatpush1.bf16.msra.mxu0 %v10299
        %10755 = vmatprep.subr.bf16.mxu0 %v10296
        %10756 = vmatpush1.bf16.msra.mxu0 %v10295
        %10757 = vmatprep.subr.bf16.mxu0 %v10292
        %10758 = vmatpush1.bf16.msra.mxu0 %v10291
        %10759 = vmatprep.subr.bf16.mxu0 %v10288
        %10760 = vmatpush1.bf16.msra.mxu0 %v10287
        %10761 = vmatprep.subr.bf16.mxu0 %v10284
        %10762 = vmatpush1.bf16.msra.mxu0 %v10283
        %10763 = vmatprep.subr.bf16.mxu0 %v10280
        %10764 = vmatpush1.bf16.msra.mxu0 %v10279
        %10765 = vmatprep.subr.bf16.mxu0 %v10276
        %10766 = vmatpush1.bf16.msra.mxu0 %v10275
        %10767 = vmatprep.subr.bf16.mxu0 %v10272
        %10768 = vmatpush1.bf16.msra.mxu0 %v10271
        %10769 = vmatprep.subr.bf16.mxu0 %v10332
        %10770 = vmatpush2.bf16.msra.mxu0 %v10331
        %10771 = vmatprep.subr.bf16.mxu0 %v10328
        %10772 = vmatpush2.bf16.msra.mxu0 %v10327
        %10773 = vmatprep.subr.bf16.mxu0 %v10324
        %10774 = vmatpush2.bf16.msra.mxu0 %v10323
        %10775 = vmatprep.subr.bf16.mxu0 %v10320
        %10776 = vmatpush2.bf16.msra.mxu0 %v10319
        %10777 = vmatprep.subr.bf16.mxu0 %v10316
        %10778 = vmatpush2.bf16.msra.mxu0 %v10315
        %10779 = vmatprep.subr.bf16.mxu0 %v10312
        %10780 = vmatpush2.bf16.msra.mxu0 %v10311
        %10781 = vmatprep.subr.bf16.mxu0 %v10308
        %10782 = vmatpush2.bf16.msra.mxu0 %v10307
        %10783 = vmatprep.subr.bf16.mxu0 %v10304
        %10784 = vmatpush2.bf16.msra.mxu0 %v10303
        %10785 = vmatprep.mubr.bf16.mxu0 %v9434
        %10786 = vmatmul.mubr.bf16.gmra.mxu0 %v9433
        %v10787 = vpop.f32.mrf.mxu0
        %v10788 = vadd.f32 %v10747, %v10787
        %v10789 = vpop.f32.mrf.mxu0
        %v10790 = vadd.f32 %v10749, %v10789
        %v10791 = vpop.f32.mrf.mxu0
        %v10792 = vpop.f32.mrf.mxu0
        %10793 = vdwg.mxu0
        %10794 = vmatprep.subr.bf16.mxu0 %v10364
        %10795 = vmatpush1.bf16.msra.mxu0 %v10363
        %10796 = vmatprep.subr.bf16.mxu0 %v10360
        %10797 = vmatpush1.bf16.msra.mxu0 %v10359
        %10798 = vmatprep.subr.bf16.mxu0 %v10356
        %10799 = vmatpush1.bf16.msra.mxu0 %v10355
        %10800 = vmatprep.subr.bf16.mxu0 %v10352
        %10801 = vmatpush1.bf16.msra.mxu0 %v10351
        %10802 = vmatprep.subr.bf16.mxu0 %v10348
        %10803 = vmatpush1.bf16.msra.mxu0 %v10347
        %10804 = vmatprep.subr.bf16.mxu0 %v10344
        %10805 = vmatpush1.bf16.msra.mxu0 %v10343
        %10806 = vmatprep.subr.bf16.mxu0 %v10340
        %10807 = vmatpush1.bf16.msra.mxu0 %v10339
        %10808 = vmatprep.subr.bf16.mxu0 %v10336
        %10809 = vmatpush1.bf16.msra.mxu0 %v10335
        %10810 = vmatprep.subr.bf16.mxu0 %v10396
        %10811 = vmatpush2.bf16.msra.mxu0 %v10395
        %10812 = vmatprep.subr.bf16.mxu0 %v10392
        %10813 = vmatpush2.bf16.msra.mxu0 %v10391
        %10814 = vmatprep.subr.bf16.mxu0 %v10388
        %10815 = vmatpush2.bf16.msra.mxu0 %v10387
        %10816 = vmatprep.subr.bf16.mxu0 %v10384
        %10817 = vmatpush2.bf16.msra.mxu0 %v10383
        %10818 = vmatprep.subr.bf16.mxu0 %v10380
        %10819 = vmatpush2.bf16.msra.mxu0 %v10379
        %10820 = vmatprep.subr.bf16.mxu0 %v10376
        %10821 = vmatpush2.bf16.msra.mxu0 %v10375
        %10822 = vmatprep.subr.bf16.mxu0 %v10372
        %10823 = vmatpush2.bf16.msra.mxu0 %v10371
        %10824 = vmatprep.subr.bf16.mxu0 %v10368
        %10825 = vmatpush2.bf16.msra.mxu0 %v10367
        %10826 = vmatprep.mubr.bf16.mxu0 %v9436
        %10827 = vmatmul.mubr.bf16.gmra.mxu0 %v9435
        %v10828 = vpop.f32.mrf.mxu0
        %v10829 = vadd.f32 %v10788, %v10828
        %v10830 = vpop.f32.mrf.mxu0
        %v10831 = vadd.f32 %v10790, %v10830
        %v10832 = vpop.f32.mrf.mxu0
        %v10833 = vpop.f32.mrf.mxu0
        %10834 = vdwg.mxu0
        %v10835 = vmul.f32 %v10706, 0.5
        %v10836 = vmul.f32 %v10708, 0.5
        %v10837 = vmul.f32 %v10829, 0.5
        %v10838 = vmul.f32 %v10831, 0.5
        %v10839 = vmul.f32 %v10706, 0.044715
        %v10840 = vmul.f32 %v10708, 0.044715
        %v10841 = vmul.f32 %v10829, 0.044715
        %v10842 = vmul.f32 %v10831, 0.044715
        %v10843 = vmul.f32 %v10839, %v10706
        %v10844 = vmul.f32 %v10840, %v10708
        %v10845 = vmul.f32 %v10841, %v10829
        %v10846 = vmul.f32 %v10842, %v10831
        %v10847 = vmul.f32 %v10843, %v10706
        %v10848 = vmul.f32 %v10844, %v10708
        %v10849 = vmul.f32 %v10845, %v10829
        %v10850 = vmul.f32 %v10846, %v10831
        %v10851 = vadd.f32 %v10706, %v10847
        %v10852 = vadd.f32 %v10708, %v10848
        %v10853 = vadd.f32 %v10829, %v10849
        %v10854 = vadd.f32 %v10831, %v10850
        %v10855 = vmul.f32 %v10851, 0.7978846
        %v10856 = vmul.f32 %v10852, 0.7978846
        %v10857 = vmul.f32 %v10853, 0.7978846
        %v10858 = vmul.f32 %v10854, 0.7978846
        %v10859 = vtanh.pop %v10855
        %v10860 = vtanh.pop %v10856
        %v10861 = vtanh.pop %v10857
        %v10862 = vtanh.pop %v10858
        %v10863 = vadd.f32 %v10859, 1.0
        %v10864 = vadd.f32 %v10860, 1.0
        %v10865 = vadd.f32 %v10861, 1.0
        %v10866 = vadd.f32 %v10862, 1.0
        %v10867 = vmul.f32 %v10835, %v10863
        %v10868 = vmul.f32 %v10836, %v10864
        %v10869 = vmul.f32 %v10837, %v10865
        %v10870 = vmul.f32 %v10838, %v10866
        %v10871 = vpack.c.bf16 %v10867, %v10867
        %v10872 = vpack.c.bf16 %v10868, %v10868
        %v10873 = vpack.c.bf16 %v10869, %v10869
        %v10874 = vpack.c.bf16 %v10870, %v10870
        %v10875 = vld [vmem:[#allocation12] sm:$0xff]
        %v10876 = vld [vmem:[#allocation12 + $0x8] sm:$0xff]
        %v10877 = vld [vmem:[#allocation12 + $0x10] sm:$0xff]
        %v10878 = vld [vmem:[#allocation12 + $0x18] sm:$0xff]
        %v10879 = vld [vmem:[#allocation12 + $0x20] sm:$0xff]
        %v10880 = vld [vmem:[#allocation12 + $0x28] sm:$0xff]
        %v10881 = vld [vmem:[#allocation12 + $0x30] sm:$0xff]
        %v10882 = vld [vmem:[#allocation12 + $0x38] sm:$0xff]
        %v10883 = vld [vmem:[#allocation12 + $0x40] sm:$0xff]
        %v10884 = vld [vmem:[#allocation12 + $0x48] sm:$0xff]
        %v10885 = vld [vmem:[#allocation12 + $0x50] sm:$0xff]
        %v10886 = vld [vmem:[#allocation12 + $0x58] sm:$0xff]
        %v10887 = vld [vmem:[#allocation12 + $0x60] sm:$0xff]
        %v10888 = vld [vmem:[#allocation12 + $0x68] sm:$0xff]
        %v10889 = vld [vmem:[#allocation12 + $0x70] sm:$0xff]
        %v10890 = vld [vmem:[#allocation12 + $0x78] sm:$0xff]
        %v10891 = vld [vmem:[#allocation12 + $0x80] sm:$0xff]
        %v10892 = vld [vmem:[#allocation12 + $0x88] sm:$0xff]
        %v10893 = vld [vmem:[#allocation12 + $0x90] sm:$0xff]
        %v10894 = vld [vmem:[#allocation12 + $0x98] sm:$0xff]
        %v10895 = vld [vmem:[#allocation12 + $0xa0] sm:$0xff]
        %v10896 = vld [vmem:[#allocation12 + $0xa8] sm:$0xff]
        %v10897 = vld [vmem:[#allocation12 + $0xb0] sm:$0xff]
        %v10898 = vld [vmem:[#allocation12 + $0xb8] sm:$0xff]
        %v10899 = vld [vmem:[#allocation12 + $0xc0] sm:$0xff]
        %v10900 = vld [vmem:[#allocation12 + $0xc8] sm:$0xff]
        %v10901 = vld [vmem:[#allocation12 + $0xd0] sm:$0xff]
        %v10902 = vld [vmem:[#allocation12 + $0xd8] sm:$0xff]
        %v10903 = vld [vmem:[#allocation12 + $0xe0] sm:$0xff]
        %v10904 = vld [vmem:[#allocation12 + $0xe8] sm:$0xff]
        %v10905 = vld [vmem:[#allocation12 + $0xf0] sm:$0xff]
        %v10906 = vld [vmem:[#allocation12 + $0xf8] sm:$0xff]
        %v10907 = vld [vmem:[#allocation12 + $0x100] sm:$0xff]
        %v10908 = vld [vmem:[#allocation12 + $0x108] sm:$0xff]
        %v10909 = vld [vmem:[#allocation12 + $0x110] sm:$0xff]
        %v10910 = vld [vmem:[#allocation12 + $0x118] sm:$0xff]
        %v10911 = vld [vmem:[#allocation12 + $0x120] sm:$0xff]
        %v10912 = vld [vmem:[#allocation12 + $0x128] sm:$0xff]
        %v10913 = vld [vmem:[#allocation12 + $0x130] sm:$0xff]
        %v10914 = vld [vmem:[#allocation12 + $0x138] sm:$0xff]
        %v10915 = vld [vmem:[#allocation12 + $0x140] sm:$0xff]
        %v10916 = vld [vmem:[#allocation12 + $0x148] sm:$0xff]
        %v10917 = vld [vmem:[#allocation12 + $0x150] sm:$0xff]
        %v10918 = vld [vmem:[#allocation12 + $0x158] sm:$0xff]
        %v10919 = vld [vmem:[#allocation12 + $0x160] sm:$0xff]
        %v10920 = vld [vmem:[#allocation12 + $0x168] sm:$0xff]
        %v10921 = vld [vmem:[#allocation12 + $0x170] sm:$0xff]
        %v10922 = vld [vmem:[#allocation12 + $0x178] sm:$0xff]
        %v10923 = vld [vmem:[#allocation12 + $0x180] sm:$0xff]
        %v10924 = vld [vmem:[#allocation12 + $0x188] sm:$0xff]
        %v10925 = vld [vmem:[#allocation12 + $0x190] sm:$0xff]
        %v10926 = vld [vmem:[#allocation12 + $0x198] sm:$0xff]
        %v10927 = vld [vmem:[#allocation12 + $0x1a0] sm:$0xff]
        %v10928 = vld [vmem:[#allocation12 + $0x1a8] sm:$0xff]
        %v10929 = vld [vmem:[#allocation12 + $0x1b0] sm:$0xff]
        %v10930 = vld [vmem:[#allocation12 + $0x1b8] sm:$0xff]
        %v10931 = vld [vmem:[#allocation12 + $0x1c0] sm:$0xff]
        %v10932 = vld [vmem:[#allocation12 + $0x1c8] sm:$0xff]
        %v10933 = vld [vmem:[#allocation12 + $0x1d0] sm:$0xff]
        %v10934 = vld [vmem:[#allocation12 + $0x1d8] sm:$0xff]
        %v10935 = vld [vmem:[#allocation12 + $0x1e0] sm:$0xff]
        %v10936 = vld [vmem:[#allocation12 + $0x1e8] sm:$0xff]
        %v10937 = vld [vmem:[#allocation12 + $0x1f0] sm:$0xff]
        %v10938 = vld [vmem:[#allocation12 + $0x1f8] sm:$0xff]
        %v10939 = vld [vmem:[#allocation12 + $0x200] sm:$0xff]
        %v10940 = vld [vmem:[#allocation12 + $0x208] sm:$0xff]
        %v10941 = vld [vmem:[#allocation12 + $0x210] sm:$0xff]
        %v10942 = vld [vmem:[#allocation12 + $0x218] sm:$0xff]
        %v10943 = vld [vmem:[#allocation12 + $0x220] sm:$0xff]
        %v10944 = vld [vmem:[#allocation12 + $0x228] sm:$0xff]
        %v10945 = vld [vmem:[#allocation12 + $0x230] sm:$0xff]
        %v10946 = vld [vmem:[#allocation12 + $0x238] sm:$0xff]
        %v10947 = vld [vmem:[#allocation12 + $0x240] sm:$0xff]
        %v10948 = vld [vmem:[#allocation12 + $0x248] sm:$0xff]
        %v10949 = vld [vmem:[#allocation12 + $0x250] sm:$0xff]
        %v10950 = vld [vmem:[#allocation12 + $0x258] sm:$0xff]
        %v10951 = vld [vmem:[#allocation12 + $0x260] sm:$0xff]
        %v10952 = vld [vmem:[#allocation12 + $0x268] sm:$0xff]
        %v10953 = vld [vmem:[#allocation12 + $0x270] sm:$0xff]
        %v10954 = vld [vmem:[#allocation12 + $0x278] sm:$0xff]
        %v10955 = vld [vmem:[#allocation12 + $0x280] sm:$0xff]
        %v10956 = vld [vmem:[#allocation12 + $0x288] sm:$0xff]
        %v10957 = vld [vmem:[#allocation12 + $0x290] sm:$0xff]
        %v10958 = vld [vmem:[#allocation12 + $0x298] sm:$0xff]
        %v10959 = vld [vmem:[#allocation12 + $0x2a0] sm:$0xff]
        %v10960 = vld [vmem:[#allocation12 + $0x2a8] sm:$0xff]
        %v10961 = vld [vmem:[#allocation12 + $0x2b0] sm:$0xff]
        %v10962 = vld [vmem:[#allocation12 + $0x2b8] sm:$0xff]
        %v10963 = vld [vmem:[#allocation12 + $0x2c0] sm:$0xff]
        %v10964 = vld [vmem:[#allocation12 + $0x2c8] sm:$0xff]
        %v10965 = vld [vmem:[#allocation12 + $0x2d0] sm:$0xff]
        %v10966 = vld [vmem:[#allocation12 + $0x2d8] sm:$0xff]
        %v10967 = vld [vmem:[#allocation12 + $0x2e0] sm:$0xff]
        %v10968 = vld [vmem:[#allocation12 + $0x2e8] sm:$0xff]
        %v10969 = vld [vmem:[#allocation12 + $0x2f0] sm:$0xff]
        %v10970 = vld [vmem:[#allocation12 + $0x2f8] sm:$0xff]
        %v10971 = vld [vmem:[#allocation12 + $0x300] sm:$0xff]
        %v10972 = vld [vmem:[#allocation12 + $0x308] sm:$0xff]
        %v10973 = vld [vmem:[#allocation12 + $0x310] sm:$0xff]
        %v10974 = vld [vmem:[#allocation12 + $0x318] sm:$0xff]
        %v10975 = vld [vmem:[#allocation12 + $0x320] sm:$0xff]
        %v10976 = vld [vmem:[#allocation12 + $0x328] sm:$0xff]
        %v10977 = vld [vmem:[#allocation12 + $0x330] sm:$0xff]
        %v10978 = vld [vmem:[#allocation12 + $0x338] sm:$0xff]
        %v10979 = vld [vmem:[#allocation12 + $0x340] sm:$0xff]
        %v10980 = vld [vmem:[#allocation12 + $0x348] sm:$0xff]
        %v10981 = vld [vmem:[#allocation12 + $0x350] sm:$0xff]
        %v10982 = vld [vmem:[#allocation12 + $0x358] sm:$0xff]
        %v10983 = vld [vmem:[#allocation12 + $0x360] sm:$0xff]
        %v10984 = vld [vmem:[#allocation12 + $0x368] sm:$0xff]
        %v10985 = vld [vmem:[#allocation12 + $0x370] sm:$0xff]
        %v10986 = vld [vmem:[#allocation12 + $0x378] sm:$0xff]
        %v10987 = vld [vmem:[#allocation12 + $0x380] sm:$0xff]
        %v10988 = vld [vmem:[#allocation12 + $0x388] sm:$0xff]
        %v10989 = vld [vmem:[#allocation12 + $0x390] sm:$0xff]
        %v10990 = vld [vmem:[#allocation12 + $0x398] sm:$0xff]
        %v10991 = vld [vmem:[#allocation12 + $0x3a0] sm:$0xff]
        %v10992 = vld [vmem:[#allocation12 + $0x3a8] sm:$0xff]
        %v10993 = vld [vmem:[#allocation12 + $0x3b0] sm:$0xff]
        %v10994 = vld [vmem:[#allocation12 + $0x3b8] sm:$0xff]
        %v10995 = vld [vmem:[#allocation12 + $0x3c0] sm:$0xff]
        %v10996 = vld [vmem:[#allocation12 + $0x3c8] sm:$0xff]
        %v10997 = vld [vmem:[#allocation12 + $0x3d0] sm:$0xff]
        %v10998 = vld [vmem:[#allocation12 + $0x3d8] sm:$0xff]
        %v10999 = vld [vmem:[#allocation12 + $0x3e0] sm:$0xff]
        %v11000 = vld [vmem:[#allocation12 + $0x3e8] sm:$0xff]
        %v11001 = vld [vmem:[#allocation12 + $0x3f0] sm:$0xff]
        %v11002 = vld [vmem:[#allocation12 + $0x3f8] sm:$0xff]
        %v11003 = vld [vmem:[#allocation12 + $0x400] sm:$0xff]
        %v11004 = vld [vmem:[#allocation12 + $0x408] sm:$0xff]
        %v11005 = vld [vmem:[#allocation12 + $0x410] sm:$0xff]
        %v11006 = vld [vmem:[#allocation12 + $0x418] sm:$0xff]
        %v11007 = vld [vmem:[#allocation12 + $0x420] sm:$0xff]
        %v11008 = vld [vmem:[#allocation12 + $0x428] sm:$0xff]
        %v11009 = vld [vmem:[#allocation12 + $0x430] sm:$0xff]
        %v11010 = vld [vmem:[#allocation12 + $0x438] sm:$0xff]
        %v11011 = vld [vmem:[#allocation12 + $0x440] sm:$0xff]
        %v11012 = vld [vmem:[#allocation12 + $0x448] sm:$0xff]
        %v11013 = vld [vmem:[#allocation12 + $0x450] sm:$0xff]
        %v11014 = vld [vmem:[#allocation12 + $0x458] sm:$0xff]
        %v11015 = vld [vmem:[#allocation12 + $0x460] sm:$0xff]
        %v11016 = vld [vmem:[#allocation12 + $0x468] sm:$0xff]
        %v11017 = vld [vmem:[#allocation12 + $0x470] sm:$0xff]
        %v11018 = vld [vmem:[#allocation12 + $0x478] sm:$0xff]
        %v11019 = vld [vmem:[#allocation12 + $0x480] sm:$0xff]
        %v11020 = vld [vmem:[#allocation12 + $0x488] sm:$0xff]
        %v11021 = vld [vmem:[#allocation12 + $0x490] sm:$0xff]
        %v11022 = vld [vmem:[#allocation12 + $0x498] sm:$0xff]
        %v11023 = vld [vmem:[#allocation12 + $0x4a0] sm:$0xff]
        %v11024 = vld [vmem:[#allocation12 + $0x4a8] sm:$0xff]
        %v11025 = vld [vmem:[#allocation12 + $0x4b0] sm:$0xff]
        %v11026 = vld [vmem:[#allocation12 + $0x4b8] sm:$0xff]
        %v11027 = vld [vmem:[#allocation12 + $0x4c0] sm:$0xff]
        %v11028 = vld [vmem:[#allocation12 + $0x4c8] sm:$0xff]
        %v11029 = vld [vmem:[#allocation12 + $0x4d0] sm:$0xff]
        %v11030 = vld [vmem:[#allocation12 + $0x4d8] sm:$0xff]
        %v11031 = vld [vmem:[#allocation12 + $0x4e0] sm:$0xff]
        %v11032 = vld [vmem:[#allocation12 + $0x4e8] sm:$0xff]
        %v11033 = vld [vmem:[#allocation12 + $0x4f0] sm:$0xff]
        %v11034 = vld [vmem:[#allocation12 + $0x4f8] sm:$0xff]
        %v11035 = vld [vmem:[#allocation12 + $0x500] sm:$0xff]
        %v11036 = vld [vmem:[#allocation12 + $0x508] sm:$0xff]
        %v11037 = vld [vmem:[#allocation12 + $0x510] sm:$0xff]
        %v11038 = vld [vmem:[#allocation12 + $0x518] sm:$0xff]
        %v11039 = vld [vmem:[#allocation12 + $0x520] sm:$0xff]
        %v11040 = vld [vmem:[#allocation12 + $0x528] sm:$0xff]
        %v11041 = vld [vmem:[#allocation12 + $0x530] sm:$0xff]
        %v11042 = vld [vmem:[#allocation12 + $0x538] sm:$0xff]
        %v11043 = vld [vmem:[#allocation12 + $0x540] sm:$0xff]
        %v11044 = vld [vmem:[#allocation12 + $0x548] sm:$0xff]
        %v11045 = vld [vmem:[#allocation12 + $0x550] sm:$0xff]
        %v11046 = vld [vmem:[#allocation12 + $0x558] sm:$0xff]
        %v11047 = vld [vmem:[#allocation12 + $0x560] sm:$0xff]
        %v11048 = vld [vmem:[#allocation12 + $0x568] sm:$0xff]
        %v11049 = vld [vmem:[#allocation12 + $0x570] sm:$0xff]
        %v11050 = vld [vmem:[#allocation12 + $0x578] sm:$0xff]
        %v11051 = vld [vmem:[#allocation12 + $0x580] sm:$0xff]
        %v11052 = vld [vmem:[#allocation12 + $0x588] sm:$0xff]
        %v11053 = vld [vmem:[#allocation12 + $0x590] sm:$0xff]
        %v11054 = vld [vmem:[#allocation12 + $0x598] sm:$0xff]
        %v11055 = vld [vmem:[#allocation12 + $0x5a0] sm:$0xff]
        %v11056 = vld [vmem:[#allocation12 + $0x5a8] sm:$0xff]
        %v11057 = vld [vmem:[#allocation12 + $0x5b0] sm:$0xff]
        %v11058 = vld [vmem:[#allocation12 + $0x5b8] sm:$0xff]
        %v11059 = vld [vmem:[#allocation12 + $0x5c0] sm:$0xff]
        %v11060 = vld [vmem:[#allocation12 + $0x5c8] sm:$0xff]
        %v11061 = vld [vmem:[#allocation12 + $0x5d0] sm:$0xff]
        %v11062 = vld [vmem:[#allocation12 + $0x5d8] sm:$0xff]
        %v11063 = vld [vmem:[#allocation12 + $0x5e0] sm:$0xff]
        %v11064 = vld [vmem:[#allocation12 + $0x5e8] sm:$0xff]
        %v11065 = vld [vmem:[#allocation12 + $0x5f0] sm:$0xff]
        %v11066 = vld [vmem:[#allocation12 + $0x5f8] sm:$0xff]
        %v11259 = vunpack.c.l.b16 %v10875
        %v11260 = vunpack.c.h.b16 %v10875
        %v11261 = vunpack.c.l.b16 %v10876
        %v11262 = vunpack.c.h.b16 %v10876
        %v11263 = vunpack.c.l.b16 %v10877
        %v11264 = vunpack.c.h.b16 %v10877
        %v11265 = vunpack.c.l.b16 %v10878
        %v11266 = vunpack.c.h.b16 %v10878
        %v11267 = vunpack.c.l.b16 %v10879
        %v11268 = vunpack.c.h.b16 %v10879
        %v11269 = vunpack.c.l.b16 %v10880
        %v11270 = vunpack.c.h.b16 %v10880
        %v11271 = vunpack.c.l.b16 %v10881
        %v11272 = vunpack.c.h.b16 %v10881
        %v11273 = vunpack.c.l.b16 %v10882
        %v11274 = vunpack.c.h.b16 %v10882
        %v11275 = vunpack.c.l.b16 %v10883
        %v11276 = vunpack.c.h.b16 %v10883
        %v11277 = vunpack.c.l.b16 %v10884
        %v11278 = vunpack.c.h.b16 %v10884
        %v11279 = vunpack.c.l.b16 %v10885
        %v11280 = vunpack.c.h.b16 %v10885
        %v11281 = vunpack.c.l.b16 %v10886
        %v11282 = vunpack.c.h.b16 %v10886
        %v11283 = vunpack.c.l.b16 %v10887
        %v11284 = vunpack.c.h.b16 %v10887
        %v11285 = vunpack.c.l.b16 %v10888
        %v11286 = vunpack.c.h.b16 %v10888
        %v11287 = vunpack.c.l.b16 %v10889
        %v11288 = vunpack.c.h.b16 %v10889
        %v11289 = vunpack.c.l.b16 %v10890
        %v11290 = vunpack.c.h.b16 %v10890
        %v11291 = vunpack.c.l.b16 %v10891
        %v11292 = vunpack.c.h.b16 %v10891
        %v11293 = vunpack.c.l.b16 %v10892
        %v11294 = vunpack.c.h.b16 %v10892
        %v11295 = vunpack.c.l.b16 %v10893
        %v11296 = vunpack.c.h.b16 %v10893
        %v11297 = vunpack.c.l.b16 %v10894
        %v11298 = vunpack.c.h.b16 %v10894
        %v11299 = vunpack.c.l.b16 %v10895
        %v11300 = vunpack.c.h.b16 %v10895
        %v11301 = vunpack.c.l.b16 %v10896
        %v11302 = vunpack.c.h.b16 %v10896
        %v11303 = vunpack.c.l.b16 %v10897
        %v11304 = vunpack.c.h.b16 %v10897
        %v11305 = vunpack.c.l.b16 %v10898
        %v11306 = vunpack.c.h.b16 %v10898
        %v11307 = vunpack.c.l.b16 %v10899
        %v11308 = vunpack.c.h.b16 %v10899
        %v11309 = vunpack.c.l.b16 %v10900
        %v11310 = vunpack.c.h.b16 %v10900
        %v11311 = vunpack.c.l.b16 %v10901
        %v11312 = vunpack.c.h.b16 %v10901
        %v11313 = vunpack.c.l.b16 %v10902
        %v11314 = vunpack.c.h.b16 %v10902
        %v11315 = vunpack.c.l.b16 %v10903
        %v11316 = vunpack.c.h.b16 %v10903
        %v11317 = vunpack.c.l.b16 %v10904
        %v11318 = vunpack.c.h.b16 %v10904
        %v11319 = vunpack.c.l.b16 %v10905
        %v11320 = vunpack.c.h.b16 %v10905
        %v11321 = vunpack.c.l.b16 %v10906
        %v11322 = vunpack.c.h.b16 %v10906
        %v11323 = vunpack.c.l.b16 %v10907
        %v11324 = vunpack.c.h.b16 %v10907
        %v11325 = vunpack.c.l.b16 %v10908
        %v11326 = vunpack.c.h.b16 %v10908
        %v11327 = vunpack.c.l.b16 %v10909
        %v11328 = vunpack.c.h.b16 %v10909
        %v11329 = vunpack.c.l.b16 %v10910
        %v11330 = vunpack.c.h.b16 %v10910
        %v11331 = vunpack.c.l.b16 %v10911
        %v11332 = vunpack.c.h.b16 %v10911
        %v11333 = vunpack.c.l.b16 %v10912
        %v11334 = vunpack.c.h.b16 %v10912
        %v11335 = vunpack.c.l.b16 %v10913
        %v11336 = vunpack.c.h.b16 %v10913
        %v11337 = vunpack.c.l.b16 %v10914
        %v11338 = vunpack.c.h.b16 %v10914
        %v11339 = vunpack.c.l.b16 %v10915
        %v11340 = vunpack.c.h.b16 %v10915
        %v11341 = vunpack.c.l.b16 %v10916
        %v11342 = vunpack.c.h.b16 %v10916
        %v11343 = vunpack.c.l.b16 %v10917
        %v11344 = vunpack.c.h.b16 %v10917
        %v11345 = vunpack.c.l.b16 %v10918
        %v11346 = vunpack.c.h.b16 %v10918
        %v11347 = vunpack.c.l.b16 %v10919
        %v11348 = vunpack.c.h.b16 %v10919
        %v11349 = vunpack.c.l.b16 %v10920
        %v11350 = vunpack.c.h.b16 %v10920
        %v11351 = vunpack.c.l.b16 %v10921
        %v11352 = vunpack.c.h.b16 %v10921
        %v11353 = vunpack.c.l.b16 %v10922
        %v11354 = vunpack.c.h.b16 %v10922
        %v11355 = vunpack.c.l.b16 %v10923
        %v11356 = vunpack.c.h.b16 %v10923
        %v11357 = vunpack.c.l.b16 %v10924
        %v11358 = vunpack.c.h.b16 %v10924
        %v11359 = vunpack.c.l.b16 %v10925
        %v11360 = vunpack.c.h.b16 %v10925
        %v11361 = vunpack.c.l.b16 %v10926
        %v11362 = vunpack.c.h.b16 %v10926
        %v11363 = vunpack.c.l.b16 %v10927
        %v11364 = vunpack.c.h.b16 %v10927
        %v11365 = vunpack.c.l.b16 %v10928
        %v11366 = vunpack.c.h.b16 %v10928
        %v11367 = vunpack.c.l.b16 %v10929
        %v11368 = vunpack.c.h.b16 %v10929
        %v11369 = vunpack.c.l.b16 %v10930
        %v11370 = vunpack.c.h.b16 %v10930
        %v11371 = vunpack.c.l.b16 %v10931
        %v11372 = vunpack.c.h.b16 %v10931
        %v11373 = vunpack.c.l.b16 %v10932
        %v11374 = vunpack.c.h.b16 %v10932
        %v11375 = vunpack.c.l.b16 %v10933
        %v11376 = vunpack.c.h.b16 %v10933
        %v11377 = vunpack.c.l.b16 %v10934
        %v11378 = vunpack.c.h.b16 %v10934
        %v11379 = vunpack.c.l.b16 %v10935
        %v11380 = vunpack.c.h.b16 %v10935
        %v11381 = vunpack.c.l.b16 %v10936
        %v11382 = vunpack.c.h.b16 %v10936
        %v11383 = vunpack.c.l.b16 %v10937
        %v11384 = vunpack.c.h.b16 %v10937
        %v11385 = vunpack.c.l.b16 %v10938
        %v11386 = vunpack.c.h.b16 %v10938
        %v11387 = vunpack.c.l.b16 %v10939
        %v11388 = vunpack.c.h.b16 %v10939
        %v11389 = vunpack.c.l.b16 %v10940
        %v11390 = vunpack.c.h.b16 %v10940
        %v11391 = vunpack.c.l.b16 %v10941
        %v11392 = vunpack.c.h.b16 %v10941
        %v11393 = vunpack.c.l.b16 %v10942
        %v11394 = vunpack.c.h.b16 %v10942
        %v11395 = vunpack.c.l.b16 %v10943
        %v11396 = vunpack.c.h.b16 %v10943
        %v11397 = vunpack.c.l.b16 %v10944
        %v11398 = vunpack.c.h.b16 %v10944
        %v11399 = vunpack.c.l.b16 %v10945
        %v11400 = vunpack.c.h.b16 %v10945
        %v11401 = vunpack.c.l.b16 %v10946
        %v11402 = vunpack.c.h.b16 %v10946
        %v11403 = vunpack.c.l.b16 %v10947
        %v11404 = vunpack.c.h.b16 %v10947
        %v11405 = vunpack.c.l.b16 %v10948
        %v11406 = vunpack.c.h.b16 %v10948
        %v11407 = vunpack.c.l.b16 %v10949
        %v11408 = vunpack.c.h.b16 %v10949
        %v11409 = vunpack.c.l.b16 %v10950
        %v11410 = vunpack.c.h.b16 %v10950
        %v11411 = vunpack.c.l.b16 %v10951
        %v11412 = vunpack.c.h.b16 %v10951
        %v11413 = vunpack.c.l.b16 %v10952
        %v11414 = vunpack.c.h.b16 %v10952
        %v11415 = vunpack.c.l.b16 %v10953
        %v11416 = vunpack.c.h.b16 %v10953
        %v11417 = vunpack.c.l.b16 %v10954
        %v11418 = vunpack.c.h.b16 %v10954
        %v11419 = vunpack.c.l.b16 %v10955
        %v11420 = vunpack.c.h.b16 %v10955
        %v11421 = vunpack.c.l.b16 %v10956
        %v11422 = vunpack.c.h.b16 %v10956
        %v11423 = vunpack.c.l.b16 %v10957
        %v11424 = vunpack.c.h.b16 %v10957
        %v11425 = vunpack.c.l.b16 %v10958
        %v11426 = vunpack.c.h.b16 %v10958
        %v11427 = vunpack.c.l.b16 %v10959
        %v11428 = vunpack.c.h.b16 %v10959
        %v11429 = vunpack.c.l.b16 %v10960
        %v11430 = vunpack.c.h.b16 %v10960
        %v11431 = vunpack.c.l.b16 %v10961
        %v11432 = vunpack.c.h.b16 %v10961
        %v11433 = vunpack.c.l.b16 %v10962
        %v11434 = vunpack.c.h.b16 %v10962
        %v11435 = vunpack.c.l.b16 %v10963
        %v11436 = vunpack.c.h.b16 %v10963
        %v11437 = vunpack.c.l.b16 %v10964
        %v11438 = vunpack.c.h.b16 %v10964
        %v11439 = vunpack.c.l.b16 %v10965
        %v11440 = vunpack.c.h.b16 %v10965
        %v11441 = vunpack.c.l.b16 %v10966
        %v11442 = vunpack.c.h.b16 %v10966
        %v11443 = vunpack.c.l.b16 %v10967
        %v11444 = vunpack.c.h.b16 %v10967
        %v11445 = vunpack.c.l.b16 %v10968
        %v11446 = vunpack.c.h.b16 %v10968
        %v11447 = vunpack.c.l.b16 %v10969
        %v11448 = vunpack.c.h.b16 %v10969
        %v11449 = vunpack.c.l.b16 %v10970
        %v11450 = vunpack.c.h.b16 %v10970
        %v11451 = vunpack.c.l.b16 %v10971
        %v11452 = vunpack.c.h.b16 %v10971
        %v11453 = vunpack.c.l.b16 %v10972
        %v11454 = vunpack.c.h.b16 %v10972
        %v11455 = vunpack.c.l.b16 %v10973
        %v11456 = vunpack.c.h.b16 %v10973
        %v11457 = vunpack.c.l.b16 %v10974
        %v11458 = vunpack.c.h.b16 %v10974
        %v11459 = vunpack.c.l.b16 %v10975
        %v11460 = vunpack.c.h.b16 %v10975
        %v11461 = vunpack.c.l.b16 %v10976
        %v11462 = vunpack.c.h.b16 %v10976
        %v11463 = vunpack.c.l.b16 %v10977
        %v11464 = vunpack.c.h.b16 %v10977
        %v11465 = vunpack.c.l.b16 %v10978
        %v11466 = vunpack.c.h.b16 %v10978
        %v11467 = vunpack.c.l.b16 %v10979
        %v11468 = vunpack.c.h.b16 %v10979
        %v11469 = vunpack.c.l.b16 %v10980
        %v11470 = vunpack.c.h.b16 %v10980
        %v11471 = vunpack.c.l.b16 %v10981
        %v11472 = vunpack.c.h.b16 %v10981
        %v11473 = vunpack.c.l.b16 %v10982
        %v11474 = vunpack.c.h.b16 %v10982
        %v11475 = vunpack.c.l.b16 %v10983
        %v11476 = vunpack.c.h.b16 %v10983
        %v11477 = vunpack.c.l.b16 %v10984
        %v11478 = vunpack.c.h.b16 %v10984
        %v11479 = vunpack.c.l.b16 %v10985
        %v11480 = vunpack.c.h.b16 %v10985
        %v11481 = vunpack.c.l.b16 %v10986
        %v11482 = vunpack.c.h.b16 %v10986
        %v11483 = vunpack.c.l.b16 %v10987
        %v11484 = vunpack.c.h.b16 %v10987
        %v11485 = vunpack.c.l.b16 %v10988
        %v11486 = vunpack.c.h.b16 %v10988
        %v11487 = vunpack.c.l.b16 %v10989
        %v11488 = vunpack.c.h.b16 %v10989
        %v11489 = vunpack.c.l.b16 %v10990
        %v11490 = vunpack.c.h.b16 %v10990
        %v11491 = vunpack.c.l.b16 %v10991
        %v11492 = vunpack.c.h.b16 %v10991
        %v11493 = vunpack.c.l.b16 %v10992
        %v11494 = vunpack.c.h.b16 %v10992
        %v11495 = vunpack.c.l.b16 %v10993
        %v11496 = vunpack.c.h.b16 %v10993
        %v11497 = vunpack.c.l.b16 %v10994
        %v11498 = vunpack.c.h.b16 %v10994
        %v11499 = vunpack.c.l.b16 %v10995
        %v11500 = vunpack.c.h.b16 %v10995
        %v11501 = vunpack.c.l.b16 %v10996
        %v11502 = vunpack.c.h.b16 %v10996
        %v11503 = vunpack.c.l.b16 %v10997
        %v11504 = vunpack.c.h.b16 %v10997
        %v11505 = vunpack.c.l.b16 %v10998
        %v11506 = vunpack.c.h.b16 %v10998
        %v11507 = vunpack.c.l.b16 %v10999
        %v11508 = vunpack.c.h.b16 %v10999
        %v11509 = vunpack.c.l.b16 %v11000
        %v11510 = vunpack.c.h.b16 %v11000
        %v11511 = vunpack.c.l.b16 %v11001
        %v11512 = vunpack.c.h.b16 %v11001
        %v11513 = vunpack.c.l.b16 %v11002
        %v11514 = vunpack.c.h.b16 %v11002
        %v11515 = vunpack.c.l.b16 %v11003
        %v11516 = vunpack.c.h.b16 %v11003
        %v11517 = vunpack.c.l.b16 %v11004
        %v11518 = vunpack.c.h.b16 %v11004
        %v11519 = vunpack.c.l.b16 %v11005
        %v11520 = vunpack.c.h.b16 %v11005
        %v11521 = vunpack.c.l.b16 %v11006
        %v11522 = vunpack.c.h.b16 %v11006
        %v11523 = vunpack.c.l.b16 %v11007
        %v11524 = vunpack.c.h.b16 %v11007
        %v11525 = vunpack.c.l.b16 %v11008
        %v11526 = vunpack.c.h.b16 %v11008
        %v11527 = vunpack.c.l.b16 %v11009
        %v11528 = vunpack.c.h.b16 %v11009
        %v11529 = vunpack.c.l.b16 %v11010
        %v11530 = vunpack.c.h.b16 %v11010
        %v11531 = vunpack.c.l.b16 %v11011
        %v11532 = vunpack.c.h.b16 %v11011
        %v11533 = vunpack.c.l.b16 %v11012
        %v11534 = vunpack.c.h.b16 %v11012
        %v11535 = vunpack.c.l.b16 %v11013
        %v11536 = vunpack.c.h.b16 %v11013
        %v11537 = vunpack.c.l.b16 %v11014
        %v11538 = vunpack.c.h.b16 %v11014
        %v11539 = vunpack.c.l.b16 %v11015
        %v11540 = vunpack.c.h.b16 %v11015
        %v11541 = vunpack.c.l.b16 %v11016
        %v11542 = vunpack.c.h.b16 %v11016
        %v11543 = vunpack.c.l.b16 %v11017
        %v11544 = vunpack.c.h.b16 %v11017
        %v11545 = vunpack.c.l.b16 %v11018
        %v11546 = vunpack.c.h.b16 %v11018
        %v11547 = vunpack.c.l.b16 %v11019
        %v11548 = vunpack.c.h.b16 %v11019
        %v11549 = vunpack.c.l.b16 %v11020
        %v11550 = vunpack.c.h.b16 %v11020
        %v11551 = vunpack.c.l.b16 %v11021
        %v11552 = vunpack.c.h.b16 %v11021
        %v11553 = vunpack.c.l.b16 %v11022
        %v11554 = vunpack.c.h.b16 %v11022
        %v11555 = vunpack.c.l.b16 %v11023
        %v11556 = vunpack.c.h.b16 %v11023
        %v11557 = vunpack.c.l.b16 %v11024
        %v11558 = vunpack.c.h.b16 %v11024
        %v11559 = vunpack.c.l.b16 %v11025
        %v11560 = vunpack.c.h.b16 %v11025
        %v11561 = vunpack.c.l.b16 %v11026
        %v11562 = vunpack.c.h.b16 %v11026
        %v11563 = vunpack.c.l.b16 %v11027
        %v11564 = vunpack.c.h.b16 %v11027
        %v11565 = vunpack.c.l.b16 %v11028
        %v11566 = vunpack.c.h.b16 %v11028
        %v11567 = vunpack.c.l.b16 %v11029
        %v11568 = vunpack.c.h.b16 %v11029
        %v11569 = vunpack.c.l.b16 %v11030
        %v11570 = vunpack.c.h.b16 %v11030
        %v11571 = vunpack.c.l.b16 %v11031
        %v11572 = vunpack.c.h.b16 %v11031
        %v11573 = vunpack.c.l.b16 %v11032
        %v11574 = vunpack.c.h.b16 %v11032
        %v11575 = vunpack.c.l.b16 %v11033
        %v11576 = vunpack.c.h.b16 %v11033
        %v11577 = vunpack.c.l.b16 %v11034
        %v11578 = vunpack.c.h.b16 %v11034
        %v11579 = vunpack.c.l.b16 %v11035
        %v11580 = vunpack.c.h.b16 %v11035
        %v11581 = vunpack.c.l.b16 %v11036
        %v11582 = vunpack.c.h.b16 %v11036
        %v11583 = vunpack.c.l.b16 %v11037
        %v11584 = vunpack.c.h.b16 %v11037
        %v11585 = vunpack.c.l.b16 %v11038
        %v11586 = vunpack.c.h.b16 %v11038
        %v11587 = vunpack.c.l.b16 %v11039
        %v11588 = vunpack.c.h.b16 %v11039
        %v11589 = vunpack.c.l.b16 %v11040
        %v11590 = vunpack.c.h.b16 %v11040
        %v11591 = vunpack.c.l.b16 %v11041
        %v11592 = vunpack.c.h.b16 %v11041
        %v11593 = vunpack.c.l.b16 %v11042
        %v11594 = vunpack.c.h.b16 %v11042
        %v11595 = vunpack.c.l.b16 %v11043
        %v11596 = vunpack.c.h.b16 %v11043
        %v11597 = vunpack.c.l.b16 %v11044
        %v11598 = vunpack.c.h.b16 %v11044
        %v11599 = vunpack.c.l.b16 %v11045
        %v11600 = vunpack.c.h.b16 %v11045
        %v11601 = vunpack.c.l.b16 %v11046
        %v11602 = vunpack.c.h.b16 %v11046
        %v11603 = vunpack.c.l.b16 %v11047
        %v11604 = vunpack.c.h.b16 %v11047
        %v11605 = vunpack.c.l.b16 %v11048
        %v11606 = vunpack.c.h.b16 %v11048
        %v11607 = vunpack.c.l.b16 %v11049
        %v11608 = vunpack.c.h.b16 %v11049
        %v11609 = vunpack.c.l.b16 %v11050
        %v11610 = vunpack.c.h.b16 %v11050
        %v11611 = vunpack.c.l.b16 %v11051
        %v11612 = vunpack.c.h.b16 %v11051
        %v11613 = vunpack.c.l.b16 %v11052
        %v11614 = vunpack.c.h.b16 %v11052
        %v11615 = vunpack.c.l.b16 %v11053
        %v11616 = vunpack.c.h.b16 %v11053
        %v11617 = vunpack.c.l.b16 %v11054
        %v11618 = vunpack.c.h.b16 %v11054
        %v11619 = vunpack.c.l.b16 %v11055
        %v11620 = vunpack.c.h.b16 %v11055
        %v11621 = vunpack.c.l.b16 %v11056
        %v11622 = vunpack.c.h.b16 %v11056
        %v11623 = vunpack.c.l.b16 %v11057
        %v11624 = vunpack.c.h.b16 %v11057
        %v11625 = vunpack.c.l.b16 %v11058
        %v11626 = vunpack.c.h.b16 %v11058
        %v11627 = vunpack.c.l.b16 %v11059
        %v11628 = vunpack.c.h.b16 %v11059
        %v11629 = vunpack.c.l.b16 %v11060
        %v11630 = vunpack.c.h.b16 %v11060
        %v11631 = vunpack.c.l.b16 %v11061
        %v11632 = vunpack.c.h.b16 %v11061
        %v11633 = vunpack.c.l.b16 %v11062
        %v11634 = vunpack.c.h.b16 %v11062
        %v11635 = vunpack.c.l.b16 %v11063
        %v11636 = vunpack.c.h.b16 %v11063
        %v11637 = vunpack.c.l.b16 %v11064
        %v11638 = vunpack.c.h.b16 %v11064
        %v11639 = vunpack.c.l.b16 %v11065
        %v11640 = vunpack.c.h.b16 %v11065
        %v11641 = vunpack.c.l.b16 %v11066
        %v11642 = vunpack.c.h.b16 %v11066
        %v11643 = vpack.c.b16 %v11265, %v11259
        %v11644 = vpack.c.b16 %v11266, %v11260
        %v11645 = vpack.c.b16 %v11267, %v11261
        %v11646 = vpack.c.b16 %v11268, %v11262
        %v11647 = vpack.c.b16 %v11269, %v11263
        %v11648 = vpack.c.b16 %v11270, %v11264
        %v11649 = vpack.c.b16 %v11277, %v11271
        %v11650 = vpack.c.b16 %v11278, %v11272
        %v11651 = vpack.c.b16 %v11279, %v11273
        %v11652 = vpack.c.b16 %v11280, %v11274
        %v11653 = vpack.c.b16 %v11281, %v11275
        %v11654 = vpack.c.b16 %v11282, %v11276
        %v11655 = vpack.c.b16 %v11289, %v11283
        %v11656 = vpack.c.b16 %v11290, %v11284
        %v11657 = vpack.c.b16 %v11291, %v11285
        %v11658 = vpack.c.b16 %v11292, %v11286
        %v11659 = vpack.c.b16 %v11293, %v11287
        %v11660 = vpack.c.b16 %v11294, %v11288
        %v11661 = vpack.c.b16 %v11301, %v11295
        %v11662 = vpack.c.b16 %v11302, %v11296
        %v11663 = vpack.c.b16 %v11303, %v11297
        %v11664 = vpack.c.b16 %v11304, %v11298
        %v11665 = vpack.c.b16 %v11305, %v11299
        %v11666 = vpack.c.b16 %v11306, %v11300
        %v11667 = vpack.c.b16 %v11313, %v11307
        %v11668 = vpack.c.b16 %v11314, %v11308
        %v11669 = vpack.c.b16 %v11315, %v11309
        %v11670 = vpack.c.b16 %v11316, %v11310
        %v11671 = vpack.c.b16 %v11317, %v11311
        %v11672 = vpack.c.b16 %v11318, %v11312
        %v11673 = vpack.c.b16 %v11325, %v11319
        %v11674 = vpack.c.b16 %v11326, %v11320
        %v11675 = vpack.c.b16 %v11327, %v11321
        %v11676 = vpack.c.b16 %v11328, %v11322
        %v11677 = vpack.c.b16 %v11329, %v11323
        %v11678 = vpack.c.b16 %v11330, %v11324
        %v11679 = vpack.c.b16 %v11337, %v11331
        %v11680 = vpack.c.b16 %v11338, %v11332
        %v11681 = vpack.c.b16 %v11339, %v11333
        %v11682 = vpack.c.b16 %v11340, %v11334
        %v11683 = vpack.c.b16 %v11341, %v11335
        %v11684 = vpack.c.b16 %v11342, %v11336
        %v11685 = vpack.c.b16 %v11349, %v11343
        %v11686 = vpack.c.b16 %v11350, %v11344
        %v11687 = vpack.c.b16 %v11351, %v11345
        %v11688 = vpack.c.b16 %v11352, %v11346
        %v11689 = vpack.c.b16 %v11353, %v11347
        %v11690 = vpack.c.b16 %v11354, %v11348
        %v11691 = vpack.c.b16 %v11361, %v11355
        %v11692 = vpack.c.b16 %v11362, %v11356
        %v11693 = vpack.c.b16 %v11363, %v11357
        %v11694 = vpack.c.b16 %v11364, %v11358
        %v11695 = vpack.c.b16 %v11365, %v11359
        %v11696 = vpack.c.b16 %v11366, %v11360
        %v11697 = vpack.c.b16 %v11373, %v11367
        %v11698 = vpack.c.b16 %v11374, %v11368
        %v11699 = vpack.c.b16 %v11375, %v11369
        %v11700 = vpack.c.b16 %v11376, %v11370
        %v11701 = vpack.c.b16 %v11377, %v11371
        %v11702 = vpack.c.b16 %v11378, %v11372
        %v11703 = vpack.c.b16 %v11385, %v11379
        %v11704 = vpack.c.b16 %v11386, %v11380
        %v11705 = vpack.c.b16 %v11387, %v11381
        %v11706 = vpack.c.b16 %v11388, %v11382
        %v11707 = vpack.c.b16 %v11389, %v11383
        %v11708 = vpack.c.b16 %v11390, %v11384
        %v11709 = vpack.c.b16 %v11397, %v11391
        %v11710 = vpack.c.b16 %v11398, %v11392
        %v11711 = vpack.c.b16 %v11399, %v11393
        %v11712 = vpack.c.b16 %v11400, %v11394
        %v11713 = vpack.c.b16 %v11401, %v11395
        %v11714 = vpack.c.b16 %v11402, %v11396
        %v11715 = vpack.c.b16 %v11409, %v11403
        %v11716 = vpack.c.b16 %v11410, %v11404
        %v11717 = vpack.c.b16 %v11411, %v11405
        %v11718 = vpack.c.b16 %v11412, %v11406
        %v11719 = vpack.c.b16 %v11413, %v11407
        %v11720 = vpack.c.b16 %v11414, %v11408
        %v11721 = vpack.c.b16 %v11421, %v11415
        %v11722 = vpack.c.b16 %v11422, %v11416
        %v11723 = vpack.c.b16 %v11423, %v11417
        %v11724 = vpack.c.b16 %v11424, %v11418
        %v11725 = vpack.c.b16 %v11425, %v11419
        %v11726 = vpack.c.b16 %v11426, %v11420
        %v11727 = vpack.c.b16 %v11433, %v11427
        %v11728 = vpack.c.b16 %v11434, %v11428
        %v11729 = vpack.c.b16 %v11435, %v11429
        %v11730 = vpack.c.b16 %v11436, %v11430
        %v11731 = vpack.c.b16 %v11437, %v11431
        %v11732 = vpack.c.b16 %v11438, %v11432
        %v11733 = vpack.c.b16 %v11445, %v11439
        %v11734 = vpack.c.b16 %v11446, %v11440
        %v11735 = vpack.c.b16 %v11447, %v11441
        %v11736 = vpack.c.b16 %v11448, %v11442
        %v11737 = vpack.c.b16 %v11449, %v11443
        %v11738 = vpack.c.b16 %v11450, %v11444
        %v11739 = vpack.c.b16 %v11457, %v11451
        %v11740 = vpack.c.b16 %v11458, %v11452
        %v11741 = vpack.c.b16 %v11459, %v11453
        %v11742 = vpack.c.b16 %v11460, %v11454
        %v11743 = vpack.c.b16 %v11461, %v11455
        %v11744 = vpack.c.b16 %v11462, %v11456
        %v11745 = vpack.c.b16 %v11469, %v11463
        %v11746 = vpack.c.b16 %v11470, %v11464
        %v11747 = vpack.c.b16 %v11471, %v11465
        %v11748 = vpack.c.b16 %v11472, %v11466
        %v11749 = vpack.c.b16 %v11473, %v11467
        %v11750 = vpack.c.b16 %v11474, %v11468
        %v11751 = vpack.c.b16 %v11481, %v11475
        %v11752 = vpack.c.b16 %v11482, %v11476
        %v11753 = vpack.c.b16 %v11483, %v11477
        %v11754 = vpack.c.b16 %v11484, %v11478
        %v11755 = vpack.c.b16 %v11485, %v11479
        %v11756 = vpack.c.b16 %v11486, %v11480
        %v11757 = vpack.c.b16 %v11493, %v11487
        %v11758 = vpack.c.b16 %v11494, %v11488
        %v11759 = vpack.c.b16 %v11495, %v11489
        %v11760 = vpack.c.b16 %v11496, %v11490
        %v11761 = vpack.c.b16 %v11497, %v11491
        %v11762 = vpack.c.b16 %v11498, %v11492
        %v11763 = vpack.c.b16 %v11505, %v11499
        %v11764 = vpack.c.b16 %v11506, %v11500
        %v11765 = vpack.c.b16 %v11507, %v11501
        %v11766 = vpack.c.b16 %v11508, %v11502
        %v11767 = vpack.c.b16 %v11509, %v11503
        %v11768 = vpack.c.b16 %v11510, %v11504
        %v11769 = vpack.c.b16 %v11517, %v11511
        %v11770 = vpack.c.b16 %v11518, %v11512
        %v11771 = vpack.c.b16 %v11519, %v11513
        %v11772 = vpack.c.b16 %v11520, %v11514
        %v11773 = vpack.c.b16 %v11521, %v11515
        %v11774 = vpack.c.b16 %v11522, %v11516
        %v11775 = vpack.c.b16 %v11529, %v11523
        %v11776 = vpack.c.b16 %v11530, %v11524
        %v11777 = vpack.c.b16 %v11531, %v11525
        %v11778 = vpack.c.b16 %v11532, %v11526
        %v11779 = vpack.c.b16 %v11533, %v11527
        %v11780 = vpack.c.b16 %v11534, %v11528
        %v11781 = vpack.c.b16 %v11541, %v11535
        %v11782 = vpack.c.b16 %v11542, %v11536
        %v11783 = vpack.c.b16 %v11543, %v11537
        %v11784 = vpack.c.b16 %v11544, %v11538
        %v11785 = vpack.c.b16 %v11545, %v11539
        %v11786 = vpack.c.b16 %v11546, %v11540
        %v11787 = vpack.c.b16 %v11553, %v11547
        %v11788 = vpack.c.b16 %v11554, %v11548
        %v11789 = vpack.c.b16 %v11555, %v11549
        %v11790 = vpack.c.b16 %v11556, %v11550
        %v11791 = vpack.c.b16 %v11557, %v11551
        %v11792 = vpack.c.b16 %v11558, %v11552
        %v11793 = vpack.c.b16 %v11565, %v11559
        %v11794 = vpack.c.b16 %v11566, %v11560
        %v11795 = vpack.c.b16 %v11567, %v11561
        %v11796 = vpack.c.b16 %v11568, %v11562
        %v11797 = vpack.c.b16 %v11569, %v11563
        %v11798 = vpack.c.b16 %v11570, %v11564
        %v11799 = vpack.c.b16 %v11577, %v11571
        %v11800 = vpack.c.b16 %v11578, %v11572
        %v11801 = vpack.c.b16 %v11579, %v11573
        %v11802 = vpack.c.b16 %v11580, %v11574
        %v11803 = vpack.c.b16 %v11581, %v11575
        %v11804 = vpack.c.b16 %v11582, %v11576
        %v11805 = vpack.c.b16 %v11589, %v11583
        %v11806 = vpack.c.b16 %v11590, %v11584
        %v11807 = vpack.c.b16 %v11591, %v11585
        %v11808 = vpack.c.b16 %v11592, %v11586
        %v11809 = vpack.c.b16 %v11593, %v11587
        %v11810 = vpack.c.b16 %v11594, %v11588
        %v11811 = vpack.c.b16 %v11601, %v11595
        %v11812 = vpack.c.b16 %v11602, %v11596
        %v11813 = vpack.c.b16 %v11603, %v11597
        %v11814 = vpack.c.b16 %v11604, %v11598
        %v11815 = vpack.c.b16 %v11605, %v11599
        %v11816 = vpack.c.b16 %v11606, %v11600
        %v11817 = vpack.c.b16 %v11613, %v11607
        %v11818 = vpack.c.b16 %v11614, %v11608
        %v11819 = vpack.c.b16 %v11615, %v11609
        %v11820 = vpack.c.b16 %v11616, %v11610
        %v11821 = vpack.c.b16 %v11617, %v11611
        %v11822 = vpack.c.b16 %v11618, %v11612
        %v11823 = vpack.c.b16 %v11625, %v11619
        %v11824 = vpack.c.b16 %v11626, %v11620
        %v11825 = vpack.c.b16 %v11627, %v11621
        %v11826 = vpack.c.b16 %v11628, %v11622
        %v11827 = vpack.c.b16 %v11629, %v11623
        %v11828 = vpack.c.b16 %v11630, %v11624
        %v11829 = vpack.c.b16 %v11637, %v11631
        %v11830 = vpack.c.b16 %v11638, %v11632
        %v11831 = vpack.c.b16 %v11639, %v11633
        %v11832 = vpack.c.b16 %v11640, %v11634
        %v11833 = vpack.c.b16 %v11641, %v11635
        %v11834 = vpack.c.b16 %v11642, %v11636
        %12027 = vmatprep.subr.bf16.mxu0 %v11686
        %12028 = vmatpush1.bf16.msra.mxu0 %v11685
        %12029 = vmatprep.subr.bf16.mxu0 %v11680
        %12030 = vmatpush1.bf16.msra.mxu0 %v11679
        %12031 = vmatprep.subr.bf16.mxu0 %v11674
        %12032 = vmatpush1.bf16.msra.mxu0 %v11673
        %12033 = vmatprep.subr.bf16.mxu0 %v11668
        %12034 = vmatpush1.bf16.msra.mxu0 %v11667
        %12035 = vmatprep.subr.bf16.mxu0 %v11662
        %12036 = vmatpush1.bf16.msra.mxu0 %v11661
        %12037 = vmatprep.subr.bf16.mxu0 %v11656
        %12038 = vmatpush1.bf16.msra.mxu0 %v11655
        %12039 = vmatprep.subr.bf16.mxu0 %v11650
        %12040 = vmatpush1.bf16.msra.mxu0 %v11649
        %12041 = vmatprep.subr.bf16.mxu0 %v11644
        %12042 = vmatpush1.bf16.msra.mxu0 %v11643
        %12043 = vmatprep.subr.bf16.mxu0 %v11734
        %12044 = vmatpush2.bf16.msra.mxu0 %v11733
        %12045 = vmatprep.subr.bf16.mxu0 %v11728
        %12046 = vmatpush2.bf16.msra.mxu0 %v11727
        %12047 = vmatprep.subr.bf16.mxu0 %v11722
        %12048 = vmatpush2.bf16.msra.mxu0 %v11721
        %12049 = vmatprep.subr.bf16.mxu0 %v11716
        %12050 = vmatpush2.bf16.msra.mxu0 %v11715
        %12051 = vmatprep.subr.bf16.mxu0 %v11710
        %12052 = vmatpush2.bf16.msra.mxu0 %v11709
        %12053 = vmatprep.subr.bf16.mxu0 %v11704
        %12054 = vmatpush2.bf16.msra.mxu0 %v11703
        %12055 = vmatprep.subr.bf16.mxu0 %v11698
        %12056 = vmatpush2.bf16.msra.mxu0 %v11697
        %12057 = vmatprep.subr.bf16.mxu0 %v11692
        %12058 = vmatpush2.bf16.msra.mxu0 %v11691
        %12059 = vmatprep.mubr.bf16.mxu0 %v10872
        %12060 = vmatmul.mubr.bf16.gmra.mxu0 %v10871
        %v12061 = vpop.f32.mrf.mxu0
        %v12062 = vadd.f32 0.0, %v12061
        %v12063 = vpop.f32.mrf.mxu0
        %v12064 = vadd.f32 0.0, %v12063
        %v12065 = vpop.f32.mrf.mxu0
        %v12066 = vpop.f32.mrf.mxu0
        %12067 = vdwg.mxu0
        %12068 = vmatprep.subr.bf16.mxu0 %v11782
        %12069 = vmatpush1.bf16.msra.mxu0 %v11781
        %12070 = vmatprep.subr.bf16.mxu0 %v11776
        %12071 = vmatpush1.bf16.msra.mxu0 %v11775
        %12072 = vmatprep.subr.bf16.mxu0 %v11770
        %12073 = vmatpush1.bf16.msra.mxu0 %v11769
        %12074 = vmatprep.subr.bf16.mxu0 %v11764
        %12075 = vmatpush1.bf16.msra.mxu0 %v11763
        %12076 = vmatprep.subr.bf16.mxu0 %v11758
        %12077 = vmatpush1.bf16.msra.mxu0 %v11757
        %12078 = vmatprep.subr.bf16.mxu0 %v11752
        %12079 = vmatpush1.bf16.msra.mxu0 %v11751
        %12080 = vmatprep.subr.bf16.mxu0 %v11746
        %12081 = vmatpush1.bf16.msra.mxu0 %v11745
        %12082 = vmatprep.subr.bf16.mxu0 %v11740
        %12083 = vmatpush1.bf16.msra.mxu0 %v11739
        %12084 = vmatprep.subr.bf16.mxu0 %v11830
        %12085 = vmatpush2.bf16.msra.mxu0 %v11829
        %12086 = vmatprep.subr.bf16.mxu0 %v11824
        %12087 = vmatpush2.bf16.msra.mxu0 %v11823
        %12088 = vmatprep.subr.bf16.mxu0 %v11818
        %12089 = vmatpush2.bf16.msra.mxu0 %v11817
        %12090 = vmatprep.subr.bf16.mxu0 %v11812
        %12091 = vmatpush2.bf16.msra.mxu0 %v11811
        %12092 = vmatprep.subr.bf16.mxu0 %v11806
        %12093 = vmatpush2.bf16.msra.mxu0 %v11805
        %12094 = vmatprep.subr.bf16.mxu0 %v11800
        %12095 = vmatpush2.bf16.msra.mxu0 %v11799
        %12096 = vmatprep.subr.bf16.mxu0 %v11794
        %12097 = vmatpush2.bf16.msra.mxu0 %v11793
        %12098 = vmatprep.subr.bf16.mxu0 %v11788
        %12099 = vmatpush2.bf16.msra.mxu0 %v11787
        %12100 = vmatprep.mubr.bf16.mxu0 %v10874
        %12101 = vmatmul.mubr.bf16.gmra.mxu0 %v10873
        %v12102 = vpop.f32.mrf.mxu0
        %v12103 = vadd.f32 %v12062, %v12102
        %v12104 = vpop.f32.mrf.mxu0
        %v12105 = vadd.f32 %v12064, %v12104
        %v12106 = vpop.f32.mrf.mxu0
        %v12107 = vpop.f32.mrf.mxu0
        %12108 = vdwg.mxu0
        %12109 = vmatprep.subr.bf16.mxu0 %v11688
        %12110 = vmatpush1.bf16.msra.mxu0 %v11687
        %12111 = vmatprep.subr.bf16.mxu0 %v11682
        %12112 = vmatpush1.bf16.msra.mxu0 %v11681
        %12113 = vmatprep.subr.bf16.mxu0 %v11676
        %12114 = vmatpush1.bf16.msra.mxu0 %v11675
        %12115 = vmatprep.subr.bf16.mxu0 %v11670
        %12116 = vmatpush1.bf16.msra.mxu0 %v11669
        %12117 = vmatprep.subr.bf16.mxu0 %v11664
        %12118 = vmatpush1.bf16.msra.mxu0 %v11663
        %12119 = vmatprep.subr.bf16.mxu0 %v11658
        %12120 = vmatpush1.bf16.msra.mxu0 %v11657
        %12121 = vmatprep.subr.bf16.mxu0 %v11652
        %12122 = vmatpush1.bf16.msra.mxu0 %v11651
        %12123 = vmatprep.subr.bf16.mxu0 %v11646
        %12124 = vmatpush1.bf16.msra.mxu0 %v11645
        %12125 = vmatprep.subr.bf16.mxu0 %v11736
        %12126 = vmatpush2.bf16.msra.mxu0 %v11735
        %12127 = vmatprep.subr.bf16.mxu0 %v11730
        %12128 = vmatpush2.bf16.msra.mxu0 %v11729
        %12129 = vmatprep.subr.bf16.mxu0 %v11724
        %12130 = vmatpush2.bf16.msra.mxu0 %v11723
        %12131 = vmatprep.subr.bf16.mxu0 %v11718
        %12132 = vmatpush2.bf16.msra.mxu0 %v11717
        %12133 = vmatprep.subr.bf16.mxu0 %v11712
        %12134 = vmatpush2.bf16.msra.mxu0 %v11711
        %12135 = vmatprep.subr.bf16.mxu0 %v11706
        %12136 = vmatpush2.bf16.msra.mxu0 %v11705
        %12137 = vmatprep.subr.bf16.mxu0 %v11700
        %12138 = vmatpush2.bf16.msra.mxu0 %v11699
        %12139 = vmatprep.subr.bf16.mxu0 %v11694
        %12140 = vmatpush2.bf16.msra.mxu0 %v11693
        %12141 = vmatprep.mubr.bf16.mxu0 %v10872
        %12142 = vmatmul.mubr.bf16.gmra.mxu0 %v10871
        %v12143 = vpop.f32.mrf.mxu0
        %v12144 = vadd.f32 0.0, %v12143
        %v12145 = vpop.f32.mrf.mxu0
        %v12146 = vadd.f32 0.0, %v12145
        %v12147 = vpop.f32.mrf.mxu0
        %v12148 = vpop.f32.mrf.mxu0
        %12149 = vdwg.mxu0
        %12150 = vmatprep.subr.bf16.mxu0 %v11784
        %12151 = vmatpush1.bf16.msra.mxu0 %v11783
        %12152 = vmatprep.subr.bf16.mxu0 %v11778
        %12153 = vmatpush1.bf16.msra.mxu0 %v11777
        %12154 = vmatprep.subr.bf16.mxu0 %v11772
        %12155 = vmatpush1.bf16.msra.mxu0 %v11771
        %12156 = vmatprep.subr.bf16.mxu0 %v11766
        %12157 = vmatpush1.bf16.msra.mxu0 %v11765
        %12158 = vmatprep.subr.bf16.mxu0 %v11760
        %12159 = vmatpush1.bf16.msra.mxu0 %v11759
        %12160 = vmatprep.subr.bf16.mxu0 %v11754
        %12161 = vmatpush1.bf16.msra.mxu0 %v11753
        %12162 = vmatprep.subr.bf16.mxu0 %v11748
        %12163 = vmatpush1.bf16.msra.mxu0 %v11747
        %12164 = vmatprep.subr.bf16.mxu0 %v11742
        %12165 = vmatpush1.bf16.msra.mxu0 %v11741
        %12166 = vmatprep.subr.bf16.mxu0 %v11832
        %12167 = vmatpush2.bf16.msra.mxu0 %v11831
        %12168 = vmatprep.subr.bf16.mxu0 %v11826
        %12169 = vmatpush2.bf16.msra.mxu0 %v11825
        %12170 = vmatprep.subr.bf16.mxu0 %v11820
        %12171 = vmatpush2.bf16.msra.mxu0 %v11819
        %12172 = vmatprep.subr.bf16.mxu0 %v11814
        %12173 = vmatpush2.bf16.msra.mxu0 %v11813
        %12174 = vmatprep.subr.bf16.mxu0 %v11808
        %12175 = vmatpush2.bf16.msra.mxu0 %v11807
        %12176 = vmatprep.subr.bf16.mxu0 %v11802
        %12177 = vmatpush2.bf16.msra.mxu0 %v11801
        %12178 = vmatprep.subr.bf16.mxu0 %v11796
        %12179 = vmatpush2.bf16.msra.mxu0 %v11795
        %12180 = vmatprep.subr.bf16.mxu0 %v11790
        %12181 = vmatpush2.bf16.msra.mxu0 %v11789
        %12182 = vmatprep.mubr.bf16.mxu0 %v10874
        %12183 = vmatmul.mubr.bf16.gmra.mxu0 %v10873
        %v12184 = vpop.f32.mrf.mxu0
        %v12185 = vadd.f32 %v12144, %v12184
        %v12186 = vpop.f32.mrf.mxu0
        %v12187 = vadd.f32 %v12146, %v12186
        %v12188 = vpop.f32.mrf.mxu0
        %v12189 = vpop.f32.mrf.mxu0
        %12190 = vdwg.mxu0
        %12191 = vmatprep.subr.bf16.mxu0 %v11690
        %12192 = vmatpush1.bf16.msra.mxu0 %v11689
        %12193 = vmatprep.subr.bf16.mxu0 %v11684
        %12194 = vmatpush1.bf16.msra.mxu0 %v11683
        %12195 = vmatprep.subr.bf16.mxu0 %v11678
        %12196 = vmatpush1.bf16.msra.mxu0 %v11677
        %12197 = vmatprep.subr.bf16.mxu0 %v11672
        %12198 = vmatpush1.bf16.msra.mxu0 %v11671
        %12199 = vmatprep.subr.bf16.mxu0 %v11666
        %12200 = vmatpush1.bf16.msra.mxu0 %v11665
        %12201 = vmatprep.subr.bf16.mxu0 %v11660
        %12202 = vmatpush1.bf16.msra.mxu0 %v11659
        %12203 = vmatprep.subr.bf16.mxu0 %v11654
        %12204 = vmatpush1.bf16.msra.mxu0 %v11653
        %12205 = vmatprep.subr.bf16.mxu0 %v11648
        %12206 = vmatpush1.bf16.msra.mxu0 %v11647
        %12207 = vmatprep.subr.bf16.mxu0 %v11738
        %12208 = vmatpush2.bf16.msra.mxu0 %v11737
        %12209 = vmatprep.subr.bf16.mxu0 %v11732
        %12210 = vmatpush2.bf16.msra.mxu0 %v11731
        %12211 = vmatprep.subr.bf16.mxu0 %v11726
        %12212 = vmatpush2.bf16.msra.mxu0 %v11725
        %12213 = vmatprep.subr.bf16.mxu0 %v11720
        %12214 = vmatpush2.bf16.msra.mxu0 %v11719
        %12215 = vmatprep.subr.bf16.mxu0 %v11714
        %12216 = vmatpush2.bf16.msra.mxu0 %v11713
        %12217 = vmatprep.subr.bf16.mxu0 %v11708
        %12218 = vmatpush2.bf16.msra.mxu0 %v11707
        %12219 = vmatprep.subr.bf16.mxu0 %v11702
        %12220 = vmatpush2.bf16.msra.mxu0 %v11701
        %12221 = vmatprep.subr.bf16.mxu0 %v11696
        %12222 = vmatpush2.bf16.msra.mxu0 %v11695
        %12223 = vmatprep.mubr.bf16.mxu0 %v10872
        %12224 = vmatmul.mubr.bf16.gmra.mxu0 %v10871
        %v12225 = vpop.f32.mrf.mxu0
        %v12226 = vadd.f32 0.0, %v12225
        %v12227 = vpop.f32.mrf.mxu0
        %v12228 = vadd.f32 0.0, %v12227
        %v12229 = vpop.f32.mrf.mxu0
        %v12230 = vpop.f32.mrf.mxu0
        %12231 = vdwg.mxu0
        %12232 = vmatprep.subr.bf16.mxu0 %v11786
        %12233 = vmatpush1.bf16.msra.mxu0 %v11785
        %12234 = vmatprep.subr.bf16.mxu0 %v11780
        %12235 = vmatpush1.bf16.msra.mxu0 %v11779
        %12236 = vmatprep.subr.bf16.mxu0 %v11774
        %12237 = vmatpush1.bf16.msra.mxu0 %v11773
        %12238 = vmatprep.subr.bf16.mxu0 %v11768
        %12239 = vmatpush1.bf16.msra.mxu0 %v11767
        %12240 = vmatprep.subr.bf16.mxu0 %v11762
        %12241 = vmatpush1.bf16.msra.mxu0 %v11761
        %12242 = vmatprep.subr.bf16.mxu0 %v11756
        %12243 = vmatpush1.bf16.msra.mxu0 %v11755
        %12244 = vmatprep.subr.bf16.mxu0 %v11750
        %12245 = vmatpush1.bf16.msra.mxu0 %v11749
        %12246 = vmatprep.subr.bf16.mxu0 %v11744
        %12247 = vmatpush1.bf16.msra.mxu0 %v11743
        %12248 = vmatprep.subr.bf16.mxu0 %v11834
        %12249 = vmatpush2.bf16.msra.mxu0 %v11833
        %12250 = vmatprep.subr.bf16.mxu0 %v11828
        %12251 = vmatpush2.bf16.msra.mxu0 %v11827
        %12252 = vmatprep.subr.bf16.mxu0 %v11822
        %12253 = vmatpush2.bf16.msra.mxu0 %v11821
        %12254 = vmatprep.subr.bf16.mxu0 %v11816
        %12255 = vmatpush2.bf16.msra.mxu0 %v11815
        %12256 = vmatprep.subr.bf16.mxu0 %v11810
        %12257 = vmatpush2.bf16.msra.mxu0 %v11809
        %12258 = vmatprep.subr.bf16.mxu0 %v11804
        %12259 = vmatpush2.bf16.msra.mxu0 %v11803
        %12260 = vmatprep.subr.bf16.mxu0 %v11798
        %12261 = vmatpush2.bf16.msra.mxu0 %v11797
        %12262 = vmatprep.subr.bf16.mxu0 %v11792
        %12263 = vmatpush2.bf16.msra.mxu0 %v11791
        %12264 = vmatprep.mubr.bf16.mxu0 %v10874
        %12265 = vmatmul.mubr.bf16.gmra.mxu0 %v10873
        %v12266 = vpop.f32.mrf.mxu0
        %v12267 = vadd.f32 %v12226, %v12266
        %v12268 = vpop.f32.mrf.mxu0
        %v12269 = vadd.f32 %v12228, %v12268
        %v12270 = vpop.f32.mrf.mxu0
        %v12271 = vpop.f32.mrf.mxu0
        %12272 = vdwg.mxu0
        %v12273 = vadd.f32 %v9425, %v12103
        %v12274 = vadd.f32 %v9426, %v12105
        %v12275 = vadd.f32 %v9427, %v12185
        %v12276 = vadd.f32 %v9428, %v12187
        %v12277 = vadd.f32 %v9429, %v12267
        %v12278 = vadd.f32 %v9430, %v12269
        %v12279 = vld [vmem:[#allocation17] sm:$0x3f]
        %v12280 = vld [vmem:[#allocation18] sm:$0x3f]
        %v12281 = vadd.f32 %v12273, %v12274
        %v12282 = vadd.f32 %v12281, %v12275
        %v12283 = vadd.f32 %v12282, %v12276
        %v12284 = vadd.f32 %v12283, %v12277
        %v12285 = vadd.f32 %v12284, %v12278
        %12286 = vadd.xlane.f32.xlu0 %v12285
        %v12287 = vpop.xlane.xlu0 %12286
        %v12288 = vmul.f32 %v12287, %v9327
        %v12289 = vsub.f32 %v12273, %v12288
        %v12290 = vsub.f32 %v12274, %v12288
        %v12291 = vsub.f32 %v12275, %v12288
        %v12292 = vsub.f32 %v12276, %v12288
        %v12293 = vsub.f32 %v12277, %v12288
        %v12294 = vsub.f32 %v12278, %v12288
        %v12295 = vmul.f32 %v12289, %v12289
        %v12296 = vmul.f32 %v12290, %v12290
        %v12297 = vmul.f32 %v12291, %v12291
        %v12298 = vmul.f32 %v12292, %v12292
        %v12299 = vmul.f32 %v12293, %v12293
        %v12300 = vmul.f32 %v12294, %v12294
        %v12301 = vadd.f32 %v12295, %v12296
        %v12302 = vadd.f32 %v12301, %v12297
        %v12303 = vadd.f32 %v12302, %v12298
        %v12304 = vadd.f32 %v12303, %v12299
        %v12305 = vadd.f32 %v12304, %v12300
        %12306 = vadd.xlane.f32.xlu0 %v12305
        %v12307 = vpop.xlane.xlu0 %12306
        %v12308 = vmul.f32 %v12307, %v9327
        %v12309 = vadd.f32 %v12308, 1e-12
        %v12310 = vrsqrt.pop %v12309
        %v12311 = vmul.f32 %v12289, %v12310
        %v12312 = vmul.f32 %v12290, %v12310
        %v12313 = vmul.f32 %v12291, %v12310
        %v12314 = vmul.f32 %v12292, %v12310
        %v12315 = vmul.f32 %v12293, %v12310
        %v12316 = vmul.f32 %v12294, %v12310
        %v12318 = vlaneseq
        %v12319 = vshrl.u32 %v12318, 7
        %v12320 = vsub.s32 0, %v12319
        %v12321 = vrot.slane %v12279, %v12320
        %v12322 = vlaneseq
        %v12323 = vshrl.u32 %v12322, 7
        %v12324 = vsub.s32 1, %v12323
        %v12325 = vrot.slane %v12279, %v12324
        %v12326 = vlaneseq
        %v12327 = vshrl.u32 %v12326, 7
        %v12328 = vsub.s32 2, %v12327
        %v12329 = vrot.slane %v12279, %v12328
        %v12330 = vlaneseq
        %v12331 = vshrl.u32 %v12330, 7
        %v12332 = vsub.s32 3, %v12331
        %v12333 = vrot.slane %v12279, %v12332
        %v12334 = vlaneseq
        %v12335 = vshrl.u32 %v12334, 7
        %v12336 = vsub.s32 4, %v12335
        %v12337 = vrot.slane %v12279, %v12336
        %v12338 = vlaneseq
        %v12339 = vshrl.u32 %v12338, 7
        %v12340 = vsub.s32 5, %v12339
        %v12341 = vrot.slane %v12279, %v12340
        %v12348 = vmul.f32 %v12311, %v12321
        %v12349 = vmul.f32 %v12312, %v12325
        %v12350 = vmul.f32 %v12313, %v12329
        %v12351 = vmul.f32 %v12314, %v12333
        %v12352 = vmul.f32 %v12315, %v12337
        %v12353 = vmul.f32 %v12316, %v12341
        %v12355 = vlaneseq
        %v12356 = vshrl.u32 %v12355, 7
        %v12357 = vsub.s32 0, %v12356
        %v12358 = vrot.slane %v12280, %v12357
        %v12359 = vlaneseq
        %v12360 = vshrl.u32 %v12359, 7
        %v12361 = vsub.s32 1, %v12360
        %v12362 = vrot.slane %v12280, %v12361
        %v12363 = vlaneseq
        %v12364 = vshrl.u32 %v12363, 7
        %v12365 = vsub.s32 2, %v12364
        %v12366 = vrot.slane %v12280, %v12365
        %v12367 = vlaneseq
        %v12368 = vshrl.u32 %v12367, 7
        %v12369 = vsub.s32 3, %v12368
        %v12370 = vrot.slane %v12280, %v12369
        %v12371 = vlaneseq
        %v12372 = vshrl.u32 %v12371, 7
        %v12373 = vsub.s32 4, %v12372
        %v12374 = vrot.slane %v12280, %v12373
        %v12375 = vlaneseq
        %v12376 = vshrl.u32 %v12375, 7
        %v12377 = vsub.s32 5, %v12376
        %v12378 = vrot.slane %v12280, %v12377
        %v12385 = vadd.f32 %v12348, %v12358
        %v12386 = vadd.f32 %v12349, %v12362
        %v12387 = vadd.f32 %v12350, %v12366
        %v12388 = vadd.f32 %v12351, %v12370
        %v12389 = vadd.f32 %v12352, %v12374
        %v12390 = vadd.f32 %v12353, %v12378
        %v12391 = vld [vmem:[#allocation20] sm:$0x3f]
        %v12392 = vpack.c.bf16 %v12385, %v12385
        %v12393 = vpack.c.bf16 %v12386, %v12386
        %v12394 = vpack.c.bf16 %v12387, %v12387
        %v12395 = vpack.c.bf16 %v12388, %v12388
        %v12396 = vpack.c.bf16 %v12389, %v12389
        %v12397 = vpack.c.bf16 %v12390, %v12390
        %s12398 = sld [smem:[#allocation2]]
        %v12399 = vstv %s12398
        %v12401 = vcombine.high %v12391, %v12391
        %v12403 = vunpack.c.l.s4 1966171168
        %v12404 = vunpack.c.0.s8 %v12403
        %v12405 = vlaneseq
        %v12406 = vshrl.u32 %v12405, 7
        %v12407 = vsub.s32 %v12404, %v12406
        %v12408 = vrot.slane %v12391, %v12407
        %v12410 = vunpack.c.l.s4 1966171168
        %v12411 = vunpack.c.0.s8 %v12410
        %v12412 = vlaneseq
        %v12413 = vshrl.u32 %v12412, 7
        %v12414 = vsub.s32 %v12411, %v12413
        %v12415 = vrot.slane %v12401, %v12414
        %v12416 = vcombine.high %v12408, %v12408
        %v12417 = vcombine.high %v12415, %v12415
        %v12419 = vunpack.c.l.s4 1966171168
        %v12420 = vunpack.c.0.s8 %v12419
        %v12421 = vlaneseq
        %v12422 = vshrl.u32 %v12421, 7
        %v12423 = vsub.s32 %v12420, %v12422
        %v12424 = vrot.slane %v12408, %v12423
        %v12426 = vunpack.c.l.s4 1966171168
        %v12427 = vunpack.c.0.s8 %v12426
        %v12428 = vlaneseq
        %v12429 = vshrl.u32 %v12428, 7
        %v12430 = vsub.s32 %v12427, %v12429
        %v12431 = vrot.slane %v12415, %v12430
        %v12433 = vunpack.c.l.s4 1966171168
        %v12434 = vunpack.c.0.s8 %v12433
        %v12435 = vlaneseq
        %v12436 = vshrl.u32 %v12435, 7
        %v12437 = vsub.s32 %v12434, %v12436
        %v12438 = vrot.slane %v12416, %v12437
        %v12440 = vunpack.c.l.s4 1966171168
        %v12441 = vunpack.c.0.s8 %v12440
        %v12442 = vlaneseq
        %v12443 = vshrl.u32 %v12442, 7
        %v12444 = vsub.s32 %v12441, %v12443
        %v12445 = vrot.slane %v12417, %v12444
        %v12446 = vcombine.high %v12424, %v12424
        %v12447 = vcombine.high %v12438, %v12438
        %12454 = vmatprep.subr.bf16.mxu0 0
        %12455 = vmatpush1.bf16.xpose.msra.mxu0 0
        %12456 = vmatprep.subr.bf16.mxu0 0
        %12457 = vmatpush1.bf16.xpose.msra.mxu0 0
        %12458 = vmatprep.subr.bf16.mxu0 0
        %12459 = vmatpush1.bf16.xpose.msra.mxu0 0
        %12460 = vmatprep.subr.bf16.mxu0 0
        %12461 = vmatpush1.bf16.xpose.msra.mxu0 0
        %12462 = vmatprep.subr.bf16.mxu0 0
        %12463 = vmatpush1.bf16.xpose.msra.mxu0 0
        %12464 = vmatprep.subr.bf16.mxu0 0
        %12465 = vmatpush1.bf16.xpose.msra.mxu0 0
        %12466 = vmatprep.subr.bf16.mxu0 0
        %12467 = vmatpush1.bf16.xpose.msra.mxu0 0
        %12468 = vmatprep.subr.bf16.mxu0 %v12393
        %12469 = vmatpush1.bf16.xpose.msra.mxu0 %v12392
        %12470 = vmatprep.subr.bf16.mxu0 0
        %12471 = vmatpush2.bf16.xpose.msra.mxu0 0
        %12472 = vmatprep.subr.bf16.mxu0 0
        %12473 = vmatpush2.bf16.xpose.msra.mxu0 0
        %12474 = vmatprep.subr.bf16.mxu0 0
        %12475 = vmatpush2.bf16.xpose.msra.mxu0 0
        %12476 = vmatprep.subr.bf16.mxu0 0
        %12477 = vmatpush2.bf16.xpose.msra.mxu0 0
        %12478 = vmatprep.subr.bf16.mxu0 0
        %12479 = vmatpush2.bf16.xpose.msra.mxu0 0
        %12480 = vmatprep.subr.bf16.mxu0 0
        %12481 = vmatpush2.bf16.xpose.msra.mxu0 0
        %12482 = vmatprep.subr.bf16.mxu0 0
        %12483 = vmatpush2.bf16.xpose.msra.mxu0 0
        %12484 = vmatprep.subr.bf16.mxu0 0
        %12485 = vmatpush2.bf16.xpose.msra.mxu0 0
        %12486 = vmatprep.mubr.bf16.mxu0 %v12438
        %12487 = vmatmul.mubr.bf16.gmra.mxu0 %v12424
        %v12488 = vpop.f32.mrf.mxu0
        %v12489 = vadd.f32 %v12399, %v12488
        %v12490 = vpop.f32.mrf.mxu0
        %v12491 = vpop.f32.mrf.mxu0
        %v12492 = vpop.f32.mrf.mxu0
        %12493 = vdwg.mxu0
        %12494 = vmatprep.subr.bf16.mxu0 0
        %12495 = vmatpush1.bf16.xpose.msra.mxu0 0
        %12496 = vmatprep.subr.bf16.mxu0 0
        %12497 = vmatpush1.bf16.xpose.msra.mxu0 0
        %12498 = vmatprep.subr.bf16.mxu0 0
        %12499 = vmatpush1.bf16.xpose.msra.mxu0 0
        %12500 = vmatprep.subr.bf16.mxu0 0
        %12501 = vmatpush1.bf16.xpose.msra.mxu0 0
        %12502 = vmatprep.subr.bf16.mxu0 0
        %12503 = vmatpush1.bf16.xpose.msra.mxu0 0
        %12504 = vmatprep.subr.bf16.mxu0 0
        %12505 = vmatpush1.bf16.xpose.msra.mxu0 0
        %12506 = vmatprep.subr.bf16.mxu0 0
        %12507 = vmatpush1.bf16.xpose.msra.mxu0 0
        %12508 = vmatprep.subr.bf16.mxu0 %v12395
        %12509 = vmatpush1.bf16.xpose.msra.mxu0 %v12394
        %12510 = vmatprep.subr.bf16.mxu0 0
        %12511 = vmatpush2.bf16.xpose.msra.mxu0 0
        %12512 = vmatprep.subr.bf16.mxu0 0
        %12513 = vmatpush2.bf16.xpose.msra.mxu0 0
        %12514 = vmatprep.subr.bf16.mxu0 0
        %12515 = vmatpush2.bf16.xpose.msra.mxu0 0
        %12516 = vmatprep.subr.bf16.mxu0 0
        %12517 = vmatpush2.bf16.xpose.msra.mxu0 0
        %12518 = vmatprep.subr.bf16.mxu0 0
        %12519 = vmatpush2.bf16.xpose.msra.mxu0 0
        %12520 = vmatprep.subr.bf16.mxu0 0
        %12521 = vmatpush2.bf16.xpose.msra.mxu0 0
        %12522 = vmatprep.subr.bf16.mxu0 0
        %12523 = vmatpush2.bf16.xpose.msra.mxu0 0
        %12524 = vmatprep.subr.bf16.mxu0 0
        %12525 = vmatpush2.bf16.xpose.msra.mxu0 0
        %12526 = vmatprep.mubr.bf16.mxu0 %v12447
        %12527 = vmatmul.mubr.bf16.gmra.mxu0 %v12446
        %v12528 = vpop.f32.mrf.mxu0
        %v12529 = vadd.f32 %v12489, %v12528
        %v12530 = vpop.f32.mrf.mxu0
        %v12531 = vpop.f32.mrf.mxu0
        %v12532 = vpop.f32.mrf.mxu0
        %12533 = vdwg.mxu0
        %12534 = vmatprep.subr.bf16.mxu0 0
        %12535 = vmatpush1.bf16.xpose.msra.mxu0 0
        %12536 = vmatprep.subr.bf16.mxu0 0
        %12537 = vmatpush1.bf16.xpose.msra.mxu0 0
        %12538 = vmatprep.subr.bf16.mxu0 0
        %12539 = vmatpush1.bf16.xpose.msra.mxu0 0
        %12540 = vmatprep.subr.bf16.mxu0 0
        %12541 = vmatpush1.bf16.xpose.msra.mxu0 0
        %12542 = vmatprep.subr.bf16.mxu0 0
        %12543 = vmatpush1.bf16.xpose.msra.mxu0 0
        %12544 = vmatprep.subr.bf16.mxu0 0
        %12545 = vmatpush1.bf16.xpose.msra.mxu0 0
        %12546 = vmatprep.subr.bf16.mxu0 0
        %12547 = vmatpush1.bf16.xpose.msra.mxu0 0
        %12548 = vmatprep.subr.bf16.mxu0 %v12397
        %12549 = vmatpush1.bf16.xpose.msra.mxu0 %v12396
        %12550 = vmatprep.subr.bf16.mxu0 0
        %12551 = vmatpush2.bf16.xpose.msra.mxu0 0
        %12552 = vmatprep.subr.bf16.mxu0 0
        %12553 = vmatpush2.bf16.xpose.msra.mxu0 0
        %12554 = vmatprep.subr.bf16.mxu0 0
        %12555 = vmatpush2.bf16.xpose.msra.mxu0 0
        %12556 = vmatprep.subr.bf16.mxu0 0
        %12557 = vmatpush2.bf16.xpose.msra.mxu0 0
        %12558 = vmatprep.subr.bf16.mxu0 0
        %12559 = vmatpush2.bf16.xpose.msra.mxu0 0
        %12560 = vmatprep.subr.bf16.mxu0 0
        %12561 = vmatpush2.bf16.xpose.msra.mxu0 0
        %12562 = vmatprep.subr.bf16.mxu0 0
        %12563 = vmatpush2.bf16.xpose.msra.mxu0 0
        %12564 = vmatprep.subr.bf16.mxu0 0
        %12565 = vmatpush2.bf16.xpose.msra.mxu0 0
        %12566 = vmatprep.mubr.bf16.mxu0 %v12445
        %12567 = vmatmul.mubr.bf16.gmra.mxu0 %v12431
        %v12568 = vpop.f32.mrf.mxu0
        %v12569 = vadd.f32 %v12529, %v12568
        %v12570 = vpop.f32.mrf.mxu0
        %v12571 = vpop.f32.mrf.mxu0
        %v12572 = vpop.f32.mrf.mxu0
        %12573 = vdwg.mxu0
        %vm12574 = vcmask 57344
        %12575 = vst.msk [vmem:[%s583] sm:$0x1] %vm12574, %v12569
        %s12576 = sand.u32 %s307, 1
        %s12577 = scalar_lea.sflag [#allocation5], %s12576
        %s12578 = sand.u32 %s307, 1
        %s12579 = scalar_lea.vmem [#allocation21], %s12578
        // Predicated region
        $region113: #{tpu_custom_call.1} parent=67 // pred_check
          %p12580 = pneg %p317
        $region114: #{tpu_custom_call.1} parent=67 // pred_check_branch
          %12582 = sbr.rel (%p12580) target = $region116
        $region115: #{tpu_custom_call.1} parent=67 // pred_region
          %s12584 = ssub.s32 16, 16
          %12585 = vsyncadd %s12577, %s12584
          %s12586 = smul.addr %s37, 16
          %s12587 = scalar_lea.hbm %s12, %s12586
          %s12589 = sshll.u32 %s12579, 4
          %s12590 = int_to_ptr.vmem [resolvable:$true] %s12589
          %12592 = dma.vmem_to_hbm [thread:$0]  %s12590, 16, %s12587, %s12577
        $region116: #{tpu_custom_call.1} parent=67 // pred_fallthru
          _
      $region68: #{tpu_custom_call.1} parent=5 // pred_fallthru
        _
      %p12593 = scmp.le.s32.totalorder 2, %s32
      // Predicated region
      $region117: #{tpu_custom_call.1} parent=5 // pred_check
        %p12594 = pneg %p12593
      $region118: #{tpu_custom_call.1} parent=5 // pred_check_branch
        %12596 = sbr.rel (%p12594) target = $region120
      $region119: #{tpu_custom_call.1} parent=5 // pred_region
        %s12597 = ssub.s32 %s32, 2
        // Predicated region
        $region121: #{tpu_custom_call.1} parent=119 // pred_check
          %p12598 = pneg %p323
        $region122: #{tpu_custom_call.1} parent=119 // pred_check_branch
          %12600 = sbr.rel (%p12598) target = $region124
        $region123: #{tpu_custom_call.1} parent=119 // pred_region
          %s12601 = sand.u32 %s308, 1
          %s12602 = scalar_lea.sflag [#allocation5], %s12601
          %s12603 = sand.u32 %s308, 1
          %s12604 = scalar_lea.vmem [#allocation21], %s12603
          %12605 = dma.done %s12602, 16
        $region124: #{tpu_custom_call.1} parent=119 // pred_fallthru
          _
      $region120: #{tpu_custom_call.1} parent=5 // pred_fallthru
        _
    $region6: #{tpu_custom_call.1} parent=1 // loop_footer
      %s36 = sadd.s32 1, %s32
    $region7: #{tpu_custom_call.1} parent=1 // loop_footer_branch
      %31 = sbr.rel target = $region3
    $region8: #{tpu_custom_call.1} parent=1 // loop_exit
      _
    %12606 = vsyncpa [#allocation4], 1
    %s12607 = scalar_lea.sflag [#allocation4], 1
    %12608 = vsyncpa %s12607, 1
    %12609 = vsyncpa [#allocation7], 1
    %s12610 = scalar_lea.sflag [#allocation7], 1
    %12611 = vsyncpa %s12610, 1
    %12612 = vsyncpa [#allocation10], 1
    %12613 = vsyncpa [#allocation13], 1
    %12614 = vsyncpa [#allocation16], 1
    %12615 = vsyncpa [#allocation19], 1
    %12616 = vsyncpa [#allocation5], 1
    %s12617 = scalar_lea.sflag [#allocation5], 1
    %12618 = vsyncpa %s12617, 1

</llo_original>
